<compile_context>
chip_gen: v7x
topology: tpu7x:2x2x1
jax: 0.10.0
libtpu: 0.0.40
codegen_flags: <defaults>
</compile_context>

<pallas_src>
import functools

import jax
import jax.numpy as jnp
from jax.experimental import pallas as pl
from jax.experimental.pallas import tpu as pltpu

BN_EPS = 1e-5


def _round_up(x, m):
    return (x + m - 1) // m * m


# ---------------------------------------------------------------------------
# Kernel A: conv3x3(pad=0) + BatchNorm(train) + ReLU + MaxPool2d(2), fused.
# ---------------------------------------------------------------------------
def _conv_bn_relu_pool_kernel(p_ref, w_ref, gb_ref, o_ref, *, m_true, mp_pad):
    # p_ref : [M_arr, Kp] bf16 im2col rows arranged as 4 pool-tap blocks of
    #         mp_pad rows each, then a tail block with the conv rows that the
    #         floor-mode pool crops (kept only for the BN batch statistics).
    # w_ref : [Kp, Cout] bf16 ; gb_ref : [2, Cout] f32 (gamma, beta).
    z = jnp.dot(p_ref[...], w_ref[...], preferred_element_type=jnp.float32)
    # Training-mode BatchNorm over the true N*Ho*Wo conv positions.  Padding
    # rows give z == 0 exactly (no conv bias), so they drop out of both sums.
    inv_m = 1.0 / m_true
    mean = jnp.sum(z, axis=0, keepdims=True) * inv_m
    var = jnp.sum(z * z, axis=0, keepdims=True) * inv_m - mean * mean
    scale = gb_ref[0:1, :] * jax.lax.rsqrt(var + BN_EPS)
    shift = gb_ref[1:2, :] - mean * scale
    y = jnp.maximum(z * scale + shift, 0.0)
    # 2x2 max-pool: the 4 taps of each pool window share a row index across
    # four contiguous, 8-aligned blocks.
    p00 = y[0 * mp_pad:1 * mp_pad]
    p01 = y[1 * mp_pad:2 * mp_pad]
    p10 = y[2 * mp_pad:3 * mp_pad]
    p11 = y[3 * mp_pad:4 * mp_pad]
    pooled = jnp.maximum(jnp.maximum(p00, p01), jnp.maximum(p10, p11))
    o_ref[...] = pooled.astype(o_ref.dtype)


def conv_bn_relu_pool(x_nhwc, w, gamma, beta):
    """3x3 valid conv + training BN + ReLU + 2x2 max-pool (floor mode)."""
    N, H, W, Cin = x_nhwc.shape
    Cout = w.shape[3]
    Ho, Wo = H - 2, W - 2
    Hp, Wp = Ho // 2, Wo // 2
    K = 9 * Cin
    Kp = _round_up(K, 16)                      # bf16-friendly contraction dim
    Mp = N * Hp * Wp
    Mp_pad = _round_up(Mp, 8)
    M_true = N * Ho * Wo

    # im2col (tap-major, cin-minor) -> [N, Ho, Wo, 9*Cin] in bf16.
    cols = []
    for dy in range(3):
        for dx in range(3):
            cols.append(x_nhwc[:, dy:dy + Ho, dx:dx + Wo, :])
    patches4 = jnp.concatenate(cols, axis=-1).astype(jnp.bfloat16)

    # One contiguous block per 2x2 pool tap, then the cropped-by-pool rows.
    blocks = []
    for di in range(2):
        for dj in range(2):
            blk = patches4[:, di:2 * Hp:2, dj:2 * Wp:2, :].reshape(Mp, K)
            blocks.append(jnp.pad(blk, ((0, Mp_pad - Mp), (0, 0))))
    rest = []
    if Ho > 2 * Hp:
        rest.append(patches4[:, 2 * Hp:, :, :].reshape(-1, K))
    if Wo > 2 * Wp:
        rest.append(patches4[:, :2 * Hp, 2 * Wp:, :].reshape(-1, K))
    if rest:
        r = jnp.concatenate(rest, axis=0)
        blocks.append(jnp.pad(r, ((0, _round_up(r.shape[0], 8) - r.shape[0]),
                                  (0, 0))))
    arranged = jnp.concatenate(blocks, axis=0)
    arranged = jnp.pad(arranged, ((0, 0), (0, Kp - K)))        # [M_arr, Kp] bf16
    M_arr = arranged.shape[0]

    w2d = jnp.pad(w.reshape(K, Cout), ((0, Kp - K), (0, 0))).astype(jnp.bfloat16)
    gb = jnp.stack([gamma, beta]).astype(jnp.float32)          # [2, Cout]

    out = pl.pallas_call(
        functools.partial(_conv_bn_relu_pool_kernel,
                          m_true=float(M_true), mp_pad=Mp_pad),
        out_shape=jax.ShapeDtypeStruct((Mp_pad, Cout), jnp.bfloat16),
        grid=(1,),
        in_specs=[
            pl.BlockSpec((M_arr, Kp), lambda i: (0, 0)),
            pl.BlockSpec((Kp, Cout), lambda i: (0, 0)),
            pl.BlockSpec((2, Cout), lambda i: (0, 0)),
        ],
        out_specs=pl.BlockSpec((Mp_pad, Cout), lambda i: (0, 0)),
        compiler_params=pltpu.CompilerParams(
            dimension_semantics=("arbitrary",)),
    )(arranged, w2d, gb)
    return out[:Mp].reshape(N, Hp, Wp, Cout)


# ---------------------------------------------------------------------------
# Kernel B: layers 3+4 fused — two (conv3x3 pad=1 + BN + ReLU) stages, the
# intermediate activation stays resident in a VMEM scratch.
# ---------------------------------------------------------------------------
_EXTRA_ROWS = 32      # tail slack so every shifted slab read stays in bounds
_STORE_OFF = 16       # 8-aligned slot for the layer-3 result in the scratch


def _fused_l3_l4_kernel(a_ref, w_ref, gb_ref, mask_ref, o_ref, b_ref, *,
                        rows, wp2, c, m_true):
    # a_ref   : [rows+EXTRA, c]  bf16 — layer-2 output, zero-padded (pad=1) and
    #           flattened over (n, i_pad, j_pad), plus zero tail rows.
    # w_ref   : [18*c, Cout]     bf16 — 9 layer-3 taps then 9 layer-4 taps.
    # gb_ref  : [4, Cout]        f32  — gamma3, beta3, gamma4, beta4.
    # mask_ref: [rows, 1]        f32  — 1.0 on anchors that are real HxW outputs.
    # b_ref   : VMEM scratch — layer-3 output re-embedded on the padded grid.
    mask = mask_ref[...]
    cout = o_ref.shape[1]
    shift = wp2 + 1               # flat-index shift of the pad=1 re-embedding
    inv_m = 1.0 / m_true

    def conv9(src_ref, base, w_base, needs_cast):
        z = jnp.zeros((rows, cout), jnp.float32)
        for t in range(9):
            dy, dx = divmod(t, 3)
            slab = src_ref[pl.ds(base + dy * wp2 + dx, rows), :]
            if needs_cast:
                slab = slab.astype(jnp.bfloat16)
            z = z + jnp.dot(slab, w_ref[pl.ds((w_base + t) * c, c), :],
                            preferred_element_type=jnp.float32)
        return z

    def bn_relu(z, g_row):
        zm = z * mask             # only real output anchors feed the stats
        mean = jnp.sum(zm, axis=0, keepdims=True) * inv_m
        var = jnp.sum(zm * zm, axis=0, keepdims=True) * inv_m - mean * mean
        sc = gb_ref[g_row:g_row + 1, :] * jax.lax.rsqrt(var + BN_EPS)
        sh = gb_ref[g_row + 1:g_row + 2, :] - mean * sc
        return jnp.maximum(z * sc + sh, 0.0)

    # ---- layer 3 ----
    z3 = conv9(a_ref, 0, 0, needs_cast=False)
    y3 = bn_relu(z3, 0) * mask    # masking recreates the zero pad=1 ring
    b_ref[...] = jnp.zeros_like(b_ref)
    b_ref[pl.ds(_STORE_OFF, rows), :] = y3
    # ---- layer 4 (reads the layer-3 output straight from VMEM) ----
    z4 = conv9(b_ref, _STORE_OFF - shift, 9, needs_cast=True)
    o_ref[...] = bn_relu(z4, 2)


def conv_bn_relu_fused34(x_nhwc, w3, gamma3, beta3, w4, gamma4, beta4):
    N, H, W, C = x_nhwc.shape
    Cout = w3.shape[3]
    Hp2, Wp2 = H + 2, W + 2
    rows = N * Hp2 * Wp2                       # one anchored row per padded pos
    assert _STORE_OFF >= Wp2 + 1
    assert _EXTRA_ROWS >= max(Wp2 + 17, 2 * Wp2 + 2)

    apad = jnp.pad(x_nhwc, ((0, 0), (1, 1), (1, 1), (0, 0)))
    a_flat = jnp.pad(apad.reshape(rows, C),
                     ((0, _EXTRA_ROWS), (0, 0))).astype(jnp.bfloat16)

    pos = jnp.arange(rows)
    i_pad = (pos % (Hp2 * Wp2)) // Wp2
    j_pad = pos % Wp2
    mask = ((i_pad < H) & (j_pad < W)).astype(jnp.float32).reshape(rows, 1)

    w34 = jnp.concatenate([w3.reshape(9 * C, Cout), w4.reshape(9 * C, Cout)],
                          axis=0).astype(jnp.bfloat16)
    gb = jnp.stack([gamma3, beta3, gamma4, beta4]).astype(jnp.float32)

    out = pl.pallas_call(
        functools.partial(_fused_l3_l4_kernel, rows=rows, wp2=Wp2, c=C,
                          m_true=float(N * H * W)),
        out_shape=jax.ShapeDtypeStruct((rows, Cout), jnp.float32),
        grid=(1,),
        in_specs=[
            pl.BlockSpec((rows + _EXTRA_ROWS, C), lambda i: (0, 0)),
            pl.BlockSpec((18 * C, Cout), lambda i: (0, 0)),
            pl.BlockSpec((4, Cout), lambda i: (0, 0)),
            pl.BlockSpec((rows, 1), lambda i: (0, 0)),
        ],
        out_specs=pl.BlockSpec((rows, Cout), lambda i: (0, 0)),
        scratch_shapes=[pltpu.VMEM((rows + _EXTRA_ROWS, Cout), jnp.float32)],
        compiler_params=pltpu.CompilerParams(
            dimension_semantics=("arbitrary",)),
    )(a_flat, w34, gb, mask)
    return out.reshape(N, Hp2, Wp2, Cout)[:, :H, :W, :]


# ---------------------------------------------------------------------------
# Full CNNEncoder forward.
# ---------------------------------------------------------------------------
def cnn_encoder(x_nchw, params):
    x = jnp.transpose(x_nchw, (0, 2, 3, 1))                    # NCHW -> NHWC
    (w1, _, g1, b1), (w2, _, g2, b2), (w3, _, g3, b3), (w4, _, g4, b4) = params
    x = conv_bn_relu_pool(x, w1, g1, b1)                       # layer 1
    x = conv_bn_relu_pool(x, w2, g2, b2)                       # layer 2
    x = conv_bn_relu_fused34(x, w3, g3, b3, w4, g4, b4)        # layers 3 + 4
    return jnp.transpose(x, (0, 3, 1, 2)).astype(jnp.float32)  # back to NCHW


def init_params(key, in_channels=3):
    # Deterministic synthetic init matching the PyTorch module's shapes.
    # The conv bias is kept for shape fidelity but is NOT passed to the kernels:
    # with training-mode BatchNorm it cancels exactly in the forward output.
    specs = [(in_channels, 64), (64, 64), (64, 64), (64, 64)]
    params = []
    for cin, cout in specs:
        key, kw, kb = jax.random.split(key, 3)
        fan_in = 9 * cin
        w = jax.random.normal(kw, (3, 3, cin, cout), jnp.float32) / jnp.sqrt(fan_in)
        b = 0.01 * jax.random.normal(kb, (cout,), jnp.float32)
        gamma = jnp.ones((cout,), jnp.float32)
        beta = jnp.zeros((cout,), jnp.float32)
        params.append((w, b, gamma, beta))
    # TODO(synk): BatchNorm running_mean/running_var buffer updates (training
    # side effect, momentum=0.1) are not modeled; only the forward output is.
    return params


if __name__ == "__main__":
    key = jax.random.PRNGKey(0)
    key, kx = jax.random.split(key)
    N, Cin, H, W = 2, 3, 32, 32
    x = jax.random.normal(kx, (N, Cin, H, W), jnp.float32)
    params = init_params(key, in_channels=Cin)

    out = jax.jit(lambda a: cnn_encoder(a, params))(x)
    jax.block_until_ready(out)
    assert out.shape == (N, 64, 6, 6), out.shape
    assert bool(jnp.isfinite(out).all())
    print("KERNEL_OK")
</pallas_src>

<mosaic_0001>
module attributes {stable_mosaic.version = 11 : i64} {
  func.func @_conv_bn_relu_pool_kernel(%arg0: i32, %arg1: memref<1824x32xbf16, #tpu.memory_space<vmem>>, %arg2: memref<32x64xbf16, #tpu.memory_space<vmem>>, %arg3: memref<2x64xf32, #tpu.memory_space<vmem>>, %arg4: memref<456x64xbf16, #tpu.memory_space<vmem>>) attributes {dimension_semantics = [#tpu.dimension_semantics<arbitrary>], iteration_bounds = array<i64: 1>, scalar_prefetch = 0 : i64, scratch_operands = 0 : i64, tpu.core_type = #tpu.core_type<tc>, window_params = [{pipeline_mode = #tpu.pipeline_mode<synchronous>, transform_indices = @transform_0, window_bounds = array<i64: 1824, 32>}, {pipeline_mode = #tpu.pipeline_mode<synchronous>, transform_indices = @transform_1, window_bounds = array<i64: 32, 64>}, {pipeline_mode = #tpu.pipeline_mode<synchronous>, transform_indices = @transform_2, window_bounds = array<i64: 2, 64>}, {pipeline_mode = #tpu.pipeline_mode<synchronous>, transform_indices = @transform_3, window_bounds = array<i64: 456, 64>}]} {
    %c0 = arith.constant 0 : index
    %c0_0 = arith.constant 0 : index
    %0 = vector.load %arg1[%c0, %c0_0] : memref<1824x32xbf16, #tpu.memory_space<vmem>>, vector<1824x32xbf16>
    %c0_1 = arith.constant 0 : index
    %c0_2 = arith.constant 0 : index
    %1 = vector.load %arg2[%c0_1, %c0_2] : memref<32x64xbf16, #tpu.memory_space<vmem>>, vector<32x64xbf16>
    %cst = arith.constant dense<0.000000e+00> : vector<1824x64xf32>
    %2 = tpu.matmul %0, %1, %cst {dimension_numbers = #tpu.dot_dimension_numbers<[1], [0], [0], [1], [0, 0, 1, 1], [], []>} : vector<1824x32xbf16>, vector<32x64xbf16>, vector<1824x64xf32> -> vector<1824x64xf32>
    %cst_3 = arith.constant dense<0.000000e+00> : vector<64xf32>
    %3 = vector.multi_reduction <add>, %2, %cst_3 [0] : vector<1824x64xf32> to vector<64xf32>
    %4 = vector.shape_cast %3 : vector<64xf32> to vector<1x64xf32>
    %cst_4 = arith.constant 5.55555569E-4 : f32
    %5 = vector.broadcast %cst_4 : f32 to vector<1x64xf32>
    %6 = arith.mulf %4, %5 : vector<1x64xf32>
    %7 = arith.mulf %2, %2 : vector<1824x64xf32>
    %cst_5 = arith.constant dense<0.000000e+00> : vector<64xf32>
    %8 = vector.multi_reduction <add>, %7, %cst_5 [0] : vector<1824x64xf32> to vector<64xf32>
    %9 = vector.shape_cast %8 : vector<64xf32> to vector<1x64xf32>
    %cst_6 = arith.constant 5.55555569E-4 : f32
    %10 = vector.broadcast %cst_6 : f32 to vector<1x64xf32>
    %11 = arith.mulf %9, %10 : vector<1x64xf32>
    %12 = arith.mulf %6, %6 : vector<1x64xf32>
    %13 = arith.subf %11, %12 : vector<1x64xf32>
    %c0_7 = arith.constant 0 : index
    %c0_8 = arith.constant 0 : index
    %14 = vector.load %arg3[%c0_7, %c0_8] : memref<2x64xf32, #tpu.memory_space<vmem>>, vector<1x64xf32>
    %cst_9 = arith.constant 9.99999974E-6 : f32
    %15 = vector.broadcast %cst_9 : f32 to vector<1x64xf32>
    %16 = arith.addf %13, %15 : vector<1x64xf32>
    %17 = math.rsqrt %16 : vector<1x64xf32>
    %18 = arith.mulf %14, %17 : vector<1x64xf32>
    %c1 = arith.constant 1 : index
    %c0_10 = arith.constant 0 : index
    %19 = vector.load %arg3[%c1, %c0_10] : memref<2x64xf32, #tpu.memory_space<vmem>>, vector<1x64xf32>
    %20 = arith.mulf %6, %18 : vector<1x64xf32>
    %21 = arith.subf %19, %20 : vector<1x64xf32>
    %22 = vector.broadcast %18 : vector<1x64xf32> to vector<1824x64xf32>
    %23 = arith.mulf %2, %22 : vector<1824x64xf32>
    %24 = vector.broadcast %21 : vector<1x64xf32> to vector<1824x64xf32>
    %25 = arith.addf %23, %24 : vector<1824x64xf32>
    %cst_11 = arith.constant 0.000000e+00 : f32
    %26 = vector.broadcast %cst_11 : f32 to vector<1824x64xf32>
    %27 = arith.maximumf %25, %26 : vector<1824x64xf32>
    %28 = vector.extract_strided_slice %27 {offsets = [0, 0], sizes = [456, 64], strides = [1, 1]} : vector<1824x64xf32> to vector<456x64xf32>
    %29 = vector.extract_strided_slice %27 {offsets = [456, 0], sizes = [456, 64], strides = [1, 1]} : vector<1824x64xf32> to vector<456x64xf32>
    %30 = vector.extract_strided_slice %27 {offsets = [912, 0], sizes = [456, 64], strides = [1, 1]} : vector<1824x64xf32> to vector<456x64xf32>
    %31 = vector.extract_strided_slice %27 {offsets = [1368, 0], sizes = [456, 64], strides = [1, 1]} : vector<1824x64xf32> to vector<456x64xf32>
    %32 = arith.maximumf %28, %29 : vector<456x64xf32>
    %33 = arith.maximumf %30, %31 : vector<456x64xf32>
    %34 = arith.maximumf %32, %33 : vector<456x64xf32>
    %35 = arith.truncf %34 : vector<456x64xf32> to vector<456x64xbf16>
    %c0_12 = arith.constant 0 : index
    %c0_13 = arith.constant 0 : index
    %36 = vector.load %arg4[%c0_12, %c0_13] : memref<456x64xbf16, #tpu.memory_space<vmem>>, vector<456x64xbf16>
    tpu.vector_store %arg4[%c0_12, %c0_13], %35 {strides = array<i32>} : memref<456x64xbf16, #tpu.memory_space<vmem>>, vector<456x64xbf16>,
    return
  }
  func.func @transform_0(%arg0: i32) -> (i32, i32) {
    %c0_i32 = arith.constant 0 : i32
    %c0_i32_0 = arith.constant 0 : i32
    %c0_i32_1 = arith.constant 0 : i32
    return %c0_i32, %c0_i32_0 : i32, i32
  }
  func.func @transform_1(%arg0: i32) -> (i32, i32) {
    %c0_i32 = arith.constant 0 : i32
    %c0_i32_0 = arith.constant 0 : i32
    %c0_i32_1 = arith.constant 0 : i32
    return %c0_i32, %c0_i32_0 : i32, i32
  }
  func.func @transform_2(%arg0: i32) -> (i32, i32) {
    %c0_i32 = arith.constant 0 : i32
    %c0_i32_0 = arith.constant 0 : i32
    %c0_i32_1 = arith.constant 0 : i32
    return %c0_i32, %c0_i32_0 : i32, i32
  }
  func.func @transform_3(%arg0: i32) -> (i32, i32) {
    %c0_i32 = arith.constant 0 : i32
    %c0_i32_0 = arith.constant 0 : i32
    %c0_i32_1 = arith.constant 0 : i32
    return %c0_i32, %c0_i32_0 : i32, i32
  }
}

module attributes {stable_mosaic.version = 11 : i64} {
  func.func @_conv_bn_relu_pool_kernel(%arg0: i32, %arg1: memref<344x576xbf16, #tpu.memory_space<vmem>>, %arg2: memref<576x64xbf16, #tpu.memory_space<vmem>>, %arg3: memref<2x64xf32, #tpu.memory_space<vmem>>, %arg4: memref<72x64xbf16, #tpu.memory_space<vmem>>) attributes {dimension_semantics = [#tpu.dimension_semantics<arbitrary>], iteration_bounds = array<i64: 1>, scalar_prefetch = 0 : i64, scratch_operands = 0 : i64, tpu.core_type = #tpu.core_type<tc>, window_params = [{pipeline_mode = #tpu.pipeline_mode<synchronous>, transform_indices = @transform_0, window_bounds = array<i64: 344, 576>}, {pipeline_mode = #tpu.pipeline_mode<synchronous>, transform_indices = @transform_1, window_bounds = array<i64: 576, 64>}, {pipeline_mode = #tpu.pipeline_mode<synchronous>, transform_indices = @transform_2, window_bounds = array<i64: 2, 64>}, {pipeline_mode = #tpu.pipeline_mode<synchronous>, transform_indices = @transform_3, window_bounds = array<i64: 72, 64>}]} {
    %c0 = arith.constant 0 : index
    %c0_0 = arith.constant 0 : index
    %0 = vector.load %arg1[%c0, %c0_0] : memref<344x576xbf16, #tpu.memory_space<vmem>>, vector<344x576xbf16>
    %c0_1 = arith.constant 0 : index
    %c0_2 = arith.constant 0 : index
    %1 = vector.load %arg2[%c0_1, %c0_2] : memref<576x64xbf16, #tpu.memory_space<vmem>>, vector<576x64xbf16>
    %cst = arith.constant dense<0.000000e+00> : vector<344x64xf32>
    %2 = tpu.matmul %0, %1, %cst {dimension_numbers = #tpu.dot_dimension_numbers<[1], [0], [0], [1], [0, 0, 1, 1], [], []>} : vector<344x576xbf16>, vector<576x64xbf16>, vector<344x64xf32> -> vector<344x64xf32>
    %cst_3 = arith.constant dense<0.000000e+00> : vector<64xf32>
    %3 = vector.multi_reduction <add>, %2, %cst_3 [0] : vector<344x64xf32> to vector<64xf32>
    %4 = vector.shape_cast %3 : vector<64xf32> to vector<1x64xf32>
    %cst_4 = arith.constant 2.958580e-03 : f32
    %5 = vector.broadcast %cst_4 : f32 to vector<1x64xf32>
    %6 = arith.mulf %4, %5 : vector<1x64xf32>
    %7 = arith.mulf %2, %2 : vector<344x64xf32>
    %cst_5 = arith.constant dense<0.000000e+00> : vector<64xf32>
    %8 = vector.multi_reduction <add>, %7, %cst_5 [0] : vector<344x64xf32> to vector<64xf32>
    %9 = vector.shape_cast %8 : vector<64xf32> to vector<1x64xf32>
    %cst_6 = arith.constant 2.958580e-03 : f32
    %10 = vector.broadcast %cst_6 : f32 to vector<1x64xf32>
    %11 = arith.mulf %9, %10 : vector<1x64xf32>
    %12 = arith.mulf %6, %6 : vector<1x64xf32>
    %13 = arith.subf %11, %12 : vector<1x64xf32>
    %c0_7 = arith.constant 0 : index
    %c0_8 = arith.constant 0 : index
    %14 = vector.load %arg3[%c0_7, %c0_8] : memref<2x64xf32, #tpu.memory_space<vmem>>, vector<1x64xf32>
    %cst_9 = arith.constant 9.99999974E-6 : f32
    %15 = vector.broadcast %cst_9 : f32 to vector<1x64xf32>
    %16 = arith.addf %13, %15 : vector<1x64xf32>
    %17 = math.rsqrt %16 : vector<1x64xf32>
    %18 = arith.mulf %14, %17 : vector<1x64xf32>
    %c1 = arith.constant 1 : index
    %c0_10 = arith.constant 0 : index
    %19 = vector.load %arg3[%c1, %c0_10] : memref<2x64xf32, #tpu.memory_space<vmem>>, vector<1x64xf32>
    %20 = arith.mulf %6, %18 : vector<1x64xf32>
    %21 = arith.subf %19, %20 : vector<1x64xf32>
    %22 = vector.broadcast %18 : vector<1x64xf32> to vector<344x64xf32>
    %23 = arith.mulf %2, %22 : vector<344x64xf32>
    %24 = vector.broadcast %21 : vector<1x64xf32> to vector<344x64xf32>
    %25 = arith.addf %23, %24 : vector<344x64xf32>
    %cst_11 = arith.constant 0.000000e+00 : f32
    %26 = vector.broadcast %cst_11 : f32 to vector<344x64xf32>
    %27 = arith.maximumf %25, %26 : vector<344x64xf32>
    %28 = vector.extract_strided_slice %27 {offsets = [0, 0], sizes = [72, 64], strides = [1, 1]} : vector<344x64xf32> to vector<72x64xf32>
    %29 = vector.extract_strided_slice %27 {offsets = [72, 0], sizes = [72, 64], strides = [1, 1]} : vector<344x64xf32> to vector<72x64xf32>
    %30 = vector.extract_strided_slice %27 {offsets = [144, 0], sizes = [72, 64], strides = [1, 1]} : vector<344x64xf32> to vector<72x64xf32>
    %31 = vector.extract_strided_slice %27 {offsets = [216, 0], sizes = [72, 64], strides = [1, 1]} : vector<344x64xf32> to vector<72x64xf32>
    %32 = arith.maximumf %28, %29 : vector<72x64xf32>
    %33 = arith.maximumf %30, %31 : vector<72x64xf32>
    %34 = arith.maximumf %32, %33 : vector<72x64xf32>
    %35 = arith.truncf %34 : vector<72x64xf32> to vector<72x64xbf16>
    %c0_12 = arith.constant 0 : index
    %c0_13 = arith.constant 0 : index
    %36 = vector.load %arg4[%c0_12, %c0_13] : memref<72x64xbf16, #tpu.memory_space<vmem>>, vector<72x64xbf16>
    tpu.vector_store %arg4[%c0_12, %c0_13], %35 {strides = array<i32>} : memref<72x64xbf16, #tpu.memory_space<vmem>>, vector<72x64xbf16>,
    return
  }
  func.func @transform_0(%arg0: i32) -> (i32, i32) {
    %c0_i32 = arith.constant 0 : i32
    %c0_i32_0 = arith.constant 0 : i32
    %c0_i32_1 = arith.constant 0 : i32
    return %c0_i32, %c0_i32_0 : i32, i32
  }
  func.func @transform_1(%arg0: i32) -> (i32, i32) {
    %c0_i32 = arith.constant 0 : i32
    %c0_i32_0 = arith.constant 0 : i32
    %c0_i32_1 = arith.constant 0 : i32
    return %c0_i32, %c0_i32_0 : i32, i32
  }
  func.func @transform_2(%arg0: i32) -> (i32, i32) {
    %c0_i32 = arith.constant 0 : i32
    %c0_i32_0 = arith.constant 0 : i32
    %c0_i32_1 = arith.constant 0 : i32
    return %c0_i32, %c0_i32_0 : i32, i32
  }
  func.func @transform_3(%arg0: i32) -> (i32, i32) {
    %c0_i32 = arith.constant 0 : i32
    %c0_i32_0 = arith.constant 0 : i32
    %c0_i32_1 = arith.constant 0 : i32
    return %c0_i32, %c0_i32_0 : i32, i32
  }
}

module attributes {stable_mosaic.version = 11 : i64} {
  func.func @_fused_l3_l4_kernel(%arg0: i32, %arg1: memref<160x64xbf16, #tpu.memory_space<vmem>>, %arg2: memref<1152x64xbf16, #tpu.memory_space<vmem>>, %arg3: memref<4x64xf32, #tpu.memory_space<vmem>>, %arg4: memref<128x1xf32, #tpu.memory_space<vmem>>, %arg5: memref<128x64xf32, #tpu.memory_space<vmem>>, %arg6: memref<160x64xf32, #tpu.memory_space<vmem>>) attributes {dimension_semantics = [#tpu.dimension_semantics<arbitrary>], iteration_bounds = array<i64: 1>, scalar_prefetch = 0 : i64, scratch_operands = 1 : i64, tpu.core_type = #tpu.core_type<tc>, window_params = [{pipeline_mode = #tpu.pipeline_mode<synchronous>, transform_indices = @transform_0, window_bounds = array<i64: 160, 64>}, {pipeline_mode = #tpu.pipeline_mode<synchronous>, transform_indices = @transform_1, window_bounds = array<i64: 1152, 64>}, {pipeline_mode = #tpu.pipeline_mode<synchronous>, transform_indices = @transform_2, window_bounds = array<i64: 4, 64>}, {pipeline_mode = #tpu.pipeline_mode<synchronous>, transform_indices = @transform_3, window_bounds = array<i64: 128, 1>}, {pipeline_mode = #tpu.pipeline_mode<synchronous>, transform_indices = @transform_4, window_bounds = array<i64: 128, 64>}]} {
    %c0 = arith.constant 0 : index
    %c0_0 = arith.constant 0 : index
    %0 = vector.load %arg4[%c0, %c0_0] : memref<128x1xf32, #tpu.memory_space<vmem>>, vector<128x1xf32>
    %cst = arith.constant 0.000000e+00 : f32
    %1 = vector.broadcast %cst : f32 to vector<128x64xf32>
    %c0_1 = arith.constant 0 : index
    %c0_2 = arith.constant 0 : index
    %2 = vector.load %arg1[%c0_1, %c0_2] : memref<160x64xbf16, #tpu.memory_space<vmem>>, vector<128x64xbf16>
    %c0_3 = arith.constant 0 : index
    %c0_4 = arith.constant 0 : index
    %3 = vector.load %arg2[%c0_3, %c0_4] : memref<1152x64xbf16, #tpu.memory_space<vmem>>, vector<64x64xbf16>
    %cst_5 = arith.constant dense<0.000000e+00> : vector<128x64xf32>
    %4 = tpu.matmul %2, %3, %cst_5 {dimension_numbers = #tpu.dot_dimension_numbers<[1], [0], [0], [1], [0, 0, 1, 1], [], []>} : vector<128x64xbf16>, vector<64x64xbf16>, vector<128x64xf32> -> vector<128x64xf32>
    %5 = arith.addf %1, %4 : vector<128x64xf32>
    %c1 = arith.constant 1 : index
    %c0_6 = arith.constant 0 : index
    %6 = vector.load %arg1[%c1, %c0_6] : memref<160x64xbf16, #tpu.memory_space<vmem>>, vector<128x64xbf16>
    %c64 = arith.constant 64 : index
    %c0_7 = arith.constant 0 : index
    %7 = vector.load %arg2[%c64, %c0_7] : memref<1152x64xbf16, #tpu.memory_space<vmem>>, vector<64x64xbf16>
    %cst_8 = arith.constant dense<0.000000e+00> : vector<128x64xf32>
    %8 = tpu.matmul %6, %7, %cst_8 {dimension_numbers = #tpu.dot_dimension_numbers<[1], [0], [0], [1], [0, 0, 1, 1], [], []>} : vector<128x64xbf16>, vector<64x64xbf16>, vector<128x64xf32> -> vector<128x64xf32>
    %9 = arith.addf %5, %8 : vector<128x64xf32>
    %c2 = arith.constant 2 : index
    %c0_9 = arith.constant 0 : index
    %10 = vector.load %arg1[%c2, %c0_9] : memref<160x64xbf16, #tpu.memory_space<vmem>>, vector<128x64xbf16>
    %c128 = arith.constant 128 : index
    %c0_10 = arith.constant 0 : index
    %11 = vector.load %arg2[%c128, %c0_10] : memref<1152x64xbf16, #tpu.memory_space<vmem>>, vector<64x64xbf16>
    %cst_11 = arith.constant dense<0.000000e+00> : vector<128x64xf32>
    %12 = tpu.matmul %10, %11, %cst_11 {dimension_numbers = #tpu.dot_dimension_numbers<[1], [0], [0], [1], [0, 0, 1, 1], [], []>} : vector<128x64xbf16>, vector<64x64xbf16>, vector<128x64xf32> -> vector<128x64xf32>
    %13 = arith.addf %9, %12 : vector<128x64xf32>
    %c8 = arith.constant 8 : index
    %c0_12 = arith.constant 0 : index
    %14 = vector.load %arg1[%c8, %c0_12] : memref<160x64xbf16, #tpu.memory_space<vmem>>, vector<128x64xbf16>
    %c192 = arith.constant 192 : index
    %c0_13 = arith.constant 0 : index
    %15 = vector.load %arg2[%c192, %c0_13] : memref<1152x64xbf16, #tpu.memory_space<vmem>>, vector<64x64xbf16>
    %cst_14 = arith.constant dense<0.000000e+00> : vector<128x64xf32>
    %16 = tpu.matmul %14, %15, %cst_14 {dimension_numbers = #tpu.dot_dimension_numbers<[1], [0], [0], [1], [0, 0, 1, 1], [], []>} : vector<128x64xbf16>, vector<64x64xbf16>, vector<128x64xf32> -> vector<128x64xf32>
    %17 = arith.addf %13, %16 : vector<128x64xf32>
    %c9 = arith.constant 9 : index
    %c0_15 = arith.constant 0 : index
    %18 = vector.load %arg1[%c9, %c0_15] : memref<160x64xbf16, #tpu.memory_space<vmem>>, vector<128x64xbf16>
    %c256 = arith.constant 256 : index
    %c0_16 = arith.constant 0 : index
    %19 = vector.load %arg2[%c256, %c0_16] : memref<1152x64xbf16, #tpu.memory_space<vmem>>, vector<64x64xbf16>
    %cst_17 = arith.constant dense<0.000000e+00> : vector<128x64xf32>
    %20 = tpu.matmul %18, %19, %cst_17 {dimension_numbers = #tpu.dot_dimension_numbers<[1], [0], [0], [1], [0, 0, 1, 1], [], []>} : vector<128x64xbf16>, vector<64x64xbf16>, vector<128x64xf32> -> vector<128x64xf32>
    %21 = arith.addf %17, %20 : vector<128x64xf32>
    %c10 = arith.constant 10 : index
    %c0_18 = arith.constant 0 : index
    %22 = vector.load %arg1[%c10, %c0_18] : memref<160x64xbf16, #tpu.memory_space<vmem>>, vector<128x64xbf16>
    %c320 = arith.constant 320 : index
    %c0_19 = arith.constant 0 : index
    %23 = vector.load %arg2[%c320, %c0_19] : memref<1152x64xbf16, #tpu.memory_space<vmem>>, vector<64x64xbf16>
    %cst_20 = arith.constant dense<0.000000e+00> : vector<128x64xf32>
    %24 = tpu.matmul %22, %23, %cst_20 {dimension_numbers = #tpu.dot_dimension_numbers<[1], [0], [0], [1], [0, 0, 1, 1], [], []>} : vector<128x64xbf16>, vector<64x64xbf16>, vector<128x64xf32> -> vector<128x64xf32>
    %25 = arith.addf %21, %24 : vector<128x64xf32>
    %c16 = arith.constant 16 : index
    %c0_21 = arith.constant 0 : index
    %26 = vector.load %arg1[%c16, %c0_21] : memref<160x64xbf16, #tpu.memory_space<vmem>>, vector<128x64xbf16>
    %c384 = arith.constant 384 : index
    %c0_22 = arith.constant 0 : index
    %27 = vector.load %arg2[%c384, %c0_22] : memref<1152x64xbf16, #tpu.memory_space<vmem>>, vector<64x64xbf16>
    %cst_23 = arith.constant dense<0.000000e+00> : vector<128x64xf32>
    %28 = tpu.matmul %26, %27, %cst_23 {dimension_numbers = #tpu.dot_dimension_numbers<[1], [0], [0], [1], [0, 0, 1, 1], [], []>} : vector<128x64xbf16>, vector<64x64xbf16>, vector<128x64xf32> -> vector<128x64xf32>
    %29 = arith.addf %25, %28 : vector<128x64xf32>
    %c17 = arith.constant 17 : index
    %c0_24 = arith.constant 0 : index
    %30 = vector.load %arg1[%c17, %c0_24] : memref<160x64xbf16, #tpu.memory_space<vmem>>, vector<128x64xbf16>
    %c448 = arith.constant 448 : index
    %c0_25 = arith.constant 0 : index
    %31 = vector.load %arg2[%c448, %c0_25] : memref<1152x64xbf16, #tpu.memory_space<vmem>>, vector<64x64xbf16>
    %cst_26 = arith.constant dense<0.000000e+00> : vector<128x64xf32>
    %32 = tpu.matmul %30, %31, %cst_26 {dimension_numbers = #tpu.dot_dimension_numbers<[1], [0], [0], [1], [0, 0, 1, 1], [], []>} : vector<128x64xbf16>, vector<64x64xbf16>, vector<128x64xf32> -> vector<128x64xf32>
    %33 = arith.addf %29, %32 : vector<128x64xf32>
    %c18 = arith.constant 18 : index
    %c0_27 = arith.constant 0 : index
    %34 = vector.load %arg1[%c18, %c0_27] : memref<160x64xbf16, #tpu.memory_space<vmem>>, vector<128x64xbf16>
    %c512 = arith.constant 512 : index
    %c0_28 = arith.constant 0 : index
    %35 = vector.load %arg2[%c512, %c0_28] : memref<1152x64xbf16, #tpu.memory_space<vmem>>, vector<64x64xbf16>
    %cst_29 = arith.constant dense<0.000000e+00> : vector<128x64xf32>
    %36 = tpu.matmul %34, %35, %cst_29 {dimension_numbers = #tpu.dot_dimension_numbers<[1], [0], [0], [1], [0, 0, 1, 1], [], []>} : vector<128x64xbf16>, vector<64x64xbf16>, vector<128x64xf32> -> vector<128x64xf32>
    %37 = arith.addf %33, %36 : vector<128x64xf32>
    %38 = vector.broadcast %0 : vector<128x1xf32> to vector<128x64xf32>
    %39 = arith.mulf %37, %38 : vector<128x64xf32>
    %cst_30 = arith.constant dense<0.000000e+00> : vector<64xf32>
    %40 = vector.multi_reduction <add>, %39, %cst_30 [0] : vector<128x64xf32> to vector<64xf32>
    %41 = vector.shape_cast %40 : vector<64xf32> to vector<1x64xf32>
    %cst_31 = arith.constant 0.013888889 : f32
    %42 = vector.broadcast %cst_31 : f32 to vector<1x64xf32>
    %43 = arith.mulf %41, %42 : vector<1x64xf32>
    %44 = arith.mulf %39, %39 : vector<128x64xf32>
    %cst_32 = arith.constant dense<0.000000e+00> : vector<64xf32>
    %45 = vector.multi_reduction <add>, %44, %cst_32 [0] : vector<128x64xf32> to vector<64xf32>
    %46 = vector.shape_cast %45 : vector<64xf32> to vector<1x64xf32>
    %cst_33 = arith.constant 0.013888889 : f32
    %47 = vector.broadcast %cst_33 : f32 to vector<1x64xf32>
    %48 = arith.mulf %46, %47 : vector<1x64xf32>
    %49 = arith.mulf %43, %43 : vector<1x64xf32>
    %50 = arith.subf %48, %49 : vector<1x64xf32>
    %c0_34 = arith.constant 0 : index
    %c0_35 = arith.constant 0 : index
    %51 = vector.load %arg3[%c0_34, %c0_35] : memref<4x64xf32, #tpu.memory_space<vmem>>, vector<1x64xf32>
    %cst_36 = arith.constant 9.99999974E-6 : f32
    %52 = vector.broadcast %cst_36 : f32 to vector<1x64xf32>
    %53 = arith.addf %50, %52 : vector<1x64xf32>
    %54 = math.rsqrt %53 : vector<1x64xf32>
    %55 = arith.mulf %51, %54 : vector<1x64xf32>
    %c1_37 = arith.constant 1 : index
    %c0_38 = arith.constant 0 : index
    %56 = vector.load %arg3[%c1_37, %c0_38] : memref<4x64xf32, #tpu.memory_space<vmem>>, vector<1x64xf32>
    %57 = arith.mulf %43, %55 : vector<1x64xf32>
    %58 = arith.subf %56, %57 : vector<1x64xf32>
    %59 = vector.broadcast %55 : vector<1x64xf32> to vector<128x64xf32>
    %60 = arith.mulf %37, %59 : vector<128x64xf32>
    %61 = vector.broadcast %58 : vector<1x64xf32> to vector<128x64xf32>
    %62 = arith.addf %60, %61 : vector<128x64xf32>
    %cst_39 = arith.constant 0.000000e+00 : f32
    %63 = vector.broadcast %cst_39 : f32 to vector<128x64xf32>
    %64 = arith.maximumf %62, %63 : vector<128x64xf32>
    %65 = vector.broadcast %0 : vector<128x1xf32> to vector<128x64xf32>
    %66 = arith.mulf %64, %65 : vector<128x64xf32>
    %cst_40 = arith.constant 0.000000e+00 : f32
    %67 = vector.broadcast %cst_40 : f32 to vector<160x64xf32>
    %c0_41 = arith.constant 0 : index
    %c0_42 = arith.constant 0 : index
    %68 = vector.load %arg6[%c0_41, %c0_42] : memref<160x64xf32, #tpu.memory_space<vmem>>, vector<160x64xf32>
    tpu.vector_store %arg6[%c0_41, %c0_42], %67 {strides = array<i32>} : memref<160x64xf32, #tpu.memory_space<vmem>>, vector<160x64xf32>,
    %c16_43 = arith.constant 16 : index
    %c0_44 = arith.constant 0 : index
    %69 = vector.load %arg6[%c16_43, %c0_44] : memref<160x64xf32, #tpu.memory_space<vmem>>, vector<128x64xf32>
    tpu.vector_store %arg6[%c16_43, %c0_44], %66 {strides = array<i32>} : memref<160x64xf32, #tpu.memory_space<vmem>>, vector<128x64xf32>,
    %cst_45 = arith.constant 0.000000e+00 : f32
    %70 = vector.broadcast %cst_45 : f32 to vector<128x64xf32>
    %c7 = arith.constant 7 : index
    %c0_46 = arith.constant 0 : index
    %71 = vector.load %arg6[%c7, %c0_46] : memref<160x64xf32, #tpu.memory_space<vmem>>, vector<128x64xf32>
    %72 = arith.truncf %71 : vector<128x64xf32> to vector<128x64xbf16>
    %c576 = arith.constant 576 : index
    %c0_47 = arith.constant 0 : index
    %73 = vector.load %arg2[%c576, %c0_47] : memref<1152x64xbf16, #tpu.memory_space<vmem>>, vector<64x64xbf16>
    %cst_48 = arith.constant dense<0.000000e+00> : vector<128x64xf32>
    %74 = tpu.matmul %72, %73, %cst_48 {dimension_numbers = #tpu.dot_dimension_numbers<[1], [0], [0], [1], [0, 0, 1, 1], [], []>} : vector<128x64xbf16>, vector<64x64xbf16>, vector<128x64xf32> -> vector<128x64xf32>
    %75 = arith.addf %70, %74 : vector<128x64xf32>
    %c8_49 = arith.constant 8 : index
    %c0_50 = arith.constant 0 : index
    %76 = vector.load %arg6[%c8_49, %c0_50] : memref<160x64xf32, #tpu.memory_space<vmem>>, vector<128x64xf32>
    %77 = arith.truncf %76 : vector<128x64xf32> to vector<128x64xbf16>
    %c640 = arith.constant 640 : index
    %c0_51 = arith.constant 0 : index
    %78 = vector.load %arg2[%c640, %c0_51] : memref<1152x64xbf16, #tpu.memory_space<vmem>>, vector<64x64xbf16>
    %cst_52 = arith.constant dense<0.000000e+00> : vector<128x64xf32>
    %79 = tpu.matmul %77, %78, %cst_52 {dimension_numbers = #tpu.dot_dimension_numbers<[1], [0], [0], [1], [0, 0, 1, 1], [], []>} : vector<128x64xbf16>, vector<64x64xbf16>, vector<128x64xf32> -> vector<128x64xf32>
    %80 = arith.addf %75, %79 : vector<128x64xf32>
    %c9_53 = arith.constant 9 : index
    %c0_54 = arith.constant 0 : index
    %81 = vector.load %arg6[%c9_53, %c0_54] : memref<160x64xf32, #tpu.memory_space<vmem>>, vector<128x64xf32>
    %82 = arith.truncf %81 : vector<128x64xf32> to vector<128x64xbf16>
    %c704 = arith.constant 704 : index
    %c0_55 = arith.constant 0 : index
    %83 = vector.load %arg2[%c704, %c0_55] : memref<1152x64xbf16, #tpu.memory_space<vmem>>, vector<64x64xbf16>
    %cst_56 = arith.constant dense<0.000000e+00> : vector<128x64xf32>
    %84 = tpu.matmul %82, %83, %cst_56 {dimension_numbers = #tpu.dot_dimension_numbers<[1], [0], [0], [1], [0, 0, 1, 1], [], []>} : vector<128x64xbf16>, vector<64x64xbf16>, vector<128x64xf32> -> vector<128x64xf32>
    %85 = arith.addf %80, %84 : vector<128x64xf32>
    %c15 = arith.constant 15 : index
    %c0_57 = arith.constant 0 : index
    %86 = vector.load %arg6[%c15, %c0_57] : memref<160x64xf32, #tpu.memory_space<vmem>>, vector<128x64xf32>
    %87 = arith.truncf %86 : vector<128x64xf32> to vector<128x64xbf16>
    %c768 = arith.constant 768 : index
    %c0_58 = arith.constant 0 : index
    %88 = vector.load %arg2[%c768, %c0_58] : memref<1152x64xbf16, #tpu.memory_space<vmem>>, vector<64x64xbf16>
    %cst_59 = arith.constant dense<0.000000e+00> : vector<128x64xf32>
    %89 = tpu.matmul %87, %88, %cst_59 {dimension_numbers = #tpu.dot_dimension_numbers<[1], [0], [0], [1], [0, 0, 1, 1], [], []>} : vector<128x64xbf16>, vector<64x64xbf16>, vector<128x64xf32> -> vector<128x64xf32>
    %90 = arith.addf %85, %89 : vector<128x64xf32>
    %c16_60 = arith.constant 16 : index
    %c0_61 = arith.constant 0 : index
    %91 = vector.load %arg6[%c16_60, %c0_61] : memref<160x64xf32, #tpu.memory_space<vmem>>, vector<128x64xf32>
    %92 = arith.truncf %91 : vector<128x64xf32> to vector<128x64xbf16>
    %c832 = arith.constant 832 : index
    %c0_62 = arith.constant 0 : index
    %93 = vector.load %arg2[%c832, %c0_62] : memref<1152x64xbf16, #tpu.memory_space<vmem>>, vector<64x64xbf16>
    %cst_63 = arith.constant dense<0.000000e+00> : vector<128x64xf32>
    %94 = tpu.matmul %92, %93, %cst_63 {dimension_numbers = #tpu.dot_dimension_numbers<[1], [0], [0], [1], [0, 0, 1, 1], [], []>} : vector<128x64xbf16>, vector<64x64xbf16>, vector<128x64xf32> -> vector<128x64xf32>
    %95 = arith.addf %90, %94 : vector<128x64xf32>
    %c17_64 = arith.constant 17 : index
    %c0_65 = arith.constant 0 : index
    %96 = vector.load %arg6[%c17_64, %c0_65] : memref<160x64xf32, #tpu.memory_space<vmem>>, vector<128x64xf32>
    %97 = arith.truncf %96 : vector<128x64xf32> to vector<128x64xbf16>
    %c896 = arith.constant 896 : index
    %c0_66 = arith.constant 0 : index
    %98 = vector.load %arg2[%c896, %c0_66] : memref<1152x64xbf16, #tpu.memory_space<vmem>>, vector<64x64xbf16>
    %cst_67 = arith.constant dense<0.000000e+00> : vector<128x64xf32>
    %99 = tpu.matmul %97, %98, %cst_67 {dimension_numbers = #tpu.dot_dimension_numbers<[1], [0], [0], [1], [0, 0, 1, 1], [], []>} : vector<128x64xbf16>, vector<64x64xbf16>, vector<128x64xf32> -> vector<128x64xf32>
    %100 = arith.addf %95, %99 : vector<128x64xf32>
    %c23 = arith.constant 23 : index
    %c0_68 = arith.constant 0 : index
    %101 = vector.load %arg6[%c23, %c0_68] : memref<160x64xf32, #tpu.memory_space<vmem>>, vector<128x64xf32>
    %102 = arith.truncf %101 : vector<128x64xf32> to vector<128x64xbf16>
    %c960 = arith.constant 960 : index
    %c0_69 = arith.constant 0 : index
    %103 = vector.load %arg2[%c960, %c0_69] : memref<1152x64xbf16, #tpu.memory_space<vmem>>, vector<64x64xbf16>
    %cst_70 = arith.constant dense<0.000000e+00> : vector<128x64xf32>
    %104 = tpu.matmul %102, %103, %cst_70 {dimension_numbers = #tpu.dot_dimension_numbers<[1], [0], [0], [1], [0, 0, 1, 1], [], []>} : vector<128x64xbf16>, vector<64x64xbf16>, vector<128x64xf32> -> vector<128x64xf32>
    %105 = arith.addf %100, %104 : vector<128x64xf32>
    %c24 = arith.constant 24 : index
    %c0_71 = arith.constant 0 : index
    %106 = vector.load %arg6[%c24, %c0_71] : memref<160x64xf32, #tpu.memory_space<vmem>>, vector<128x64xf32>
    %107 = arith.truncf %106 : vector<128x64xf32> to vector<128x64xbf16>
    %c1024 = arith.constant 1024 : index
    %c0_72 = arith.constant 0 : index
    %108 = vector.load %arg2[%c1024, %c0_72] : memref<1152x64xbf16, #tpu.memory_space<vmem>>, vector<64x64xbf16>
    %cst_73 = arith.constant dense<0.000000e+00> : vector<128x64xf32>
    %109 = tpu.matmul %107, %108, %cst_73 {dimension_numbers = #tpu.dot_dimension_numbers<[1], [0], [0], [1], [0, 0, 1, 1], [], []>} : vector<128x64xbf16>, vector<64x64xbf16>, vector<128x64xf32> -> vector<128x64xf32>
    %110 = arith.addf %105, %109 : vector<128x64xf32>
    %c25 = arith.constant 25 : index
    %c0_74 = arith.constant 0 : index
    %111 = vector.load %arg6[%c25, %c0_74] : memref<160x64xf32, #tpu.memory_space<vmem>>, vector<128x64xf32>
    %112 = arith.truncf %111 : vector<128x64xf32> to vector<128x64xbf16>
    %c1088 = arith.constant 1088 : index
    %c0_75 = arith.constant 0 : index
    %113 = vector.load %arg2[%c1088, %c0_75] : memref<1152x64xbf16, #tpu.memory_space<vmem>>, vector<64x64xbf16>
    %cst_76 = arith.constant dense<0.000000e+00> : vector<128x64xf32>
    %114 = tpu.matmul %112, %113, %cst_76 {dimension_numbers = #tpu.dot_dimension_numbers<[1], [0], [0], [1], [0, 0, 1, 1], [], []>} : vector<128x64xbf16>, vector<64x64xbf16>, vector<128x64xf32> -> vector<128x64xf32>
    %115 = arith.addf %110, %114 : vector<128x64xf32>
    %116 = vector.broadcast %0 : vector<128x1xf32> to vector<128x64xf32>
    %117 = arith.mulf %115, %116 : vector<128x64xf32>
    %cst_77 = arith.constant dense<0.000000e+00> : vector<64xf32>
    %118 = vector.multi_reduction <add>, %117, %cst_77 [0] : vector<128x64xf32> to vector<64xf32>
    %119 = vector.shape_cast %118 : vector<64xf32> to vector<1x64xf32>
    %cst_78 = arith.constant 0.013888889 : f32
    %120 = vector.broadcast %cst_78 : f32 to vector<1x64xf32>
    %121 = arith.mulf %119, %120 : vector<1x64xf32>
    %122 = arith.mulf %117, %117 : vector<128x64xf32>
    %cst_79 = arith.constant dense<0.000000e+00> : vector<64xf32>
    %123 = vector.multi_reduction <add>, %122, %cst_79 [0] : vector<128x64xf32> to vector<64xf32>
    %124 = vector.shape_cast %123 : vector<64xf32> to vector<1x64xf32>
    %cst_80 = arith.constant 0.013888889 : f32
    %125 = vector.broadcast %cst_80 : f32 to vector<1x64xf32>
    %126 = arith.mulf %124, %125 : vector<1x64xf32>
    %127 = arith.mulf %121, %121 : vector<1x64xf32>
    %128 = arith.subf %126, %127 : vector<1x64xf32>
    %c2_81 = arith.constant 2 : index
    %c0_82 = arith.constant 0 : index
    %129 = vector.load %arg3[%c2_81, %c0_82] : memref<4x64xf32, #tpu.memory_space<vmem>>, vector<1x64xf32>
    %cst_83 = arith.constant 9.99999974E-6 : f32
    %130 = vector.broadcast %cst_83 : f32 to vector<1x64xf32>
    %131 = arith.addf %128, %130 : vector<1x64xf32>
    %132 = math.rsqrt %131 : vector<1x64xf32>
    %133 = arith.mulf %129, %132 : vector<1x64xf32>
    %c3 = arith.constant 3 : index
    %c0_84 = arith.constant 0 : index
    %134 = vector.load %arg3[%c3, %c0_84] : memref<4x64xf32, #tpu.memory_space<vmem>>, vector<1x64xf32>
    %135 = arith.mulf %121, %133 : vector<1x64xf32>
    %136 = arith.subf %134, %135 : vector<1x64xf32>
    %137 = vector.broadcast %133 : vector<1x64xf32> to vector<128x64xf32>
    %138 = arith.mulf %115, %137 : vector<128x64xf32>
    %139 = vector.broadcast %136 : vector<1x64xf32> to vector<128x64xf32>
    %140 = arith.addf %138, %139 : vector<128x64xf32>
    %cst_85 = arith.constant 0.000000e+00 : f32
    %141 = vector.broadcast %cst_85 : f32 to vector<128x64xf32>
    %142 = arith.maximumf %140, %141 : vector<128x64xf32>
    %c0_86 = arith.constant 0 : index
    %c0_87 = arith.constant 0 : index
    %143 = vector.load %arg5[%c0_86, %c0_87] : memref<128x64xf32, #tpu.memory_space<vmem>>, vector<128x64xf32>
    tpu.vector_store %arg5[%c0_86, %c0_87], %142 {strides = array<i32>} : memref<128x64xf32, #tpu.memory_space<vmem>>, vector<128x64xf32>,
    return
  }
  func.func @transform_0(%arg0: i32) -> (i32, i32) {
    %c0_i32 = arith.constant 0 : i32
    %c0_i32_0 = arith.constant 0 : i32
    %c0_i32_1 = arith.constant 0 : i32
    return %c0_i32, %c0_i32_0 : i32, i32
  }
  func.func @transform_1(%arg0: i32) -> (i32, i32) {
    %c0_i32 = arith.constant 0 : i32
    %c0_i32_0 = arith.constant 0 : i32
    %c0_i32_1 = arith.constant 0 : i32
    return %c0_i32, %c0_i32_0 : i32, i32
  }
  func.func @transform_2(%arg0: i32) -> (i32, i32) {
    %c0_i32 = arith.constant 0 : i32
    %c0_i32_0 = arith.constant 0 : i32
    %c0_i32_1 = arith.constant 0 : i32
    return %c0_i32, %c0_i32_0 : i32, i32
  }
  func.func @transform_3(%arg0: i32) -> (i32, i32) {
    %c0_i32 = arith.constant 0 : i32
    %c0_i32_0 = arith.constant 0 : i32
    %c0_i32_1 = arith.constant 0 : i32
    return %c0_i32, %c0_i32_0 : i32, i32
  }
  func.func @transform_4(%arg0: i32) -> (i32, i32) {
    %c0_i32 = arith.constant 0 : i32
    %c0_i32_0 = arith.constant 0 : i32
    %c0_i32_1 = arith.constant 0 : i32
    return %c0_i32, %c0_i32_0 : i32, i32
  }
}

</mosaic_0001>

<llo_original>
// kernel: _lambda_.3
$region0: #{_lambda_.3}
  #allocation0 [shape = 'u32[]', space=smem, size = 0x4, offset = 0x4, fixed_abs, tag = 'smem constant byte address 0x4 - core index']
  #allocation1 [shape = 'u32[144,128]{1,0:T(1,128)}', space=vmem, size = 0x12000, scoped, tag = 'internal scratch']
  %s0 = inlined_call_operand.vmem [shape: bf16[1824,32], index: 0, kind: input, shape index: {}]
  %s1 = inlined_call_operand.vmem [shape: bf16[32,64], index: 1, kind: input, shape index: {}]
  %s2 = inlined_call_operand.vmem [shape: f32[2,64], index: 2, kind: input, shape index: {}]
  %s3 = inlined_call_operand.vmem [shape: bf16[456,64], index: 3, kind: output, shape index: {}]
  %s4 = sld [smem:[#allocation0]]
  $region22: #{_lambda_.3} parent=0
    _
  %s6 = ssub.s32 1, %s4
  %s7 = scalar_select 0, %s6, %s4
  // Predicated region
  $region2: #{_lambda_.3} parent=0 // pred_check
    _
  $region3: #{_lambda_.3} parent=0 // pred_check_branch
    %9 = sbr.rel (0) target = $region5
  $region4: #{_lambda_.3} parent=0 // pred_region
    _
  $region5: #{_lambda_.3} parent=0 // pred_fallthru
    _
  // Predicated region
  $region6: #{_lambda_.3} parent=0 // pred_check
    _
  $region7: #{_lambda_.3} parent=0 // pred_check_branch
    %11 = sbr.rel (0) target = $region9
  $region8: #{_lambda_.3} parent=0 // pred_region
    _
  $region9: #{_lambda_.3} parent=0 // pred_fallthru
    _
  // Predicated region
  $region10: #{_lambda_.3} parent=0 // pred_check
    _
  $region11: #{_lambda_.3} parent=0 // pred_check_branch
    %13 = sbr.rel (0) target = $region13
  $region12: #{_lambda_.3} parent=0 // pred_region
    _
  $region13: #{_lambda_.3} parent=0 // pred_fallthru
    _
  %v15 = vld [vmem:[%s0] sm:$0xf]
  %v16 = vld [vmem:[%s0 + $0x4] sm:$0xf]
  %v17 = vld [vmem:[%s0 + $0x8] sm:$0xf]
  %v18 = vld [vmem:[%s0 + $0xc] sm:$0xf]
  %v19 = vld [vmem:[%s0 + $0x10] sm:$0xf]
  %v20 = vld [vmem:[%s0 + $0x14] sm:$0xf]
  %v21 = vld [vmem:[%s0 + $0x18] sm:$0xf]
  %v22 = vld [vmem:[%s0 + $0x1c] sm:$0xf]
  %v23 = vld [vmem:[%s0 + $0x20] sm:$0xf]
  %v24 = vld [vmem:[%s0 + $0x24] sm:$0xf]
  %v25 = vld [vmem:[%s0 + $0x28] sm:$0xf]
  %v26 = vld [vmem:[%s0 + $0x2c] sm:$0xf]
  %v27 = vld [vmem:[%s0 + $0x30] sm:$0xf]
  %v28 = vld [vmem:[%s0 + $0x34] sm:$0xf]
  %v29 = vld [vmem:[%s0 + $0x38] sm:$0xf]
  %v30 = vld [vmem:[%s0 + $0x3c] sm:$0xf]
  %v31 = vld [vmem:[%s0 + $0x40] sm:$0xf]
  %v32 = vld [vmem:[%s0 + $0x44] sm:$0xf]
  %v33 = vld [vmem:[%s0 + $0x48] sm:$0xf]
  %v34 = vld [vmem:[%s0 + $0x4c] sm:$0xf]
  %v35 = vld [vmem:[%s0 + $0x50] sm:$0xf]
  %v36 = vld [vmem:[%s0 + $0x54] sm:$0xf]
  %v37 = vld [vmem:[%s0 + $0x58] sm:$0xf]
  %v38 = vld [vmem:[%s0 + $0x5c] sm:$0xf]
  %v39 = vld [vmem:[%s0 + $0x60] sm:$0xf]
  %v40 = vld [vmem:[%s0 + $0x64] sm:$0xf]
  %v41 = vld [vmem:[%s0 + $0x68] sm:$0xf]
  %v42 = vld [vmem:[%s0 + $0x6c] sm:$0xf]
  %v43 = vld [vmem:[%s0 + $0x70] sm:$0xf]
  %v44 = vld [vmem:[%s0 + $0x74] sm:$0xf]
  %v45 = vld [vmem:[%s0 + $0x78] sm:$0xf]
  %v46 = vld [vmem:[%s0 + $0x7c] sm:$0xf]
  %v47 = vld [vmem:[%s0 + $0x80] sm:$0xf]
  %v48 = vld [vmem:[%s0 + $0x84] sm:$0xf]
  %v49 = vld [vmem:[%s0 + $0x88] sm:$0xf]
  %v50 = vld [vmem:[%s0 + $0x8c] sm:$0xf]
  %v51 = vld [vmem:[%s0 + $0x90] sm:$0xf]
  %v52 = vld [vmem:[%s0 + $0x94] sm:$0xf]
  %v53 = vld [vmem:[%s0 + $0x98] sm:$0xf]
  %v54 = vld [vmem:[%s0 + $0x9c] sm:$0xf]
  %v55 = vld [vmem:[%s0 + $0xa0] sm:$0xf]
  %v56 = vld [vmem:[%s0 + $0xa4] sm:$0xf]
  %v57 = vld [vmem:[%s0 + $0xa8] sm:$0xf]
  %v58 = vld [vmem:[%s0 + $0xac] sm:$0xf]
  %v59 = vld [vmem:[%s0 + $0xb0] sm:$0xf]
  %v60 = vld [vmem:[%s0 + $0xb4] sm:$0xf]
  %v61 = vld [vmem:[%s0 + $0xb8] sm:$0xf]
  %v62 = vld [vmem:[%s0 + $0xbc] sm:$0xf]
  %v63 = vld [vmem:[%s0 + $0xc0] sm:$0xf]
  %v64 = vld [vmem:[%s0 + $0xc4] sm:$0xf]
  %v65 = vld [vmem:[%s0 + $0xc8] sm:$0xf]
  %v66 = vld [vmem:[%s0 + $0xcc] sm:$0xf]
  %v67 = vld [vmem:[%s0 + $0xd0] sm:$0xf]
  %v68 = vld [vmem:[%s0 + $0xd4] sm:$0xf]
  %v69 = vld [vmem:[%s0 + $0xd8] sm:$0xf]
  %v70 = vld [vmem:[%s0 + $0xdc] sm:$0xf]
  %v71 = vld [vmem:[%s0 + $0xe0] sm:$0xf]
  %v72 = vld [vmem:[%s0 + $0xe4] sm:$0xf]
  %v73 = vld [vmem:[%s0 + $0xe8] sm:$0xf]
  %v74 = vld [vmem:[%s0 + $0xec] sm:$0xf]
  %v75 = vld [vmem:[%s0 + $0xf0] sm:$0xf]
  %v76 = vld [vmem:[%s0 + $0xf4] sm:$0xf]
  %v77 = vld [vmem:[%s0 + $0xf8] sm:$0xf]
  %v78 = vld [vmem:[%s0 + $0xfc] sm:$0xf]
  %v79 = vld [vmem:[%s0 + $0x100] sm:$0xf]
  %v80 = vld [vmem:[%s0 + $0x104] sm:$0xf]
  %v81 = vld [vmem:[%s0 + $0x108] sm:$0xf]
  %v82 = vld [vmem:[%s0 + $0x10c] sm:$0xf]
  %v83 = vld [vmem:[%s0 + $0x110] sm:$0xf]
  %v84 = vld [vmem:[%s0 + $0x114] sm:$0xf]
  %v85 = vld [vmem:[%s0 + $0x118] sm:$0xf]
  %v86 = vld [vmem:[%s0 + $0x11c] sm:$0xf]
  %v87 = vld [vmem:[%s0 + $0x120] sm:$0xf]
  %v88 = vld [vmem:[%s0 + $0x124] sm:$0xf]
  %v89 = vld [vmem:[%s0 + $0x128] sm:$0xf]
  %v90 = vld [vmem:[%s0 + $0x12c] sm:$0xf]
  %v91 = vld [vmem:[%s0 + $0x130] sm:$0xf]
  %v92 = vld [vmem:[%s0 + $0x134] sm:$0xf]
  %v93 = vld [vmem:[%s0 + $0x138] sm:$0xf]
  %v94 = vld [vmem:[%s0 + $0x13c] sm:$0xf]
  %v95 = vld [vmem:[%s0 + $0x140] sm:$0xf]
  %v96 = vld [vmem:[%s0 + $0x144] sm:$0xf]
  %v97 = vld [vmem:[%s0 + $0x148] sm:$0xf]
  %v98 = vld [vmem:[%s0 + $0x14c] sm:$0xf]
  %v99 = vld [vmem:[%s0 + $0x150] sm:$0xf]
  %v100 = vld [vmem:[%s0 + $0x154] sm:$0xf]
  %v101 = vld [vmem:[%s0 + $0x158] sm:$0xf]
  %v102 = vld [vmem:[%s0 + $0x15c] sm:$0xf]
  %v103 = vld [vmem:[%s0 + $0x160] sm:$0xf]
  %v104 = vld [vmem:[%s0 + $0x164] sm:$0xf]
  %v105 = vld [vmem:[%s0 + $0x168] sm:$0xf]
  %v106 = vld [vmem:[%s0 + $0x16c] sm:$0xf]
  %v107 = vld [vmem:[%s0 + $0x170] sm:$0xf]
  %v108 = vld [vmem:[%s0 + $0x174] sm:$0xf]
  %v109 = vld [vmem:[%s0 + $0x178] sm:$0xf]
  %v110 = vld [vmem:[%s0 + $0x17c] sm:$0xf]
  %v111 = vld [vmem:[%s0 + $0x180] sm:$0xf]
  %v112 = vld [vmem:[%s0 + $0x184] sm:$0xf]
  %v113 = vld [vmem:[%s0 + $0x188] sm:$0xf]
  %v114 = vld [vmem:[%s0 + $0x18c] sm:$0xf]
  %v115 = vld [vmem:[%s0 + $0x190] sm:$0xf]
  %v116 = vld [vmem:[%s0 + $0x194] sm:$0xf]
  %v117 = vld [vmem:[%s0 + $0x198] sm:$0xf]
  %v118 = vld [vmem:[%s0 + $0x19c] sm:$0xf]
  %v119 = vld [vmem:[%s0 + $0x1a0] sm:$0xf]
  %v120 = vld [vmem:[%s0 + $0x1a4] sm:$0xf]
  %v121 = vld [vmem:[%s0 + $0x1a8] sm:$0xf]
  %v122 = vld [vmem:[%s0 + $0x1ac] sm:$0xf]
  %v123 = vld [vmem:[%s0 + $0x1b0] sm:$0xf]
  %v124 = vld [vmem:[%s0 + $0x1b4] sm:$0xf]
  %v125 = vld [vmem:[%s0 + $0x1b8] sm:$0xf]
  %v126 = vld [vmem:[%s0 + $0x1bc] sm:$0xf]
  %v127 = vld [vmem:[%s0 + $0x1c0] sm:$0xf]
  %v128 = vld [vmem:[%s0 + $0x1c4] sm:$0xf]
  %v129 = vld [vmem:[%s0 + $0x1c8] sm:$0xf]
  %v130 = vld [vmem:[%s0 + $0x1cc] sm:$0xf]
  %v131 = vld [vmem:[%s0 + $0x1d0] sm:$0xf]
  %v132 = vld [vmem:[%s0 + $0x1d4] sm:$0xf]
  %v133 = vld [vmem:[%s0 + $0x1d8] sm:$0xf]
  %v134 = vld [vmem:[%s0 + $0x1dc] sm:$0xf]
  %v135 = vld [vmem:[%s0 + $0x1e0] sm:$0xf]
  %v136 = vld [vmem:[%s0 + $0x1e4] sm:$0xf]
  %v137 = vld [vmem:[%s0 + $0x1e8] sm:$0xf]
  %v138 = vld [vmem:[%s0 + $0x1ec] sm:$0xf]
  %v139 = vld [vmem:[%s0 + $0x1f0] sm:$0xf]
  %v140 = vld [vmem:[%s0 + $0x1f4] sm:$0xf]
  %v141 = vld [vmem:[%s0 + $0x1f8] sm:$0xf]
  %v142 = vld [vmem:[%s0 + $0x1fc] sm:$0xf]
  %v143 = vld [vmem:[%s0 + $0x200] sm:$0xf]
  %v144 = vld [vmem:[%s0 + $0x204] sm:$0xf]
  %v145 = vld [vmem:[%s0 + $0x208] sm:$0xf]
  %v146 = vld [vmem:[%s0 + $0x20c] sm:$0xf]
  %v147 = vld [vmem:[%s0 + $0x210] sm:$0xf]
  %v148 = vld [vmem:[%s0 + $0x214] sm:$0xf]
  %v149 = vld [vmem:[%s0 + $0x218] sm:$0xf]
  %v150 = vld [vmem:[%s0 + $0x21c] sm:$0xf]
  %v151 = vld [vmem:[%s0 + $0x220] sm:$0xf]
  %v152 = vld [vmem:[%s0 + $0x224] sm:$0xf]
  %v153 = vld [vmem:[%s0 + $0x228] sm:$0xf]
  %v154 = vld [vmem:[%s0 + $0x22c] sm:$0xf]
  %v155 = vld [vmem:[%s0 + $0x230] sm:$0xf]
  %v156 = vld [vmem:[%s0 + $0x234] sm:$0xf]
  %v157 = vld [vmem:[%s0 + $0x238] sm:$0xf]
  %v158 = vld [vmem:[%s0 + $0x23c] sm:$0xf]
  %v159 = vld [vmem:[%s0 + $0x240] sm:$0xf]
  %v160 = vld [vmem:[%s0 + $0x244] sm:$0xf]
  %v161 = vld [vmem:[%s0 + $0x248] sm:$0xf]
  %v162 = vld [vmem:[%s0 + $0x24c] sm:$0xf]
  %v163 = vld [vmem:[%s0 + $0x250] sm:$0xf]
  %v164 = vld [vmem:[%s0 + $0x254] sm:$0xf]
  %v165 = vld [vmem:[%s0 + $0x258] sm:$0xf]
  %v166 = vld [vmem:[%s0 + $0x25c] sm:$0xf]
  %v167 = vld [vmem:[%s0 + $0x260] sm:$0xf]
  %v168 = vld [vmem:[%s0 + $0x264] sm:$0xf]
  %v169 = vld [vmem:[%s0 + $0x268] sm:$0xf]
  %v170 = vld [vmem:[%s0 + $0x26c] sm:$0xf]
  %v171 = vld [vmem:[%s0 + $0x270] sm:$0xf]
  %v172 = vld [vmem:[%s0 + $0x274] sm:$0xf]
  %v173 = vld [vmem:[%s0 + $0x278] sm:$0xf]
  %v174 = vld [vmem:[%s0 + $0x27c] sm:$0xf]
  %v175 = vld [vmem:[%s0 + $0x280] sm:$0xf]
  %v176 = vld [vmem:[%s0 + $0x284] sm:$0xf]
  %v177 = vld [vmem:[%s0 + $0x288] sm:$0xf]
  %v178 = vld [vmem:[%s0 + $0x28c] sm:$0xf]
  %v179 = vld [vmem:[%s0 + $0x290] sm:$0xf]
  %v180 = vld [vmem:[%s0 + $0x294] sm:$0xf]
  %v181 = vld [vmem:[%s0 + $0x298] sm:$0xf]
  %v182 = vld [vmem:[%s0 + $0x29c] sm:$0xf]
  %v183 = vld [vmem:[%s0 + $0x2a0] sm:$0xf]
  %v184 = vld [vmem:[%s0 + $0x2a4] sm:$0xf]
  %v185 = vld [vmem:[%s0 + $0x2a8] sm:$0xf]
  %v186 = vld [vmem:[%s0 + $0x2ac] sm:$0xf]
  %v187 = vld [vmem:[%s0 + $0x2b0] sm:$0xf]
  %v188 = vld [vmem:[%s0 + $0x2b4] sm:$0xf]
  %v189 = vld [vmem:[%s0 + $0x2b8] sm:$0xf]
  %v190 = vld [vmem:[%s0 + $0x2bc] sm:$0xf]
  %v191 = vld [vmem:[%s0 + $0x2c0] sm:$0xf]
  %v192 = vld [vmem:[%s0 + $0x2c4] sm:$0xf]
  %v193 = vld [vmem:[%s0 + $0x2c8] sm:$0xf]
  %v194 = vld [vmem:[%s0 + $0x2cc] sm:$0xf]
  %v195 = vld [vmem:[%s0 + $0x2d0] sm:$0xf]
  %v196 = vld [vmem:[%s0 + $0x2d4] sm:$0xf]
  %v197 = vld [vmem:[%s0 + $0x2d8] sm:$0xf]
  %v198 = vld [vmem:[%s0 + $0x2dc] sm:$0xf]
  %v199 = vld [vmem:[%s0 + $0x2e0] sm:$0xf]
  %v200 = vld [vmem:[%s0 + $0x2e4] sm:$0xf]
  %v201 = vld [vmem:[%s0 + $0x2e8] sm:$0xf]
  %v202 = vld [vmem:[%s0 + $0x2ec] sm:$0xf]
  %v203 = vld [vmem:[%s0 + $0x2f0] sm:$0xf]
  %v204 = vld [vmem:[%s0 + $0x2f4] sm:$0xf]
  %v205 = vld [vmem:[%s0 + $0x2f8] sm:$0xf]
  %v206 = vld [vmem:[%s0 + $0x2fc] sm:$0xf]
  %v207 = vld [vmem:[%s0 + $0x300] sm:$0xf]
  %v208 = vld [vmem:[%s0 + $0x304] sm:$0xf]
  %v209 = vld [vmem:[%s0 + $0x308] sm:$0xf]
  %v210 = vld [vmem:[%s0 + $0x30c] sm:$0xf]
  %v211 = vld [vmem:[%s0 + $0x310] sm:$0xf]
  %v212 = vld [vmem:[%s0 + $0x314] sm:$0xf]
  %v213 = vld [vmem:[%s0 + $0x318] sm:$0xf]
  %v214 = vld [vmem:[%s0 + $0x31c] sm:$0xf]
  %v215 = vld [vmem:[%s0 + $0x320] sm:$0xf]
  %v216 = vld [vmem:[%s0 + $0x324] sm:$0xf]
  %v217 = vld [vmem:[%s0 + $0x328] sm:$0xf]
  %v218 = vld [vmem:[%s0 + $0x32c] sm:$0xf]
  %v219 = vld [vmem:[%s0 + $0x330] sm:$0xf]
  %v220 = vld [vmem:[%s0 + $0x334] sm:$0xf]
  %v221 = vld [vmem:[%s0 + $0x338] sm:$0xf]
  %v222 = vld [vmem:[%s0 + $0x33c] sm:$0xf]
  %v223 = vld [vmem:[%s0 + $0x340] sm:$0xf]
  %v224 = vld [vmem:[%s0 + $0x344] sm:$0xf]
  %v225 = vld [vmem:[%s0 + $0x348] sm:$0xf]
  %v226 = vld [vmem:[%s0 + $0x34c] sm:$0xf]
  %v227 = vld [vmem:[%s0 + $0x350] sm:$0xf]
  %v228 = vld [vmem:[%s0 + $0x354] sm:$0xf]
  %v229 = vld [vmem:[%s0 + $0x358] sm:$0xf]
  %v230 = vld [vmem:[%s0 + $0x35c] sm:$0xf]
  %v231 = vld [vmem:[%s0 + $0x360] sm:$0xf]
  %v232 = vld [vmem:[%s0 + $0x364] sm:$0xf]
  %v233 = vld [vmem:[%s0 + $0x368] sm:$0xf]
  %v234 = vld [vmem:[%s0 + $0x36c] sm:$0xf]
  %v235 = vld [vmem:[%s0 + $0x370] sm:$0xf]
  %v236 = vld [vmem:[%s0 + $0x374] sm:$0xf]
  %v237 = vld [vmem:[%s0 + $0x378] sm:$0xf]
  %v238 = vld [vmem:[%s0 + $0x37c] sm:$0xf]
  %v239 = vld [vmem:[%s0 + $0x380] sm:$0xf]
  %v240 = vld [vmem:[%s0 + $0x384] sm:$0xf]
  %v241 = vld [vmem:[%s0 + $0x388] sm:$0xf]
  %v242 = vld [vmem:[%s0 + $0x38c] sm:$0xf]
  %v243 = vld [vmem:[%s1] sm:$0xf]
  %v244 = vld [vmem:[%s1 + $0x4] sm:$0xf]
  %v245 = vld [vmem:[%s1 + $0x8] sm:$0xf]
  %v246 = vld [vmem:[%s1 + $0xc] sm:$0xf]
  %v475 = vunpack.c.l.b16 %v15
  %v476 = vunpack.c.l.b16 %v16
  %v477 = vunpack.c.l.b16 %v17
  %v478 = vunpack.c.l.b16 %v18
  %v479 = vunpack.c.l.b16 %v19
  %v480 = vunpack.c.l.b16 %v20
  %v481 = vunpack.c.l.b16 %v21
  %v482 = vunpack.c.l.b16 %v22
  %v483 = vunpack.c.l.b16 %v23
  %v484 = vunpack.c.l.b16 %v24
  %v485 = vunpack.c.l.b16 %v25
  %v486 = vunpack.c.l.b16 %v26
  %v487 = vunpack.c.l.b16 %v27
  %v488 = vunpack.c.l.b16 %v28
  %v489 = vunpack.c.l.b16 %v29
  %v490 = vunpack.c.l.b16 %v30
  %v491 = vunpack.c.l.b16 %v31
  %v492 = vunpack.c.l.b16 %v32
  %v493 = vunpack.c.l.b16 %v33
  %v494 = vunpack.c.l.b16 %v34
  %v495 = vunpack.c.l.b16 %v35
  %v496 = vunpack.c.l.b16 %v36
  %v497 = vunpack.c.l.b16 %v37
  %v498 = vunpack.c.l.b16 %v38
  %v499 = vunpack.c.l.b16 %v39
  %v500 = vunpack.c.l.b16 %v40
  %v501 = vunpack.c.l.b16 %v41
  %v502 = vunpack.c.l.b16 %v42
  %v503 = vunpack.c.l.b16 %v43
  %v504 = vunpack.c.l.b16 %v44
  %v505 = vunpack.c.l.b16 %v45
  %v506 = vunpack.c.l.b16 %v46
  %v507 = vunpack.c.l.b16 %v47
  %v508 = vunpack.c.l.b16 %v48
  %v509 = vunpack.c.l.b16 %v49
  %v510 = vunpack.c.l.b16 %v50
  %v511 = vunpack.c.l.b16 %v51
  %v512 = vunpack.c.l.b16 %v52
  %v513 = vunpack.c.l.b16 %v53
  %v514 = vunpack.c.l.b16 %v54
  %v515 = vunpack.c.l.b16 %v55
  %v516 = vunpack.c.l.b16 %v56
  %v517 = vunpack.c.l.b16 %v57
  %v518 = vunpack.c.l.b16 %v58
  %v519 = vunpack.c.l.b16 %v59
  %v520 = vunpack.c.l.b16 %v60
  %v521 = vunpack.c.l.b16 %v61
  %v522 = vunpack.c.l.b16 %v62
  %v523 = vunpack.c.l.b16 %v63
  %v524 = vunpack.c.l.b16 %v64
  %v525 = vunpack.c.l.b16 %v65
  %v526 = vunpack.c.l.b16 %v66
  %v527 = vunpack.c.l.b16 %v67
  %v528 = vunpack.c.l.b16 %v68
  %v529 = vunpack.c.l.b16 %v69
  %v530 = vunpack.c.l.b16 %v70
  %v531 = vunpack.c.l.b16 %v71
  %v532 = vunpack.c.l.b16 %v72
  %v533 = vunpack.c.l.b16 %v73
  %v534 = vunpack.c.l.b16 %v74
  %v535 = vunpack.c.l.b16 %v75
  %v536 = vunpack.c.l.b16 %v76
  %v537 = vunpack.c.l.b16 %v77
  %v538 = vunpack.c.l.b16 %v78
  %v539 = vunpack.c.l.b16 %v79
  %v540 = vunpack.c.l.b16 %v80
  %v541 = vunpack.c.l.b16 %v81
  %v542 = vunpack.c.l.b16 %v82
  %v543 = vunpack.c.l.b16 %v83
  %v544 = vunpack.c.l.b16 %v84
  %v545 = vunpack.c.l.b16 %v85
  %v546 = vunpack.c.l.b16 %v86
  %v547 = vunpack.c.l.b16 %v87
  %v548 = vunpack.c.l.b16 %v88
  %v549 = vunpack.c.l.b16 %v89
  %v550 = vunpack.c.l.b16 %v90
  %v551 = vunpack.c.l.b16 %v91
  %v552 = vunpack.c.l.b16 %v92
  %v553 = vunpack.c.l.b16 %v93
  %v554 = vunpack.c.l.b16 %v94
  %v555 = vunpack.c.l.b16 %v95
  %v556 = vunpack.c.l.b16 %v96
  %v557 = vunpack.c.l.b16 %v97
  %v558 = vunpack.c.l.b16 %v98
  %v559 = vunpack.c.l.b16 %v99
  %v560 = vunpack.c.l.b16 %v100
  %v561 = vunpack.c.l.b16 %v101
  %v562 = vunpack.c.l.b16 %v102
  %v563 = vunpack.c.l.b16 %v103
  %v564 = vunpack.c.l.b16 %v104
  %v565 = vunpack.c.l.b16 %v105
  %v566 = vunpack.c.l.b16 %v106
  %v567 = vunpack.c.l.b16 %v107
  %v568 = vunpack.c.l.b16 %v108
  %v569 = vunpack.c.l.b16 %v109
  %v570 = vunpack.c.l.b16 %v110
  %v571 = vunpack.c.l.b16 %v111
  %v572 = vunpack.c.l.b16 %v112
  %v573 = vunpack.c.l.b16 %v113
  %v574 = vunpack.c.l.b16 %v114
  %v575 = vunpack.c.l.b16 %v115
  %v576 = vunpack.c.l.b16 %v116
  %v577 = vunpack.c.l.b16 %v117
  %v578 = vunpack.c.l.b16 %v118
  %v579 = vunpack.c.l.b16 %v119
  %v580 = vunpack.c.l.b16 %v120
  %v581 = vunpack.c.l.b16 %v121
  %v582 = vunpack.c.l.b16 %v122
  %v583 = vunpack.c.l.b16 %v123
  %v584 = vunpack.c.l.b16 %v124
  %v585 = vunpack.c.l.b16 %v125
  %v586 = vunpack.c.l.b16 %v126
  %v587 = vunpack.c.l.b16 %v127
  %v588 = vunpack.c.l.b16 %v128
  %v589 = vunpack.c.l.b16 %v129
  %v590 = vunpack.c.l.b16 %v130
  %v591 = vunpack.c.l.b16 %v131
  %v592 = vunpack.c.l.b16 %v132
  %v593 = vunpack.c.l.b16 %v133
  %v594 = vunpack.c.l.b16 %v134
  %v595 = vunpack.c.l.b16 %v135
  %v596 = vunpack.c.l.b16 %v136
  %v597 = vunpack.c.l.b16 %v137
  %v598 = vunpack.c.l.b16 %v138
  %v599 = vunpack.c.l.b16 %v139
  %v600 = vunpack.c.l.b16 %v140
  %v601 = vunpack.c.l.b16 %v141
  %v602 = vunpack.c.l.b16 %v142
  %v603 = vunpack.c.l.b16 %v143
  %v604 = vunpack.c.l.b16 %v144
  %v605 = vunpack.c.l.b16 %v145
  %v606 = vunpack.c.l.b16 %v146
  %v607 = vunpack.c.l.b16 %v147
  %v608 = vunpack.c.l.b16 %v148
  %v609 = vunpack.c.l.b16 %v149
  %v610 = vunpack.c.l.b16 %v150
  %v611 = vunpack.c.l.b16 %v151
  %v612 = vunpack.c.l.b16 %v152
  %v613 = vunpack.c.l.b16 %v153
  %v614 = vunpack.c.l.b16 %v154
  %v615 = vunpack.c.l.b16 %v155
  %v616 = vunpack.c.l.b16 %v156
  %v617 = vunpack.c.l.b16 %v157
  %v618 = vunpack.c.l.b16 %v158
  %v619 = vunpack.c.l.b16 %v159
  %v620 = vunpack.c.l.b16 %v160
  %v621 = vunpack.c.l.b16 %v161
  %v622 = vunpack.c.l.b16 %v162
  %v623 = vunpack.c.l.b16 %v163
  %v624 = vunpack.c.l.b16 %v164
  %v625 = vunpack.c.l.b16 %v165
  %v626 = vunpack.c.l.b16 %v166
  %v627 = vunpack.c.l.b16 %v167
  %v628 = vunpack.c.l.b16 %v168
  %v629 = vunpack.c.l.b16 %v169
  %v630 = vunpack.c.l.b16 %v170
  %v631 = vunpack.c.l.b16 %v171
  %v632 = vunpack.c.l.b16 %v172
  %v633 = vunpack.c.l.b16 %v173
  %v634 = vunpack.c.l.b16 %v174
  %v635 = vunpack.c.l.b16 %v175
  %v636 = vunpack.c.l.b16 %v176
  %v637 = vunpack.c.l.b16 %v177
  %v638 = vunpack.c.l.b16 %v178
  %v639 = vunpack.c.l.b16 %v179
  %v640 = vunpack.c.l.b16 %v180
  %v641 = vunpack.c.l.b16 %v181
  %v642 = vunpack.c.l.b16 %v182
  %v643 = vunpack.c.l.b16 %v183
  %v644 = vunpack.c.l.b16 %v184
  %v645 = vunpack.c.l.b16 %v185
  %v646 = vunpack.c.l.b16 %v186
  %v647 = vunpack.c.l.b16 %v187
  %v648 = vunpack.c.l.b16 %v188
  %v649 = vunpack.c.l.b16 %v189
  %v650 = vunpack.c.l.b16 %v190
  %v651 = vunpack.c.l.b16 %v191
  %v652 = vunpack.c.l.b16 %v192
  %v653 = vunpack.c.l.b16 %v193
  %v654 = vunpack.c.l.b16 %v194
  %v655 = vunpack.c.l.b16 %v195
  %v656 = vunpack.c.l.b16 %v196
  %v657 = vunpack.c.l.b16 %v197
  %v658 = vunpack.c.l.b16 %v198
  %v659 = vunpack.c.l.b16 %v199
  %v660 = vunpack.c.l.b16 %v200
  %v661 = vunpack.c.l.b16 %v201
  %v662 = vunpack.c.l.b16 %v202
  %v663 = vunpack.c.l.b16 %v203
  %v664 = vunpack.c.l.b16 %v204
  %v665 = vunpack.c.l.b16 %v205
  %v666 = vunpack.c.l.b16 %v206
  %v667 = vunpack.c.l.b16 %v207
  %v668 = vunpack.c.l.b16 %v208
  %v669 = vunpack.c.l.b16 %v209
  %v670 = vunpack.c.l.b16 %v210
  %v671 = vunpack.c.l.b16 %v211
  %v672 = vunpack.c.l.b16 %v212
  %v673 = vunpack.c.l.b16 %v213
  %v674 = vunpack.c.l.b16 %v214
  %v675 = vunpack.c.l.b16 %v215
  %v676 = vunpack.c.l.b16 %v216
  %v677 = vunpack.c.l.b16 %v217
  %v678 = vunpack.c.l.b16 %v218
  %v679 = vunpack.c.l.b16 %v219
  %v680 = vunpack.c.l.b16 %v220
  %v681 = vunpack.c.l.b16 %v221
  %v682 = vunpack.c.l.b16 %v222
  %v683 = vunpack.c.l.b16 %v223
  %v684 = vunpack.c.l.b16 %v224
  %v685 = vunpack.c.l.b16 %v225
  %v686 = vunpack.c.l.b16 %v226
  %v687 = vunpack.c.l.b16 %v227
  %v688 = vunpack.c.l.b16 %v228
  %v689 = vunpack.c.l.b16 %v229
  %v690 = vunpack.c.l.b16 %v230
  %v691 = vunpack.c.l.b16 %v231
  %v692 = vunpack.c.l.b16 %v232
  %v693 = vunpack.c.l.b16 %v233
  %v694 = vunpack.c.l.b16 %v234
  %v695 = vunpack.c.l.b16 %v235
  %v696 = vunpack.c.l.b16 %v236
  %v697 = vunpack.c.l.b16 %v237
  %v698 = vunpack.c.l.b16 %v238
  %v699 = vunpack.c.l.b16 %v239
  %v700 = vunpack.c.l.b16 %v240
  %v701 = vunpack.c.l.b16 %v241
  %v702 = vunpack.c.l.b16 %v242
  %v703 = vpack.c.b16 %v476, %v475
  %v704 = vpack.c.b16 %v478, %v477
  %v705 = vpack.c.b16 %v480, %v479
  %v706 = vpack.c.b16 %v482, %v481
  %v707 = vpack.c.b16 %v484, %v483
  %v708 = vpack.c.b16 %v486, %v485
  %v709 = vpack.c.b16 %v488, %v487
  %v710 = vpack.c.b16 %v490, %v489
  %v711 = vpack.c.b16 %v492, %v491
  %v712 = vpack.c.b16 %v494, %v493
  %v713 = vpack.c.b16 %v496, %v495
  %v714 = vpack.c.b16 %v498, %v497
  %v715 = vpack.c.b16 %v500, %v499
  %v716 = vpack.c.b16 %v502, %v501
  %v717 = vpack.c.b16 %v504, %v503
  %v718 = vpack.c.b16 %v506, %v505
  %v719 = vpack.c.b16 %v508, %v507
  %v720 = vpack.c.b16 %v510, %v509
  %v721 = vpack.c.b16 %v512, %v511
  %v722 = vpack.c.b16 %v514, %v513
  %v723 = vpack.c.b16 %v516, %v515
  %v724 = vpack.c.b16 %v518, %v517
  %v725 = vpack.c.b16 %v520, %v519
  %v726 = vpack.c.b16 %v522, %v521
  %v727 = vpack.c.b16 %v524, %v523
  %v728 = vpack.c.b16 %v526, %v525
  %v729 = vpack.c.b16 %v528, %v527
  %v730 = vpack.c.b16 %v530, %v529
  %v731 = vpack.c.b16 %v532, %v531
  %v732 = vpack.c.b16 %v534, %v533
  %v733 = vpack.c.b16 %v536, %v535
  %v734 = vpack.c.b16 %v538, %v537
  %v735 = vpack.c.b16 %v540, %v539
  %v736 = vpack.c.b16 %v542, %v541
  %v737 = vpack.c.b16 %v544, %v543
  %v738 = vpack.c.b16 %v546, %v545
  %v739 = vpack.c.b16 %v548, %v547
  %v740 = vpack.c.b16 %v550, %v549
  %v741 = vpack.c.b16 %v552, %v551
  %v742 = vpack.c.b16 %v554, %v553
  %v743 = vpack.c.b16 %v556, %v555
  %v744 = vpack.c.b16 %v558, %v557
  %v745 = vpack.c.b16 %v560, %v559
  %v746 = vpack.c.b16 %v562, %v561
  %v747 = vpack.c.b16 %v564, %v563
  %v748 = vpack.c.b16 %v566, %v565
  %v749 = vpack.c.b16 %v568, %v567
  %v750 = vpack.c.b16 %v570, %v569
  %v751 = vpack.c.b16 %v572, %v571
  %v752 = vpack.c.b16 %v574, %v573
  %v753 = vpack.c.b16 %v576, %v575
  %v754 = vpack.c.b16 %v578, %v577
  %v755 = vpack.c.b16 %v580, %v579
  %v756 = vpack.c.b16 %v582, %v581
  %v757 = vpack.c.b16 %v584, %v583
  %v758 = vpack.c.b16 %v586, %v585
  %v759 = vpack.c.b16 %v588, %v587
  %v760 = vpack.c.b16 %v590, %v589
  %v761 = vpack.c.b16 %v592, %v591
  %v762 = vpack.c.b16 %v594, %v593
  %v763 = vpack.c.b16 %v596, %v595
  %v764 = vpack.c.b16 %v598, %v597
  %v765 = vpack.c.b16 %v600, %v599
  %v766 = vpack.c.b16 %v602, %v601
  %v767 = vpack.c.b16 %v604, %v603
  %v768 = vpack.c.b16 %v606, %v605
  %v769 = vpack.c.b16 %v608, %v607
  %v770 = vpack.c.b16 %v610, %v609
  %v771 = vpack.c.b16 %v612, %v611
  %v772 = vpack.c.b16 %v614, %v613
  %v773 = vpack.c.b16 %v616, %v615
  %v774 = vpack.c.b16 %v618, %v617
  %v775 = vpack.c.b16 %v620, %v619
  %v776 = vpack.c.b16 %v622, %v621
  %v777 = vpack.c.b16 %v624, %v623
  %v778 = vpack.c.b16 %v626, %v625
  %v779 = vpack.c.b16 %v628, %v627
  %v780 = vpack.c.b16 %v630, %v629
  %v781 = vpack.c.b16 %v632, %v631
  %v782 = vpack.c.b16 %v634, %v633
  %v783 = vpack.c.b16 %v636, %v635
  %v784 = vpack.c.b16 %v638, %v637
  %v785 = vpack.c.b16 %v640, %v639
  %v786 = vpack.c.b16 %v642, %v641
  %v787 = vpack.c.b16 %v644, %v643
  %v788 = vpack.c.b16 %v646, %v645
  %v789 = vpack.c.b16 %v648, %v647
  %v790 = vpack.c.b16 %v650, %v649
  %v791 = vpack.c.b16 %v652, %v651
  %v792 = vpack.c.b16 %v654, %v653
  %v793 = vpack.c.b16 %v656, %v655
  %v794 = vpack.c.b16 %v658, %v657
  %v795 = vpack.c.b16 %v660, %v659
  %v796 = vpack.c.b16 %v662, %v661
  %v797 = vpack.c.b16 %v664, %v663
  %v798 = vpack.c.b16 %v666, %v665
  %v799 = vpack.c.b16 %v668, %v667
  %v800 = vpack.c.b16 %v670, %v669
  %v801 = vpack.c.b16 %v672, %v671
  %v802 = vpack.c.b16 %v674, %v673
  %v803 = vpack.c.b16 %v676, %v675
  %v804 = vpack.c.b16 %v678, %v677
  %v805 = vpack.c.b16 %v680, %v679
  %v806 = vpack.c.b16 %v682, %v681
  %v807 = vpack.c.b16 %v684, %v683
  %v808 = vpack.c.b16 %v686, %v685
  %v809 = vpack.c.b16 %v688, %v687
  %v810 = vpack.c.b16 %v690, %v689
  %v811 = vpack.c.b16 %v692, %v691
  %v812 = vpack.c.b16 %v694, %v693
  %v813 = vpack.c.b16 %v696, %v695
  %v814 = vpack.c.b16 %v698, %v697
  %v815 = vpack.c.b16 %v700, %v699
  %v816 = vpack.c.b16 %v702, %v701
  %v821 = vunpack.c.l.b16 %v243
  %v822 = vunpack.c.l.b16 %v244
  %v823 = vunpack.c.l.b16 %v245
  %v824 = vunpack.c.l.b16 %v246
  %v825 = vpack.c.b16 %v822, %v821
  %v826 = vpack.c.b16 %v824, %v823
  %vm829 = vcmask 261120
  %v831 = vsel %vm829, %v703, 0
  %v834 = vsel %vm829, %v704, 0
  %v837 = vsel %vm829, %v705, 0
  %v840 = vsel %vm829, %v706, 0
  %v843 = vsel %vm829, %v707, 0
  %v846 = vsel %vm829, %v708, 0
  %v849 = vsel %vm829, %v709, 0
  %v852 = vsel %vm829, %v710, 0
  %v855 = vsel %vm829, %v711, 0
  %v858 = vsel %vm829, %v712, 0
  %v861 = vsel %vm829, %v713, 0
  %v864 = vsel %vm829, %v714, 0
  %v867 = vsel %vm829, %v715, 0
  %v870 = vsel %vm829, %v716, 0
  %v873 = vsel %vm829, %v717, 0
  %v876 = vsel %vm829, %v718, 0
  %v879 = vsel %vm829, %v719, 0
  %v882 = vsel %vm829, %v720, 0
  %v885 = vsel %vm829, %v721, 0
  %v888 = vsel %vm829, %v722, 0
  %v891 = vsel %vm829, %v723, 0
  %v894 = vsel %vm829, %v724, 0
  %v897 = vsel %vm829, %v725, 0
  %v900 = vsel %vm829, %v726, 0
  %v903 = vsel %vm829, %v727, 0
  %v906 = vsel %vm829, %v728, 0
  %v909 = vsel %vm829, %v729, 0
  %v912 = vsel %vm829, %v730, 0
  %v915 = vsel %vm829, %v731, 0
  %v918 = vsel %vm829, %v732, 0
  %v921 = vsel %vm829, %v733, 0
  %v924 = vsel %vm829, %v734, 0
  %v927 = vsel %vm829, %v735, 0
  %v930 = vsel %vm829, %v736, 0
  %v933 = vsel %vm829, %v737, 0
  %v936 = vsel %vm829, %v738, 0
  %v939 = vsel %vm829, %v739, 0
  %v942 = vsel %vm829, %v740, 0
  %v945 = vsel %vm829, %v741, 0
  %v948 = vsel %vm829, %v742, 0
  %v951 = vsel %vm829, %v743, 0
  %v954 = vsel %vm829, %v744, 0
  %v957 = vsel %vm829, %v745, 0
  %v960 = vsel %vm829, %v746, 0
  %v963 = vsel %vm829, %v747, 0
  %v966 = vsel %vm829, %v748, 0
  %v969 = vsel %vm829, %v749, 0
  %v972 = vsel %vm829, %v750, 0
  %v975 = vsel %vm829, %v751, 0
  %v978 = vsel %vm829, %v752, 0
  %v981 = vsel %vm829, %v753, 0
  %v984 = vsel %vm829, %v754, 0
  %v987 = vsel %vm829, %v755, 0
  %v990 = vsel %vm829, %v756, 0
  %v993 = vsel %vm829, %v757, 0
  %v996 = vsel %vm829, %v758, 0
  %v999 = vsel %vm829, %v759, 0
  %v1002 = vsel %vm829, %v760, 0
  %v1005 = vsel %vm829, %v761, 0
  %v1008 = vsel %vm829, %v762, 0
  %v1011 = vsel %vm829, %v763, 0
  %v1014 = vsel %vm829, %v764, 0
  %v1017 = vsel %vm829, %v765, 0
  %v1020 = vsel %vm829, %v766, 0
  %v1023 = vsel %vm829, %v767, 0
  %v1026 = vsel %vm829, %v768, 0
  %v1029 = vsel %vm829, %v769, 0
  %v1032 = vsel %vm829, %v770, 0
  %v1035 = vsel %vm829, %v771, 0
  %v1038 = vsel %vm829, %v772, 0
  %v1041 = vsel %vm829, %v773, 0
  %v1044 = vsel %vm829, %v774, 0
  %v1047 = vsel %vm829, %v775, 0
  %v1050 = vsel %vm829, %v776, 0
  %v1053 = vsel %vm829, %v777, 0
  %v1056 = vsel %vm829, %v778, 0
  %v1059 = vsel %vm829, %v779, 0
  %v1062 = vsel %vm829, %v780, 0
  %v1065 = vsel %vm829, %v781, 0
  %v1068 = vsel %vm829, %v782, 0
  %v1071 = vsel %vm829, %v783, 0
  %v1074 = vsel %vm829, %v784, 0
  %v1077 = vsel %vm829, %v785, 0
  %v1080 = vsel %vm829, %v786, 0
  %v1083 = vsel %vm829, %v787, 0
  %v1086 = vsel %vm829, %v788, 0
  %v1089 = vsel %vm829, %v789, 0
  %v1092 = vsel %vm829, %v790, 0
  %v1095 = vsel %vm829, %v791, 0
  %v1098 = vsel %vm829, %v792, 0
  %v1101 = vsel %vm829, %v793, 0
  %v1104 = vsel %vm829, %v794, 0
  %v1107 = vsel %vm829, %v795, 0
  %v1110 = vsel %vm829, %v796, 0
  %v1113 = vsel %vm829, %v797, 0
  %v1116 = vsel %vm829, %v798, 0
  %v1119 = vsel %vm829, %v799, 0
  %v1122 = vsel %vm829, %v800, 0
  %v1125 = vsel %vm829, %v801, 0
  %v1128 = vsel %vm829, %v802, 0
  %v1131 = vsel %vm829, %v803, 0
  %v1134 = vsel %vm829, %v804, 0
  %v1137 = vsel %vm829, %v805, 0
  %v1140 = vsel %vm829, %v806, 0
  %v1143 = vsel %vm829, %v807, 0
  %v1146 = vsel %vm829, %v808, 0
  %v1149 = vsel %vm829, %v809, 0
  %v1152 = vsel %vm829, %v810, 0
  %v1155 = vsel %vm829, %v811, 0
  %v1158 = vsel %vm829, %v812, 0
  %v1161 = vsel %vm829, %v813, 0
  %v1164 = vsel %vm829, %v814, 0
  %v1167 = vsel %vm829, %v815, 0
  %v1170 = vsel %vm829, %v816, 0
  %1172 = vmatprep.subr.bf16.mxu0 0
  %1173 = vmatpush1.bf16.msra.mxu0 %v825
  %1174 = vmatprep.subr.bf16.mxu0 0
  %1175 = vmatpush1.bf16.msra.mxu0 %v826
  %1176 = vmatprep.subr.bf16.mxu0 0
  %1177 = vmatpush1.bf16.msra.mxu0 0
  %1178 = vmatprep.subr.bf16.mxu0 0
  %1179 = vmatpush1.bf16.msra.mxu0 0
  %1180 = vmatprep.subr.bf16.mxu0 0
  %1181 = vmatpush1.bf16.msra.mxu0 0
  %1182 = vmatprep.subr.bf16.mxu0 0
  %1183 = vmatpush1.bf16.msra.mxu0 0
  %1184 = vmatprep.subr.bf16.mxu0 0
  %1185 = vmatpush1.bf16.msra.mxu0 0
  %1186 = vmatprep.subr.bf16.mxu0 0
  %1187 = vmatpush1.bf16.msra.mxu0 0
  %1188 = vmatprep.subr.bf16.mxu0 0
  %1189 = vmatpush1.bf16.msra.mxu0 0
  %1190 = vmatprep.subr.bf16.mxu0 0
  %1191 = vmatpush1.bf16.msra.mxu0 0
  %1192 = vmatprep.subr.bf16.mxu0 0
  %1193 = vmatpush1.bf16.msra.mxu0 0
  %1194 = vmatprep.subr.bf16.mxu0 0
  %1195 = vmatpush1.bf16.msra.mxu0 0
  %1196 = vmatprep.subr.bf16.mxu0 0
  %1197 = vmatpush1.bf16.msra.mxu0 0
  %1198 = vmatprep.subr.bf16.mxu0 0
  %1199 = vmatpush1.bf16.msra.mxu0 0
  %1200 = vmatprep.subr.bf16.mxu0 0
  %1201 = vmatpush1.bf16.msra.mxu0 0
  %1202 = vmatprep.subr.bf16.mxu0 0
  %1203 = vmatpush1.bf16.msra.mxu0 0
  %1204 = vmatprep.mubr.bf16.mxu0 0
  %1205 = vmatmul.mubr.bf16.gmra.mrb[0].mxu0 %v831
  %v1206 = vpop.f32.mrb[0].mxu0
  %v1207 = vadd.f32 0.0, %v1206
  %v1208 = vpop.f32.mrb[0].mxu0
  %v1209 = vpop.f32.mrb[0].mxu0
  %v1210 = vadd.f32 0.0, %v1209
  %v1211 = vpop.f32.mrb[0].mxu0
  %1212 = vmatprep.mubr.bf16.mxu0 0
  %1213 = vmatmul.mubr.bf16.gmra.mrb[0].mxu0 %v834
  %v1214 = vpop.f32.mrb[0].mxu0
  %v1215 = vadd.f32 0.0, %v1214
  %v1216 = vpop.f32.mrb[0].mxu0
  %v1217 = vpop.f32.mrb[0].mxu0
  %v1218 = vadd.f32 0.0, %v1217
  %v1219 = vpop.f32.mrb[0].mxu0
  %1220 = vmatprep.mubr.bf16.mxu0 0
  %1221 = vmatmul.mubr.bf16.gmra.mrb[0].mxu0 %v837
  %v1222 = vpop.f32.mrb[0].mxu0
  %v1223 = vadd.f32 0.0, %v1222
  %v1224 = vpop.f32.mrb[0].mxu0
  %v1225 = vpop.f32.mrb[0].mxu0
  %v1226 = vadd.f32 0.0, %v1225
  %v1227 = vpop.f32.mrb[0].mxu0
  %1228 = vmatprep.mubr.bf16.mxu0 0
  %1229 = vmatmul.mubr.bf16.gmra.mrb[0].mxu0 %v840
  %v1230 = vpop.f32.mrb[0].mxu0
  %v1231 = vadd.f32 0.0, %v1230
  %v1232 = vpop.f32.mrb[0].mxu0
  %v1233 = vpop.f32.mrb[0].mxu0
  %v1234 = vadd.f32 0.0, %v1233
  %v1235 = vpop.f32.mrb[0].mxu0
  %1236 = vmatprep.mubr.bf16.mxu0 0
  %1237 = vmatmul.mubr.bf16.gmra.mrb[0].mxu0 %v843
  %v1238 = vpop.f32.mrb[0].mxu0
  %v1239 = vadd.f32 0.0, %v1238
  %v1240 = vpop.f32.mrb[0].mxu0
  %v1241 = vpop.f32.mrb[0].mxu0
  %v1242 = vadd.f32 0.0, %v1241
  %v1243 = vpop.f32.mrb[0].mxu0
  %1244 = vmatprep.mubr.bf16.mxu0 0
  %1245 = vmatmul.mubr.bf16.gmra.mrb[0].mxu0 %v846
  %v1246 = vpop.f32.mrb[0].mxu0
  %v1247 = vadd.f32 0.0, %v1246
  %v1248 = vpop.f32.mrb[0].mxu0
  %v1249 = vpop.f32.mrb[0].mxu0
  %v1250 = vadd.f32 0.0, %v1249
  %v1251 = vpop.f32.mrb[0].mxu0
  %1252 = vmatprep.mubr.bf16.mxu0 0
  %1253 = vmatmul.mubr.bf16.gmra.mrb[0].mxu0 %v849
  %v1254 = vpop.f32.mrb[0].mxu0
  %v1255 = vadd.f32 0.0, %v1254
  %v1256 = vpop.f32.mrb[0].mxu0
  %v1257 = vpop.f32.mrb[0].mxu0
  %v1258 = vadd.f32 0.0, %v1257
  %v1259 = vpop.f32.mrb[0].mxu0
  %1260 = vmatprep.mubr.bf16.mxu0 0
  %1261 = vmatmul.mubr.bf16.gmra.mrb[0].mxu0 %v852
  %v1262 = vpop.f32.mrb[0].mxu0
  %v1263 = vadd.f32 0.0, %v1262
  %v1264 = vpop.f32.mrb[0].mxu0
  %v1265 = vpop.f32.mrb[0].mxu0
  %v1266 = vadd.f32 0.0, %v1265
  %v1267 = vpop.f32.mrb[0].mxu0
  %1268 = vmatprep.mubr.bf16.mxu0 0
  %1269 = vmatmul.mubr.bf16.gmra.mrb[0].mxu0 %v855
  %v1270 = vpop.f32.mrb[0].mxu0
  %v1271 = vadd.f32 0.0, %v1270
  %v1272 = vpop.f32.mrb[0].mxu0
  %v1273 = vpop.f32.mrb[0].mxu0
  %v1274 = vadd.f32 0.0, %v1273
  %v1275 = vpop.f32.mrb[0].mxu0
  %1276 = vmatprep.mubr.bf16.mxu0 0
  %1277 = vmatmul.mubr.bf16.gmra.mrb[0].mxu0 %v858
  %v1278 = vpop.f32.mrb[0].mxu0
  %v1279 = vadd.f32 0.0, %v1278
  %v1280 = vpop.f32.mrb[0].mxu0
  %v1281 = vpop.f32.mrb[0].mxu0
  %v1282 = vadd.f32 0.0, %v1281
  %v1283 = vpop.f32.mrb[0].mxu0
  %1284 = vmatprep.mubr.bf16.mxu0 0
  %1285 = vmatmul.mubr.bf16.gmra.mrb[0].mxu0 %v861
  %v1286 = vpop.f32.mrb[0].mxu0
  %v1287 = vadd.f32 0.0, %v1286
  %v1288 = vpop.f32.mrb[0].mxu0
  %v1289 = vpop.f32.mrb[0].mxu0
  %v1290 = vadd.f32 0.0, %v1289
  %v1291 = vpop.f32.mrb[0].mxu0
  %1292 = vmatprep.mubr.bf16.mxu0 0
  %1293 = vmatmul.mubr.bf16.gmra.mrb[0].mxu0 %v864
  %v1294 = vpop.f32.mrb[0].mxu0
  %v1295 = vadd.f32 0.0, %v1294
  %v1296 = vpop.f32.mrb[0].mxu0
  %v1297 = vpop.f32.mrb[0].mxu0
  %v1298 = vadd.f32 0.0, %v1297
  %v1299 = vpop.f32.mrb[0].mxu0
  %1300 = vmatprep.mubr.bf16.mxu0 0
  %1301 = vmatmul.mubr.bf16.gmra.mrb[0].mxu0 %v867
  %v1302 = vpop.f32.mrb[0].mxu0
  %v1303 = vadd.f32 0.0, %v1302
  %v1304 = vpop.f32.mrb[0].mxu0
  %v1305 = vpop.f32.mrb[0].mxu0
  %v1306 = vadd.f32 0.0, %v1305
  %v1307 = vpop.f32.mrb[0].mxu0
  %1308 = vmatprep.mubr.bf16.mxu0 0
  %1309 = vmatmul.mubr.bf16.gmra.mrb[0].mxu0 %v870
  %v1310 = vpop.f32.mrb[0].mxu0
  %v1311 = vadd.f32 0.0, %v1310
  %v1312 = vpop.f32.mrb[0].mxu0
  %v1313 = vpop.f32.mrb[0].mxu0
  %v1314 = vadd.f32 0.0, %v1313
  %v1315 = vpop.f32.mrb[0].mxu0
  %1316 = vmatprep.mubr.bf16.mxu0 0
  %1317 = vmatmul.mubr.bf16.gmra.mrb[0].mxu0 %v873
  %v1318 = vpop.f32.mrb[0].mxu0
  %v1319 = vadd.f32 0.0, %v1318
  %v1320 = vpop.f32.mrb[0].mxu0
  %v1321 = vpop.f32.mrb[0].mxu0
  %v1322 = vadd.f32 0.0, %v1321
  %v1323 = vpop.f32.mrb[0].mxu0
  %1324 = vmatprep.mubr.bf16.mxu0 0
  %1325 = vmatmul.mubr.bf16.gmra.mrb[0].mxu0 %v876
  %v1326 = vpop.f32.mrb[0].mxu0
  %v1327 = vadd.f32 0.0, %v1326
  %v1328 = vpop.f32.mrb[0].mxu0
  %v1329 = vpop.f32.mrb[0].mxu0
  %v1330 = vadd.f32 0.0, %v1329
  %v1331 = vpop.f32.mrb[0].mxu0
  %1332 = vmatprep.mubr.bf16.mxu0 0
  %1333 = vmatmul.mubr.bf16.gmra.mrb[0].mxu0 %v879
  %v1334 = vpop.f32.mrb[0].mxu0
  %v1335 = vadd.f32 0.0, %v1334
  %v1336 = vpop.f32.mrb[0].mxu0
  %v1337 = vpop.f32.mrb[0].mxu0
  %v1338 = vadd.f32 0.0, %v1337
  %v1339 = vpop.f32.mrb[0].mxu0
  %1340 = vmatprep.mubr.bf16.mxu0 0
  %1341 = vmatmul.mubr.bf16.gmra.mrb[0].mxu0 %v882
  %v1342 = vpop.f32.mrb[0].mxu0
  %v1343 = vadd.f32 0.0, %v1342
  %v1344 = vpop.f32.mrb[0].mxu0
  %v1345 = vpop.f32.mrb[0].mxu0
  %v1346 = vadd.f32 0.0, %v1345
  %v1347 = vpop.f32.mrb[0].mxu0
  %1348 = vmatprep.mubr.bf16.mxu0 0
  %1349 = vmatmul.mubr.bf16.gmra.mrb[0].mxu0 %v885
  %v1350 = vpop.f32.mrb[0].mxu0
  %v1351 = vadd.f32 0.0, %v1350
  %v1352 = vpop.f32.mrb[0].mxu0
  %v1353 = vpop.f32.mrb[0].mxu0
  %v1354 = vadd.f32 0.0, %v1353
  %v1355 = vpop.f32.mrb[0].mxu0
  %1356 = vmatprep.mubr.bf16.mxu0 0
  %1357 = vmatmul.mubr.bf16.gmra.mrb[0].mxu0 %v888
  %v1358 = vpop.f32.mrb[0].mxu0
  %v1359 = vadd.f32 0.0, %v1358
  %v1360 = vpop.f32.mrb[0].mxu0
  %v1361 = vpop.f32.mrb[0].mxu0
  %v1362 = vadd.f32 0.0, %v1361
  %v1363 = vpop.f32.mrb[0].mxu0
  %1364 = vmatprep.mubr.bf16.mxu0 0
  %1365 = vmatmul.mubr.bf16.gmra.mrb[0].mxu0 %v891
  %v1366 = vpop.f32.mrb[0].mxu0
  %v1367 = vadd.f32 0.0, %v1366
  %v1368 = vpop.f32.mrb[0].mxu0
  %v1369 = vpop.f32.mrb[0].mxu0
  %v1370 = vadd.f32 0.0, %v1369
  %v1371 = vpop.f32.mrb[0].mxu0
  %1372 = vmatprep.mubr.bf16.mxu0 0
  %1373 = vmatmul.mubr.bf16.gmra.mrb[0].mxu0 %v894
  %v1374 = vpop.f32.mrb[0].mxu0
  %v1375 = vadd.f32 0.0, %v1374
  %v1376 = vpop.f32.mrb[0].mxu0
  %v1377 = vpop.f32.mrb[0].mxu0
  %v1378 = vadd.f32 0.0, %v1377
  %v1379 = vpop.f32.mrb[0].mxu0
  %1380 = vmatprep.mubr.bf16.mxu0 0
  %1381 = vmatmul.mubr.bf16.gmra.mrb[0].mxu0 %v897
  %v1382 = vpop.f32.mrb[0].mxu0
  %v1383 = vadd.f32 0.0, %v1382
  %v1384 = vpop.f32.mrb[0].mxu0
  %v1385 = vpop.f32.mrb[0].mxu0
  %v1386 = vadd.f32 0.0, %v1385
  %v1387 = vpop.f32.mrb[0].mxu0
  %1388 = vmatprep.mubr.bf16.mxu0 0
  %1389 = vmatmul.mubr.bf16.gmra.mrb[0].mxu0 %v900
  %v1390 = vpop.f32.mrb[0].mxu0
  %v1391 = vadd.f32 0.0, %v1390
  %v1392 = vpop.f32.mrb[0].mxu0
  %v1393 = vpop.f32.mrb[0].mxu0
  %v1394 = vadd.f32 0.0, %v1393
  %v1395 = vpop.f32.mrb[0].mxu0
  %1396 = vmatprep.mubr.bf16.mxu0 0
  %1397 = vmatmul.mubr.bf16.gmra.mrb[0].mxu0 %v903
  %v1398 = vpop.f32.mrb[0].mxu0
  %v1399 = vadd.f32 0.0, %v1398
  %v1400 = vpop.f32.mrb[0].mxu0
  %v1401 = vpop.f32.mrb[0].mxu0
  %v1402 = vadd.f32 0.0, %v1401
  %v1403 = vpop.f32.mrb[0].mxu0
  %1404 = vmatprep.mubr.bf16.mxu0 0
  %1405 = vmatmul.mubr.bf16.gmra.mrb[0].mxu0 %v906
  %v1406 = vpop.f32.mrb[0].mxu0
  %v1407 = vadd.f32 0.0, %v1406
  %v1408 = vpop.f32.mrb[0].mxu0
  %v1409 = vpop.f32.mrb[0].mxu0
  %v1410 = vadd.f32 0.0, %v1409
  %v1411 = vpop.f32.mrb[0].mxu0
  %1412 = vmatprep.mubr.bf16.mxu0 0
  %1413 = vmatmul.mubr.bf16.gmra.mrb[0].mxu0 %v909
  %v1414 = vpop.f32.mrb[0].mxu0
  %v1415 = vadd.f32 0.0, %v1414
  %v1416 = vpop.f32.mrb[0].mxu0
  %v1417 = vpop.f32.mrb[0].mxu0
  %v1418 = vadd.f32 0.0, %v1417
  %v1419 = vpop.f32.mrb[0].mxu0
  %1420 = vmatprep.mubr.bf16.mxu0 0
  %1421 = vmatmul.mubr.bf16.gmra.mrb[0].mxu0 %v912
  %v1422 = vpop.f32.mrb[0].mxu0
  %v1423 = vadd.f32 0.0, %v1422
  %v1424 = vpop.f32.mrb[0].mxu0
  %v1425 = vpop.f32.mrb[0].mxu0
  %v1426 = vadd.f32 0.0, %v1425
  %v1427 = vpop.f32.mrb[0].mxu0
  %1428 = vmatprep.mubr.bf16.mxu0 0
  %1429 = vmatmul.mubr.bf16.gmra.mrb[0].mxu0 %v915
  %v1430 = vpop.f32.mrb[0].mxu0
  %v1431 = vadd.f32 0.0, %v1430
  %v1432 = vpop.f32.mrb[0].mxu0
  %v1433 = vpop.f32.mrb[0].mxu0
  %v1434 = vadd.f32 0.0, %v1433
  %v1435 = vpop.f32.mrb[0].mxu0
  %1436 = vmatprep.mubr.bf16.mxu0 0
  %1437 = vmatmul.mubr.bf16.gmra.mrb[0].mxu0 %v918
  %v1438 = vpop.f32.mrb[0].mxu0
  %v1439 = vadd.f32 0.0, %v1438
  %v1440 = vpop.f32.mrb[0].mxu0
  %v1441 = vpop.f32.mrb[0].mxu0
  %v1442 = vadd.f32 0.0, %v1441
  %v1443 = vpop.f32.mrb[0].mxu0
  %1444 = vmatprep.mubr.bf16.mxu0 0
  %1445 = vmatmul.mubr.bf16.gmra.mrb[0].mxu0 %v921
  %v1446 = vpop.f32.mrb[0].mxu0
  %v1447 = vadd.f32 0.0, %v1446
  %v1448 = vpop.f32.mrb[0].mxu0
  %v1449 = vpop.f32.mrb[0].mxu0
  %v1450 = vadd.f32 0.0, %v1449
  %v1451 = vpop.f32.mrb[0].mxu0
  %1452 = vmatprep.mubr.bf16.mxu0 0
  %1453 = vmatmul.mubr.bf16.gmra.mrb[0].mxu0 %v924
  %v1454 = vpop.f32.mrb[0].mxu0
  %v1455 = vadd.f32 0.0, %v1454
  %v1456 = vpop.f32.mrb[0].mxu0
  %v1457 = vpop.f32.mrb[0].mxu0
  %v1458 = vadd.f32 0.0, %v1457
  %v1459 = vpop.f32.mrb[0].mxu0
  %1460 = vmatprep.mubr.bf16.mxu0 0
  %1461 = vmatmul.mubr.bf16.gmra.mrb[0].mxu0 %v927
  %v1462 = vpop.f32.mrb[0].mxu0
  %v1463 = vadd.f32 0.0, %v1462
  %v1464 = vpop.f32.mrb[0].mxu0
  %v1465 = vpop.f32.mrb[0].mxu0
  %v1466 = vadd.f32 0.0, %v1465
  %v1467 = vpop.f32.mrb[0].mxu0
  %1468 = vmatprep.mubr.bf16.mxu0 0
  %1469 = vmatmul.mubr.bf16.gmra.mrb[0].mxu0 %v930
  %v1470 = vpop.f32.mrb[0].mxu0
  %v1471 = vadd.f32 0.0, %v1470
  %v1472 = vpop.f32.mrb[0].mxu0
  %v1473 = vpop.f32.mrb[0].mxu0
  %v1474 = vadd.f32 0.0, %v1473
  %v1475 = vpop.f32.mrb[0].mxu0
  %1476 = vmatprep.mubr.bf16.mxu0 0
  %1477 = vmatmul.mubr.bf16.gmra.mrb[0].mxu0 %v933
  %v1478 = vpop.f32.mrb[0].mxu0
  %v1479 = vadd.f32 0.0, %v1478
  %v1480 = vpop.f32.mrb[0].mxu0
  %v1481 = vpop.f32.mrb[0].mxu0
  %v1482 = vadd.f32 0.0, %v1481
  %v1483 = vpop.f32.mrb[0].mxu0
  %1484 = vmatprep.mubr.bf16.mxu0 0
  %1485 = vmatmul.mubr.bf16.gmra.mrb[0].mxu0 %v936
  %v1486 = vpop.f32.mrb[0].mxu0
  %v1487 = vadd.f32 0.0, %v1486
  %v1488 = vpop.f32.mrb[0].mxu0
  %v1489 = vpop.f32.mrb[0].mxu0
  %v1490 = vadd.f32 0.0, %v1489
  %v1491 = vpop.f32.mrb[0].mxu0
  %1492 = vmatprep.mubr.bf16.mxu0 0
  %1493 = vmatmul.mubr.bf16.gmra.mrb[0].mxu0 %v939
  %v1494 = vpop.f32.mrb[0].mxu0
  %v1495 = vadd.f32 0.0, %v1494
  %v1496 = vpop.f32.mrb[0].mxu0
  %v1497 = vpop.f32.mrb[0].mxu0
  %v1498 = vadd.f32 0.0, %v1497
  %v1499 = vpop.f32.mrb[0].mxu0
  %1500 = vmatprep.mubr.bf16.mxu0 0
  %1501 = vmatmul.mubr.bf16.gmra.mrb[0].mxu0 %v942
  %v1502 = vpop.f32.mrb[0].mxu0
  %v1503 = vadd.f32 0.0, %v1502
  %v1504 = vpop.f32.mrb[0].mxu0
  %v1505 = vpop.f32.mrb[0].mxu0
  %v1506 = vadd.f32 0.0, %v1505
  %v1507 = vpop.f32.mrb[0].mxu0
  %1508 = vmatprep.mubr.bf16.mxu0 0
  %1509 = vmatmul.mubr.bf16.gmra.mrb[0].mxu0 %v945
  %v1510 = vpop.f32.mrb[0].mxu0
  %v1511 = vadd.f32 0.0, %v1510
  %v1512 = vpop.f32.mrb[0].mxu0
  %v1513 = vpop.f32.mrb[0].mxu0
  %v1514 = vadd.f32 0.0, %v1513
  %v1515 = vpop.f32.mrb[0].mxu0
  %1516 = vmatprep.mubr.bf16.mxu0 0
  %1517 = vmatmul.mubr.bf16.gmra.mrb[0].mxu0 %v948
  %v1518 = vpop.f32.mrb[0].mxu0
  %v1519 = vadd.f32 0.0, %v1518
  %v1520 = vpop.f32.mrb[0].mxu0
  %v1521 = vpop.f32.mrb[0].mxu0
  %v1522 = vadd.f32 0.0, %v1521
  %v1523 = vpop.f32.mrb[0].mxu0
  %1524 = vmatprep.mubr.bf16.mxu0 0
  %1525 = vmatmul.mubr.bf16.gmra.mrb[0].mxu0 %v951
  %v1526 = vpop.f32.mrb[0].mxu0
  %v1527 = vadd.f32 0.0, %v1526
  %v1528 = vpop.f32.mrb[0].mxu0
  %v1529 = vpop.f32.mrb[0].mxu0
  %v1530 = vadd.f32 0.0, %v1529
  %v1531 = vpop.f32.mrb[0].mxu0
  %1532 = vmatprep.mubr.bf16.mxu0 0
  %1533 = vmatmul.mubr.bf16.gmra.mrb[0].mxu0 %v954
  %v1534 = vpop.f32.mrb[0].mxu0
  %v1535 = vadd.f32 0.0, %v1534
  %v1536 = vpop.f32.mrb[0].mxu0
  %v1537 = vpop.f32.mrb[0].mxu0
  %v1538 = vadd.f32 0.0, %v1537
  %v1539 = vpop.f32.mrb[0].mxu0
  %1540 = vmatprep.mubr.bf16.mxu0 0
  %1541 = vmatmul.mubr.bf16.gmra.mrb[0].mxu0 %v957
  %v1542 = vpop.f32.mrb[0].mxu0
  %v1543 = vadd.f32 0.0, %v1542
  %v1544 = vpop.f32.mrb[0].mxu0
  %v1545 = vpop.f32.mrb[0].mxu0
  %v1546 = vadd.f32 0.0, %v1545
  %v1547 = vpop.f32.mrb[0].mxu0
  %1548 = vmatprep.mubr.bf16.mxu0 0
  %1549 = vmatmul.mubr.bf16.gmra.mrb[0].mxu0 %v960
  %v1550 = vpop.f32.mrb[0].mxu0
  %v1551 = vadd.f32 0.0, %v1550
  %v1552 = vpop.f32.mrb[0].mxu0
  %v1553 = vpop.f32.mrb[0].mxu0
  %v1554 = vadd.f32 0.0, %v1553
  %v1555 = vpop.f32.mrb[0].mxu0
  %1556 = vmatprep.mubr.bf16.mxu0 0
  %1557 = vmatmul.mubr.bf16.gmra.mrb[0].mxu0 %v963
  %v1558 = vpop.f32.mrb[0].mxu0
  %v1559 = vadd.f32 0.0, %v1558
  %v1560 = vpop.f32.mrb[0].mxu0
  %v1561 = vpop.f32.mrb[0].mxu0
  %v1562 = vadd.f32 0.0, %v1561
  %v1563 = vpop.f32.mrb[0].mxu0
  %1564 = vmatprep.mubr.bf16.mxu0 0
  %1565 = vmatmul.mubr.bf16.gmra.mrb[0].mxu0 %v966
  %v1566 = vpop.f32.mrb[0].mxu0
  %v1567 = vadd.f32 0.0, %v1566
  %v1568 = vpop.f32.mrb[0].mxu0
  %v1569 = vpop.f32.mrb[0].mxu0
  %v1570 = vadd.f32 0.0, %v1569
  %v1571 = vpop.f32.mrb[0].mxu0
  %1572 = vmatprep.mubr.bf16.mxu0 0
  %1573 = vmatmul.mubr.bf16.gmra.mrb[0].mxu0 %v969
  %v1574 = vpop.f32.mrb[0].mxu0
  %v1575 = vadd.f32 0.0, %v1574
  %v1576 = vpop.f32.mrb[0].mxu0
  %v1577 = vpop.f32.mrb[0].mxu0
  %v1578 = vadd.f32 0.0, %v1577
  %v1579 = vpop.f32.mrb[0].mxu0
  %1580 = vmatprep.mubr.bf16.mxu0 0
  %1581 = vmatmul.mubr.bf16.gmra.mrb[0].mxu0 %v972
  %v1582 = vpop.f32.mrb[0].mxu0
  %v1583 = vadd.f32 0.0, %v1582
  %v1584 = vpop.f32.mrb[0].mxu0
  %v1585 = vpop.f32.mrb[0].mxu0
  %v1586 = vadd.f32 0.0, %v1585
  %v1587 = vpop.f32.mrb[0].mxu0
  %1588 = vmatprep.mubr.bf16.mxu0 0
  %1589 = vmatmul.mubr.bf16.gmra.mrb[0].mxu0 %v975
  %v1590 = vpop.f32.mrb[0].mxu0
  %v1591 = vadd.f32 0.0, %v1590
  %v1592 = vpop.f32.mrb[0].mxu0
  %v1593 = vpop.f32.mrb[0].mxu0
  %v1594 = vadd.f32 0.0, %v1593
  %v1595 = vpop.f32.mrb[0].mxu0
  %1596 = vmatprep.mubr.bf16.mxu0 0
  %1597 = vmatmul.mubr.bf16.gmra.mrb[0].mxu0 %v978
  %v1598 = vpop.f32.mrb[0].mxu0
  %v1599 = vadd.f32 0.0, %v1598
  %v1600 = vpop.f32.mrb[0].mxu0
  %v1601 = vpop.f32.mrb[0].mxu0
  %v1602 = vadd.f32 0.0, %v1601
  %v1603 = vpop.f32.mrb[0].mxu0
  %1604 = vmatprep.mubr.bf16.mxu0 0
  %1605 = vmatmul.mubr.bf16.gmra.mrb[0].mxu0 %v981
  %v1606 = vpop.f32.mrb[0].mxu0
  %v1607 = vadd.f32 0.0, %v1606
  %v1608 = vpop.f32.mrb[0].mxu0
  %v1609 = vpop.f32.mrb[0].mxu0
  %v1610 = vadd.f32 0.0, %v1609
  %v1611 = vpop.f32.mrb[0].mxu0
  %1612 = vmatprep.mubr.bf16.mxu0 0
  %1613 = vmatmul.mubr.bf16.gmra.mrb[0].mxu0 %v984
  %v1614 = vpop.f32.mrb[0].mxu0
  %v1615 = vadd.f32 0.0, %v1614
  %v1616 = vpop.f32.mrb[0].mxu0
  %v1617 = vpop.f32.mrb[0].mxu0
  %v1618 = vadd.f32 0.0, %v1617
  %v1619 = vpop.f32.mrb[0].mxu0
  %1620 = vmatprep.mubr.bf16.mxu0 0
  %1621 = vmatmul.mubr.bf16.gmra.mrb[0].mxu0 %v987
  %v1622 = vpop.f32.mrb[0].mxu0
  %v1623 = vadd.f32 0.0, %v1622
  %v1624 = vpop.f32.mrb[0].mxu0
  %v1625 = vpop.f32.mrb[0].mxu0
  %v1626 = vadd.f32 0.0, %v1625
  %v1627 = vpop.f32.mrb[0].mxu0
  %1628 = vmatprep.mubr.bf16.mxu0 0
  %1629 = vmatmul.mubr.bf16.gmra.mrb[0].mxu0 %v990
  %v1630 = vpop.f32.mrb[0].mxu0
  %v1631 = vadd.f32 0.0, %v1630
  %v1632 = vpop.f32.mrb[0].mxu0
  %v1633 = vpop.f32.mrb[0].mxu0
  %v1634 = vadd.f32 0.0, %v1633
  %v1635 = vpop.f32.mrb[0].mxu0
  %1636 = vmatprep.mubr.bf16.mxu0 0
  %1637 = vmatmul.mubr.bf16.gmra.mrb[0].mxu0 %v993
  %v1638 = vpop.f32.mrb[0].mxu0
  %v1639 = vadd.f32 0.0, %v1638
  %v1640 = vpop.f32.mrb[0].mxu0
  %v1641 = vpop.f32.mrb[0].mxu0
  %v1642 = vadd.f32 0.0, %v1641
  %v1643 = vpop.f32.mrb[0].mxu0
  %1644 = vmatprep.mubr.bf16.mxu0 0
  %1645 = vmatmul.mubr.bf16.gmra.mrb[0].mxu0 %v996
  %v1646 = vpop.f32.mrb[0].mxu0
  %v1647 = vadd.f32 0.0, %v1646
  %v1648 = vpop.f32.mrb[0].mxu0
  %v1649 = vpop.f32.mrb[0].mxu0
  %v1650 = vadd.f32 0.0, %v1649
  %v1651 = vpop.f32.mrb[0].mxu0
  %1652 = vmatprep.mubr.bf16.mxu0 0
  %1653 = vmatmul.mubr.bf16.gmra.mrb[0].mxu0 %v999
  %v1654 = vpop.f32.mrb[0].mxu0
  %v1655 = vadd.f32 0.0, %v1654
  %v1656 = vpop.f32.mrb[0].mxu0
  %v1657 = vpop.f32.mrb[0].mxu0
  %v1658 = vadd.f32 0.0, %v1657
  %v1659 = vpop.f32.mrb[0].mxu0
  %1660 = vmatprep.mubr.bf16.mxu0 0
  %1661 = vmatmul.mubr.bf16.gmra.mrb[0].mxu0 %v1002
  %v1662 = vpop.f32.mrb[0].mxu0
  %v1663 = vadd.f32 0.0, %v1662
  %v1664 = vpop.f32.mrb[0].mxu0
  %v1665 = vpop.f32.mrb[0].mxu0
  %v1666 = vadd.f32 0.0, %v1665
  %v1667 = vpop.f32.mrb[0].mxu0
  %1668 = vmatprep.mubr.bf16.mxu0 0
  %1669 = vmatmul.mubr.bf16.gmra.mrb[0].mxu0 %v1005
  %v1670 = vpop.f32.mrb[0].mxu0
  %v1671 = vadd.f32 0.0, %v1670
  %v1672 = vpop.f32.mrb[0].mxu0
  %v1673 = vpop.f32.mrb[0].mxu0
  %v1674 = vadd.f32 0.0, %v1673
  %v1675 = vpop.f32.mrb[0].mxu0
  %1676 = vmatprep.mubr.bf16.mxu0 0
  %1677 = vmatmul.mubr.bf16.gmra.mrb[0].mxu0 %v1008
  %v1678 = vpop.f32.mrb[0].mxu0
  %v1679 = vadd.f32 0.0, %v1678
  %v1680 = vpop.f32.mrb[0].mxu0
  %v1681 = vpop.f32.mrb[0].mxu0
  %v1682 = vadd.f32 0.0, %v1681
  %v1683 = vpop.f32.mrb[0].mxu0
  %1684 = vmatprep.mubr.bf16.mxu0 0
  %1685 = vmatmul.mubr.bf16.gmra.mrb[0].mxu0 %v1011
  %v1686 = vpop.f32.mrb[0].mxu0
  %v1687 = vadd.f32 0.0, %v1686
  %v1688 = vpop.f32.mrb[0].mxu0
  %v1689 = vpop.f32.mrb[0].mxu0
  %v1690 = vadd.f32 0.0, %v1689
  %v1691 = vpop.f32.mrb[0].mxu0
  %1692 = vmatprep.mubr.bf16.mxu0 0
  %1693 = vmatmul.mubr.bf16.gmra.mrb[0].mxu0 %v1014
  %v1694 = vpop.f32.mrb[0].mxu0
  %v1695 = vadd.f32 0.0, %v1694
  %v1696 = vpop.f32.mrb[0].mxu0
  %v1697 = vpop.f32.mrb[0].mxu0
  %v1698 = vadd.f32 0.0, %v1697
  %v1699 = vpop.f32.mrb[0].mxu0
  %1700 = vmatprep.mubr.bf16.mxu0 0
  %1701 = vmatmul.mubr.bf16.gmra.mrb[0].mxu0 %v1017
  %v1702 = vpop.f32.mrb[0].mxu0
  %v1703 = vadd.f32 0.0, %v1702
  %v1704 = vpop.f32.mrb[0].mxu0
  %v1705 = vpop.f32.mrb[0].mxu0
  %v1706 = vadd.f32 0.0, %v1705
  %v1707 = vpop.f32.mrb[0].mxu0
  %1708 = vmatprep.mubr.bf16.mxu0 0
  %1709 = vmatmul.mubr.bf16.gmra.mrb[0].mxu0 %v1020
  %v1710 = vpop.f32.mrb[0].mxu0
  %v1711 = vadd.f32 0.0, %v1710
  %v1712 = vpop.f32.mrb[0].mxu0
  %v1713 = vpop.f32.mrb[0].mxu0
  %v1714 = vadd.f32 0.0, %v1713
  %v1715 = vpop.f32.mrb[0].mxu0
  %1716 = vmatprep.mubr.bf16.mxu0 0
  %1717 = vmatmul.mubr.bf16.gmra.mrb[0].mxu0 %v1023
  %v1718 = vpop.f32.mrb[0].mxu0
  %v1719 = vadd.f32 0.0, %v1718
  %v1720 = vpop.f32.mrb[0].mxu0
  %v1721 = vpop.f32.mrb[0].mxu0
  %v1722 = vadd.f32 0.0, %v1721
  %v1723 = vpop.f32.mrb[0].mxu0
  %1724 = vmatprep.mubr.bf16.mxu0 0
  %1725 = vmatmul.mubr.bf16.gmra.mrb[0].mxu0 %v1026
  %v1726 = vpop.f32.mrb[0].mxu0
  %v1727 = vadd.f32 0.0, %v1726
  %v1728 = vpop.f32.mrb[0].mxu0
  %v1729 = vpop.f32.mrb[0].mxu0
  %v1730 = vadd.f32 0.0, %v1729
  %v1731 = vpop.f32.mrb[0].mxu0
  %1732 = vmatprep.mubr.bf16.mxu0 0
  %1733 = vmatmul.mubr.bf16.gmra.mrb[0].mxu0 %v1029
  %v1734 = vpop.f32.mrb[0].mxu0
  %v1735 = vadd.f32 0.0, %v1734
  %v1736 = vpop.f32.mrb[0].mxu0
  %v1737 = vpop.f32.mrb[0].mxu0
  %v1738 = vadd.f32 0.0, %v1737
  %v1739 = vpop.f32.mrb[0].mxu0
  %1740 = vmatprep.mubr.bf16.mxu0 0
  %1741 = vmatmul.mubr.bf16.gmra.mrb[0].mxu0 %v1032
  %v1742 = vpop.f32.mrb[0].mxu0
  %v1743 = vadd.f32 0.0, %v1742
  %v1744 = vpop.f32.mrb[0].mxu0
  %v1745 = vpop.f32.mrb[0].mxu0
  %v1746 = vadd.f32 0.0, %v1745
  %v1747 = vpop.f32.mrb[0].mxu0
  %1748 = vmatprep.mubr.bf16.mxu0 0
  %1749 = vmatmul.mubr.bf16.gmra.mrb[0].mxu0 %v1035
  %v1750 = vpop.f32.mrb[0].mxu0
  %v1751 = vadd.f32 0.0, %v1750
  %v1752 = vpop.f32.mrb[0].mxu0
  %v1753 = vpop.f32.mrb[0].mxu0
  %v1754 = vadd.f32 0.0, %v1753
  %v1755 = vpop.f32.mrb[0].mxu0
  %1756 = vmatprep.mubr.bf16.mxu0 0
  %1757 = vmatmul.mubr.bf16.gmra.mrb[0].mxu0 %v1038
  %v1758 = vpop.f32.mrb[0].mxu0
  %v1759 = vadd.f32 0.0, %v1758
  %v1760 = vpop.f32.mrb[0].mxu0
  %v1761 = vpop.f32.mrb[0].mxu0
  %v1762 = vadd.f32 0.0, %v1761
  %v1763 = vpop.f32.mrb[0].mxu0
  %1764 = vmatprep.mubr.bf16.mxu0 0
  %1765 = vmatmul.mubr.bf16.gmra.mrb[0].mxu0 %v1041
  %v1766 = vpop.f32.mrb[0].mxu0
  %v1767 = vadd.f32 0.0, %v1766
  %v1768 = vpop.f32.mrb[0].mxu0
  %v1769 = vpop.f32.mrb[0].mxu0
  %v1770 = vadd.f32 0.0, %v1769
  %v1771 = vpop.f32.mrb[0].mxu0
  %1772 = vmatprep.mubr.bf16.mxu0 0
  %1773 = vmatmul.mubr.bf16.gmra.mrb[0].mxu0 %v1044
  %v1774 = vpop.f32.mrb[0].mxu0
  %v1775 = vadd.f32 0.0, %v1774
  %v1776 = vpop.f32.mrb[0].mxu0
  %v1777 = vpop.f32.mrb[0].mxu0
  %v1778 = vadd.f32 0.0, %v1777
  %v1779 = vpop.f32.mrb[0].mxu0
  %1780 = vmatprep.mubr.bf16.mxu0 0
  %1781 = vmatmul.mubr.bf16.gmra.mrb[0].mxu0 %v1047
  %v1782 = vpop.f32.mrb[0].mxu0
  %v1783 = vadd.f32 0.0, %v1782
  %v1784 = vpop.f32.mrb[0].mxu0
  %v1785 = vpop.f32.mrb[0].mxu0
  %v1786 = vadd.f32 0.0, %v1785
  %v1787 = vpop.f32.mrb[0].mxu0
  %1788 = vmatprep.mubr.bf16.mxu0 0
  %1789 = vmatmul.mubr.bf16.gmra.mrb[0].mxu0 %v1050
  %v1790 = vpop.f32.mrb[0].mxu0
  %v1791 = vadd.f32 0.0, %v1790
  %v1792 = vpop.f32.mrb[0].mxu0
  %v1793 = vpop.f32.mrb[0].mxu0
  %v1794 = vadd.f32 0.0, %v1793
  %v1795 = vpop.f32.mrb[0].mxu0
  %1796 = vmatprep.mubr.bf16.mxu0 0
  %1797 = vmatmul.mubr.bf16.gmra.mrb[0].mxu0 %v1053
  %v1798 = vpop.f32.mrb[0].mxu0
  %v1799 = vadd.f32 0.0, %v1798
  %v1800 = vpop.f32.mrb[0].mxu0
  %v1801 = vpop.f32.mrb[0].mxu0
  %v1802 = vadd.f32 0.0, %v1801
  %v1803 = vpop.f32.mrb[0].mxu0
  %1804 = vmatprep.mubr.bf16.mxu0 0
  %1805 = vmatmul.mubr.bf16.gmra.mrb[0].mxu0 %v1056
  %v1806 = vpop.f32.mrb[0].mxu0
  %v1807 = vadd.f32 0.0, %v1806
  %v1808 = vpop.f32.mrb[0].mxu0
  %v1809 = vpop.f32.mrb[0].mxu0
  %v1810 = vadd.f32 0.0, %v1809
  %v1811 = vpop.f32.mrb[0].mxu0
  %1812 = vmatprep.mubr.bf16.mxu0 0
  %1813 = vmatmul.mubr.bf16.gmra.mrb[0].mxu0 %v1059
  %v1814 = vpop.f32.mrb[0].mxu0
  %v1815 = vadd.f32 0.0, %v1814
  %v1816 = vpop.f32.mrb[0].mxu0
  %v1817 = vpop.f32.mrb[0].mxu0
  %v1818 = vadd.f32 0.0, %v1817
  %v1819 = vpop.f32.mrb[0].mxu0
  %1820 = vmatprep.mubr.bf16.mxu0 0
  %1821 = vmatmul.mubr.bf16.gmra.mrb[0].mxu0 %v1062
  %v1822 = vpop.f32.mrb[0].mxu0
  %v1823 = vadd.f32 0.0, %v1822
  %v1824 = vpop.f32.mrb[0].mxu0
  %v1825 = vpop.f32.mrb[0].mxu0
  %v1826 = vadd.f32 0.0, %v1825
  %v1827 = vpop.f32.mrb[0].mxu0
  %1828 = vmatprep.mubr.bf16.mxu0 0
  %1829 = vmatmul.mubr.bf16.gmra.mrb[0].mxu0 %v1065
  %v1830 = vpop.f32.mrb[0].mxu0
  %v1831 = vadd.f32 0.0, %v1830
  %v1832 = vpop.f32.mrb[0].mxu0
  %v1833 = vpop.f32.mrb[0].mxu0
  %v1834 = vadd.f32 0.0, %v1833
  %v1835 = vpop.f32.mrb[0].mxu0
  %1836 = vmatprep.mubr.bf16.mxu0 0
  %1837 = vmatmul.mubr.bf16.gmra.mrb[0].mxu0 %v1068
  %v1838 = vpop.f32.mrb[0].mxu0
  %v1839 = vadd.f32 0.0, %v1838
  %v1840 = vpop.f32.mrb[0].mxu0
  %v1841 = vpop.f32.mrb[0].mxu0
  %v1842 = vadd.f32 0.0, %v1841
  %v1843 = vpop.f32.mrb[0].mxu0
  %1844 = vmatprep.mubr.bf16.mxu0 0
  %1845 = vmatmul.mubr.bf16.gmra.mrb[0].mxu0 %v1071
  %v1846 = vpop.f32.mrb[0].mxu0
  %v1847 = vadd.f32 0.0, %v1846
  %v1848 = vpop.f32.mrb[0].mxu0
  %v1849 = vpop.f32.mrb[0].mxu0
  %v1850 = vadd.f32 0.0, %v1849
  %v1851 = vpop.f32.mrb[0].mxu0
  %1852 = vmatprep.mubr.bf16.mxu0 0
  %1853 = vmatmul.mubr.bf16.gmra.mrb[0].mxu0 %v1074
  %v1854 = vpop.f32.mrb[0].mxu0
  %v1855 = vadd.f32 0.0, %v1854
  %v1856 = vpop.f32.mrb[0].mxu0
  %v1857 = vpop.f32.mrb[0].mxu0
  %v1858 = vadd.f32 0.0, %v1857
  %v1859 = vpop.f32.mrb[0].mxu0
  %1860 = vmatprep.mubr.bf16.mxu0 0
  %1861 = vmatmul.mubr.bf16.gmra.mrb[0].mxu0 %v1077
  %v1862 = vpop.f32.mrb[0].mxu0
  %v1863 = vadd.f32 0.0, %v1862
  %v1864 = vpop.f32.mrb[0].mxu0
  %v1865 = vpop.f32.mrb[0].mxu0
  %v1866 = vadd.f32 0.0, %v1865
  %v1867 = vpop.f32.mrb[0].mxu0
  %1868 = vmatprep.mubr.bf16.mxu0 0
  %1869 = vmatmul.mubr.bf16.gmra.mrb[0].mxu0 %v1080
  %v1870 = vpop.f32.mrb[0].mxu0
  %v1871 = vadd.f32 0.0, %v1870
  %v1872 = vpop.f32.mrb[0].mxu0
  %v1873 = vpop.f32.mrb[0].mxu0
  %v1874 = vadd.f32 0.0, %v1873
  %v1875 = vpop.f32.mrb[0].mxu0
  %1876 = vmatprep.mubr.bf16.mxu0 0
  %1877 = vmatmul.mubr.bf16.gmra.mrb[0].mxu0 %v1083
  %v1878 = vpop.f32.mrb[0].mxu0
  %v1879 = vadd.f32 0.0, %v1878
  %v1880 = vpop.f32.mrb[0].mxu0
  %v1881 = vpop.f32.mrb[0].mxu0
  %v1882 = vadd.f32 0.0, %v1881
  %v1883 = vpop.f32.mrb[0].mxu0
  %1884 = vmatprep.mubr.bf16.mxu0 0
  %1885 = vmatmul.mubr.bf16.gmra.mrb[0].mxu0 %v1086
  %v1886 = vpop.f32.mrb[0].mxu0
  %v1887 = vadd.f32 0.0, %v1886
  %v1888 = vpop.f32.mrb[0].mxu0
  %v1889 = vpop.f32.mrb[0].mxu0
  %v1890 = vadd.f32 0.0, %v1889
  %v1891 = vpop.f32.mrb[0].mxu0
  %1892 = vmatprep.mubr.bf16.mxu0 0
  %1893 = vmatmul.mubr.bf16.gmra.mrb[0].mxu0 %v1089
  %v1894 = vpop.f32.mrb[0].mxu0
  %v1895 = vadd.f32 0.0, %v1894
  %v1896 = vpop.f32.mrb[0].mxu0
  %v1897 = vpop.f32.mrb[0].mxu0
  %v1898 = vadd.f32 0.0, %v1897
  %v1899 = vpop.f32.mrb[0].mxu0
  %1900 = vmatprep.mubr.bf16.mxu0 0
  %1901 = vmatmul.mubr.bf16.gmra.mrb[0].mxu0 %v1092
  %v1902 = vpop.f32.mrb[0].mxu0
  %v1903 = vadd.f32 0.0, %v1902
  %v1904 = vpop.f32.mrb[0].mxu0
  %v1905 = vpop.f32.mrb[0].mxu0
  %v1906 = vadd.f32 0.0, %v1905
  %v1907 = vpop.f32.mrb[0].mxu0
  %1908 = vmatprep.mubr.bf16.mxu0 0
  %1909 = vmatmul.mubr.bf16.gmra.mrb[0].mxu0 %v1095
  %v1910 = vpop.f32.mrb[0].mxu0
  %v1911 = vadd.f32 0.0, %v1910
  %v1912 = vpop.f32.mrb[0].mxu0
  %v1913 = vpop.f32.mrb[0].mxu0
  %v1914 = vadd.f32 0.0, %v1913
  %v1915 = vpop.f32.mrb[0].mxu0
  %1916 = vmatprep.mubr.bf16.mxu0 0
  %1917 = vmatmul.mubr.bf16.gmra.mrb[0].mxu0 %v1098
  %v1918 = vpop.f32.mrb[0].mxu0
  %v1919 = vadd.f32 0.0, %v1918
  %v1920 = vpop.f32.mrb[0].mxu0
  %v1921 = vpop.f32.mrb[0].mxu0
  %v1922 = vadd.f32 0.0, %v1921
  %v1923 = vpop.f32.mrb[0].mxu0
  %1924 = vmatprep.mubr.bf16.mxu0 0
  %1925 = vmatmul.mubr.bf16.gmra.mrb[0].mxu0 %v1101
  %v1926 = vpop.f32.mrb[0].mxu0
  %v1927 = vadd.f32 0.0, %v1926
  %v1928 = vpop.f32.mrb[0].mxu0
  %v1929 = vpop.f32.mrb[0].mxu0
  %v1930 = vadd.f32 0.0, %v1929
  %v1931 = vpop.f32.mrb[0].mxu0
  %1932 = vmatprep.mubr.bf16.mxu0 0
  %1933 = vmatmul.mubr.bf16.gmra.mrb[0].mxu0 %v1104
  %v1934 = vpop.f32.mrb[0].mxu0
  %v1935 = vadd.f32 0.0, %v1934
  %v1936 = vpop.f32.mrb[0].mxu0
  %v1937 = vpop.f32.mrb[0].mxu0
  %v1938 = vadd.f32 0.0, %v1937
  %v1939 = vpop.f32.mrb[0].mxu0
  %1940 = vmatprep.mubr.bf16.mxu0 0
  %1941 = vmatmul.mubr.bf16.gmra.mrb[0].mxu0 %v1107
  %v1942 = vpop.f32.mrb[0].mxu0
  %v1943 = vadd.f32 0.0, %v1942
  %v1944 = vpop.f32.mrb[0].mxu0
  %v1945 = vpop.f32.mrb[0].mxu0
  %v1946 = vadd.f32 0.0, %v1945
  %v1947 = vpop.f32.mrb[0].mxu0
  %1948 = vmatprep.mubr.bf16.mxu0 0
  %1949 = vmatmul.mubr.bf16.gmra.mrb[0].mxu0 %v1110
  %v1950 = vpop.f32.mrb[0].mxu0
  %v1951 = vadd.f32 0.0, %v1950
  %v1952 = vpop.f32.mrb[0].mxu0
  %v1953 = vpop.f32.mrb[0].mxu0
  %v1954 = vadd.f32 0.0, %v1953
  %v1955 = vpop.f32.mrb[0].mxu0
  %1956 = vmatprep.mubr.bf16.mxu0 0
  %1957 = vmatmul.mubr.bf16.gmra.mrb[0].mxu0 %v1113
  %v1958 = vpop.f32.mrb[0].mxu0
  %v1959 = vadd.f32 0.0, %v1958
  %v1960 = vpop.f32.mrb[0].mxu0
  %v1961 = vpop.f32.mrb[0].mxu0
  %v1962 = vadd.f32 0.0, %v1961
  %v1963 = vpop.f32.mrb[0].mxu0
  %1964 = vmatprep.mubr.bf16.mxu0 0
  %1965 = vmatmul.mubr.bf16.gmra.mrb[0].mxu0 %v1116
  %v1966 = vpop.f32.mrb[0].mxu0
  %v1967 = vadd.f32 0.0, %v1966
  %v1968 = vpop.f32.mrb[0].mxu0
  %v1969 = vpop.f32.mrb[0].mxu0
  %v1970 = vadd.f32 0.0, %v1969
  %v1971 = vpop.f32.mrb[0].mxu0
  %1972 = vmatprep.mubr.bf16.mxu0 0
  %1973 = vmatmul.mubr.bf16.gmra.mrb[0].mxu0 %v1119
  %v1974 = vpop.f32.mrb[0].mxu0
  %v1975 = vadd.f32 0.0, %v1974
  %v1976 = vpop.f32.mrb[0].mxu0
  %v1977 = vpop.f32.mrb[0].mxu0
  %v1978 = vadd.f32 0.0, %v1977
  %v1979 = vpop.f32.mrb[0].mxu0
  %1980 = vmatprep.mubr.bf16.mxu0 0
  %1981 = vmatmul.mubr.bf16.gmra.mrb[0].mxu0 %v1122
  %v1982 = vpop.f32.mrb[0].mxu0
  %v1983 = vadd.f32 0.0, %v1982
  %v1984 = vpop.f32.mrb[0].mxu0
  %v1985 = vpop.f32.mrb[0].mxu0
  %v1986 = vadd.f32 0.0, %v1985
  %v1987 = vpop.f32.mrb[0].mxu0
  %1988 = vmatprep.mubr.bf16.mxu0 0
  %1989 = vmatmul.mubr.bf16.gmra.mrb[0].mxu0 %v1125
  %v1990 = vpop.f32.mrb[0].mxu0
  %v1991 = vadd.f32 0.0, %v1990
  %v1992 = vpop.f32.mrb[0].mxu0
  %v1993 = vpop.f32.mrb[0].mxu0
  %v1994 = vadd.f32 0.0, %v1993
  %v1995 = vpop.f32.mrb[0].mxu0
  %1996 = vmatprep.mubr.bf16.mxu0 0
  %1997 = vmatmul.mubr.bf16.gmra.mrb[0].mxu0 %v1128
  %v1998 = vpop.f32.mrb[0].mxu0
  %v1999 = vadd.f32 0.0, %v1998
  %v2000 = vpop.f32.mrb[0].mxu0
  %v2001 = vpop.f32.mrb[0].mxu0
  %v2002 = vadd.f32 0.0, %v2001
  %v2003 = vpop.f32.mrb[0].mxu0
  %2004 = vmatprep.mubr.bf16.mxu0 0
  %2005 = vmatmul.mubr.bf16.gmra.mrb[0].mxu0 %v1131
  %v2006 = vpop.f32.mrb[0].mxu0
  %v2007 = vadd.f32 0.0, %v2006
  %v2008 = vpop.f32.mrb[0].mxu0
  %v2009 = vpop.f32.mrb[0].mxu0
  %v2010 = vadd.f32 0.0, %v2009
  %v2011 = vpop.f32.mrb[0].mxu0
  %2012 = vmatprep.mubr.bf16.mxu0 0
  %2013 = vmatmul.mubr.bf16.gmra.mrb[0].mxu0 %v1134
  %v2014 = vpop.f32.mrb[0].mxu0
  %v2015 = vadd.f32 0.0, %v2014
  %v2016 = vpop.f32.mrb[0].mxu0
  %v2017 = vpop.f32.mrb[0].mxu0
  %v2018 = vadd.f32 0.0, %v2017
  %v2019 = vpop.f32.mrb[0].mxu0
  %2020 = vmatprep.mubr.bf16.mxu0 0
  %2021 = vmatmul.mubr.bf16.gmra.mrb[0].mxu0 %v1137
  %v2022 = vpop.f32.mrb[0].mxu0
  %v2023 = vadd.f32 0.0, %v2022
  %v2024 = vpop.f32.mrb[0].mxu0
  %v2025 = vpop.f32.mrb[0].mxu0
  %v2026 = vadd.f32 0.0, %v2025
  %v2027 = vpop.f32.mrb[0].mxu0
  %2028 = vmatprep.mubr.bf16.mxu0 0
  %2029 = vmatmul.mubr.bf16.gmra.mrb[0].mxu0 %v1140
  %v2030 = vpop.f32.mrb[0].mxu0
  %v2031 = vadd.f32 0.0, %v2030
  %v2032 = vpop.f32.mrb[0].mxu0
  %v2033 = vpop.f32.mrb[0].mxu0
  %v2034 = vadd.f32 0.0, %v2033
  %v2035 = vpop.f32.mrb[0].mxu0
  %2036 = vmatprep.mubr.bf16.mxu0 0
  %2037 = vmatmul.mubr.bf16.gmra.mrb[0].mxu0 %v1143
  %v2038 = vpop.f32.mrb[0].mxu0
  %v2039 = vadd.f32 0.0, %v2038
  %v2040 = vpop.f32.mrb[0].mxu0
  %v2041 = vpop.f32.mrb[0].mxu0
  %v2042 = vadd.f32 0.0, %v2041
  %v2043 = vpop.f32.mrb[0].mxu0
  %2044 = vmatprep.mubr.bf16.mxu0 0
  %2045 = vmatmul.mubr.bf16.gmra.mrb[0].mxu0 %v1146
  %v2046 = vpop.f32.mrb[0].mxu0
  %v2047 = vadd.f32 0.0, %v2046
  %v2048 = vpop.f32.mrb[0].mxu0
  %v2049 = vpop.f32.mrb[0].mxu0
  %v2050 = vadd.f32 0.0, %v2049
  %v2051 = vpop.f32.mrb[0].mxu0
  %2052 = vmatprep.mubr.bf16.mxu0 0
  %2053 = vmatmul.mubr.bf16.gmra.mrb[0].mxu0 %v1149
  %v2054 = vpop.f32.mrb[0].mxu0
  %v2055 = vadd.f32 0.0, %v2054
  %v2056 = vpop.f32.mrb[0].mxu0
  %v2057 = vpop.f32.mrb[0].mxu0
  %v2058 = vadd.f32 0.0, %v2057
  %v2059 = vpop.f32.mrb[0].mxu0
  %2060 = vmatprep.mubr.bf16.mxu0 0
  %2061 = vmatmul.mubr.bf16.gmra.mrb[0].mxu0 %v1152
  %v2062 = vpop.f32.mrb[0].mxu0
  %v2063 = vadd.f32 0.0, %v2062
  %v2064 = vpop.f32.mrb[0].mxu0
  %v2065 = vpop.f32.mrb[0].mxu0
  %v2066 = vadd.f32 0.0, %v2065
  %v2067 = vpop.f32.mrb[0].mxu0
  %2068 = vmatprep.mubr.bf16.mxu0 0
  %2069 = vmatmul.mubr.bf16.gmra.mrb[0].mxu0 %v1155
  %v2070 = vpop.f32.mrb[0].mxu0
  %v2071 = vadd.f32 0.0, %v2070
  %v2072 = vpop.f32.mrb[0].mxu0
  %v2073 = vpop.f32.mrb[0].mxu0
  %v2074 = vadd.f32 0.0, %v2073
  %v2075 = vpop.f32.mrb[0].mxu0
  %2076 = vmatprep.mubr.bf16.mxu0 0
  %2077 = vmatmul.mubr.bf16.gmra.mrb[0].mxu0 %v1158
  %v2078 = vpop.f32.mrb[0].mxu0
  %v2079 = vadd.f32 0.0, %v2078
  %v2080 = vpop.f32.mrb[0].mxu0
  %v2081 = vpop.f32.mrb[0].mxu0
  %v2082 = vadd.f32 0.0, %v2081
  %v2083 = vpop.f32.mrb[0].mxu0
  %2084 = vmatprep.mubr.bf16.mxu0 0
  %2085 = vmatmul.mubr.bf16.gmra.mrb[0].mxu0 %v1161
  %v2086 = vpop.f32.mrb[0].mxu0
  %v2087 = vadd.f32 0.0, %v2086
  %v2088 = vpop.f32.mrb[0].mxu0
  %v2089 = vpop.f32.mrb[0].mxu0
  %v2090 = vadd.f32 0.0, %v2089
  %v2091 = vpop.f32.mrb[0].mxu0
  %2092 = vmatprep.mubr.bf16.mxu0 0
  %2093 = vmatmul.mubr.bf16.gmra.mrb[0].mxu0 %v1164
  %v2094 = vpop.f32.mrb[0].mxu0
  %v2095 = vadd.f32 0.0, %v2094
  %v2096 = vpop.f32.mrb[0].mxu0
  %v2097 = vpop.f32.mrb[0].mxu0
  %v2098 = vadd.f32 0.0, %v2097
  %v2099 = vpop.f32.mrb[0].mxu0
  %2100 = vmatprep.mubr.bf16.mxu0 0
  %2101 = vmatmul.mubr.bf16.gmra.mrb[0].mxu0 %v1167
  %v2102 = vpop.f32.mrb[0].mxu0
  %v2103 = vadd.f32 0.0, %v2102
  %v2104 = vpop.f32.mrb[0].mxu0
  %v2105 = vpop.f32.mrb[0].mxu0
  %v2106 = vadd.f32 0.0, %v2105
  %v2107 = vpop.f32.mrb[0].mxu0
  %2108 = vmatprep.mubr.bf16.mxu0 0
  %2109 = vmatmul.mubr.bf16.gmra.mrb[0].mxu0 %v1170
  %v2110 = vpop.f32.mrb[0].mxu0
  %v2111 = vadd.f32 0.0, %v2110
  %v2112 = vpop.f32.mrb[0].mxu0
  %v2113 = vpop.f32.mrb[0].mxu0
  %v2114 = vadd.f32 0.0, %v2113
  %v2115 = vpop.f32.mrb[0].mxu0
  %2116 = vdwg.mxu0
  %vm2117 = vcmask 523264
  %v2118 = vsel %vm2117, %v1207, 0.0
  %v2119 = vsel %vm2117, %v1210, 0.0
  %v2120 = vadd.f32 %v2118, %v2119
  %v2121 = vsel %vm2117, %v1215, 0.0
  %v2122 = vadd.f32 %v2120, %v2121
  %v2123 = vsel %vm2117, %v1218, 0.0
  %v2124 = vadd.f32 %v2122, %v2123
  %v2125 = vsel %vm2117, %v1223, 0.0
  %v2126 = vadd.f32 %v2124, %v2125
  %v2127 = vsel %vm2117, %v1226, 0.0
  %v2128 = vadd.f32 %v2126, %v2127
  %v2129 = vsel %vm2117, %v1231, 0.0
  %v2130 = vadd.f32 %v2128, %v2129
  %v2131 = vsel %vm2117, %v1234, 0.0
  %v2132 = vadd.f32 %v2130, %v2131
  %v2133 = vsel %vm2117, %v1239, 0.0
  %v2134 = vadd.f32 %v2132, %v2133
  %v2135 = vsel %vm2117, %v1242, 0.0
  %v2136 = vadd.f32 %v2134, %v2135
  %v2137 = vsel %vm2117, %v1247, 0.0
  %v2138 = vadd.f32 %v2136, %v2137
  %v2139 = vsel %vm2117, %v1250, 0.0
  %v2140 = vadd.f32 %v2138, %v2139
  %v2141 = vsel %vm2117, %v1255, 0.0
  %v2142 = vadd.f32 %v2140, %v2141
  %v2143 = vsel %vm2117, %v1258, 0.0
  %v2144 = vadd.f32 %v2142, %v2143
  %v2145 = vsel %vm2117, %v1263, 0.0
  %v2146 = vadd.f32 %v2144, %v2145
  %v2147 = vsel %vm2117, %v1266, 0.0
  %v2148 = vadd.f32 %v2146, %v2147
  %v2149 = vsel %vm2117, %v1271, 0.0
  %v2150 = vadd.f32 %v2148, %v2149
  %v2151 = vsel %vm2117, %v1274, 0.0
  %v2152 = vadd.f32 %v2150, %v2151
  %v2153 = vsel %vm2117, %v1279, 0.0
  %v2154 = vadd.f32 %v2152, %v2153
  %v2155 = vsel %vm2117, %v1282, 0.0
  %v2156 = vadd.f32 %v2154, %v2155
  %v2157 = vsel %vm2117, %v1287, 0.0
  %v2158 = vadd.f32 %v2156, %v2157
  %v2159 = vsel %vm2117, %v1290, 0.0
  %v2160 = vadd.f32 %v2158, %v2159
  %v2161 = vsel %vm2117, %v1295, 0.0
  %v2162 = vadd.f32 %v2160, %v2161
  %v2163 = vsel %vm2117, %v1298, 0.0
  %v2164 = vadd.f32 %v2162, %v2163
  %v2165 = vsel %vm2117, %v1303, 0.0
  %v2166 = vadd.f32 %v2164, %v2165
  %v2167 = vsel %vm2117, %v1306, 0.0
  %v2168 = vadd.f32 %v2166, %v2167
  %v2169 = vsel %vm2117, %v1311, 0.0
  %v2170 = vadd.f32 %v2168, %v2169
  %v2171 = vsel %vm2117, %v1314, 0.0
  %v2172 = vadd.f32 %v2170, %v2171
  %v2173 = vsel %vm2117, %v1319, 0.0
  %v2174 = vadd.f32 %v2172, %v2173
  %v2175 = vsel %vm2117, %v1322, 0.0
  %v2176 = vadd.f32 %v2174, %v2175
  %v2177 = vsel %vm2117, %v1327, 0.0
  %v2178 = vadd.f32 %v2176, %v2177
  %v2179 = vsel %vm2117, %v1330, 0.0
  %v2180 = vadd.f32 %v2178, %v2179
  %v2181 = vsel %vm2117, %v1335, 0.0
  %v2182 = vadd.f32 %v2180, %v2181
  %v2183 = vsel %vm2117, %v1338, 0.0
  %v2184 = vadd.f32 %v2182, %v2183
  %v2185 = vsel %vm2117, %v1343, 0.0
  %v2186 = vadd.f32 %v2184, %v2185
  %v2187 = vsel %vm2117, %v1346, 0.0
  %v2188 = vadd.f32 %v2186, %v2187
  %v2189 = vsel %vm2117, %v1351, 0.0
  %v2190 = vadd.f32 %v2188, %v2189
  %v2191 = vsel %vm2117, %v1354, 0.0
  %v2192 = vadd.f32 %v2190, %v2191
  %v2193 = vsel %vm2117, %v1359, 0.0
  %v2194 = vadd.f32 %v2192, %v2193
  %v2195 = vsel %vm2117, %v1362, 0.0
  %v2196 = vadd.f32 %v2194, %v2195
  %v2197 = vsel %vm2117, %v1367, 0.0
  %v2198 = vadd.f32 %v2196, %v2197
  %v2199 = vsel %vm2117, %v1370, 0.0
  %v2200 = vadd.f32 %v2198, %v2199
  %v2201 = vsel %vm2117, %v1375, 0.0
  %v2202 = vadd.f32 %v2200, %v2201
  %v2203 = vsel %vm2117, %v1378, 0.0
  %v2204 = vadd.f32 %v2202, %v2203
  %v2205 = vsel %vm2117, %v1383, 0.0
  %v2206 = vadd.f32 %v2204, %v2205
  %v2207 = vsel %vm2117, %v1386, 0.0
  %v2208 = vadd.f32 %v2206, %v2207
  %v2209 = vsel %vm2117, %v1391, 0.0
  %v2210 = vadd.f32 %v2208, %v2209
  %v2211 = vsel %vm2117, %v1394, 0.0
  %v2212 = vadd.f32 %v2210, %v2211
  %v2213 = vsel %vm2117, %v1399, 0.0
  %v2214 = vadd.f32 %v2212, %v2213
  %v2215 = vsel %vm2117, %v1402, 0.0
  %v2216 = vadd.f32 %v2214, %v2215
  %v2217 = vsel %vm2117, %v1407, 0.0
  %v2218 = vadd.f32 %v2216, %v2217
  %v2219 = vsel %vm2117, %v1410, 0.0
  %v2220 = vadd.f32 %v2218, %v2219
  %v2221 = vsel %vm2117, %v1415, 0.0
  %v2222 = vadd.f32 %v2220, %v2221
  %v2223 = vsel %vm2117, %v1418, 0.0
  %v2224 = vadd.f32 %v2222, %v2223
  %v2225 = vsel %vm2117, %v1423, 0.0
  %v2226 = vadd.f32 %v2224, %v2225
  %v2227 = vsel %vm2117, %v1426, 0.0
  %v2228 = vadd.f32 %v2226, %v2227
  %v2229 = vsel %vm2117, %v1431, 0.0
  %v2230 = vadd.f32 %v2228, %v2229
  %v2231 = vsel %vm2117, %v1434, 0.0
  %v2232 = vadd.f32 %v2230, %v2231
  %v2233 = vsel %vm2117, %v1439, 0.0
  %v2234 = vadd.f32 %v2232, %v2233
  %v2235 = vsel %vm2117, %v1442, 0.0
  %v2236 = vadd.f32 %v2234, %v2235
  %v2237 = vsel %vm2117, %v1447, 0.0
  %v2238 = vadd.f32 %v2236, %v2237
  %v2239 = vsel %vm2117, %v1450, 0.0
  %v2240 = vadd.f32 %v2238, %v2239
  %v2241 = vsel %vm2117, %v1455, 0.0
  %v2242 = vadd.f32 %v2240, %v2241
  %v2243 = vsel %vm2117, %v1458, 0.0
  %v2244 = vadd.f32 %v2242, %v2243
  %v2245 = vsel %vm2117, %v1463, 0.0
  %v2246 = vadd.f32 %v2244, %v2245
  %v2247 = vsel %vm2117, %v1466, 0.0
  %v2248 = vadd.f32 %v2246, %v2247
  %v2249 = vsel %vm2117, %v1471, 0.0
  %v2250 = vadd.f32 %v2248, %v2249
  %v2251 = vsel %vm2117, %v1474, 0.0
  %v2252 = vadd.f32 %v2250, %v2251
  %v2253 = vsel %vm2117, %v1479, 0.0
  %v2254 = vadd.f32 %v2252, %v2253
  %v2255 = vsel %vm2117, %v1482, 0.0
  %v2256 = vadd.f32 %v2254, %v2255
  %v2257 = vsel %vm2117, %v1487, 0.0
  %v2258 = vadd.f32 %v2256, %v2257
  %v2259 = vsel %vm2117, %v1490, 0.0
  %v2260 = vadd.f32 %v2258, %v2259
  %v2261 = vsel %vm2117, %v1495, 0.0
  %v2262 = vadd.f32 %v2260, %v2261
  %v2263 = vsel %vm2117, %v1498, 0.0
  %v2264 = vadd.f32 %v2262, %v2263
  %v2265 = vsel %vm2117, %v1503, 0.0
  %v2266 = vadd.f32 %v2264, %v2265
  %v2267 = vsel %vm2117, %v1506, 0.0
  %v2268 = vadd.f32 %v2266, %v2267
  %v2269 = vsel %vm2117, %v1511, 0.0
  %v2270 = vadd.f32 %v2268, %v2269
  %v2271 = vsel %vm2117, %v1514, 0.0
  %v2272 = vadd.f32 %v2270, %v2271
  %v2273 = vsel %vm2117, %v1519, 0.0
  %v2274 = vadd.f32 %v2272, %v2273
  %v2275 = vsel %vm2117, %v1522, 0.0
  %v2276 = vadd.f32 %v2274, %v2275
  %v2277 = vsel %vm2117, %v1527, 0.0
  %v2278 = vadd.f32 %v2276, %v2277
  %v2279 = vsel %vm2117, %v1530, 0.0
  %v2280 = vadd.f32 %v2278, %v2279
  %v2281 = vsel %vm2117, %v1535, 0.0
  %v2282 = vadd.f32 %v2280, %v2281
  %v2283 = vsel %vm2117, %v1538, 0.0
  %v2284 = vadd.f32 %v2282, %v2283
  %v2285 = vsel %vm2117, %v1543, 0.0
  %v2286 = vadd.f32 %v2284, %v2285
  %v2287 = vsel %vm2117, %v1546, 0.0
  %v2288 = vadd.f32 %v2286, %v2287
  %v2289 = vsel %vm2117, %v1551, 0.0
  %v2290 = vadd.f32 %v2288, %v2289
  %v2291 = vsel %vm2117, %v1554, 0.0
  %v2292 = vadd.f32 %v2290, %v2291
  %v2293 = vsel %vm2117, %v1559, 0.0
  %v2294 = vadd.f32 %v2292, %v2293
  %v2295 = vsel %vm2117, %v1562, 0.0
  %v2296 = vadd.f32 %v2294, %v2295
  %v2297 = vsel %vm2117, %v1567, 0.0
  %v2298 = vadd.f32 %v2296, %v2297
  %v2299 = vsel %vm2117, %v1570, 0.0
  %v2300 = vadd.f32 %v2298, %v2299
  %v2301 = vsel %vm2117, %v1575, 0.0
  %v2302 = vadd.f32 %v2300, %v2301
  %v2303 = vsel %vm2117, %v1578, 0.0
  %v2304 = vadd.f32 %v2302, %v2303
  %v2305 = vsel %vm2117, %v1583, 0.0
  %v2306 = vadd.f32 %v2304, %v2305
  %v2307 = vsel %vm2117, %v1586, 0.0
  %v2308 = vadd.f32 %v2306, %v2307
  %v2309 = vsel %vm2117, %v1591, 0.0
  %v2310 = vadd.f32 %v2308, %v2309
  %v2311 = vsel %vm2117, %v1594, 0.0
  %v2312 = vadd.f32 %v2310, %v2311
  %v2313 = vsel %vm2117, %v1599, 0.0
  %v2314 = vadd.f32 %v2312, %v2313
  %v2315 = vsel %vm2117, %v1602, 0.0
  %v2316 = vadd.f32 %v2314, %v2315
  %v2317 = vsel %vm2117, %v1607, 0.0
  %v2318 = vadd.f32 %v2316, %v2317
  %v2319 = vsel %vm2117, %v1610, 0.0
  %v2320 = vadd.f32 %v2318, %v2319
  %v2321 = vsel %vm2117, %v1615, 0.0
  %v2322 = vadd.f32 %v2320, %v2321
  %v2323 = vsel %vm2117, %v1618, 0.0
  %v2324 = vadd.f32 %v2322, %v2323
  %v2325 = vsel %vm2117, %v1623, 0.0
  %v2326 = vadd.f32 %v2324, %v2325
  %v2327 = vsel %vm2117, %v1626, 0.0
  %v2328 = vadd.f32 %v2326, %v2327
  %v2329 = vsel %vm2117, %v1631, 0.0
  %v2330 = vadd.f32 %v2328, %v2329
  %v2331 = vsel %vm2117, %v1634, 0.0
  %v2332 = vadd.f32 %v2330, %v2331
  %v2333 = vsel %vm2117, %v1639, 0.0
  %v2334 = vadd.f32 %v2332, %v2333
  %v2335 = vsel %vm2117, %v1642, 0.0
  %v2336 = vadd.f32 %v2334, %v2335
  %v2337 = vsel %vm2117, %v1647, 0.0
  %v2338 = vadd.f32 %v2336, %v2337
  %v2339 = vsel %vm2117, %v1650, 0.0
  %v2340 = vadd.f32 %v2338, %v2339
  %v2341 = vsel %vm2117, %v1655, 0.0
  %v2342 = vadd.f32 %v2340, %v2341
  %v2343 = vsel %vm2117, %v1658, 0.0
  %v2344 = vadd.f32 %v2342, %v2343
  %v2345 = vsel %vm2117, %v1663, 0.0
  %v2346 = vadd.f32 %v2344, %v2345
  %v2347 = vsel %vm2117, %v1666, 0.0
  %v2348 = vadd.f32 %v2346, %v2347
  %v2349 = vsel %vm2117, %v1671, 0.0
  %v2350 = vadd.f32 %v2348, %v2349
  %v2351 = vsel %vm2117, %v1674, 0.0
  %v2352 = vadd.f32 %v2350, %v2351
  %v2353 = vsel %vm2117, %v1679, 0.0
  %v2354 = vadd.f32 %v2352, %v2353
  %v2355 = vsel %vm2117, %v1682, 0.0
  %v2356 = vadd.f32 %v2354, %v2355
  %v2357 = vsel %vm2117, %v1687, 0.0
  %v2358 = vadd.f32 %v2356, %v2357
  %v2359 = vsel %vm2117, %v1690, 0.0
  %v2360 = vadd.f32 %v2358, %v2359
  %v2361 = vsel %vm2117, %v1695, 0.0
  %v2362 = vadd.f32 %v2360, %v2361
  %v2363 = vsel %vm2117, %v1698, 0.0
  %v2364 = vadd.f32 %v2362, %v2363
  %v2365 = vsel %vm2117, %v1703, 0.0
  %v2366 = vadd.f32 %v2364, %v2365
  %v2367 = vsel %vm2117, %v1706, 0.0
  %v2368 = vadd.f32 %v2366, %v2367
  %v2369 = vsel %vm2117, %v1711, 0.0
  %v2370 = vadd.f32 %v2368, %v2369
  %v2371 = vsel %vm2117, %v1714, 0.0
  %v2372 = vadd.f32 %v2370, %v2371
  %v2373 = vsel %vm2117, %v1719, 0.0
  %v2374 = vadd.f32 %v2372, %v2373
  %v2375 = vsel %vm2117, %v1722, 0.0
  %v2376 = vadd.f32 %v2374, %v2375
  %v2377 = vsel %vm2117, %v1727, 0.0
  %v2378 = vadd.f32 %v2376, %v2377
  %v2379 = vsel %vm2117, %v1730, 0.0
  %v2380 = vadd.f32 %v2378, %v2379
  %v2381 = vsel %vm2117, %v1735, 0.0
  %v2382 = vadd.f32 %v2380, %v2381
  %v2383 = vsel %vm2117, %v1738, 0.0
  %v2384 = vadd.f32 %v2382, %v2383
  %v2385 = vsel %vm2117, %v1743, 0.0
  %v2386 = vadd.f32 %v2384, %v2385
  %v2387 = vsel %vm2117, %v1746, 0.0
  %v2388 = vadd.f32 %v2386, %v2387
  %v2389 = vsel %vm2117, %v1751, 0.0
  %v2390 = vadd.f32 %v2388, %v2389
  %v2391 = vsel %vm2117, %v1754, 0.0
  %v2392 = vadd.f32 %v2390, %v2391
  %v2393 = vsel %vm2117, %v1759, 0.0
  %v2394 = vadd.f32 %v2392, %v2393
  %v2395 = vsel %vm2117, %v1762, 0.0
  %v2396 = vadd.f32 %v2394, %v2395
  %v2397 = vsel %vm2117, %v1767, 0.0
  %v2398 = vadd.f32 %v2396, %v2397
  %v2399 = vsel %vm2117, %v1770, 0.0
  %v2400 = vadd.f32 %v2398, %v2399
  %v2401 = vsel %vm2117, %v1775, 0.0
  %v2402 = vadd.f32 %v2400, %v2401
  %v2403 = vsel %vm2117, %v1778, 0.0
  %v2404 = vadd.f32 %v2402, %v2403
  %v2405 = vsel %vm2117, %v1783, 0.0
  %v2406 = vadd.f32 %v2404, %v2405
  %v2407 = vsel %vm2117, %v1786, 0.0
  %v2408 = vadd.f32 %v2406, %v2407
  %v2409 = vsel %vm2117, %v1791, 0.0
  %v2410 = vadd.f32 %v2408, %v2409
  %v2411 = vsel %vm2117, %v1794, 0.0
  %v2412 = vadd.f32 %v2410, %v2411
  %v2413 = vsel %vm2117, %v1799, 0.0
  %v2414 = vadd.f32 %v2412, %v2413
  %v2415 = vsel %vm2117, %v1802, 0.0
  %v2416 = vadd.f32 %v2414, %v2415
  %v2417 = vsel %vm2117, %v1807, 0.0
  %v2418 = vadd.f32 %v2416, %v2417
  %v2419 = vsel %vm2117, %v1810, 0.0
  %v2420 = vadd.f32 %v2418, %v2419
  %v2421 = vsel %vm2117, %v1815, 0.0
  %v2422 = vadd.f32 %v2420, %v2421
  %v2423 = vsel %vm2117, %v1818, 0.0
  %v2424 = vadd.f32 %v2422, %v2423
  %v2425 = vsel %vm2117, %v1823, 0.0
  %v2426 = vadd.f32 %v2424, %v2425
  %v2427 = vsel %vm2117, %v1826, 0.0
  %v2428 = vadd.f32 %v2426, %v2427
  %v2429 = vsel %vm2117, %v1831, 0.0
  %v2430 = vadd.f32 %v2428, %v2429
  %v2431 = vsel %vm2117, %v1834, 0.0
  %v2432 = vadd.f32 %v2430, %v2431
  %v2433 = vsel %vm2117, %v1839, 0.0
  %v2434 = vadd.f32 %v2432, %v2433
  %v2435 = vsel %vm2117, %v1842, 0.0
  %v2436 = vadd.f32 %v2434, %v2435
  %v2437 = vsel %vm2117, %v1847, 0.0
  %v2438 = vadd.f32 %v2436, %v2437
  %v2439 = vsel %vm2117, %v1850, 0.0
  %v2440 = vadd.f32 %v2438, %v2439
  %v2441 = vsel %vm2117, %v1855, 0.0
  %v2442 = vadd.f32 %v2440, %v2441
  %v2443 = vsel %vm2117, %v1858, 0.0
  %v2444 = vadd.f32 %v2442, %v2443
  %v2445 = vsel %vm2117, %v1863, 0.0
  %v2446 = vadd.f32 %v2444, %v2445
  %v2447 = vsel %vm2117, %v1866, 0.0
  %v2448 = vadd.f32 %v2446, %v2447
  %v2449 = vsel %vm2117, %v1871, 0.0
  %v2450 = vadd.f32 %v2448, %v2449
  %v2451 = vsel %vm2117, %v1874, 0.0
  %v2452 = vadd.f32 %v2450, %v2451
  %v2453 = vsel %vm2117, %v1879, 0.0
  %v2454 = vadd.f32 %v2452, %v2453
  %v2455 = vsel %vm2117, %v1882, 0.0
  %v2456 = vadd.f32 %v2454, %v2455
  %v2457 = vsel %vm2117, %v1887, 0.0
  %v2458 = vadd.f32 %v2456, %v2457
  %v2459 = vsel %vm2117, %v1890, 0.0
  %v2460 = vadd.f32 %v2458, %v2459
  %v2461 = vsel %vm2117, %v1895, 0.0
  %v2462 = vadd.f32 %v2460, %v2461
  %v2463 = vsel %vm2117, %v1898, 0.0
  %v2464 = vadd.f32 %v2462, %v2463
  %v2465 = vsel %vm2117, %v1903, 0.0
  %v2466 = vadd.f32 %v2464, %v2465
  %v2467 = vsel %vm2117, %v1906, 0.0
  %v2468 = vadd.f32 %v2466, %v2467
  %v2469 = vsel %vm2117, %v1911, 0.0
  %v2470 = vadd.f32 %v2468, %v2469
  %v2471 = vsel %vm2117, %v1914, 0.0
  %v2472 = vadd.f32 %v2470, %v2471
  %v2473 = vsel %vm2117, %v1919, 0.0
  %v2474 = vadd.f32 %v2472, %v2473
  %v2475 = vsel %vm2117, %v1922, 0.0
  %v2476 = vadd.f32 %v2474, %v2475
  %v2477 = vsel %vm2117, %v1927, 0.0
  %v2478 = vadd.f32 %v2476, %v2477
  %v2479 = vsel %vm2117, %v1930, 0.0
  %v2480 = vadd.f32 %v2478, %v2479
  %v2481 = vsel %vm2117, %v1935, 0.0
  %v2482 = vadd.f32 %v2480, %v2481
  %v2483 = vsel %vm2117, %v1938, 0.0
  %v2484 = vadd.f32 %v2482, %v2483
  %v2485 = vsel %vm2117, %v1943, 0.0
  %v2486 = vadd.f32 %v2484, %v2485
  %v2487 = vsel %vm2117, %v1946, 0.0
  %v2488 = vadd.f32 %v2486, %v2487
  %v2489 = vsel %vm2117, %v1951, 0.0
  %v2490 = vadd.f32 %v2488, %v2489
  %v2491 = vsel %vm2117, %v1954, 0.0
  %v2492 = vadd.f32 %v2490, %v2491
  %v2493 = vsel %vm2117, %v1959, 0.0
  %v2494 = vadd.f32 %v2492, %v2493
  %v2495 = vsel %vm2117, %v1962, 0.0
  %v2496 = vadd.f32 %v2494, %v2495
  %v2497 = vsel %vm2117, %v1967, 0.0
  %v2498 = vadd.f32 %v2496, %v2497
  %v2499 = vsel %vm2117, %v1970, 0.0
  %v2500 = vadd.f32 %v2498, %v2499
  %v2501 = vsel %vm2117, %v1975, 0.0
  %v2502 = vadd.f32 %v2500, %v2501
  %v2503 = vsel %vm2117, %v1978, 0.0
  %v2504 = vadd.f32 %v2502, %v2503
  %v2505 = vsel %vm2117, %v1983, 0.0
  %v2506 = vadd.f32 %v2504, %v2505
  %v2507 = vsel %vm2117, %v1986, 0.0
  %v2508 = vadd.f32 %v2506, %v2507
  %v2509 = vsel %vm2117, %v1991, 0.0
  %v2510 = vadd.f32 %v2508, %v2509
  %v2511 = vsel %vm2117, %v1994, 0.0
  %v2512 = vadd.f32 %v2510, %v2511
  %v2513 = vsel %vm2117, %v1999, 0.0
  %v2514 = vadd.f32 %v2512, %v2513
  %v2515 = vsel %vm2117, %v2002, 0.0
  %v2516 = vadd.f32 %v2514, %v2515
  %v2517 = vsel %vm2117, %v2007, 0.0
  %v2518 = vadd.f32 %v2516, %v2517
  %v2519 = vsel %vm2117, %v2010, 0.0
  %v2520 = vadd.f32 %v2518, %v2519
  %v2521 = vsel %vm2117, %v2015, 0.0
  %v2522 = vadd.f32 %v2520, %v2521
  %v2523 = vsel %vm2117, %v2018, 0.0
  %v2524 = vadd.f32 %v2522, %v2523
  %v2525 = vsel %vm2117, %v2023, 0.0
  %v2526 = vadd.f32 %v2524, %v2525
  %v2527 = vsel %vm2117, %v2026, 0.0
  %v2528 = vadd.f32 %v2526, %v2527
  %v2529 = vsel %vm2117, %v2031, 0.0
  %v2530 = vadd.f32 %v2528, %v2529
  %v2531 = vsel %vm2117, %v2034, 0.0
  %v2532 = vadd.f32 %v2530, %v2531
  %v2533 = vsel %vm2117, %v2039, 0.0
  %v2534 = vadd.f32 %v2532, %v2533
  %v2535 = vsel %vm2117, %v2042, 0.0
  %v2536 = vadd.f32 %v2534, %v2535
  %v2537 = vsel %vm2117, %v2047, 0.0
  %v2538 = vadd.f32 %v2536, %v2537
  %v2539 = vsel %vm2117, %v2050, 0.0
  %v2540 = vadd.f32 %v2538, %v2539
  %v2541 = vsel %vm2117, %v2055, 0.0
  %v2542 = vadd.f32 %v2540, %v2541
  %v2543 = vsel %vm2117, %v2058, 0.0
  %v2544 = vadd.f32 %v2542, %v2543
  %v2545 = vsel %vm2117, %v2063, 0.0
  %v2546 = vadd.f32 %v2544, %v2545
  %v2547 = vsel %vm2117, %v2066, 0.0
  %v2548 = vadd.f32 %v2546, %v2547
  %v2549 = vsel %vm2117, %v2071, 0.0
  %v2550 = vadd.f32 %v2548, %v2549
  %v2551 = vsel %vm2117, %v2074, 0.0
  %v2552 = vadd.f32 %v2550, %v2551
  %v2553 = vsel %vm2117, %v2079, 0.0
  %v2554 = vadd.f32 %v2552, %v2553
  %v2555 = vsel %vm2117, %v2082, 0.0
  %v2556 = vadd.f32 %v2554, %v2555
  %v2557 = vsel %vm2117, %v2087, 0.0
  %v2558 = vadd.f32 %v2556, %v2557
  %v2559 = vsel %vm2117, %v2090, 0.0
  %v2560 = vadd.f32 %v2558, %v2559
  %v2561 = vsel %vm2117, %v2095, 0.0
  %v2562 = vadd.f32 %v2560, %v2561
  %v2563 = vsel %vm2117, %v2098, 0.0
  %v2564 = vadd.f32 %v2562, %v2563
  %v2565 = vsel %vm2117, %v2103, 0.0
  %v2566 = vadd.f32 %v2564, %v2565
  %v2567 = vsel %vm2117, %v2106, 0.0
  %v2568 = vadd.f32 %v2566, %v2567
  %v2569 = vsel %vm2117, %v2111, 0.0
  %v2570 = vadd.f32 %v2568, %v2569
  %v2571 = vsel %vm2117, %v2114, 0.0
  %v2572 = vadd.f32 %v2570, %v2571
  %v2573 = vrot.slane %v2572, 4
  %v2574 = vadd.f32 %v2572, %v2573
  %v2575 = vrot.slane %v2574, 2
  %v2576 = vadd.f32 %v2574, %v2575
  %v2577 = vrot.slane %v2576, 1
  %v2578 = vadd.f32 %v2576, %v2577
  %v2579 = vmul.f32 %v2578, 0.00055555557
  %v2580 = vmul.f32 %v1207, %v1207
  %v2581 = vmul.f32 %v1210, %v1210
  %v2582 = vmul.f32 %v1215, %v1215
  %v2583 = vmul.f32 %v1218, %v1218
  %v2584 = vmul.f32 %v1223, %v1223
  %v2585 = vmul.f32 %v1226, %v1226
  %v2586 = vmul.f32 %v1231, %v1231
  %v2587 = vmul.f32 %v1234, %v1234
  %v2588 = vmul.f32 %v1239, %v1239
  %v2589 = vmul.f32 %v1242, %v1242
  %v2590 = vmul.f32 %v1247, %v1247
  %v2591 = vmul.f32 %v1250, %v1250
  %v2592 = vmul.f32 %v1255, %v1255
  %v2593 = vmul.f32 %v1258, %v1258
  %v2594 = vmul.f32 %v1263, %v1263
  %v2595 = vmul.f32 %v1266, %v1266
  %v2596 = vmul.f32 %v1271, %v1271
  %v2597 = vmul.f32 %v1274, %v1274
  %v2598 = vmul.f32 %v1279, %v1279
  %v2599 = vmul.f32 %v1282, %v1282
  %v2600 = vmul.f32 %v1287, %v1287
  %v2601 = vmul.f32 %v1290, %v1290
  %v2602 = vmul.f32 %v1295, %v1295
  %v2603 = vmul.f32 %v1298, %v1298
  %v2604 = vmul.f32 %v1303, %v1303
  %v2605 = vmul.f32 %v1306, %v1306
  %v2606 = vmul.f32 %v1311, %v1311
  %v2607 = vmul.f32 %v1314, %v1314
  %v2608 = vmul.f32 %v1319, %v1319
  %v2609 = vmul.f32 %v1322, %v1322
  %v2610 = vmul.f32 %v1327, %v1327
  %v2611 = vmul.f32 %v1330, %v1330
  %v2612 = vmul.f32 %v1335, %v1335
  %v2613 = vmul.f32 %v1338, %v1338
  %v2614 = vmul.f32 %v1343, %v1343
  %v2615 = vmul.f32 %v1346, %v1346
  %v2616 = vmul.f32 %v1351, %v1351
  %v2617 = vmul.f32 %v1354, %v1354
  %v2618 = vmul.f32 %v1359, %v1359
  %v2619 = vmul.f32 %v1362, %v1362
  %v2620 = vmul.f32 %v1367, %v1367
  %v2621 = vmul.f32 %v1370, %v1370
  %v2622 = vmul.f32 %v1375, %v1375
  %v2623 = vmul.f32 %v1378, %v1378
  %v2624 = vmul.f32 %v1383, %v1383
  %v2625 = vmul.f32 %v1386, %v1386
  %v2626 = vmul.f32 %v1391, %v1391
  %v2627 = vmul.f32 %v1394, %v1394
  %v2628 = vmul.f32 %v1399, %v1399
  %v2629 = vmul.f32 %v1402, %v1402
  %v2630 = vmul.f32 %v1407, %v1407
  %v2631 = vmul.f32 %v1410, %v1410
  %v2632 = vmul.f32 %v1415, %v1415
  %v2633 = vmul.f32 %v1418, %v1418
  %v2634 = vmul.f32 %v1423, %v1423
  %v2635 = vmul.f32 %v1426, %v1426
  %v2636 = vmul.f32 %v1431, %v1431
  %v2637 = vmul.f32 %v1434, %v1434
  %v2638 = vmul.f32 %v1439, %v1439
  %v2639 = vmul.f32 %v1442, %v1442
  %v2640 = vmul.f32 %v1447, %v1447
  %v2641 = vmul.f32 %v1450, %v1450
  %v2642 = vmul.f32 %v1455, %v1455
  %v2643 = vmul.f32 %v1458, %v1458
  %v2644 = vmul.f32 %v1463, %v1463
  %v2645 = vmul.f32 %v1466, %v1466
  %v2646 = vmul.f32 %v1471, %v1471
  %v2647 = vmul.f32 %v1474, %v1474
  %v2648 = vmul.f32 %v1479, %v1479
  %v2649 = vmul.f32 %v1482, %v1482
  %v2650 = vmul.f32 %v1487, %v1487
  %v2651 = vmul.f32 %v1490, %v1490
  %v2652 = vmul.f32 %v1495, %v1495
  %v2653 = vmul.f32 %v1498, %v1498
  %v2654 = vmul.f32 %v1503, %v1503
  %v2655 = vmul.f32 %v1506, %v1506
  %v2656 = vmul.f32 %v1511, %v1511
  %v2657 = vmul.f32 %v1514, %v1514
  %v2658 = vmul.f32 %v1519, %v1519
  %v2659 = vmul.f32 %v1522, %v1522
  %v2660 = vmul.f32 %v1527, %v1527
  %v2661 = vmul.f32 %v1530, %v1530
  %v2662 = vmul.f32 %v1535, %v1535
  %v2663 = vmul.f32 %v1538, %v1538
  %v2664 = vmul.f32 %v1543, %v1543
  %v2665 = vmul.f32 %v1546, %v1546
  %v2666 = vmul.f32 %v1551, %v1551
  %v2667 = vmul.f32 %v1554, %v1554
  %v2668 = vmul.f32 %v1559, %v1559
  %v2669 = vmul.f32 %v1562, %v1562
  %v2670 = vmul.f32 %v1567, %v1567
  %v2671 = vmul.f32 %v1570, %v1570
  %v2672 = vmul.f32 %v1575, %v1575
  %v2673 = vmul.f32 %v1578, %v1578
  %v2674 = vmul.f32 %v1583, %v1583
  %v2675 = vmul.f32 %v1586, %v1586
  %v2676 = vmul.f32 %v1591, %v1591
  %v2677 = vmul.f32 %v1594, %v1594
  %v2678 = vmul.f32 %v1599, %v1599
  %v2679 = vmul.f32 %v1602, %v1602
  %v2680 = vmul.f32 %v1607, %v1607
  %v2681 = vmul.f32 %v1610, %v1610
  %v2682 = vmul.f32 %v1615, %v1615
  %v2683 = vmul.f32 %v1618, %v1618
  %v2684 = vmul.f32 %v1623, %v1623
  %v2685 = vmul.f32 %v1626, %v1626
  %v2686 = vmul.f32 %v1631, %v1631
  %v2687 = vmul.f32 %v1634, %v1634
  %v2688 = vmul.f32 %v1639, %v1639
  %v2689 = vmul.f32 %v1642, %v1642
  %v2690 = vmul.f32 %v1647, %v1647
  %v2691 = vmul.f32 %v1650, %v1650
  %v2692 = vmul.f32 %v1655, %v1655
  %v2693 = vmul.f32 %v1658, %v1658
  %v2694 = vmul.f32 %v1663, %v1663
  %v2695 = vmul.f32 %v1666, %v1666
  %v2696 = vmul.f32 %v1671, %v1671
  %v2697 = vmul.f32 %v1674, %v1674
  %v2698 = vmul.f32 %v1679, %v1679
  %v2699 = vmul.f32 %v1682, %v1682
  %v2700 = vmul.f32 %v1687, %v1687
  %v2701 = vmul.f32 %v1690, %v1690
  %v2702 = vmul.f32 %v1695, %v1695
  %v2703 = vmul.f32 %v1698, %v1698
  %v2704 = vmul.f32 %v1703, %v1703
  %v2705 = vmul.f32 %v1706, %v1706
  %v2706 = vmul.f32 %v1711, %v1711
  %v2707 = vmul.f32 %v1714, %v1714
  %v2708 = vmul.f32 %v1719, %v1719
  %v2709 = vmul.f32 %v1722, %v1722
  %v2710 = vmul.f32 %v1727, %v1727
  %v2711 = vmul.f32 %v1730, %v1730
  %v2712 = vmul.f32 %v1735, %v1735
  %v2713 = vmul.f32 %v1738, %v1738
  %v2714 = vmul.f32 %v1743, %v1743
  %v2715 = vmul.f32 %v1746, %v1746
  %v2716 = vmul.f32 %v1751, %v1751
  %v2717 = vmul.f32 %v1754, %v1754
  %v2718 = vmul.f32 %v1759, %v1759
  %v2719 = vmul.f32 %v1762, %v1762
  %v2720 = vmul.f32 %v1767, %v1767
  %v2721 = vmul.f32 %v1770, %v1770
  %v2722 = vmul.f32 %v1775, %v1775
  %v2723 = vmul.f32 %v1778, %v1778
  %v2724 = vmul.f32 %v1783, %v1783
  %v2725 = vmul.f32 %v1786, %v1786
  %v2726 = vmul.f32 %v1791, %v1791
  %v2727 = vmul.f32 %v1794, %v1794
  %v2728 = vmul.f32 %v1799, %v1799
  %v2729 = vmul.f32 %v1802, %v1802
  %v2730 = vmul.f32 %v1807, %v1807
  %v2731 = vmul.f32 %v1810, %v1810
  %v2732 = vmul.f32 %v1815, %v1815
  %v2733 = vmul.f32 %v1818, %v1818
  %v2734 = vmul.f32 %v1823, %v1823
  %v2735 = vmul.f32 %v1826, %v1826
  %v2736 = vmul.f32 %v1831, %v1831
  %v2737 = vmul.f32 %v1834, %v1834
  %v2738 = vmul.f32 %v1839, %v1839
  %v2739 = vmul.f32 %v1842, %v1842
  %v2740 = vmul.f32 %v1847, %v1847
  %v2741 = vmul.f32 %v1850, %v1850
  %v2742 = vmul.f32 %v1855, %v1855
  %v2743 = vmul.f32 %v1858, %v1858
  %v2744 = vmul.f32 %v1863, %v1863
  %v2745 = vmul.f32 %v1866, %v1866
  %v2746 = vmul.f32 %v1871, %v1871
  %v2747 = vmul.f32 %v1874, %v1874
  %v2748 = vmul.f32 %v1879, %v1879
  %v2749 = vmul.f32 %v1882, %v1882
  %v2750 = vmul.f32 %v1887, %v1887
  %v2751 = vmul.f32 %v1890, %v1890
  %v2752 = vmul.f32 %v1895, %v1895
  %v2753 = vmul.f32 %v1898, %v1898
  %v2754 = vmul.f32 %v1903, %v1903
  %v2755 = vmul.f32 %v1906, %v1906
  %v2756 = vmul.f32 %v1911, %v1911
  %v2757 = vmul.f32 %v1914, %v1914
  %v2758 = vmul.f32 %v1919, %v1919
  %v2759 = vmul.f32 %v1922, %v1922
  %v2760 = vmul.f32 %v1927, %v1927
  %v2761 = vmul.f32 %v1930, %v1930
  %v2762 = vmul.f32 %v1935, %v1935
  %v2763 = vmul.f32 %v1938, %v1938
  %v2764 = vmul.f32 %v1943, %v1943
  %v2765 = vmul.f32 %v1946, %v1946
  %v2766 = vmul.f32 %v1951, %v1951
  %v2767 = vmul.f32 %v1954, %v1954
  %v2768 = vmul.f32 %v1959, %v1959
  %v2769 = vmul.f32 %v1962, %v1962
  %v2770 = vmul.f32 %v1967, %v1967
  %v2771 = vmul.f32 %v1970, %v1970
  %v2772 = vmul.f32 %v1975, %v1975
  %v2773 = vmul.f32 %v1978, %v1978
  %v2774 = vmul.f32 %v1983, %v1983
  %v2775 = vmul.f32 %v1986, %v1986
  %v2776 = vmul.f32 %v1991, %v1991
  %v2777 = vmul.f32 %v1994, %v1994
  %v2778 = vmul.f32 %v1999, %v1999
  %v2779 = vmul.f32 %v2002, %v2002
  %v2780 = vmul.f32 %v2007, %v2007
  %v2781 = vmul.f32 %v2010, %v2010
  %v2782 = vmul.f32 %v2015, %v2015
  %v2783 = vmul.f32 %v2018, %v2018
  %v2784 = vmul.f32 %v2023, %v2023
  %v2785 = vmul.f32 %v2026, %v2026
  %v2786 = vmul.f32 %v2031, %v2031
  %v2787 = vmul.f32 %v2034, %v2034
  %v2788 = vmul.f32 %v2039, %v2039
  %v2789 = vmul.f32 %v2042, %v2042
  %v2790 = vmul.f32 %v2047, %v2047
  %v2791 = vmul.f32 %v2050, %v2050
  %v2792 = vmul.f32 %v2055, %v2055
  %v2793 = vmul.f32 %v2058, %v2058
  %v2794 = vmul.f32 %v2063, %v2063
  %v2795 = vmul.f32 %v2066, %v2066
  %v2796 = vmul.f32 %v2071, %v2071
  %v2797 = vmul.f32 %v2074, %v2074
  %v2798 = vmul.f32 %v2079, %v2079
  %v2799 = vmul.f32 %v2082, %v2082
  %v2800 = vmul.f32 %v2087, %v2087
  %v2801 = vmul.f32 %v2090, %v2090
  %v2802 = vmul.f32 %v2095, %v2095
  %v2803 = vmul.f32 %v2098, %v2098
  %v2804 = vmul.f32 %v2103, %v2103
  %v2805 = vmul.f32 %v2106, %v2106
  %v2806 = vmul.f32 %v2111, %v2111
  %v2807 = vmul.f32 %v2114, %v2114
  %v2808 = vsel %vm2117, %v2580, 0.0
  %v2809 = vsel %vm2117, %v2581, 0.0
  %v2810 = vadd.f32 %v2808, %v2809
  %v2811 = vsel %vm2117, %v2582, 0.0
  %v2812 = vadd.f32 %v2810, %v2811
  %v2813 = vsel %vm2117, %v2583, 0.0
  %v2814 = vadd.f32 %v2812, %v2813
  %v2815 = vsel %vm2117, %v2584, 0.0
  %v2816 = vadd.f32 %v2814, %v2815
  %v2817 = vsel %vm2117, %v2585, 0.0
  %v2818 = vadd.f32 %v2816, %v2817
  %v2819 = vsel %vm2117, %v2586, 0.0
  %v2820 = vadd.f32 %v2818, %v2819
  %v2821 = vsel %vm2117, %v2587, 0.0
  %v2822 = vadd.f32 %v2820, %v2821
  %v2823 = vsel %vm2117, %v2588, 0.0
  %v2824 = vadd.f32 %v2822, %v2823
  %v2825 = vsel %vm2117, %v2589, 0.0
  %v2826 = vadd.f32 %v2824, %v2825
  %v2827 = vsel %vm2117, %v2590, 0.0
  %v2828 = vadd.f32 %v2826, %v2827
  %v2829 = vsel %vm2117, %v2591, 0.0
  %v2830 = vadd.f32 %v2828, %v2829
  %v2831 = vsel %vm2117, %v2592, 0.0
  %v2832 = vadd.f32 %v2830, %v2831
  %v2833 = vsel %vm2117, %v2593, 0.0
  %v2834 = vadd.f32 %v2832, %v2833
  %v2835 = vsel %vm2117, %v2594, 0.0
  %v2836 = vadd.f32 %v2834, %v2835
  %v2837 = vsel %vm2117, %v2595, 0.0
  %v2838 = vadd.f32 %v2836, %v2837
  %v2839 = vsel %vm2117, %v2596, 0.0
  %v2840 = vadd.f32 %v2838, %v2839
  %v2841 = vsel %vm2117, %v2597, 0.0
  %v2842 = vadd.f32 %v2840, %v2841
  %v2843 = vsel %vm2117, %v2598, 0.0
  %v2844 = vadd.f32 %v2842, %v2843
  %v2845 = vsel %vm2117, %v2599, 0.0
  %v2846 = vadd.f32 %v2844, %v2845
  %v2847 = vsel %vm2117, %v2600, 0.0
  %v2848 = vadd.f32 %v2846, %v2847
  %v2849 = vsel %vm2117, %v2601, 0.0
  %v2850 = vadd.f32 %v2848, %v2849
  %v2851 = vsel %vm2117, %v2602, 0.0
  %v2852 = vadd.f32 %v2850, %v2851
  %v2853 = vsel %vm2117, %v2603, 0.0
  %v2854 = vadd.f32 %v2852, %v2853
  %v2855 = vsel %vm2117, %v2604, 0.0
  %v2856 = vadd.f32 %v2854, %v2855
  %v2857 = vsel %vm2117, %v2605, 0.0
  %v2858 = vadd.f32 %v2856, %v2857
  %v2859 = vsel %vm2117, %v2606, 0.0
  %v2860 = vadd.f32 %v2858, %v2859
  %v2861 = vsel %vm2117, %v2607, 0.0
  %v2862 = vadd.f32 %v2860, %v2861
  %v2863 = vsel %vm2117, %v2608, 0.0
  %v2864 = vadd.f32 %v2862, %v2863
  %v2865 = vsel %vm2117, %v2609, 0.0
  %v2866 = vadd.f32 %v2864, %v2865
  %v2867 = vsel %vm2117, %v2610, 0.0
  %v2868 = vadd.f32 %v2866, %v2867
  %v2869 = vsel %vm2117, %v2611, 0.0
  %v2870 = vadd.f32 %v2868, %v2869
  %v2871 = vsel %vm2117, %v2612, 0.0
  %v2872 = vadd.f32 %v2870, %v2871
  %v2873 = vsel %vm2117, %v2613, 0.0
  %v2874 = vadd.f32 %v2872, %v2873
  %v2875 = vsel %vm2117, %v2614, 0.0
  %v2876 = vadd.f32 %v2874, %v2875
  %v2877 = vsel %vm2117, %v2615, 0.0
  %v2878 = vadd.f32 %v2876, %v2877
  %v2879 = vsel %vm2117, %v2616, 0.0
  %v2880 = vadd.f32 %v2878, %v2879
  %v2881 = vsel %vm2117, %v2617, 0.0
  %v2882 = vadd.f32 %v2880, %v2881
  %v2883 = vsel %vm2117, %v2618, 0.0
  %v2884 = vadd.f32 %v2882, %v2883
  %v2885 = vsel %vm2117, %v2619, 0.0
  %v2886 = vadd.f32 %v2884, %v2885
  %v2887 = vsel %vm2117, %v2620, 0.0
  %v2888 = vadd.f32 %v2886, %v2887
  %v2889 = vsel %vm2117, %v2621, 0.0
  %v2890 = vadd.f32 %v2888, %v2889
  %v2891 = vsel %vm2117, %v2622, 0.0
  %v2892 = vadd.f32 %v2890, %v2891
  %v2893 = vsel %vm2117, %v2623, 0.0
  %v2894 = vadd.f32 %v2892, %v2893
  %v2895 = vsel %vm2117, %v2624, 0.0
  %v2896 = vadd.f32 %v2894, %v2895
  %v2897 = vsel %vm2117, %v2625, 0.0
  %v2898 = vadd.f32 %v2896, %v2897
  %v2899 = vsel %vm2117, %v2626, 0.0
  %v2900 = vadd.f32 %v2898, %v2899
  %v2901 = vsel %vm2117, %v2627, 0.0
  %v2902 = vadd.f32 %v2900, %v2901
  %v2903 = vsel %vm2117, %v2628, 0.0
  %v2904 = vadd.f32 %v2902, %v2903
  %v2905 = vsel %vm2117, %v2629, 0.0
  %v2906 = vadd.f32 %v2904, %v2905
  %v2907 = vsel %vm2117, %v2630, 0.0
  %v2908 = vadd.f32 %v2906, %v2907
  %v2909 = vsel %vm2117, %v2631, 0.0
  %v2910 = vadd.f32 %v2908, %v2909
  %v2911 = vsel %vm2117, %v2632, 0.0
  %v2912 = vadd.f32 %v2910, %v2911
  %v2913 = vsel %vm2117, %v2633, 0.0
  %v2914 = vadd.f32 %v2912, %v2913
  %v2915 = vsel %vm2117, %v2634, 0.0
  %v2916 = vadd.f32 %v2914, %v2915
  %v2917 = vsel %vm2117, %v2635, 0.0
  %v2918 = vadd.f32 %v2916, %v2917
  %v2919 = vsel %vm2117, %v2636, 0.0
  %v2920 = vadd.f32 %v2918, %v2919
  %v2921 = vsel %vm2117, %v2637, 0.0
  %v2922 = vadd.f32 %v2920, %v2921
  %v2923 = vsel %vm2117, %v2638, 0.0
  %v2924 = vadd.f32 %v2922, %v2923
  %v2925 = vsel %vm2117, %v2639, 0.0
  %v2926 = vadd.f32 %v2924, %v2925
  %v2927 = vsel %vm2117, %v2640, 0.0
  %v2928 = vadd.f32 %v2926, %v2927
  %v2929 = vsel %vm2117, %v2641, 0.0
  %v2930 = vadd.f32 %v2928, %v2929
  %v2931 = vsel %vm2117, %v2642, 0.0
  %v2932 = vadd.f32 %v2930, %v2931
  %v2933 = vsel %vm2117, %v2643, 0.0
  %v2934 = vadd.f32 %v2932, %v2933
  %v2935 = vsel %vm2117, %v2644, 0.0
  %v2936 = vadd.f32 %v2934, %v2935
  %v2937 = vsel %vm2117, %v2645, 0.0
  %v2938 = vadd.f32 %v2936, %v2937
  %v2939 = vsel %vm2117, %v2646, 0.0
  %v2940 = vadd.f32 %v2938, %v2939
  %v2941 = vsel %vm2117, %v2647, 0.0
  %v2942 = vadd.f32 %v2940, %v2941
  %v2943 = vsel %vm2117, %v2648, 0.0
  %v2944 = vadd.f32 %v2942, %v2943
  %v2945 = vsel %vm2117, %v2649, 0.0
  %v2946 = vadd.f32 %v2944, %v2945
  %v2947 = vsel %vm2117, %v2650, 0.0
  %v2948 = vadd.f32 %v2946, %v2947
  %v2949 = vsel %vm2117, %v2651, 0.0
  %v2950 = vadd.f32 %v2948, %v2949
  %v2951 = vsel %vm2117, %v2652, 0.0
  %v2952 = vadd.f32 %v2950, %v2951
  %v2953 = vsel %vm2117, %v2653, 0.0
  %v2954 = vadd.f32 %v2952, %v2953
  %v2955 = vsel %vm2117, %v2654, 0.0
  %v2956 = vadd.f32 %v2954, %v2955
  %v2957 = vsel %vm2117, %v2655, 0.0
  %v2958 = vadd.f32 %v2956, %v2957
  %v2959 = vsel %vm2117, %v2656, 0.0
  %v2960 = vadd.f32 %v2958, %v2959
  %v2961 = vsel %vm2117, %v2657, 0.0
  %v2962 = vadd.f32 %v2960, %v2961
  %v2963 = vsel %vm2117, %v2658, 0.0
  %v2964 = vadd.f32 %v2962, %v2963
  %v2965 = vsel %vm2117, %v2659, 0.0
  %v2966 = vadd.f32 %v2964, %v2965
  %v2967 = vsel %vm2117, %v2660, 0.0
  %v2968 = vadd.f32 %v2966, %v2967
  %v2969 = vsel %vm2117, %v2661, 0.0
  %v2970 = vadd.f32 %v2968, %v2969
  %v2971 = vsel %vm2117, %v2662, 0.0
  %v2972 = vadd.f32 %v2970, %v2971
  %v2973 = vsel %vm2117, %v2663, 0.0
  %v2974 = vadd.f32 %v2972, %v2973
  %v2975 = vsel %vm2117, %v2664, 0.0
  %v2976 = vadd.f32 %v2974, %v2975
  %v2977 = vsel %vm2117, %v2665, 0.0
  %v2978 = vadd.f32 %v2976, %v2977
  %v2979 = vsel %vm2117, %v2666, 0.0
  %v2980 = vadd.f32 %v2978, %v2979
  %v2981 = vsel %vm2117, %v2667, 0.0
  %v2982 = vadd.f32 %v2980, %v2981
  %v2983 = vsel %vm2117, %v2668, 0.0
  %v2984 = vadd.f32 %v2982, %v2983
  %v2985 = vsel %vm2117, %v2669, 0.0
  %v2986 = vadd.f32 %v2984, %v2985
  %v2987 = vsel %vm2117, %v2670, 0.0
  %v2988 = vadd.f32 %v2986, %v2987
  %v2989 = vsel %vm2117, %v2671, 0.0
  %v2990 = vadd.f32 %v2988, %v2989
  %v2991 = vsel %vm2117, %v2672, 0.0
  %v2992 = vadd.f32 %v2990, %v2991
  %v2993 = vsel %vm2117, %v2673, 0.0
  %v2994 = vadd.f32 %v2992, %v2993
  %v2995 = vsel %vm2117, %v2674, 0.0
  %v2996 = vadd.f32 %v2994, %v2995
  %v2997 = vsel %vm2117, %v2675, 0.0
  %v2998 = vadd.f32 %v2996, %v2997
  %v2999 = vsel %vm2117, %v2676, 0.0
  %v3000 = vadd.f32 %v2998, %v2999
  %v3001 = vsel %vm2117, %v2677, 0.0
  %v3002 = vadd.f32 %v3000, %v3001
  %v3003 = vsel %vm2117, %v2678, 0.0
  %v3004 = vadd.f32 %v3002, %v3003
  %v3005 = vsel %vm2117, %v2679, 0.0
  %v3006 = vadd.f32 %v3004, %v3005
  %v3007 = vsel %vm2117, %v2680, 0.0
  %v3008 = vadd.f32 %v3006, %v3007
  %v3009 = vsel %vm2117, %v2681, 0.0
  %v3010 = vadd.f32 %v3008, %v3009
  %v3011 = vsel %vm2117, %v2682, 0.0
  %v3012 = vadd.f32 %v3010, %v3011
  %v3013 = vsel %vm2117, %v2683, 0.0
  %v3014 = vadd.f32 %v3012, %v3013
  %v3015 = vsel %vm2117, %v2684, 0.0
  %v3016 = vadd.f32 %v3014, %v3015
  %v3017 = vsel %vm2117, %v2685, 0.0
  %v3018 = vadd.f32 %v3016, %v3017
  %v3019 = vsel %vm2117, %v2686, 0.0
  %v3020 = vadd.f32 %v3018, %v3019
  %v3021 = vsel %vm2117, %v2687, 0.0
  %v3022 = vadd.f32 %v3020, %v3021
  %v3023 = vsel %vm2117, %v2688, 0.0
  %v3024 = vadd.f32 %v3022, %v3023
  %v3025 = vsel %vm2117, %v2689, 0.0
  %v3026 = vadd.f32 %v3024, %v3025
  %v3027 = vsel %vm2117, %v2690, 0.0
  %v3028 = vadd.f32 %v3026, %v3027
  %v3029 = vsel %vm2117, %v2691, 0.0
  %v3030 = vadd.f32 %v3028, %v3029
  %v3031 = vsel %vm2117, %v2692, 0.0
  %v3032 = vadd.f32 %v3030, %v3031
  %v3033 = vsel %vm2117, %v2693, 0.0
  %v3034 = vadd.f32 %v3032, %v3033
  %v3035 = vsel %vm2117, %v2694, 0.0
  %v3036 = vadd.f32 %v3034, %v3035
  %v3037 = vsel %vm2117, %v2695, 0.0
  %v3038 = vadd.f32 %v3036, %v3037
  %v3039 = vsel %vm2117, %v2696, 0.0
  %v3040 = vadd.f32 %v3038, %v3039
  %v3041 = vsel %vm2117, %v2697, 0.0
  %v3042 = vadd.f32 %v3040, %v3041
  %v3043 = vsel %vm2117, %v2698, 0.0
  %v3044 = vadd.f32 %v3042, %v3043
  %v3045 = vsel %vm2117, %v2699, 0.0
  %v3046 = vadd.f32 %v3044, %v3045
  %v3047 = vsel %vm2117, %v2700, 0.0
  %v3048 = vadd.f32 %v3046, %v3047
  %v3049 = vsel %vm2117, %v2701, 0.0
  %v3050 = vadd.f32 %v3048, %v3049
  %v3051 = vsel %vm2117, %v2702, 0.0
  %v3052 = vadd.f32 %v3050, %v3051
  %v3053 = vsel %vm2117, %v2703, 0.0
  %v3054 = vadd.f32 %v3052, %v3053
  %v3055 = vsel %vm2117, %v2704, 0.0
  %v3056 = vadd.f32 %v3054, %v3055
  %v3057 = vsel %vm2117, %v2705, 0.0
  %v3058 = vadd.f32 %v3056, %v3057
  %v3059 = vsel %vm2117, %v2706, 0.0
  %v3060 = vadd.f32 %v3058, %v3059
  %v3061 = vsel %vm2117, %v2707, 0.0
  %v3062 = vadd.f32 %v3060, %v3061
  %v3063 = vsel %vm2117, %v2708, 0.0
  %v3064 = vadd.f32 %v3062, %v3063
  %v3065 = vsel %vm2117, %v2709, 0.0
  %v3066 = vadd.f32 %v3064, %v3065
  %v3067 = vsel %vm2117, %v2710, 0.0
  %v3068 = vadd.f32 %v3066, %v3067
  %v3069 = vsel %vm2117, %v2711, 0.0
  %v3070 = vadd.f32 %v3068, %v3069
  %v3071 = vsel %vm2117, %v2712, 0.0
  %v3072 = vadd.f32 %v3070, %v3071
  %v3073 = vsel %vm2117, %v2713, 0.0
  %v3074 = vadd.f32 %v3072, %v3073
  %v3075 = vsel %vm2117, %v2714, 0.0
  %v3076 = vadd.f32 %v3074, %v3075
  %v3077 = vsel %vm2117, %v2715, 0.0
  %v3078 = vadd.f32 %v3076, %v3077
  %v3079 = vsel %vm2117, %v2716, 0.0
  %v3080 = vadd.f32 %v3078, %v3079
  %v3081 = vsel %vm2117, %v2717, 0.0
  %v3082 = vadd.f32 %v3080, %v3081
  %v3083 = vsel %vm2117, %v2718, 0.0
  %v3084 = vadd.f32 %v3082, %v3083
  %v3085 = vsel %vm2117, %v2719, 0.0
  %v3086 = vadd.f32 %v3084, %v3085
  %v3087 = vsel %vm2117, %v2720, 0.0
  %v3088 = vadd.f32 %v3086, %v3087
  %v3089 = vsel %vm2117, %v2721, 0.0
  %v3090 = vadd.f32 %v3088, %v3089
  %v3091 = vsel %vm2117, %v2722, 0.0
  %v3092 = vadd.f32 %v3090, %v3091
  %v3093 = vsel %vm2117, %v2723, 0.0
  %v3094 = vadd.f32 %v3092, %v3093
  %v3095 = vsel %vm2117, %v2724, 0.0
  %v3096 = vadd.f32 %v3094, %v3095
  %v3097 = vsel %vm2117, %v2725, 0.0
  %v3098 = vadd.f32 %v3096, %v3097
  %v3099 = vsel %vm2117, %v2726, 0.0
  %v3100 = vadd.f32 %v3098, %v3099
  %v3101 = vsel %vm2117, %v2727, 0.0
  %v3102 = vadd.f32 %v3100, %v3101
  %v3103 = vsel %vm2117, %v2728, 0.0
  %v3104 = vadd.f32 %v3102, %v3103
  %v3105 = vsel %vm2117, %v2729, 0.0
  %v3106 = vadd.f32 %v3104, %v3105
  %v3107 = vsel %vm2117, %v2730, 0.0
  %v3108 = vadd.f32 %v3106, %v3107
  %v3109 = vsel %vm2117, %v2731, 0.0
  %v3110 = vadd.f32 %v3108, %v3109
  %v3111 = vsel %vm2117, %v2732, 0.0
  %v3112 = vadd.f32 %v3110, %v3111
  %v3113 = vsel %vm2117, %v2733, 0.0
  %v3114 = vadd.f32 %v3112, %v3113
  %v3115 = vsel %vm2117, %v2734, 0.0
  %v3116 = vadd.f32 %v3114, %v3115
  %v3117 = vsel %vm2117, %v2735, 0.0
  %v3118 = vadd.f32 %v3116, %v3117
  %v3119 = vsel %vm2117, %v2736, 0.0
  %v3120 = vadd.f32 %v3118, %v3119
  %v3121 = vsel %vm2117, %v2737, 0.0
  %v3122 = vadd.f32 %v3120, %v3121
  %v3123 = vsel %vm2117, %v2738, 0.0
  %v3124 = vadd.f32 %v3122, %v3123
  %v3125 = vsel %vm2117, %v2739, 0.0
  %v3126 = vadd.f32 %v3124, %v3125
  %v3127 = vsel %vm2117, %v2740, 0.0
  %v3128 = vadd.f32 %v3126, %v3127
  %v3129 = vsel %vm2117, %v2741, 0.0
  %v3130 = vadd.f32 %v3128, %v3129
  %v3131 = vsel %vm2117, %v2742, 0.0
  %v3132 = vadd.f32 %v3130, %v3131
  %v3133 = vsel %vm2117, %v2743, 0.0
  %v3134 = vadd.f32 %v3132, %v3133
  %v3135 = vsel %vm2117, %v2744, 0.0
  %v3136 = vadd.f32 %v3134, %v3135
  %v3137 = vsel %vm2117, %v2745, 0.0
  %v3138 = vadd.f32 %v3136, %v3137
  %v3139 = vsel %vm2117, %v2746, 0.0
  %v3140 = vadd.f32 %v3138, %v3139
  %v3141 = vsel %vm2117, %v2747, 0.0
  %v3142 = vadd.f32 %v3140, %v3141
  %v3143 = vsel %vm2117, %v2748, 0.0
  %v3144 = vadd.f32 %v3142, %v3143
  %v3145 = vsel %vm2117, %v2749, 0.0
  %v3146 = vadd.f32 %v3144, %v3145
  %v3147 = vsel %vm2117, %v2750, 0.0
  %v3148 = vadd.f32 %v3146, %v3147
  %v3149 = vsel %vm2117, %v2751, 0.0
  %v3150 = vadd.f32 %v3148, %v3149
  %v3151 = vsel %vm2117, %v2752, 0.0
  %v3152 = vadd.f32 %v3150, %v3151
  %v3153 = vsel %vm2117, %v2753, 0.0
  %v3154 = vadd.f32 %v3152, %v3153
  %v3155 = vsel %vm2117, %v2754, 0.0
  %v3156 = vadd.f32 %v3154, %v3155
  %v3157 = vsel %vm2117, %v2755, 0.0
  %v3158 = vadd.f32 %v3156, %v3157
  %v3159 = vsel %vm2117, %v2756, 0.0
  %v3160 = vadd.f32 %v3158, %v3159
  %v3161 = vsel %vm2117, %v2757, 0.0
  %v3162 = vadd.f32 %v3160, %v3161
  %v3163 = vsel %vm2117, %v2758, 0.0
  %v3164 = vadd.f32 %v3162, %v3163
  %v3165 = vsel %vm2117, %v2759, 0.0
  %v3166 = vadd.f32 %v3164, %v3165
  %v3167 = vsel %vm2117, %v2760, 0.0
  %v3168 = vadd.f32 %v3166, %v3167
  %v3169 = vsel %vm2117, %v2761, 0.0
  %v3170 = vadd.f32 %v3168, %v3169
  %v3171 = vsel %vm2117, %v2762, 0.0
  %v3172 = vadd.f32 %v3170, %v3171
  %v3173 = vsel %vm2117, %v2763, 0.0
  %v3174 = vadd.f32 %v3172, %v3173
  %v3175 = vsel %vm2117, %v2764, 0.0
  %v3176 = vadd.f32 %v3174, %v3175
  %v3177 = vsel %vm2117, %v2765, 0.0
  %v3178 = vadd.f32 %v3176, %v3177
  %v3179 = vsel %vm2117, %v2766, 0.0
  %v3180 = vadd.f32 %v3178, %v3179
  %v3181 = vsel %vm2117, %v2767, 0.0
  %v3182 = vadd.f32 %v3180, %v3181
  %v3183 = vsel %vm2117, %v2768, 0.0
  %v3184 = vadd.f32 %v3182, %v3183
  %v3185 = vsel %vm2117, %v2769, 0.0
  %v3186 = vadd.f32 %v3184, %v3185
  %v3187 = vsel %vm2117, %v2770, 0.0
  %v3188 = vadd.f32 %v3186, %v3187
  %v3189 = vsel %vm2117, %v2771, 0.0
  %v3190 = vadd.f32 %v3188, %v3189
  %v3191 = vsel %vm2117, %v2772, 0.0
  %v3192 = vadd.f32 %v3190, %v3191
  %v3193 = vsel %vm2117, %v2773, 0.0
  %v3194 = vadd.f32 %v3192, %v3193
  %v3195 = vsel %vm2117, %v2774, 0.0
  %v3196 = vadd.f32 %v3194, %v3195
  %v3197 = vsel %vm2117, %v2775, 0.0
  %v3198 = vadd.f32 %v3196, %v3197
  %v3199 = vsel %vm2117, %v2776, 0.0
  %v3200 = vadd.f32 %v3198, %v3199
  %v3201 = vsel %vm2117, %v2777, 0.0
  %v3202 = vadd.f32 %v3200, %v3201
  %v3203 = vsel %vm2117, %v2778, 0.0
  %v3204 = vadd.f32 %v3202, %v3203
  %v3205 = vsel %vm2117, %v2779, 0.0
  %v3206 = vadd.f32 %v3204, %v3205
  %v3207 = vsel %vm2117, %v2780, 0.0
  %v3208 = vadd.f32 %v3206, %v3207
  %v3209 = vsel %vm2117, %v2781, 0.0
  %v3210 = vadd.f32 %v3208, %v3209
  %v3211 = vsel %vm2117, %v2782, 0.0
  %v3212 = vadd.f32 %v3210, %v3211
  %v3213 = vsel %vm2117, %v2783, 0.0
  %v3214 = vadd.f32 %v3212, %v3213
  %v3215 = vsel %vm2117, %v2784, 0.0
  %v3216 = vadd.f32 %v3214, %v3215
  %v3217 = vsel %vm2117, %v2785, 0.0
  %v3218 = vadd.f32 %v3216, %v3217
  %v3219 = vsel %vm2117, %v2786, 0.0
  %v3220 = vadd.f32 %v3218, %v3219
  %v3221 = vsel %vm2117, %v2787, 0.0
  %v3222 = vadd.f32 %v3220, %v3221
  %v3223 = vsel %vm2117, %v2788, 0.0
  %v3224 = vadd.f32 %v3222, %v3223
  %v3225 = vsel %vm2117, %v2789, 0.0
  %v3226 = vadd.f32 %v3224, %v3225
  %v3227 = vsel %vm2117, %v2790, 0.0
  %v3228 = vadd.f32 %v3226, %v3227
  %v3229 = vsel %vm2117, %v2791, 0.0
  %v3230 = vadd.f32 %v3228, %v3229
  %v3231 = vsel %vm2117, %v2792, 0.0
  %v3232 = vadd.f32 %v3230, %v3231
  %v3233 = vsel %vm2117, %v2793, 0.0
  %v3234 = vadd.f32 %v3232, %v3233
  %v3235 = vsel %vm2117, %v2794, 0.0
  %v3236 = vadd.f32 %v3234, %v3235
  %v3237 = vsel %vm2117, %v2795, 0.0
  %v3238 = vadd.f32 %v3236, %v3237
  %v3239 = vsel %vm2117, %v2796, 0.0
  %v3240 = vadd.f32 %v3238, %v3239
  %v3241 = vsel %vm2117, %v2797, 0.0
  %v3242 = vadd.f32 %v3240, %v3241
  %v3243 = vsel %vm2117, %v2798, 0.0
  %v3244 = vadd.f32 %v3242, %v3243
  %v3245 = vsel %vm2117, %v2799, 0.0
  %v3246 = vadd.f32 %v3244, %v3245
  %v3247 = vsel %vm2117, %v2800, 0.0
  %v3248 = vadd.f32 %v3246, %v3247
  %v3249 = vsel %vm2117, %v2801, 0.0
  %v3250 = vadd.f32 %v3248, %v3249
  %v3251 = vsel %vm2117, %v2802, 0.0
  %v3252 = vadd.f32 %v3250, %v3251
  %v3253 = vsel %vm2117, %v2803, 0.0
  %v3254 = vadd.f32 %v3252, %v3253
  %v3255 = vsel %vm2117, %v2804, 0.0
  %v3256 = vadd.f32 %v3254, %v3255
  %v3257 = vsel %vm2117, %v2805, 0.0
  %v3258 = vadd.f32 %v3256, %v3257
  %v3259 = vsel %vm2117, %v2806, 0.0
  %v3260 = vadd.f32 %v3258, %v3259
  %v3261 = vsel %vm2117, %v2807, 0.0
  %v3262 = vadd.f32 %v3260, %v3261
  %v3263 = vrot.slane %v3262, 4
  %v3264 = vadd.f32 %v3262, %v3263
  %v3265 = vrot.slane %v3264, 2
  %v3266 = vadd.f32 %v3264, %v3265
  %v3267 = vrot.slane %v3266, 1
  %v3268 = vadd.f32 %v3266, %v3267
  %v3269 = vmul.f32 %v3268, 0.00055555557
  %v3270 = vmul.f32 %v2579, %v2579
  %v3271 = vsub.f32 %v3269, %v3270
  %v3272 = vld [vmem:[%s2] sm:$0x1]
  %v3273 = vadd.f32 %v3271, 1e-05
  %v3274 = vrsqrt.pop %v3273
  %v3275 = vmul.f32 %v3272, %v3274
  %v3276 = vld [vmem:[%s2 + $0x1] sm:$0x1]
  %v3277 = vmul.f32 %v2579, %v3275
  %v3278 = vsub.f32 %v3276, %v3277
  %v3279 = vlaneseq
  %v3280 = vshrl.u32 %v3279, 7
  %v3281 = vsub.s32 0, %v3280
  %v3282 = vrot.slane %v3275, %v3281
  %v3283 = vmul.f32 %v1207, %v3282
  %v3284 = vmul.f32 %v1210, %v3282
  %v3285 = vmul.f32 %v1215, %v3282
  %v3286 = vmul.f32 %v1218, %v3282
  %v3287 = vmul.f32 %v1223, %v3282
  %v3288 = vmul.f32 %v1226, %v3282
  %v3289 = vmul.f32 %v1231, %v3282
  %v3290 = vmul.f32 %v1234, %v3282
  %v3291 = vmul.f32 %v1239, %v3282
  %v3292 = vmul.f32 %v1242, %v3282
  %v3293 = vmul.f32 %v1247, %v3282
  %v3294 = vmul.f32 %v1250, %v3282
  %v3295 = vmul.f32 %v1255, %v3282
  %v3296 = vmul.f32 %v1258, %v3282
  %v3297 = vmul.f32 %v1263, %v3282
  %v3298 = vmul.f32 %v1266, %v3282
  %v3299 = vmul.f32 %v1271, %v3282
  %v3300 = vmul.f32 %v1274, %v3282
  %v3301 = vmul.f32 %v1279, %v3282
  %v3302 = vmul.f32 %v1282, %v3282
  %v3303 = vmul.f32 %v1287, %v3282
  %v3304 = vmul.f32 %v1290, %v3282
  %v3305 = vmul.f32 %v1295, %v3282
  %v3306 = vmul.f32 %v1298, %v3282
  %v3307 = vmul.f32 %v1303, %v3282
  %v3308 = vmul.f32 %v1306, %v3282
  %v3309 = vmul.f32 %v1311, %v3282
  %v3310 = vmul.f32 %v1314, %v3282
  %v3311 = vmul.f32 %v1319, %v3282
  %v3312 = vmul.f32 %v1322, %v3282
  %v3313 = vmul.f32 %v1327, %v3282
  %v3314 = vmul.f32 %v1330, %v3282
  %v3315 = vmul.f32 %v1335, %v3282
  %v3316 = vmul.f32 %v1338, %v3282
  %v3317 = vmul.f32 %v1343, %v3282
  %v3318 = vmul.f32 %v1346, %v3282
  %v3319 = vmul.f32 %v1351, %v3282
  %v3320 = vmul.f32 %v1354, %v3282
  %v3321 = vmul.f32 %v1359, %v3282
  %v3322 = vmul.f32 %v1362, %v3282
  %v3323 = vmul.f32 %v1367, %v3282
  %v3324 = vmul.f32 %v1370, %v3282
  %v3325 = vmul.f32 %v1375, %v3282
  %v3326 = vmul.f32 %v1378, %v3282
  %v3327 = vmul.f32 %v1383, %v3282
  %v3328 = vmul.f32 %v1386, %v3282
  %v3329 = vmul.f32 %v1391, %v3282
  %v3330 = vmul.f32 %v1394, %v3282
  %v3331 = vmul.f32 %v1399, %v3282
  %v3332 = vmul.f32 %v1402, %v3282
  %v3333 = vmul.f32 %v1407, %v3282
  %v3334 = vmul.f32 %v1410, %v3282
  %v3335 = vmul.f32 %v1415, %v3282
  %v3336 = vmul.f32 %v1418, %v3282
  %v3337 = vmul.f32 %v1423, %v3282
  %v3338 = vmul.f32 %v1426, %v3282
  %v3339 = vmul.f32 %v1431, %v3282
  %v3340 = vmul.f32 %v1434, %v3282
  %v3341 = vmul.f32 %v1439, %v3282
  %v3342 = vmul.f32 %v1442, %v3282
  %v3343 = vmul.f32 %v1447, %v3282
  %v3344 = vmul.f32 %v1450, %v3282
  %v3345 = vmul.f32 %v1455, %v3282
  %v3346 = vmul.f32 %v1458, %v3282
  %v3347 = vmul.f32 %v1463, %v3282
  %v3348 = vmul.f32 %v1466, %v3282
  %v3349 = vmul.f32 %v1471, %v3282
  %v3350 = vmul.f32 %v1474, %v3282
  %v3351 = vmul.f32 %v1479, %v3282
  %v3352 = vmul.f32 %v1482, %v3282
  %v3353 = vmul.f32 %v1487, %v3282
  %v3354 = vmul.f32 %v1490, %v3282
  %v3355 = vmul.f32 %v1495, %v3282
  %v3356 = vmul.f32 %v1498, %v3282
  %v3357 = vmul.f32 %v1503, %v3282
  %v3358 = vmul.f32 %v1506, %v3282
  %v3359 = vmul.f32 %v1511, %v3282
  %v3360 = vmul.f32 %v1514, %v3282
  %v3361 = vmul.f32 %v1519, %v3282
  %v3362 = vmul.f32 %v1522, %v3282
  %v3363 = vmul.f32 %v1527, %v3282
  %v3364 = vmul.f32 %v1530, %v3282
  %v3365 = vmul.f32 %v1535, %v3282
  %v3366 = vmul.f32 %v1538, %v3282
  %v3367 = vmul.f32 %v1543, %v3282
  %v3368 = vmul.f32 %v1546, %v3282
  %v3369 = vmul.f32 %v1551, %v3282
  %v3370 = vmul.f32 %v1554, %v3282
  %v3371 = vmul.f32 %v1559, %v3282
  %v3372 = vmul.f32 %v1562, %v3282
  %v3373 = vmul.f32 %v1567, %v3282
  %v3374 = vmul.f32 %v1570, %v3282
  %v3375 = vmul.f32 %v1575, %v3282
  %v3376 = vmul.f32 %v1578, %v3282
  %v3377 = vmul.f32 %v1583, %v3282
  %v3378 = vmul.f32 %v1586, %v3282
  %v3379 = vmul.f32 %v1591, %v3282
  %v3380 = vmul.f32 %v1594, %v3282
  %v3381 = vmul.f32 %v1599, %v3282
  %v3382 = vmul.f32 %v1602, %v3282
  %v3383 = vmul.f32 %v1607, %v3282
  %v3384 = vmul.f32 %v1610, %v3282
  %v3385 = vmul.f32 %v1615, %v3282
  %v3386 = vmul.f32 %v1618, %v3282
  %v3387 = vmul.f32 %v1623, %v3282
  %v3388 = vmul.f32 %v1626, %v3282
  %v3389 = vmul.f32 %v1631, %v3282
  %v3390 = vmul.f32 %v1634, %v3282
  %v3391 = vmul.f32 %v1639, %v3282
  %v3392 = vmul.f32 %v1642, %v3282
  %v3393 = vmul.f32 %v1647, %v3282
  %v3394 = vmul.f32 %v1650, %v3282
  %v3395 = vmul.f32 %v1655, %v3282
  %v3396 = vmul.f32 %v1658, %v3282
  %v3397 = vmul.f32 %v1663, %v3282
  %v3398 = vmul.f32 %v1666, %v3282
  %v3399 = vmul.f32 %v1671, %v3282
  %v3400 = vmul.f32 %v1674, %v3282
  %v3401 = vmul.f32 %v1679, %v3282
  %v3402 = vmul.f32 %v1682, %v3282
  %v3403 = vmul.f32 %v1687, %v3282
  %v3404 = vmul.f32 %v1690, %v3282
  %v3405 = vmul.f32 %v1695, %v3282
  %v3406 = vmul.f32 %v1698, %v3282
  %v3407 = vmul.f32 %v1703, %v3282
  %v3408 = vmul.f32 %v1706, %v3282
  %v3409 = vmul.f32 %v1711, %v3282
  %v3410 = vmul.f32 %v1714, %v3282
  %v3411 = vmul.f32 %v1719, %v3282
  %v3412 = vmul.f32 %v1722, %v3282
  %v3413 = vmul.f32 %v1727, %v3282
  %v3414 = vmul.f32 %v1730, %v3282
  %v3415 = vmul.f32 %v1735, %v3282
  %v3416 = vmul.f32 %v1738, %v3282
  %v3417 = vmul.f32 %v1743, %v3282
  %v3418 = vmul.f32 %v1746, %v3282
  %v3419 = vmul.f32 %v1751, %v3282
  %v3420 = vmul.f32 %v1754, %v3282
  %v3421 = vmul.f32 %v1759, %v3282
  %v3422 = vmul.f32 %v1762, %v3282
  %v3423 = vmul.f32 %v1767, %v3282
  %v3424 = vmul.f32 %v1770, %v3282
  %v3425 = vmul.f32 %v1775, %v3282
  %v3426 = vmul.f32 %v1778, %v3282
  %v3427 = vmul.f32 %v1783, %v3282
  %v3428 = vmul.f32 %v1786, %v3282
  %v3429 = vmul.f32 %v1791, %v3282
  %v3430 = vmul.f32 %v1794, %v3282
  %v3431 = vmul.f32 %v1799, %v3282
  %v3432 = vmul.f32 %v1802, %v3282
  %v3433 = vmul.f32 %v1807, %v3282
  %v3434 = vmul.f32 %v1810, %v3282
  %v3435 = vmul.f32 %v1815, %v3282
  %v3436 = vmul.f32 %v1818, %v3282
  %v3437 = vmul.f32 %v1823, %v3282
  %v3438 = vmul.f32 %v1826, %v3282
  %v3439 = vmul.f32 %v1831, %v3282
  %v3440 = vmul.f32 %v1834, %v3282
  %v3441 = vmul.f32 %v1839, %v3282
  %v3442 = vmul.f32 %v1842, %v3282
  %v3443 = vmul.f32 %v1847, %v3282
  %v3444 = vmul.f32 %v1850, %v3282
  %v3445 = vmul.f32 %v1855, %v3282
  %v3446 = vmul.f32 %v1858, %v3282
  %v3447 = vmul.f32 %v1863, %v3282
  %v3448 = vmul.f32 %v1866, %v3282
  %v3449 = vmul.f32 %v1871, %v3282
  %v3450 = vmul.f32 %v1874, %v3282
  %v3451 = vmul.f32 %v1879, %v3282
  %v3452 = vmul.f32 %v1882, %v3282
  %v3453 = vmul.f32 %v1887, %v3282
  %v3454 = vmul.f32 %v1890, %v3282
  %v3455 = vmul.f32 %v1895, %v3282
  %v3456 = vmul.f32 %v1898, %v3282
  %v3457 = vmul.f32 %v1903, %v3282
  %v3458 = vmul.f32 %v1906, %v3282
  %v3459 = vmul.f32 %v1911, %v3282
  %v3460 = vmul.f32 %v1914, %v3282
  %v3461 = vmul.f32 %v1919, %v3282
  %v3462 = vmul.f32 %v1922, %v3282
  %v3463 = vmul.f32 %v1927, %v3282
  %v3464 = vmul.f32 %v1930, %v3282
  %v3465 = vmul.f32 %v1935, %v3282
  %v3466 = vmul.f32 %v1938, %v3282
  %v3467 = vmul.f32 %v1943, %v3282
  %v3468 = vmul.f32 %v1946, %v3282
  %v3469 = vmul.f32 %v1951, %v3282
  %v3470 = vmul.f32 %v1954, %v3282
  %v3471 = vmul.f32 %v1959, %v3282
  %v3472 = vmul.f32 %v1962, %v3282
  %v3473 = vmul.f32 %v1967, %v3282
  %v3474 = vmul.f32 %v1970, %v3282
  %v3475 = vmul.f32 %v1975, %v3282
  %v3476 = vmul.f32 %v1978, %v3282
  %v3477 = vmul.f32 %v1983, %v3282
  %v3478 = vmul.f32 %v1986, %v3282
  %v3479 = vmul.f32 %v1991, %v3282
  %v3480 = vmul.f32 %v1994, %v3282
  %v3481 = vmul.f32 %v1999, %v3282
  %v3482 = vmul.f32 %v2002, %v3282
  %v3483 = vmul.f32 %v2007, %v3282
  %v3484 = vmul.f32 %v2010, %v3282
  %v3485 = vmul.f32 %v2015, %v3282
  %v3486 = vmul.f32 %v2018, %v3282
  %v3487 = vmul.f32 %v2023, %v3282
  %v3488 = vmul.f32 %v2026, %v3282
  %v3489 = vmul.f32 %v2031, %v3282
  %v3490 = vmul.f32 %v2034, %v3282
  %v3491 = vmul.f32 %v2039, %v3282
  %v3492 = vmul.f32 %v2042, %v3282
  %v3493 = vmul.f32 %v2047, %v3282
  %v3494 = vmul.f32 %v2050, %v3282
  %v3495 = vmul.f32 %v2055, %v3282
  %v3496 = vmul.f32 %v2058, %v3282
  %v3497 = vmul.f32 %v2063, %v3282
  %v3498 = vmul.f32 %v2066, %v3282
  %v3499 = vmul.f32 %v2071, %v3282
  %v3500 = vmul.f32 %v2074, %v3282
  %v3501 = vmul.f32 %v2079, %v3282
  %v3502 = vmul.f32 %v2082, %v3282
  %v3503 = vmul.f32 %v2087, %v3282
  %v3504 = vmul.f32 %v2090, %v3282
  %v3505 = vmul.f32 %v2095, %v3282
  %v3506 = vmul.f32 %v2098, %v3282
  %v3507 = vmul.f32 %v2103, %v3282
  %v3508 = vmul.f32 %v2106, %v3282
  %v3509 = vmul.f32 %v2111, %v3282
  %v3510 = vmul.f32 %v2114, %v3282
  %v3511 = vlaneseq
  %v3512 = vshrl.u32 %v3511, 7
  %v3513 = vsub.s32 0, %v3512
  %v3514 = vrot.slane %v3278, %v3513
  %v3515 = vadd.f32 %v3283, %v3514
  %v3516 = vadd.f32 %v3284, %v3514
  %v3517 = vadd.f32 %v3285, %v3514
  %v3518 = vadd.f32 %v3286, %v3514
  %v3519 = vadd.f32 %v3287, %v3514
  %v3520 = vadd.f32 %v3288, %v3514
  %v3521 = vadd.f32 %v3289, %v3514
  %v3522 = vadd.f32 %v3290, %v3514
  %v3523 = vadd.f32 %v3291, %v3514
  %v3524 = vadd.f32 %v3292, %v3514
  %v3525 = vadd.f32 %v3293, %v3514
  %v3526 = vadd.f32 %v3294, %v3514
  %v3527 = vadd.f32 %v3295, %v3514
  %v3528 = vadd.f32 %v3296, %v3514
  %v3529 = vadd.f32 %v3297, %v3514
  %v3530 = vadd.f32 %v3298, %v3514
  %v3531 = vadd.f32 %v3299, %v3514
  %v3532 = vadd.f32 %v3300, %v3514
  %v3533 = vadd.f32 %v3301, %v3514
  %v3534 = vadd.f32 %v3302, %v3514
  %v3535 = vadd.f32 %v3303, %v3514
  %v3536 = vadd.f32 %v3304, %v3514
  %v3537 = vadd.f32 %v3305, %v3514
  %v3538 = vadd.f32 %v3306, %v3514
  %v3539 = vadd.f32 %v3307, %v3514
  %v3540 = vadd.f32 %v3308, %v3514
  %v3541 = vadd.f32 %v3309, %v3514
  %v3542 = vadd.f32 %v3310, %v3514
  %v3543 = vadd.f32 %v3311, %v3514
  %v3544 = vadd.f32 %v3312, %v3514
  %v3545 = vadd.f32 %v3313, %v3514
  %v3546 = vadd.f32 %v3314, %v3514
  %v3547 = vadd.f32 %v3315, %v3514
  %v3548 = vadd.f32 %v3316, %v3514
  %v3549 = vadd.f32 %v3317, %v3514
  %v3550 = vadd.f32 %v3318, %v3514
  %v3551 = vadd.f32 %v3319, %v3514
  %v3552 = vadd.f32 %v3320, %v3514
  %v3553 = vadd.f32 %v3321, %v3514
  %v3554 = vadd.f32 %v3322, %v3514
  %v3555 = vadd.f32 %v3323, %v3514
  %v3556 = vadd.f32 %v3324, %v3514
  %v3557 = vadd.f32 %v3325, %v3514
  %v3558 = vadd.f32 %v3326, %v3514
  %v3559 = vadd.f32 %v3327, %v3514
  %v3560 = vadd.f32 %v3328, %v3514
  %v3561 = vadd.f32 %v3329, %v3514
  %v3562 = vadd.f32 %v3330, %v3514
  %v3563 = vadd.f32 %v3331, %v3514
  %v3564 = vadd.f32 %v3332, %v3514
  %v3565 = vadd.f32 %v3333, %v3514
  %v3566 = vadd.f32 %v3334, %v3514
  %v3567 = vadd.f32 %v3335, %v3514
  %v3568 = vadd.f32 %v3336, %v3514
  %v3569 = vadd.f32 %v3337, %v3514
  %v3570 = vadd.f32 %v3338, %v3514
  %v3571 = vadd.f32 %v3339, %v3514
  %v3572 = vadd.f32 %v3340, %v3514
  %v3573 = vadd.f32 %v3341, %v3514
  %v3574 = vadd.f32 %v3342, %v3514
  %v3575 = vadd.f32 %v3343, %v3514
  %v3576 = vadd.f32 %v3344, %v3514
  %v3577 = vadd.f32 %v3345, %v3514
  %v3578 = vadd.f32 %v3346, %v3514
  %v3579 = vadd.f32 %v3347, %v3514
  %v3580 = vadd.f32 %v3348, %v3514
  %v3581 = vadd.f32 %v3349, %v3514
  %v3582 = vadd.f32 %v3350, %v3514
  %v3583 = vadd.f32 %v3351, %v3514
  %v3584 = vadd.f32 %v3352, %v3514
  %v3585 = vadd.f32 %v3353, %v3514
  %v3586 = vadd.f32 %v3354, %v3514
  %v3587 = vadd.f32 %v3355, %v3514
  %v3588 = vadd.f32 %v3356, %v3514
  %v3589 = vadd.f32 %v3357, %v3514
  %v3590 = vadd.f32 %v3358, %v3514
  %v3591 = vadd.f32 %v3359, %v3514
  %v3592 = vadd.f32 %v3360, %v3514
  %v3593 = vadd.f32 %v3361, %v3514
  %v3594 = vadd.f32 %v3362, %v3514
  %v3595 = vadd.f32 %v3363, %v3514
  %v3596 = vadd.f32 %v3364, %v3514
  %v3597 = vadd.f32 %v3365, %v3514
  %v3598 = vadd.f32 %v3366, %v3514
  %v3599 = vadd.f32 %v3367, %v3514
  %v3600 = vadd.f32 %v3368, %v3514
  %v3601 = vadd.f32 %v3369, %v3514
  %v3602 = vadd.f32 %v3370, %v3514
  %v3603 = vadd.f32 %v3371, %v3514
  %v3604 = vadd.f32 %v3372, %v3514
  %v3605 = vadd.f32 %v3373, %v3514
  %v3606 = vadd.f32 %v3374, %v3514
  %v3607 = vadd.f32 %v3375, %v3514
  %v3608 = vadd.f32 %v3376, %v3514
  %v3609 = vadd.f32 %v3377, %v3514
  %v3610 = vadd.f32 %v3378, %v3514
  %v3611 = vadd.f32 %v3379, %v3514
  %v3612 = vadd.f32 %v3380, %v3514
  %v3613 = vadd.f32 %v3381, %v3514
  %v3614 = vadd.f32 %v3382, %v3514
  %v3615 = vadd.f32 %v3383, %v3514
  %v3616 = vadd.f32 %v3384, %v3514
  %v3617 = vadd.f32 %v3385, %v3514
  %v3618 = vadd.f32 %v3386, %v3514
  %v3619 = vadd.f32 %v3387, %v3514
  %v3620 = vadd.f32 %v3388, %v3514
  %v3621 = vadd.f32 %v3389, %v3514
  %v3622 = vadd.f32 %v3390, %v3514
  %v3623 = vadd.f32 %v3391, %v3514
  %v3624 = vadd.f32 %v3392, %v3514
  %v3625 = vadd.f32 %v3393, %v3514
  %v3626 = vadd.f32 %v3394, %v3514
  %v3627 = vadd.f32 %v3395, %v3514
  %v3628 = vadd.f32 %v3396, %v3514
  %v3629 = vadd.f32 %v3397, %v3514
  %v3630 = vadd.f32 %v3398, %v3514
  %v3631 = vadd.f32 %v3399, %v3514
  %v3632 = vadd.f32 %v3400, %v3514
  %v3633 = vadd.f32 %v3401, %v3514
  %v3634 = vadd.f32 %v3402, %v3514
  %v3635 = vadd.f32 %v3403, %v3514
  %v3636 = vadd.f32 %v3404, %v3514
  %v3637 = vadd.f32 %v3405, %v3514
  %v3638 = vadd.f32 %v3406, %v3514
  %v3639 = vadd.f32 %v3407, %v3514
  %v3640 = vadd.f32 %v3408, %v3514
  %v3641 = vadd.f32 %v3409, %v3514
  %v3642 = vadd.f32 %v3410, %v3514
  %v3643 = vadd.f32 %v3411, %v3514
  %v3644 = vadd.f32 %v3412, %v3514
  %v3645 = vadd.f32 %v3413, %v3514
  %v3646 = vadd.f32 %v3414, %v3514
  %v3647 = vadd.f32 %v3415, %v3514
  %v3648 = vadd.f32 %v3416, %v3514
  %v3649 = vadd.f32 %v3417, %v3514
  %v3650 = vadd.f32 %v3418, %v3514
  %v3651 = vadd.f32 %v3419, %v3514
  %v3652 = vadd.f32 %v3420, %v3514
  %v3653 = vadd.f32 %v3421, %v3514
  %v3654 = vadd.f32 %v3422, %v3514
  %v3655 = vadd.f32 %v3423, %v3514
  %v3656 = vadd.f32 %v3424, %v3514
  %v3657 = vadd.f32 %v3425, %v3514
  %v3658 = vadd.f32 %v3426, %v3514
  %v3659 = vadd.f32 %v3427, %v3514
  %v3660 = vadd.f32 %v3428, %v3514
  %v3661 = vadd.f32 %v3429, %v3514
  %v3662 = vadd.f32 %v3430, %v3514
  %v3663 = vadd.f32 %v3431, %v3514
  %v3664 = vadd.f32 %v3432, %v3514
  %v3665 = vadd.f32 %v3433, %v3514
  %v3666 = vadd.f32 %v3434, %v3514
  %v3667 = vadd.f32 %v3435, %v3514
  %v3668 = vadd.f32 %v3436, %v3514
  %v3669 = vadd.f32 %v3437, %v3514
  %v3670 = vadd.f32 %v3438, %v3514
  %v3671 = vadd.f32 %v3439, %v3514
  %v3672 = vadd.f32 %v3440, %v3514
  %v3673 = vadd.f32 %v3441, %v3514
  %v3674 = vadd.f32 %v3442, %v3514
  %v3675 = vadd.f32 %v3443, %v3514
  %v3676 = vadd.f32 %v3444, %v3514
  %v3677 = vadd.f32 %v3445, %v3514
  %v3678 = vadd.f32 %v3446, %v3514
  %v3679 = vadd.f32 %v3447, %v3514
  %v3680 = vadd.f32 %v3448, %v3514
  %v3681 = vadd.f32 %v3449, %v3514
  %v3682 = vadd.f32 %v3450, %v3514
  %v3683 = vadd.f32 %v3451, %v3514
  %v3684 = vadd.f32 %v3452, %v3514
  %v3685 = vadd.f32 %v3453, %v3514
  %v3686 = vadd.f32 %v3454, %v3514
  %v3687 = vadd.f32 %v3455, %v3514
  %v3688 = vadd.f32 %v3456, %v3514
  %v3689 = vadd.f32 %v3457, %v3514
  %v3690 = vadd.f32 %v3458, %v3514
  %v3691 = vadd.f32 %v3459, %v3514
  %v3692 = vadd.f32 %v3460, %v3514
  %v3693 = vadd.f32 %v3461, %v3514
  %v3694 = vadd.f32 %v3462, %v3514
  %v3695 = vadd.f32 %v3463, %v3514
  %v3696 = vadd.f32 %v3464, %v3514
  %v3697 = vadd.f32 %v3465, %v3514
  %v3698 = vadd.f32 %v3466, %v3514
  %v3699 = vadd.f32 %v3467, %v3514
  %v3700 = vadd.f32 %v3468, %v3514
  %v3701 = vadd.f32 %v3469, %v3514
  %v3702 = vadd.f32 %v3470, %v3514
  %v3703 = vadd.f32 %v3471, %v3514
  %v3704 = vadd.f32 %v3472, %v3514
  %v3705 = vadd.f32 %v3473, %v3514
  %v3706 = vadd.f32 %v3474, %v3514
  %v3707 = vadd.f32 %v3475, %v3514
  %v3708 = vadd.f32 %v3476, %v3514
  %v3709 = vadd.f32 %v3477, %v3514
  %v3710 = vadd.f32 %v3478, %v3514
  %v3711 = vadd.f32 %v3479, %v3514
  %v3712 = vadd.f32 %v3480, %v3514
  %v3713 = vadd.f32 %v3481, %v3514
  %v3714 = vadd.f32 %v3482, %v3514
  %v3715 = vadd.f32 %v3483, %v3514
  %v3716 = vadd.f32 %v3484, %v3514
  %v3717 = vadd.f32 %v3485, %v3514
  %v3718 = vadd.f32 %v3486, %v3514
  %v3719 = vadd.f32 %v3487, %v3514
  %v3720 = vadd.f32 %v3488, %v3514
  %v3721 = vadd.f32 %v3489, %v3514
  %v3722 = vadd.f32 %v3490, %v3514
  %v3723 = vadd.f32 %v3491, %v3514
  %v3724 = vadd.f32 %v3492, %v3514
  %v3725 = vadd.f32 %v3493, %v3514
  %v3726 = vadd.f32 %v3494, %v3514
  %v3727 = vadd.f32 %v3495, %v3514
  %v3728 = vadd.f32 %v3496, %v3514
  %v3729 = vadd.f32 %v3497, %v3514
  %v3730 = vadd.f32 %v3498, %v3514
  %v3731 = vadd.f32 %v3499, %v3514
  %v3732 = vadd.f32 %v3500, %v3514
  %v3733 = vadd.f32 %v3501, %v3514
  %v3734 = vadd.f32 %v3502, %v3514
  %v3735 = vadd.f32 %v3503, %v3514
  %v3736 = vadd.f32 %v3504, %v3514
  %v3737 = vadd.f32 %v3505, %v3514
  %v3738 = vadd.f32 %v3506, %v3514
  %v3739 = vadd.f32 %v3507, %v3514
  %v3740 = vadd.f32 %v3508, %v3514
  %v3741 = vadd.f32 %v3509, %v3514
  %v3742 = vadd.f32 %v3510, %v3514
  %v3743 = vmax.f32 %v3515, 0.0
  %v3744 = vmax.f32 %v3516, 0.0
  %v3745 = vmax.f32 %v3517, 0.0
  %v3746 = vmax.f32 %v3518, 0.0
  %v3747 = vmax.f32 %v3519, 0.0
  %v3748 = vmax.f32 %v3520, 0.0
  %v3749 = vmax.f32 %v3521, 0.0
  %v3750 = vmax.f32 %v3522, 0.0
  %v3751 = vmax.f32 %v3523, 0.0
  %v3752 = vmax.f32 %v3524, 0.0
  %v3753 = vmax.f32 %v3525, 0.0
  %v3754 = vmax.f32 %v3526, 0.0
  %v3755 = vmax.f32 %v3527, 0.0
  %v3756 = vmax.f32 %v3528, 0.0
  %v3757 = vmax.f32 %v3529, 0.0
  %v3758 = vmax.f32 %v3530, 0.0
  %v3759 = vmax.f32 %v3531, 0.0
  %v3760 = vmax.f32 %v3532, 0.0
  %v3761 = vmax.f32 %v3533, 0.0
  %v3762 = vmax.f32 %v3534, 0.0
  %v3763 = vmax.f32 %v3535, 0.0
  %v3764 = vmax.f32 %v3536, 0.0
  %v3765 = vmax.f32 %v3537, 0.0
  %v3766 = vmax.f32 %v3538, 0.0
  %v3767 = vmax.f32 %v3539, 0.0
  %v3768 = vmax.f32 %v3540, 0.0
  %v3769 = vmax.f32 %v3541, 0.0
  %v3770 = vmax.f32 %v3542, 0.0
  %v3771 = vmax.f32 %v3543, 0.0
  %v3772 = vmax.f32 %v3544, 0.0
  %v3773 = vmax.f32 %v3545, 0.0
  %v3774 = vmax.f32 %v3546, 0.0
  %v3775 = vmax.f32 %v3547, 0.0
  %v3776 = vmax.f32 %v3548, 0.0
  %v3777 = vmax.f32 %v3549, 0.0
  %v3778 = vmax.f32 %v3550, 0.0
  %v3779 = vmax.f32 %v3551, 0.0
  %v3780 = vmax.f32 %v3552, 0.0
  %v3781 = vmax.f32 %v3553, 0.0
  %v3782 = vmax.f32 %v3554, 0.0
  %v3783 = vmax.f32 %v3555, 0.0
  %v3784 = vmax.f32 %v3556, 0.0
  %v3785 = vmax.f32 %v3557, 0.0
  %v3786 = vmax.f32 %v3558, 0.0
  %v3787 = vmax.f32 %v3559, 0.0
  %v3788 = vmax.f32 %v3560, 0.0
  %v3789 = vmax.f32 %v3561, 0.0
  %v3790 = vmax.f32 %v3562, 0.0
  %v3791 = vmax.f32 %v3563, 0.0
  %v3792 = vmax.f32 %v3564, 0.0
  %v3793 = vmax.f32 %v3565, 0.0
  %v3794 = vmax.f32 %v3566, 0.0
  %v3795 = vmax.f32 %v3567, 0.0
  %v3796 = vmax.f32 %v3568, 0.0
  %v3797 = vmax.f32 %v3569, 0.0
  %v3798 = vmax.f32 %v3570, 0.0
  %v3799 = vmax.f32 %v3571, 0.0
  %v3800 = vmax.f32 %v3572, 0.0
  %v3801 = vmax.f32 %v3573, 0.0
  %v3802 = vmax.f32 %v3574, 0.0
  %v3803 = vmax.f32 %v3575, 0.0
  %v3804 = vmax.f32 %v3576, 0.0
  %v3805 = vmax.f32 %v3577, 0.0
  %v3806 = vmax.f32 %v3578, 0.0
  %v3807 = vmax.f32 %v3579, 0.0
  %v3808 = vmax.f32 %v3580, 0.0
  %v3809 = vmax.f32 %v3581, 0.0
  %v3810 = vmax.f32 %v3582, 0.0
  %v3811 = vmax.f32 %v3583, 0.0
  %v3812 = vmax.f32 %v3584, 0.0
  %v3813 = vmax.f32 %v3585, 0.0
  %v3814 = vmax.f32 %v3586, 0.0
  %v3815 = vmax.f32 %v3587, 0.0
  %v3816 = vmax.f32 %v3588, 0.0
  %v3817 = vmax.f32 %v3589, 0.0
  %v3818 = vmax.f32 %v3590, 0.0
  %v3819 = vmax.f32 %v3591, 0.0
  %v3820 = vmax.f32 %v3592, 0.0
  %v3821 = vmax.f32 %v3593, 0.0
  %v3822 = vmax.f32 %v3594, 0.0
  %v3823 = vmax.f32 %v3595, 0.0
  %v3824 = vmax.f32 %v3596, 0.0
  %v3825 = vmax.f32 %v3597, 0.0
  %v3826 = vmax.f32 %v3598, 0.0
  %v3827 = vmax.f32 %v3599, 0.0
  %v3828 = vmax.f32 %v3600, 0.0
  %v3829 = vmax.f32 %v3601, 0.0
  %v3830 = vmax.f32 %v3602, 0.0
  %v3831 = vmax.f32 %v3603, 0.0
  %v3832 = vmax.f32 %v3604, 0.0
  %v3833 = vmax.f32 %v3605, 0.0
  %v3834 = vmax.f32 %v3606, 0.0
  %v3835 = vmax.f32 %v3607, 0.0
  %v3836 = vmax.f32 %v3608, 0.0
  %v3837 = vmax.f32 %v3609, 0.0
  %v3838 = vmax.f32 %v3610, 0.0
  %v3839 = vmax.f32 %v3611, 0.0
  %v3840 = vmax.f32 %v3612, 0.0
  %v3841 = vmax.f32 %v3613, 0.0
  %v3842 = vmax.f32 %v3614, 0.0
  %v3843 = vmax.f32 %v3615, 0.0
  %v3844 = vmax.f32 %v3616, 0.0
  %v3845 = vmax.f32 %v3617, 0.0
  %v3846 = vmax.f32 %v3618, 0.0
  %v3847 = vmax.f32 %v3619, 0.0
  %v3848 = vmax.f32 %v3620, 0.0
  %v3849 = vmax.f32 %v3621, 0.0
  %v3850 = vmax.f32 %v3622, 0.0
  %v3851 = vmax.f32 %v3623, 0.0
  %v3852 = vmax.f32 %v3624, 0.0
  %v3853 = vmax.f32 %v3625, 0.0
  %v3854 = vmax.f32 %v3626, 0.0
  %v3855 = vmax.f32 %v3627, 0.0
  %v3856 = vmax.f32 %v3628, 0.0
  %v3857 = vmax.f32 %v3629, 0.0
  %v3858 = vmax.f32 %v3630, 0.0
  %v3859 = vmax.f32 %v3631, 0.0
  %v3860 = vmax.f32 %v3632, 0.0
  %v3861 = vmax.f32 %v3633, 0.0
  %v3862 = vmax.f32 %v3634, 0.0
  %v3863 = vmax.f32 %v3635, 0.0
  %v3864 = vmax.f32 %v3636, 0.0
  %v3865 = vmax.f32 %v3637, 0.0
  %v3866 = vmax.f32 %v3638, 0.0
  %v3867 = vmax.f32 %v3639, 0.0
  %v3868 = vmax.f32 %v3640, 0.0
  %v3869 = vmax.f32 %v3641, 0.0
  %v3870 = vmax.f32 %v3642, 0.0
  %v3871 = vmax.f32 %v3643, 0.0
  %v3872 = vmax.f32 %v3644, 0.0
  %v3873 = vmax.f32 %v3645, 0.0
  %v3874 = vmax.f32 %v3646, 0.0
  %v3875 = vmax.f32 %v3647, 0.0
  %v3876 = vmax.f32 %v3648, 0.0
  %v3877 = vmax.f32 %v3649, 0.0
  %v3878 = vmax.f32 %v3650, 0.0
  %v3879 = vmax.f32 %v3651, 0.0
  %v3880 = vmax.f32 %v3652, 0.0
  %v3881 = vmax.f32 %v3653, 0.0
  %v3882 = vmax.f32 %v3654, 0.0
  %v3883 = vmax.f32 %v3655, 0.0
  %v3884 = vmax.f32 %v3656, 0.0
  %v3885 = vmax.f32 %v3657, 0.0
  %v3886 = vmax.f32 %v3658, 0.0
  %v3887 = vmax.f32 %v3659, 0.0
  %v3888 = vmax.f32 %v3660, 0.0
  %v3889 = vmax.f32 %v3661, 0.0
  %v3890 = vmax.f32 %v3662, 0.0
  %v3891 = vmax.f32 %v3663, 0.0
  %v3892 = vmax.f32 %v3664, 0.0
  %v3893 = vmax.f32 %v3665, 0.0
  %v3894 = vmax.f32 %v3666, 0.0
  %v3895 = vmax.f32 %v3667, 0.0
  %v3896 = vmax.f32 %v3668, 0.0
  %v3897 = vmax.f32 %v3669, 0.0
  %v3898 = vmax.f32 %v3670, 0.0
  %v3899 = vmax.f32 %v3671, 0.0
  %v3900 = vmax.f32 %v3672, 0.0
  %v3901 = vmax.f32 %v3673, 0.0
  %v3902 = vmax.f32 %v3674, 0.0
  %v3903 = vmax.f32 %v3675, 0.0
  %v3904 = vmax.f32 %v3676, 0.0
  %v3905 = vmax.f32 %v3677, 0.0
  %v3906 = vmax.f32 %v3678, 0.0
  %v3907 = vmax.f32 %v3679, 0.0
  %v3908 = vmax.f32 %v3680, 0.0
  %v3909 = vmax.f32 %v3681, 0.0
  %v3910 = vmax.f32 %v3682, 0.0
  %v3911 = vmax.f32 %v3683, 0.0
  %v3912 = vmax.f32 %v3684, 0.0
  %v3913 = vmax.f32 %v3685, 0.0
  %v3914 = vmax.f32 %v3686, 0.0
  %v3915 = vmax.f32 %v3687, 0.0
  %v3916 = vmax.f32 %v3688, 0.0
  %v3917 = vmax.f32 %v3689, 0.0
  %v3918 = vmax.f32 %v3690, 0.0
  %v3919 = vmax.f32 %v3691, 0.0
  %v3920 = vmax.f32 %v3692, 0.0
  %v3921 = vmax.f32 %v3693, 0.0
  %v3922 = vmax.f32 %v3694, 0.0
  %v3923 = vmax.f32 %v3695, 0.0
  %v3924 = vmax.f32 %v3696, 0.0
  %v3925 = vmax.f32 %v3697, 0.0
  %v3926 = vmax.f32 %v3698, 0.0
  %v3927 = vmax.f32 %v3699, 0.0
  %v3928 = vmax.f32 %v3700, 0.0
  %v3929 = vmax.f32 %v3701, 0.0
  %v3930 = vmax.f32 %v3702, 0.0
  %v3931 = vmax.f32 %v3703, 0.0
  %v3932 = vmax.f32 %v3704, 0.0
  %v3933 = vmax.f32 %v3705, 0.0
  %v3934 = vmax.f32 %v3706, 0.0
  %v3935 = vmax.f32 %v3707, 0.0
  %v3936 = vmax.f32 %v3708, 0.0
  %v3937 = vmax.f32 %v3709, 0.0
  %v3938 = vmax.f32 %v3710, 0.0
  %v3939 = vmax.f32 %v3711, 0.0
  %v3940 = vmax.f32 %v3712, 0.0
  %v3941 = vmax.f32 %v3713, 0.0
  %v3942 = vmax.f32 %v3714, 0.0
  %v3943 = vmax.f32 %v3715, 0.0
  %v3944 = vmax.f32 %v3716, 0.0
  %v3945 = vmax.f32 %v3717, 0.0
  %v3946 = vmax.f32 %v3718, 0.0
  %v3947 = vmax.f32 %v3719, 0.0
  %v3948 = vmax.f32 %v3720, 0.0
  %v3949 = vmax.f32 %v3721, 0.0
  %v3950 = vmax.f32 %v3722, 0.0
  %v3951 = vmax.f32 %v3723, 0.0
  %v3952 = vmax.f32 %v3724, 0.0
  %v3953 = vmax.f32 %v3725, 0.0
  %v3954 = vmax.f32 %v3726, 0.0
  %v3955 = vmax.f32 %v3727, 0.0
  %v3956 = vmax.f32 %v3728, 0.0
  %v3957 = vmax.f32 %v3729, 0.0
  %v3958 = vmax.f32 %v3730, 0.0
  %v3959 = vmax.f32 %v3731, 0.0
  %v3960 = vmax.f32 %v3732, 0.0
  %v3961 = vmax.f32 %v3733, 0.0
  %v3962 = vmax.f32 %v3734, 0.0
  %v3963 = vmax.f32 %v3735, 0.0
  %v3964 = vmax.f32 %v3736, 0.0
  %v3965 = vmax.f32 %v3737, 0.0
  %v3966 = vmax.f32 %v3738, 0.0
  %v3967 = vmax.f32 %v3739, 0.0
  %v3968 = vmax.f32 %v3740, 0.0
  %v3969 = vmax.f32 %v3741, 0.0
  %v3970 = vmax.f32 %v3742, 0.0
  %v3971 = vmax.f32 %v3743, %v3800
  %v3972 = vmax.f32 %v3744, %v3801
  %v3973 = vmax.f32 %v3745, %v3802
  %v3974 = vmax.f32 %v3746, %v3803
  %v3975 = vmax.f32 %v3747, %v3804
  %v3976 = vmax.f32 %v3748, %v3805
  %v3977 = vmax.f32 %v3749, %v3806
  %v3978 = vmax.f32 %v3750, %v3807
  %v3979 = vmax.f32 %v3751, %v3808
  %v3980 = vmax.f32 %v3752, %v3809
  %v3981 = vmax.f32 %v3753, %v3810
  %v3982 = vmax.f32 %v3754, %v3811
  %v3983 = vmax.f32 %v3755, %v3812
  %v3984 = vmax.f32 %v3756, %v3813
  %v3985 = vmax.f32 %v3757, %v3814
  %v3986 = vmax.f32 %v3758, %v3815
  %v3987 = vmax.f32 %v3759, %v3816
  %v3988 = vmax.f32 %v3760, %v3817
  %v3989 = vmax.f32 %v3761, %v3818
  %v3990 = vmax.f32 %v3762, %v3819
  %v3991 = vmax.f32 %v3763, %v3820
  %v3992 = vmax.f32 %v3764, %v3821
  %v3993 = vmax.f32 %v3765, %v3822
  %v3994 = vmax.f32 %v3766, %v3823
  %v3995 = vmax.f32 %v3767, %v3824
  %v3996 = vmax.f32 %v3768, %v3825
  %v3997 = vmax.f32 %v3769, %v3826
  %v3998 = vmax.f32 %v3770, %v3827
  %v3999 = vmax.f32 %v3771, %v3828
  %v4000 = vmax.f32 %v3772, %v3829
  %v4001 = vmax.f32 %v3773, %v3830
  %v4002 = vmax.f32 %v3774, %v3831
  %v4003 = vmax.f32 %v3775, %v3832
  %v4004 = vmax.f32 %v3776, %v3833
  %v4005 = vmax.f32 %v3777, %v3834
  %v4006 = vmax.f32 %v3778, %v3835
  %v4007 = vmax.f32 %v3779, %v3836
  %v4008 = vmax.f32 %v3780, %v3837
  %v4009 = vmax.f32 %v3781, %v3838
  %v4010 = vmax.f32 %v3782, %v3839
  %v4011 = vmax.f32 %v3783, %v3840
  %v4012 = vmax.f32 %v3784, %v3841
  %v4013 = vmax.f32 %v3785, %v3842
  %v4014 = vmax.f32 %v3786, %v3843
  %v4015 = vmax.f32 %v3787, %v3844
  %v4016 = vmax.f32 %v3788, %v3845
  %v4017 = vmax.f32 %v3789, %v3846
  %v4018 = vmax.f32 %v3790, %v3847
  %v4019 = vmax.f32 %v3791, %v3848
  %v4020 = vmax.f32 %v3792, %v3849
  %v4021 = vmax.f32 %v3793, %v3850
  %v4022 = vmax.f32 %v3794, %v3851
  %v4023 = vmax.f32 %v3795, %v3852
  %v4024 = vmax.f32 %v3796, %v3853
  %v4025 = vmax.f32 %v3797, %v3854
  %v4026 = vmax.f32 %v3798, %v3855
  %v4027 = vmax.f32 %v3799, %v3856
  %v4028 = vmax.f32 %v3857, %v3914
  %v4029 = vmax.f32 %v3858, %v3915
  %v4030 = vmax.f32 %v3859, %v3916
  %v4031 = vmax.f32 %v3860, %v3917
  %v4032 = vmax.f32 %v3861, %v3918
  %v4033 = vmax.f32 %v3862, %v3919
  %v4034 = vmax.f32 %v3863, %v3920
  %v4035 = vmax.f32 %v3864, %v3921
  %v4036 = vmax.f32 %v3865, %v3922
  %v4037 = vmax.f32 %v3866, %v3923
  %v4038 = vmax.f32 %v3867, %v3924
  %v4039 = vmax.f32 %v3868, %v3925
  %v4040 = vmax.f32 %v3869, %v3926
  %v4041 = vmax.f32 %v3870, %v3927
  %v4042 = vmax.f32 %v3871, %v3928
  %v4043 = vmax.f32 %v3872, %v3929
  %v4044 = vmax.f32 %v3873, %v3930
  %v4045 = vmax.f32 %v3874, %v3931
  %v4046 = vmax.f32 %v3875, %v3932
  %v4047 = vmax.f32 %v3876, %v3933
  %v4048 = vmax.f32 %v3877, %v3934
  %v4049 = vmax.f32 %v3878, %v3935
  %v4050 = vmax.f32 %v3879, %v3936
  %v4051 = vmax.f32 %v3880, %v3937
  %v4052 = vmax.f32 %v3881, %v3938
  %v4053 = vmax.f32 %v3882, %v3939
  %v4054 = vmax.f32 %v3883, %v3940
  %v4055 = vmax.f32 %v3884, %v3941
  %v4056 = vmax.f32 %v3885, %v3942
  %v4057 = vmax.f32 %v3886, %v3943
  %v4058 = vmax.f32 %v3887, %v3944
  %v4059 = vmax.f32 %v3888, %v3945
  %v4060 = vmax.f32 %v3889, %v3946
  %v4061 = vmax.f32 %v3890, %v3947
  %v4062 = vmax.f32 %v3891, %v3948
  %v4063 = vmax.f32 %v3892, %v3949
  %v4064 = vmax.f32 %v3893, %v3950
  %v4065 = vmax.f32 %v3894, %v3951
  %v4066 = vmax.f32 %v3895, %v3952
  %v4067 = vmax.f32 %v3896, %v3953
  %v4068 = vmax.f32 %v3897, %v3954
  %v4069 = vmax.f32 %v3898, %v3955
  %v4070 = vmax.f32 %v3899, %v3956
  %v4071 = vmax.f32 %v3900, %v3957
  %v4072 = vmax.f32 %v3901, %v3958
  %v4073 = vmax.f32 %v3902, %v3959
  %v4074 = vmax.f32 %v3903, %v3960
  %v4075 = vmax.f32 %v3904, %v3961
  %v4076 = vmax.f32 %v3905, %v3962
  %v4077 = vmax.f32 %v3906, %v3963
  %v4078 = vmax.f32 %v3907, %v3964
  %v4079 = vmax.f32 %v3908, %v3965
  %v4080 = vmax.f32 %v3909, %v3966
  %v4081 = vmax.f32 %v3910, %v3967
  %v4082 = vmax.f32 %v3911, %v3968
  %v4083 = vmax.f32 %v3912, %v3969
  %v4084 = vmax.f32 %v3913, %v3970
  %v4085 = vmax.f32 %v3971, %v4028
  %v4086 = vmax.f32 %v3972, %v4029
  %v4087 = vmax.f32 %v3973, %v4030
  %v4088 = vmax.f32 %v3974, %v4031
  %v4089 = vmax.f32 %v3975, %v4032
  %v4090 = vmax.f32 %v3976, %v4033
  %v4091 = vmax.f32 %v3977, %v4034
  %v4092 = vmax.f32 %v3978, %v4035
  %v4093 = vmax.f32 %v3979, %v4036
  %v4094 = vmax.f32 %v3980, %v4037
  %v4095 = vmax.f32 %v3981, %v4038
  %v4096 = vmax.f32 %v3982, %v4039
  %v4097 = vmax.f32 %v3983, %v4040
  %v4098 = vmax.f32 %v3984, %v4041
  %v4099 = vmax.f32 %v3985, %v4042
  %v4100 = vmax.f32 %v3986, %v4043
  %v4101 = vmax.f32 %v3987, %v4044
  %v4102 = vmax.f32 %v3988, %v4045
  %v4103 = vmax.f32 %v3989, %v4046
  %v4104 = vmax.f32 %v3990, %v4047
  %v4105 = vmax.f32 %v3991, %v4048
  %v4106 = vmax.f32 %v3992, %v4049
  %v4107 = vmax.f32 %v3993, %v4050
  %v4108 = vmax.f32 %v3994, %v4051
  %v4109 = vmax.f32 %v3995, %v4052
  %v4110 = vmax.f32 %v3996, %v4053
  %v4111 = vmax.f32 %v3997, %v4054
  %v4112 = vmax.f32 %v3998, %v4055
  %v4113 = vmax.f32 %v3999, %v4056
  %v4114 = vmax.f32 %v4000, %v4057
  %v4115 = vmax.f32 %v4001, %v4058
  %v4116 = vmax.f32 %v4002, %v4059
  %v4117 = vmax.f32 %v4003, %v4060
  %v4118 = vmax.f32 %v4004, %v4061
  %v4119 = vmax.f32 %v4005, %v4062
  %v4120 = vmax.f32 %v4006, %v4063
  %v4121 = vmax.f32 %v4007, %v4064
  %v4122 = vmax.f32 %v4008, %v4065
  %v4123 = vmax.f32 %v4009, %v4066
  %v4124 = vmax.f32 %v4010, %v4067
  %v4125 = vmax.f32 %v4011, %v4068
  %v4126 = vmax.f32 %v4012, %v4069
  %v4127 = vmax.f32 %v4013, %v4070
  %v4128 = vmax.f32 %v4014, %v4071
  %v4129 = vmax.f32 %v4015, %v4072
  %v4130 = vmax.f32 %v4016, %v4073
  %v4131 = vmax.f32 %v4017, %v4074
  %v4132 = vmax.f32 %v4018, %v4075
  %v4133 = vmax.f32 %v4019, %v4076
  %v4134 = vmax.f32 %v4020, %v4077
  %v4135 = vmax.f32 %v4021, %v4078
  %v4136 = vmax.f32 %v4022, %v4079
  %v4137 = vmax.f32 %v4023, %v4080
  %v4138 = vmax.f32 %v4024, %v4081
  %v4139 = vmax.f32 %v4025, %v4082
  %v4140 = vmax.f32 %v4026, %v4083
  %v4141 = vmax.f32 %v4027, %v4084
  %v4142 = vpack.c.bf16 %v4086, %v4085
  %v4143 = vpack.c.bf16 %v4088, %v4087
  %v4144 = vpack.c.bf16 %v4090, %v4089
  %v4145 = vpack.c.bf16 %v4092, %v4091
  %v4146 = vpack.c.bf16 %v4094, %v4093
  %v4147 = vpack.c.bf16 %v4096, %v4095
  %v4148 = vpack.c.bf16 %v4098, %v4097
  %v4149 = vpack.c.bf16 %v4100, %v4099
  %v4150 = vpack.c.bf16 %v4102, %v4101
  %v4151 = vpack.c.bf16 %v4104, %v4103
  %v4152 = vpack.c.bf16 %v4106, %v4105
  %v4153 = vpack.c.bf16 %v4108, %v4107
  %v4154 = vpack.c.bf16 %v4110, %v4109
  %v4155 = vpack.c.bf16 %v4112, %v4111
  %v4156 = vpack.c.bf16 %v4114, %v4113
  %v4157 = vpack.c.bf16 %v4116, %v4115
  %v4158 = vpack.c.bf16 %v4118, %v4117
  %v4159 = vpack.c.bf16 %v4120, %v4119
  %v4160 = vpack.c.bf16 %v4122, %v4121
  %v4161 = vpack.c.bf16 %v4124, %v4123
  %v4162 = vpack.c.bf16 %v4126, %v4125
  %v4163 = vpack.c.bf16 %v4128, %v4127
  %v4164 = vpack.c.bf16 %v4130, %v4129
  %v4165 = vpack.c.bf16 %v4132, %v4131
  %v4166 = vpack.c.bf16 %v4134, %v4133
  %v4167 = vpack.c.bf16 %v4136, %v4135
  %v4168 = vpack.c.bf16 %v4138, %v4137
  %v4169 = vpack.c.bf16 %v4140, %v4139
  %v4170 = vpack.c.bf16 %v4141, %v4141
  %v4200 = vunpack.c.l.b16 %v4142
  %v4201 = vunpack.c.h.b16 %v4142
  %v4202 = vunpack.c.l.b16 %v4143
  %v4203 = vunpack.c.h.b16 %v4143
  %v4204 = vunpack.c.l.b16 %v4144
  %v4205 = vunpack.c.h.b16 %v4144
  %v4206 = vunpack.c.l.b16 %v4145
  %v4207 = vunpack.c.h.b16 %v4145
  %v4208 = vunpack.c.l.b16 %v4146
  %v4209 = vunpack.c.h.b16 %v4146
  %v4210 = vunpack.c.l.b16 %v4147
  %v4211 = vunpack.c.h.b16 %v4147
  %v4212 = vunpack.c.l.b16 %v4148
  %v4213 = vunpack.c.h.b16 %v4148
  %v4214 = vunpack.c.l.b16 %v4149
  %v4215 = vunpack.c.h.b16 %v4149
  %v4216 = vunpack.c.l.b16 %v4150
  %v4217 = vunpack.c.h.b16 %v4150
  %v4218 = vunpack.c.l.b16 %v4151
  %v4219 = vunpack.c.h.b16 %v4151
  %v4220 = vunpack.c.l.b16 %v4152
  %v4221 = vunpack.c.h.b16 %v4152
  %v4222 = vunpack.c.l.b16 %v4153
  %v4223 = vunpack.c.h.b16 %v4153
  %v4224 = vunpack.c.l.b16 %v4154
  %v4225 = vunpack.c.h.b16 %v4154
  %v4226 = vunpack.c.l.b16 %v4155
  %v4227 = vunpack.c.h.b16 %v4155
  %v4228 = vunpack.c.l.b16 %v4156
  %v4229 = vunpack.c.h.b16 %v4156
  %v4230 = vunpack.c.l.b16 %v4157
  %v4231 = vunpack.c.h.b16 %v4157
  %v4232 = vunpack.c.l.b16 %v4158
  %v4233 = vunpack.c.h.b16 %v4158
  %v4234 = vunpack.c.l.b16 %v4159
  %v4235 = vunpack.c.h.b16 %v4159
  %v4236 = vunpack.c.l.b16 %v4160
  %v4237 = vunpack.c.h.b16 %v4160
  %v4238 = vunpack.c.l.b16 %v4161
  %v4239 = vunpack.c.h.b16 %v4161
  %v4240 = vunpack.c.l.b16 %v4162
  %v4241 = vunpack.c.h.b16 %v4162
  %v4242 = vunpack.c.l.b16 %v4163
  %v4243 = vunpack.c.h.b16 %v4163
  %v4244 = vunpack.c.l.b16 %v4164
  %v4245 = vunpack.c.h.b16 %v4164
  %v4246 = vunpack.c.l.b16 %v4165
  %v4247 = vunpack.c.h.b16 %v4165
  %v4248 = vunpack.c.l.b16 %v4166
  %v4249 = vunpack.c.h.b16 %v4166
  %v4250 = vunpack.c.l.b16 %v4167
  %v4251 = vunpack.c.h.b16 %v4167
  %v4252 = vunpack.c.l.b16 %v4168
  %v4253 = vunpack.c.h.b16 %v4168
  %v4254 = vunpack.c.l.b16 %v4169
  %v4255 = vunpack.c.h.b16 %v4169
  %v4256 = vunpack.c.l.b16 %v4170
  %v4257 = vpack.c.b16 %v4200, %v4200
  %v4258 = vpack.c.b16 %v4201, %v4201
  %v4259 = vpack.c.b16 %v4202, %v4202
  %v4260 = vpack.c.b16 %v4203, %v4203
  %v4261 = vpack.c.b16 %v4204, %v4204
  %v4262 = vpack.c.b16 %v4205, %v4205
  %v4263 = vpack.c.b16 %v4206, %v4206
  %v4264 = vpack.c.b16 %v4207, %v4207
  %v4265 = vpack.c.b16 %v4208, %v4208
  %v4266 = vpack.c.b16 %v4209, %v4209
  %v4267 = vpack.c.b16 %v4210, %v4210
  %v4268 = vpack.c.b16 %v4211, %v4211
  %v4269 = vpack.c.b16 %v4212, %v4212
  %v4270 = vpack.c.b16 %v4213, %v4213
  %v4271 = vpack.c.b16 %v4214, %v4214
  %v4272 = vpack.c.b16 %v4215, %v4215
  %v4273 = vpack.c.b16 %v4216, %v4216
  %v4274 = vpack.c.b16 %v4217, %v4217
  %v4275 = vpack.c.b16 %v4218, %v4218
  %v4276 = vpack.c.b16 %v4219, %v4219
  %v4277 = vpack.c.b16 %v4220, %v4220
  %v4278 = vpack.c.b16 %v4221, %v4221
  %v4279 = vpack.c.b16 %v4222, %v4222
  %v4280 = vpack.c.b16 %v4223, %v4223
  %v4281 = vpack.c.b16 %v4224, %v4224
  %v4282 = vpack.c.b16 %v4225, %v4225
  %v4283 = vpack.c.b16 %v4226, %v4226
  %v4284 = vpack.c.b16 %v4227, %v4227
  %v4285 = vpack.c.b16 %v4228, %v4228
  %v4286 = vpack.c.b16 %v4229, %v4229
  %v4287 = vpack.c.b16 %v4230, %v4230
  %v4288 = vpack.c.b16 %v4231, %v4231
  %v4289 = vpack.c.b16 %v4232, %v4232
  %v4290 = vpack.c.b16 %v4233, %v4233
  %v4291 = vpack.c.b16 %v4234, %v4234
  %v4292 = vpack.c.b16 %v4235, %v4235
  %v4293 = vpack.c.b16 %v4236, %v4236
  %v4294 = vpack.c.b16 %v4237, %v4237
  %v4295 = vpack.c.b16 %v4238, %v4238
  %v4296 = vpack.c.b16 %v4239, %v4239
  %v4297 = vpack.c.b16 %v4240, %v4240
  %v4298 = vpack.c.b16 %v4241, %v4241
  %v4299 = vpack.c.b16 %v4242, %v4242
  %v4300 = vpack.c.b16 %v4243, %v4243
  %v4301 = vpack.c.b16 %v4244, %v4244
  %v4302 = vpack.c.b16 %v4245, %v4245
  %v4303 = vpack.c.b16 %v4246, %v4246
  %v4304 = vpack.c.b16 %v4247, %v4247
  %v4305 = vpack.c.b16 %v4248, %v4248
  %v4306 = vpack.c.b16 %v4249, %v4249
  %v4307 = vpack.c.b16 %v4250, %v4250
  %v4308 = vpack.c.b16 %v4251, %v4251
  %v4309 = vpack.c.b16 %v4252, %v4252
  %v4310 = vpack.c.b16 %v4253, %v4253
  %v4311 = vpack.c.b16 %v4254, %v4254
  %v4312 = vpack.c.b16 %v4255, %v4255
  %v4313 = vpack.c.b16 %v4256, %v4256
  %vm4371 = vcmask 519168
  %4372 = vst.msk [vmem:[%s3] sm:$0xf] %vm4371, %v4257
  %4373 = vst.msk [vmem:[%s3 + $0x4] sm:$0xf] %vm4371, %v4258
  %4374 = vst.msk [vmem:[%s3 + $0x8] sm:$0xf] %vm4371, %v4259
  %4375 = vst.msk [vmem:[%s3 + $0xc] sm:$0xf] %vm4371, %v4260
  %4376 = vst.msk [vmem:[%s3 + $0x10] sm:$0xf] %vm4371, %v4261
  %4377 = vst.msk [vmem:[%s3 + $0x14] sm:$0xf] %vm4371, %v4262
  %4378 = vst.msk [vmem:[%s3 + $0x18] sm:$0xf] %vm4371, %v4263
  %4379 = vst.msk [vmem:[%s3 + $0x1c] sm:$0xf] %vm4371, %v4264
  %4380 = vst.msk [vmem:[%s3 + $0x20] sm:$0xf] %vm4371, %v4265
  %4381 = vst.msk [vmem:[%s3 + $0x24] sm:$0xf] %vm4371, %v4266
  %4382 = vst.msk [vmem:[%s3 + $0x28] sm:$0xf] %vm4371, %v4267
  %4383 = vst.msk [vmem:[%s3 + $0x2c] sm:$0xf] %vm4371, %v4268
  %4384 = vst.msk [vmem:[%s3 + $0x30] sm:$0xf] %vm4371, %v4269
  %4385 = vst.msk [vmem:[%s3 + $0x34] sm:$0xf] %vm4371, %v4270
  %4386 = vst.msk [vmem:[%s3 + $0x38] sm:$0xf] %vm4371, %v4271
  %4387 = vst.msk [vmem:[%s3 + $0x3c] sm:$0xf] %vm4371, %v4272
  %4388 = vst.msk [vmem:[%s3 + $0x40] sm:$0xf] %vm4371, %v4273
  %4389 = vst.msk [vmem:[%s3 + $0x44] sm:$0xf] %vm4371, %v4274
  %4390 = vst.msk [vmem:[%s3 + $0x48] sm:$0xf] %vm4371, %v4275
  %4391 = vst.msk [vmem:[%s3 + $0x4c] sm:$0xf] %vm4371, %v4276
  %4392 = vst.msk [vmem:[%s3 + $0x50] sm:$0xf] %vm4371, %v4277
  %4393 = vst.msk [vmem:[%s3 + $0x54] sm:$0xf] %vm4371, %v4278
  %4394 = vst.msk [vmem:[%s3 + $0x58] sm:$0xf] %vm4371, %v4279
  %4395 = vst.msk [vmem:[%s3 + $0x5c] sm:$0xf] %vm4371, %v4280
  %4396 = vst.msk [vmem:[%s3 + $0x60] sm:$0xf] %vm4371, %v4281
  %4397 = vst.msk [vmem:[%s3 + $0x64] sm:$0xf] %vm4371, %v4282
  %4398 = vst.msk [vmem:[%s3 + $0x68] sm:$0xf] %vm4371, %v4283
  %4399 = vst.msk [vmem:[%s3 + $0x6c] sm:$0xf] %vm4371, %v4284
  %4400 = vst.msk [vmem:[%s3 + $0x70] sm:$0xf] %vm4371, %v4285
  %4401 = vst.msk [vmem:[%s3 + $0x74] sm:$0xf] %vm4371, %v4286
  %4402 = vst.msk [vmem:[%s3 + $0x78] sm:$0xf] %vm4371, %v4287
  %4403 = vst.msk [vmem:[%s3 + $0x7c] sm:$0xf] %vm4371, %v4288
  %4404 = vst.msk [vmem:[%s3 + $0x80] sm:$0xf] %vm4371, %v4289
  %4405 = vst.msk [vmem:[%s3 + $0x84] sm:$0xf] %vm4371, %v4290
  %4406 = vst.msk [vmem:[%s3 + $0x88] sm:$0xf] %vm4371, %v4291
  %4407 = vst.msk [vmem:[%s3 + $0x8c] sm:$0xf] %vm4371, %v4292
  %4408 = vst.msk [vmem:[%s3 + $0x90] sm:$0xf] %vm4371, %v4293
  %4409 = vst.msk [vmem:[%s3 + $0x94] sm:$0xf] %vm4371, %v4294
  %4410 = vst.msk [vmem:[%s3 + $0x98] sm:$0xf] %vm4371, %v4295
  %4411 = vst.msk [vmem:[%s3 + $0x9c] sm:$0xf] %vm4371, %v4296
  %4412 = vst.msk [vmem:[%s3 + $0xa0] sm:$0xf] %vm4371, %v4297
  %4413 = vst.msk [vmem:[%s3 + $0xa4] sm:$0xf] %vm4371, %v4298
  %4414 = vst.msk [vmem:[%s3 + $0xa8] sm:$0xf] %vm4371, %v4299
  %4415 = vst.msk [vmem:[%s3 + $0xac] sm:$0xf] %vm4371, %v4300
  %4416 = vst.msk [vmem:[%s3 + $0xb0] sm:$0xf] %vm4371, %v4301
  %4417 = vst.msk [vmem:[%s3 + $0xb4] sm:$0xf] %vm4371, %v4302
  %4418 = vst.msk [vmem:[%s3 + $0xb8] sm:$0xf] %vm4371, %v4303
  %4419 = vst.msk [vmem:[%s3 + $0xbc] sm:$0xf] %vm4371, %v4304
  %4420 = vst.msk [vmem:[%s3 + $0xc0] sm:$0xf] %vm4371, %v4305
  %4421 = vst.msk [vmem:[%s3 + $0xc4] sm:$0xf] %vm4371, %v4306
  %4422 = vst.msk [vmem:[%s3 + $0xc8] sm:$0xf] %vm4371, %v4307
  %4423 = vst.msk [vmem:[%s3 + $0xcc] sm:$0xf] %vm4371, %v4308
  %4424 = vst.msk [vmem:[%s3 + $0xd0] sm:$0xf] %vm4371, %v4309
  %4425 = vst.msk [vmem:[%s3 + $0xd4] sm:$0xf] %vm4371, %v4310
  %4426 = vst.msk [vmem:[%s3 + $0xd8] sm:$0xf] %vm4371, %v4311
  %4427 = vst.msk [vmem:[%s3 + $0xdc] sm:$0xf] %vm4371, %v4312
  %4428 = vst.msk [vmem:[%s3 + $0xe0] sm:$0xf] %vm4371, %v4313
  // Predicated region
  $region14: #{_lambda_.3} parent=0 // pred_check
    _
  $region15: #{_lambda_.3} parent=0 // pred_check_branch
    %4430 = sbr.rel (0) target = $region17
  $region16: #{_lambda_.3} parent=0 // pred_region
    _
  $region17: #{_lambda_.3} parent=0 // pred_fallthru
    _
  // Predicated region
  $region18: #{_lambda_.3} parent=0 // pred_check
    _
  $region19: #{_lambda_.3} parent=0 // pred_check_branch
    %4432 = sbr.rel (0) target = $region21
  $region20: #{_lambda_.3} parent=0 // pred_region
    _
  $region21: #{_lambda_.3} parent=0 // pred_fallthru
    _

// kernel: _lambda_.4
$region0: #{_lambda_.4}
  #allocation0 [shape = 'u32[]', space=smem, size = 0x4, offset = 0x4, fixed_abs, tag = 'smem constant byte address 0x4 - core index']
  #allocation1 [shape = 'u32[144,128]{1,0:T(1,128)}', space=vmem, size = 0x12000, scoped, tag = 'internal scratch']
  %s0 = inlined_call_operand.vmem [shape: bf16[344,576], index: 0, kind: input, shape index: {}]
  %s1 = inlined_call_operand.vmem [shape: bf16[576,64], index: 1, kind: input, shape index: {}]
  %s2 = inlined_call_operand.vmem [shape: f32[2,64], index: 2, kind: input, shape index: {}]
  %s3 = inlined_call_operand.vmem [shape: bf16[72,64], index: 3, kind: output, shape index: {}]
  %s4 = sld [smem:[#allocation0]]
  $region22: #{_lambda_.4} parent=0
    _
  %s6 = ssub.s32 1, %s4
  %s7 = scalar_select 0, %s6, %s4
  // Predicated region
  $region2: #{_lambda_.4} parent=0 // pred_check
    _
  $region3: #{_lambda_.4} parent=0 // pred_check_branch
    %9 = sbr.rel (0) target = $region5
  $region4: #{_lambda_.4} parent=0 // pred_region
    _
  $region5: #{_lambda_.4} parent=0 // pred_fallthru
    _
  // Predicated region
  $region6: #{_lambda_.4} parent=0 // pred_check
    _
  $region7: #{_lambda_.4} parent=0 // pred_check_branch
    %11 = sbr.rel (0) target = $region9
  $region8: #{_lambda_.4} parent=0 // pred_region
    _
  $region9: #{_lambda_.4} parent=0 // pred_fallthru
    _
  // Predicated region
  $region10: #{_lambda_.4} parent=0 // pred_check
    _
  $region11: #{_lambda_.4} parent=0 // pred_check_branch
    %13 = sbr.rel (0) target = $region13
  $region12: #{_lambda_.4} parent=0 // pred_region
    _
  $region13: #{_lambda_.4} parent=0 // pred_fallthru
    _
  %v15 = vld [vmem:[%s0] sm:$0xff]
  %v16 = vld [vmem:[%s0 + $0x8] sm:$0xff]
  %v17 = vld [vmem:[%s0 + $0x10] sm:$0xf]
  %v18 = vld [vmem:[%s0 + $0x14] sm:$0xff]
  %v19 = vld [vmem:[%s0 + $0x1c] sm:$0xff]
  %v20 = vld [vmem:[%s0 + $0x24] sm:$0xf]
  %v21 = vld [vmem:[%s0 + $0x28] sm:$0xff]
  %v22 = vld [vmem:[%s0 + $0x30] sm:$0xff]
  %v23 = vld [vmem:[%s0 + $0x38] sm:$0xf]
  %v24 = vld [vmem:[%s0 + $0x3c] sm:$0xff]
  %v25 = vld [vmem:[%s0 + $0x44] sm:$0xff]
  %v26 = vld [vmem:[%s0 + $0x4c] sm:$0xf]
  %v27 = vld [vmem:[%s0 + $0x50] sm:$0xff]
  %v28 = vld [vmem:[%s0 + $0x58] sm:$0xff]
  %v29 = vld [vmem:[%s0 + $0x60] sm:$0xf]
  %v30 = vld [vmem:[%s0 + $0x64] sm:$0xff]
  %v31 = vld [vmem:[%s0 + $0x6c] sm:$0xff]
  %v32 = vld [vmem:[%s0 + $0x74] sm:$0xf]
  %v33 = vld [vmem:[%s0 + $0x78] sm:$0xff]
  %v34 = vld [vmem:[%s0 + $0x80] sm:$0xff]
  %v35 = vld [vmem:[%s0 + $0x88] sm:$0xf]
  %v36 = vld [vmem:[%s0 + $0x8c] sm:$0xff]
  %v37 = vld [vmem:[%s0 + $0x94] sm:$0xff]
  %v38 = vld [vmem:[%s0 + $0x9c] sm:$0xf]
  %v39 = vld [vmem:[%s0 + $0xa0] sm:$0xff]
  %v40 = vld [vmem:[%s0 + $0xa8] sm:$0xff]
  %v41 = vld [vmem:[%s0 + $0xb0] sm:$0xf]
  %v42 = vld [vmem:[%s0 + $0xb4] sm:$0xff]
  %v43 = vld [vmem:[%s0 + $0xbc] sm:$0xff]
  %v44 = vld [vmem:[%s0 + $0xc4] sm:$0xf]
  %v45 = vld [vmem:[%s0 + $0xc8] sm:$0xff]
  %v46 = vld [vmem:[%s0 + $0xd0] sm:$0xff]
  %v47 = vld [vmem:[%s0 + $0xd8] sm:$0xf]
  %v48 = vld [vmem:[%s0 + $0xdc] sm:$0xff]
  %v49 = vld [vmem:[%s0 + $0xe4] sm:$0xff]
  %v50 = vld [vmem:[%s0 + $0xec] sm:$0xf]
  %v51 = vld [vmem:[%s0 + $0xf0] sm:$0xff]
  %v52 = vld [vmem:[%s0 + $0xf8] sm:$0xff]
  %v53 = vld [vmem:[%s0 + $0x100] sm:$0xf]
  %v54 = vld [vmem:[%s0 + $0x104] sm:$0xff]
  %v55 = vld [vmem:[%s0 + $0x10c] sm:$0xff]
  %v56 = vld [vmem:[%s0 + $0x114] sm:$0xf]
  %v57 = vld [vmem:[%s0 + $0x118] sm:$0xff]
  %v58 = vld [vmem:[%s0 + $0x120] sm:$0xff]
  %v59 = vld [vmem:[%s0 + $0x128] sm:$0xf]
  %v60 = vld [vmem:[%s0 + $0x12c] sm:$0xff]
  %v61 = vld [vmem:[%s0 + $0x134] sm:$0xff]
  %v62 = vld [vmem:[%s0 + $0x13c] sm:$0xf]
  %v63 = vld [vmem:[%s0 + $0x140] sm:$0xff]
  %v64 = vld [vmem:[%s0 + $0x148] sm:$0xff]
  %v65 = vld [vmem:[%s0 + $0x150] sm:$0xf]
  %v66 = vld [vmem:[%s0 + $0x154] sm:$0xff]
  %v67 = vld [vmem:[%s0 + $0x15c] sm:$0xff]
  %v68 = vld [vmem:[%s0 + $0x164] sm:$0xf]
  %v69 = vld [vmem:[%s0 + $0x168] sm:$0xff]
  %v70 = vld [vmem:[%s0 + $0x170] sm:$0xff]
  %v71 = vld [vmem:[%s0 + $0x178] sm:$0xf]
  %v72 = vld [vmem:[%s0 + $0x17c] sm:$0xff]
  %v73 = vld [vmem:[%s0 + $0x184] sm:$0xff]
  %v74 = vld [vmem:[%s0 + $0x18c] sm:$0xf]
  %v75 = vld [vmem:[%s0 + $0x190] sm:$0xff]
  %v76 = vld [vmem:[%s0 + $0x198] sm:$0xff]
  %v77 = vld [vmem:[%s0 + $0x1a0] sm:$0xf]
  %v78 = vld [vmem:[%s0 + $0x1a4] sm:$0xff]
  %v79 = vld [vmem:[%s0 + $0x1ac] sm:$0xff]
  %v80 = vld [vmem:[%s0 + $0x1b4] sm:$0xf]
  %v81 = vld [vmem:[%s0 + $0x1b8] sm:$0xff]
  %v82 = vld [vmem:[%s0 + $0x1c0] sm:$0xff]
  %v83 = vld [vmem:[%s0 + $0x1c8] sm:$0xf]
  %v84 = vld [vmem:[%s0 + $0x1cc] sm:$0xff]
  %v85 = vld [vmem:[%s0 + $0x1d4] sm:$0xff]
  %v86 = vld [vmem:[%s0 + $0x1dc] sm:$0xf]
  %v87 = vld [vmem:[%s0 + $0x1e0] sm:$0xff]
  %v88 = vld [vmem:[%s0 + $0x1e8] sm:$0xff]
  %v89 = vld [vmem:[%s0 + $0x1f0] sm:$0xf]
  %v90 = vld [vmem:[%s0 + $0x1f4] sm:$0xff]
  %v91 = vld [vmem:[%s0 + $0x1fc] sm:$0xff]
  %v92 = vld [vmem:[%s0 + $0x204] sm:$0xf]
  %v93 = vld [vmem:[%s0 + $0x208] sm:$0xff]
  %v94 = vld [vmem:[%s0 + $0x210] sm:$0xff]
  %v95 = vld [vmem:[%s0 + $0x218] sm:$0xf]
  %v96 = vld [vmem:[%s0 + $0x21c] sm:$0xff]
  %v97 = vld [vmem:[%s0 + $0x224] sm:$0xff]
  %v98 = vld [vmem:[%s0 + $0x22c] sm:$0xf]
  %v99 = vld [vmem:[%s0 + $0x230] sm:$0xff]
  %v100 = vld [vmem:[%s0 + $0x238] sm:$0xff]
  %v101 = vld [vmem:[%s0 + $0x240] sm:$0xf]
  %v102 = vld [vmem:[%s0 + $0x244] sm:$0xff]
  %v103 = vld [vmem:[%s0 + $0x24c] sm:$0xff]
  %v104 = vld [vmem:[%s0 + $0x254] sm:$0xf]
  %v105 = vld [vmem:[%s0 + $0x258] sm:$0xff]
  %v106 = vld [vmem:[%s0 + $0x260] sm:$0xff]
  %v107 = vld [vmem:[%s0 + $0x268] sm:$0xf]
  %v108 = vld [vmem:[%s0 + $0x26c] sm:$0xff]
  %v109 = vld [vmem:[%s0 + $0x274] sm:$0xff]
  %v110 = vld [vmem:[%s0 + $0x27c] sm:$0xf]
  %v111 = vld [vmem:[%s0 + $0x280] sm:$0xff]
  %v112 = vld [vmem:[%s0 + $0x288] sm:$0xff]
  %v113 = vld [vmem:[%s0 + $0x290] sm:$0xf]
  %v114 = vld [vmem:[%s0 + $0x294] sm:$0xff]
  %v115 = vld [vmem:[%s0 + $0x29c] sm:$0xff]
  %v116 = vld [vmem:[%s0 + $0x2a4] sm:$0xf]
  %v117 = vld [vmem:[%s0 + $0x2a8] sm:$0xff]
  %v118 = vld [vmem:[%s0 + $0x2b0] sm:$0xff]
  %v119 = vld [vmem:[%s0 + $0x2b8] sm:$0xf]
  %v120 = vld [vmem:[%s0 + $0x2bc] sm:$0xff]
  %v121 = vld [vmem:[%s0 + $0x2c4] sm:$0xff]
  %v122 = vld [vmem:[%s0 + $0x2cc] sm:$0xf]
  %v123 = vld [vmem:[%s0 + $0x2d0] sm:$0xff]
  %v124 = vld [vmem:[%s0 + $0x2d8] sm:$0xff]
  %v125 = vld [vmem:[%s0 + $0x2e0] sm:$0xf]
  %v126 = vld [vmem:[%s0 + $0x2e4] sm:$0xff]
  %v127 = vld [vmem:[%s0 + $0x2ec] sm:$0xff]
  %v128 = vld [vmem:[%s0 + $0x2f4] sm:$0xf]
  %v129 = vld [vmem:[%s0 + $0x2f8] sm:$0xff]
  %v130 = vld [vmem:[%s0 + $0x300] sm:$0xff]
  %v131 = vld [vmem:[%s0 + $0x308] sm:$0xf]
  %v132 = vld [vmem:[%s0 + $0x30c] sm:$0xff]
  %v133 = vld [vmem:[%s0 + $0x314] sm:$0xff]
  %v134 = vld [vmem:[%s0 + $0x31c] sm:$0xf]
  %v135 = vld [vmem:[%s0 + $0x320] sm:$0xff]
  %v136 = vld [vmem:[%s0 + $0x328] sm:$0xff]
  %v137 = vld [vmem:[%s0 + $0x330] sm:$0xf]
  %v138 = vld [vmem:[%s0 + $0x334] sm:$0xff]
  %v139 = vld [vmem:[%s0 + $0x33c] sm:$0xff]
  %v140 = vld [vmem:[%s0 + $0x344] sm:$0xf]
  %v141 = vld [vmem:[%s0 + $0x348] sm:$0xff]
  %v142 = vld [vmem:[%s0 + $0x350] sm:$0xff]
  %v143 = vld [vmem:[%s0 + $0x358] sm:$0xf]
  %v144 = vld [vmem:[%s1] sm:$0xf]
  %v145 = vld [vmem:[%s1 + $0x4] sm:$0xf]
  %v146 = vld [vmem:[%s1 + $0x8] sm:$0xf]
  %v147 = vld [vmem:[%s1 + $0xc] sm:$0xf]
  %v148 = vld [vmem:[%s1 + $0x10] sm:$0xf]
  %v149 = vld [vmem:[%s1 + $0x14] sm:$0xf]
  %v150 = vld [vmem:[%s1 + $0x18] sm:$0xf]
  %v151 = vld [vmem:[%s1 + $0x1c] sm:$0xf]
  %v152 = vld [vmem:[%s1 + $0x20] sm:$0xf]
  %v153 = vld [vmem:[%s1 + $0x24] sm:$0xf]
  %v154 = vld [vmem:[%s1 + $0x28] sm:$0xf]
  %v155 = vld [vmem:[%s1 + $0x2c] sm:$0xf]
  %v156 = vld [vmem:[%s1 + $0x30] sm:$0xf]
  %v157 = vld [vmem:[%s1 + $0x34] sm:$0xf]
  %v158 = vld [vmem:[%s1 + $0x38] sm:$0xf]
  %v159 = vld [vmem:[%s1 + $0x3c] sm:$0xf]
  %v160 = vld [vmem:[%s1 + $0x40] sm:$0xf]
  %v161 = vld [vmem:[%s1 + $0x44] sm:$0xf]
  %v162 = vld [vmem:[%s1 + $0x48] sm:$0xf]
  %v163 = vld [vmem:[%s1 + $0x4c] sm:$0xf]
  %v164 = vld [vmem:[%s1 + $0x50] sm:$0xf]
  %v165 = vld [vmem:[%s1 + $0x54] sm:$0xf]
  %v166 = vld [vmem:[%s1 + $0x58] sm:$0xf]
  %v167 = vld [vmem:[%s1 + $0x5c] sm:$0xf]
  %v168 = vld [vmem:[%s1 + $0x60] sm:$0xf]
  %v169 = vld [vmem:[%s1 + $0x64] sm:$0xf]
  %v170 = vld [vmem:[%s1 + $0x68] sm:$0xf]
  %v171 = vld [vmem:[%s1 + $0x6c] sm:$0xf]
  %v172 = vld [vmem:[%s1 + $0x70] sm:$0xf]
  %v173 = vld [vmem:[%s1 + $0x74] sm:$0xf]
  %v174 = vld [vmem:[%s1 + $0x78] sm:$0xf]
  %v175 = vld [vmem:[%s1 + $0x7c] sm:$0xf]
  %v176 = vld [vmem:[%s1 + $0x80] sm:$0xf]
  %v177 = vld [vmem:[%s1 + $0x84] sm:$0xf]
  %v178 = vld [vmem:[%s1 + $0x88] sm:$0xf]
  %v179 = vld [vmem:[%s1 + $0x8c] sm:$0xf]
  %v180 = vld [vmem:[%s1 + $0x90] sm:$0xf]
  %v181 = vld [vmem:[%s1 + $0x94] sm:$0xf]
  %v182 = vld [vmem:[%s1 + $0x98] sm:$0xf]
  %v183 = vld [vmem:[%s1 + $0x9c] sm:$0xf]
  %v184 = vld [vmem:[%s1 + $0xa0] sm:$0xf]
  %v185 = vld [vmem:[%s1 + $0xa4] sm:$0xf]
  %v186 = vld [vmem:[%s1 + $0xa8] sm:$0xf]
  %v187 = vld [vmem:[%s1 + $0xac] sm:$0xf]
  %v188 = vld [vmem:[%s1 + $0xb0] sm:$0xf]
  %v189 = vld [vmem:[%s1 + $0xb4] sm:$0xf]
  %v190 = vld [vmem:[%s1 + $0xb8] sm:$0xf]
  %v191 = vld [vmem:[%s1 + $0xbc] sm:$0xf]
  %v192 = vld [vmem:[%s1 + $0xc0] sm:$0xf]
  %v193 = vld [vmem:[%s1 + $0xc4] sm:$0xf]
  %v194 = vld [vmem:[%s1 + $0xc8] sm:$0xf]
  %v195 = vld [vmem:[%s1 + $0xcc] sm:$0xf]
  %v196 = vld [vmem:[%s1 + $0xd0] sm:$0xf]
  %v197 = vld [vmem:[%s1 + $0xd4] sm:$0xf]
  %v198 = vld [vmem:[%s1 + $0xd8] sm:$0xf]
  %v199 = vld [vmem:[%s1 + $0xdc] sm:$0xf]
  %v200 = vld [vmem:[%s1 + $0xe0] sm:$0xf]
  %v201 = vld [vmem:[%s1 + $0xe4] sm:$0xf]
  %v202 = vld [vmem:[%s1 + $0xe8] sm:$0xf]
  %v203 = vld [vmem:[%s1 + $0xec] sm:$0xf]
  %v204 = vld [vmem:[%s1 + $0xf0] sm:$0xf]
  %v205 = vld [vmem:[%s1 + $0xf4] sm:$0xf]
  %v206 = vld [vmem:[%s1 + $0xf8] sm:$0xf]
  %v207 = vld [vmem:[%s1 + $0xfc] sm:$0xf]
  %v208 = vld [vmem:[%s1 + $0x100] sm:$0xf]
  %v209 = vld [vmem:[%s1 + $0x104] sm:$0xf]
  %v210 = vld [vmem:[%s1 + $0x108] sm:$0xf]
  %v211 = vld [vmem:[%s1 + $0x10c] sm:$0xf]
  %v212 = vld [vmem:[%s1 + $0x110] sm:$0xf]
  %v213 = vld [vmem:[%s1 + $0x114] sm:$0xf]
  %v214 = vld [vmem:[%s1 + $0x118] sm:$0xf]
  %v215 = vld [vmem:[%s1 + $0x11c] sm:$0xf]
  %v345 = vunpack.c.l.b16 %v15
  %v346 = vunpack.c.h.b16 %v15
  %v347 = vunpack.c.l.b16 %v16
  %v348 = vunpack.c.h.b16 %v16
  %v349 = vunpack.c.l.b16 %v17
  %v350 = vunpack.c.l.b16 %v18
  %v351 = vunpack.c.h.b16 %v18
  %v352 = vunpack.c.l.b16 %v19
  %v353 = vunpack.c.h.b16 %v19
  %v354 = vunpack.c.l.b16 %v20
  %v355 = vunpack.c.l.b16 %v21
  %v356 = vunpack.c.h.b16 %v21
  %v357 = vunpack.c.l.b16 %v22
  %v358 = vunpack.c.h.b16 %v22
  %v359 = vunpack.c.l.b16 %v23
  %v360 = vunpack.c.l.b16 %v24
  %v361 = vunpack.c.h.b16 %v24
  %v362 = vunpack.c.l.b16 %v25
  %v363 = vunpack.c.h.b16 %v25
  %v364 = vunpack.c.l.b16 %v26
  %v365 = vunpack.c.l.b16 %v27
  %v366 = vunpack.c.h.b16 %v27
  %v367 = vunpack.c.l.b16 %v28
  %v368 = vunpack.c.h.b16 %v28
  %v369 = vunpack.c.l.b16 %v29
  %v370 = vunpack.c.l.b16 %v30
  %v371 = vunpack.c.h.b16 %v30
  %v372 = vunpack.c.l.b16 %v31
  %v373 = vunpack.c.h.b16 %v31
  %v374 = vunpack.c.l.b16 %v32
  %v375 = vunpack.c.l.b16 %v33
  %v376 = vunpack.c.h.b16 %v33
  %v377 = vunpack.c.l.b16 %v34
  %v378 = vunpack.c.h.b16 %v34
  %v379 = vunpack.c.l.b16 %v35
  %v380 = vunpack.c.l.b16 %v36
  %v381 = vunpack.c.h.b16 %v36
  %v382 = vunpack.c.l.b16 %v37
  %v383 = vunpack.c.h.b16 %v37
  %v384 = vunpack.c.l.b16 %v38
  %v385 = vunpack.c.l.b16 %v39
  %v386 = vunpack.c.h.b16 %v39
  %v387 = vunpack.c.l.b16 %v40
  %v388 = vunpack.c.h.b16 %v40
  %v389 = vunpack.c.l.b16 %v41
  %v390 = vunpack.c.l.b16 %v42
  %v391 = vunpack.c.h.b16 %v42
  %v392 = vunpack.c.l.b16 %v43
  %v393 = vunpack.c.h.b16 %v43
  %v394 = vunpack.c.l.b16 %v44
  %v395 = vunpack.c.l.b16 %v45
  %v396 = vunpack.c.h.b16 %v45
  %v397 = vunpack.c.l.b16 %v46
  %v398 = vunpack.c.h.b16 %v46
  %v399 = vunpack.c.l.b16 %v47
  %v400 = vunpack.c.l.b16 %v48
  %v401 = vunpack.c.h.b16 %v48
  %v402 = vunpack.c.l.b16 %v49
  %v403 = vunpack.c.h.b16 %v49
  %v404 = vunpack.c.l.b16 %v50
  %v405 = vunpack.c.l.b16 %v51
  %v406 = vunpack.c.h.b16 %v51
  %v407 = vunpack.c.l.b16 %v52
  %v408 = vunpack.c.h.b16 %v52
  %v409 = vunpack.c.l.b16 %v53
  %v410 = vunpack.c.l.b16 %v54
  %v411 = vunpack.c.h.b16 %v54
  %v412 = vunpack.c.l.b16 %v55
  %v413 = vunpack.c.h.b16 %v55
  %v414 = vunpack.c.l.b16 %v56
  %v415 = vunpack.c.l.b16 %v57
  %v416 = vunpack.c.h.b16 %v57
  %v417 = vunpack.c.l.b16 %v58
  %v418 = vunpack.c.h.b16 %v58
  %v419 = vunpack.c.l.b16 %v59
  %v420 = vunpack.c.l.b16 %v60
  %v421 = vunpack.c.h.b16 %v60
  %v422 = vunpack.c.l.b16 %v61
  %v423 = vunpack.c.h.b16 %v61
  %v424 = vunpack.c.l.b16 %v62
  %v425 = vunpack.c.l.b16 %v63
  %v426 = vunpack.c.h.b16 %v63
  %v427 = vunpack.c.l.b16 %v64
  %v428 = vunpack.c.h.b16 %v64
  %v429 = vunpack.c.l.b16 %v65
  %v430 = vunpack.c.l.b16 %v66
  %v431 = vunpack.c.h.b16 %v66
  %v432 = vunpack.c.l.b16 %v67
  %v433 = vunpack.c.h.b16 %v67
  %v434 = vunpack.c.l.b16 %v68
  %v435 = vunpack.c.l.b16 %v69
  %v436 = vunpack.c.h.b16 %v69
  %v437 = vunpack.c.l.b16 %v70
  %v438 = vunpack.c.h.b16 %v70
  %v439 = vunpack.c.l.b16 %v71
  %v440 = vunpack.c.l.b16 %v72
  %v441 = vunpack.c.h.b16 %v72
  %v442 = vunpack.c.l.b16 %v73
  %v443 = vunpack.c.h.b16 %v73
  %v444 = vunpack.c.l.b16 %v74
  %v445 = vunpack.c.l.b16 %v75
  %v446 = vunpack.c.h.b16 %v75
  %v447 = vunpack.c.l.b16 %v76
  %v448 = vunpack.c.h.b16 %v76
  %v449 = vunpack.c.l.b16 %v77
  %v450 = vunpack.c.l.b16 %v78
  %v451 = vunpack.c.h.b16 %v78
  %v452 = vunpack.c.l.b16 %v79
  %v453 = vunpack.c.h.b16 %v79
  %v454 = vunpack.c.l.b16 %v80
  %v455 = vunpack.c.l.b16 %v81
  %v456 = vunpack.c.h.b16 %v81
  %v457 = vunpack.c.l.b16 %v82
  %v458 = vunpack.c.h.b16 %v82
  %v459 = vunpack.c.l.b16 %v83
  %v460 = vunpack.c.l.b16 %v84
  %v461 = vunpack.c.h.b16 %v84
  %v462 = vunpack.c.l.b16 %v85
  %v463 = vunpack.c.h.b16 %v85
  %v464 = vunpack.c.l.b16 %v86
  %v465 = vunpack.c.l.b16 %v87
  %v466 = vunpack.c.h.b16 %v87
  %v467 = vunpack.c.l.b16 %v88
  %v468 = vunpack.c.h.b16 %v88
  %v469 = vunpack.c.l.b16 %v89
  %v470 = vunpack.c.l.b16 %v90
  %v471 = vunpack.c.h.b16 %v90
  %v472 = vunpack.c.l.b16 %v91
  %v473 = vunpack.c.h.b16 %v91
  %v474 = vunpack.c.l.b16 %v92
  %v475 = vunpack.c.l.b16 %v93
  %v476 = vunpack.c.h.b16 %v93
  %v477 = vunpack.c.l.b16 %v94
  %v478 = vunpack.c.h.b16 %v94
  %v479 = vunpack.c.l.b16 %v95
  %v480 = vunpack.c.l.b16 %v96
  %v481 = vunpack.c.h.b16 %v96
  %v482 = vunpack.c.l.b16 %v97
  %v483 = vunpack.c.h.b16 %v97
  %v484 = vunpack.c.l.b16 %v98
  %v485 = vunpack.c.l.b16 %v99
  %v486 = vunpack.c.h.b16 %v99
  %v487 = vunpack.c.l.b16 %v100
  %v488 = vunpack.c.h.b16 %v100
  %v489 = vunpack.c.l.b16 %v101
  %v490 = vunpack.c.l.b16 %v102
  %v491 = vunpack.c.h.b16 %v102
  %v492 = vunpack.c.l.b16 %v103
  %v493 = vunpack.c.h.b16 %v103
  %v494 = vunpack.c.l.b16 %v104
  %v495 = vunpack.c.l.b16 %v105
  %v496 = vunpack.c.h.b16 %v105
  %v497 = vunpack.c.l.b16 %v106
  %v498 = vunpack.c.h.b16 %v106
  %v499 = vunpack.c.l.b16 %v107
  %v500 = vunpack.c.l.b16 %v108
  %v501 = vunpack.c.h.b16 %v108
  %v502 = vunpack.c.l.b16 %v109
  %v503 = vunpack.c.h.b16 %v109
  %v504 = vunpack.c.l.b16 %v110
  %v505 = vunpack.c.l.b16 %v111
  %v506 = vunpack.c.h.b16 %v111
  %v507 = vunpack.c.l.b16 %v112
  %v508 = vunpack.c.h.b16 %v112
  %v509 = vunpack.c.l.b16 %v113
  %v510 = vunpack.c.l.b16 %v114
  %v511 = vunpack.c.h.b16 %v114
  %v512 = vunpack.c.l.b16 %v115
  %v513 = vunpack.c.h.b16 %v115
  %v514 = vunpack.c.l.b16 %v116
  %v515 = vunpack.c.l.b16 %v117
  %v516 = vunpack.c.h.b16 %v117
  %v517 = vunpack.c.l.b16 %v118
  %v518 = vunpack.c.h.b16 %v118
  %v519 = vunpack.c.l.b16 %v119
  %v520 = vunpack.c.l.b16 %v120
  %v521 = vunpack.c.h.b16 %v120
  %v522 = vunpack.c.l.b16 %v121
  %v523 = vunpack.c.h.b16 %v121
  %v524 = vunpack.c.l.b16 %v122
  %v525 = vunpack.c.l.b16 %v123
  %v526 = vunpack.c.h.b16 %v123
  %v527 = vunpack.c.l.b16 %v124
  %v528 = vunpack.c.h.b16 %v124
  %v529 = vunpack.c.l.b16 %v125
  %v530 = vunpack.c.l.b16 %v126
  %v531 = vunpack.c.h.b16 %v126
  %v532 = vunpack.c.l.b16 %v127
  %v533 = vunpack.c.h.b16 %v127
  %v534 = vunpack.c.l.b16 %v128
  %v535 = vunpack.c.l.b16 %v129
  %v536 = vunpack.c.h.b16 %v129
  %v537 = vunpack.c.l.b16 %v130
  %v538 = vunpack.c.h.b16 %v130
  %v539 = vunpack.c.l.b16 %v131
  %v540 = vunpack.c.l.b16 %v132
  %v541 = vunpack.c.h.b16 %v132
  %v542 = vunpack.c.l.b16 %v133
  %v543 = vunpack.c.h.b16 %v133
  %v544 = vunpack.c.l.b16 %v134
  %v545 = vunpack.c.l.b16 %v135
  %v546 = vunpack.c.h.b16 %v135
  %v547 = vunpack.c.l.b16 %v136
  %v548 = vunpack.c.h.b16 %v136
  %v549 = vunpack.c.l.b16 %v137
  %v550 = vunpack.c.l.b16 %v138
  %v551 = vunpack.c.h.b16 %v138
  %v552 = vunpack.c.l.b16 %v139
  %v553 = vunpack.c.h.b16 %v139
  %v554 = vunpack.c.l.b16 %v140
  %v555 = vunpack.c.l.b16 %v141
  %v556 = vunpack.c.h.b16 %v141
  %v557 = vunpack.c.l.b16 %v142
  %v558 = vunpack.c.h.b16 %v142
  %v559 = vunpack.c.l.b16 %v143
  %v560 = vpack.c.b16 %v350, %v345
  %v561 = vpack.c.b16 %v351, %v346
  %v562 = vpack.c.b16 %v352, %v347
  %v563 = vpack.c.b16 %v353, %v348
  %v564 = vpack.c.b16 %v354, %v349
  %v565 = vpack.c.b16 %v360, %v355
  %v566 = vpack.c.b16 %v361, %v356
  %v567 = vpack.c.b16 %v362, %v357
  %v568 = vpack.c.b16 %v363, %v358
  %v569 = vpack.c.b16 %v364, %v359
  %v570 = vpack.c.b16 %v370, %v365
  %v571 = vpack.c.b16 %v371, %v366
  %v572 = vpack.c.b16 %v372, %v367
  %v573 = vpack.c.b16 %v373, %v368
  %v574 = vpack.c.b16 %v374, %v369
  %v575 = vpack.c.b16 %v380, %v375
  %v576 = vpack.c.b16 %v381, %v376
  %v577 = vpack.c.b16 %v382, %v377
  %v578 = vpack.c.b16 %v383, %v378
  %v579 = vpack.c.b16 %v384, %v379
  %v580 = vpack.c.b16 %v390, %v385
  %v581 = vpack.c.b16 %v391, %v386
  %v582 = vpack.c.b16 %v392, %v387
  %v583 = vpack.c.b16 %v393, %v388
  %v584 = vpack.c.b16 %v394, %v389
  %v585 = vpack.c.b16 %v400, %v395
  %v586 = vpack.c.b16 %v401, %v396
  %v587 = vpack.c.b16 %v402, %v397
  %v588 = vpack.c.b16 %v403, %v398
  %v589 = vpack.c.b16 %v404, %v399
  %v590 = vpack.c.b16 %v410, %v405
  %v591 = vpack.c.b16 %v411, %v406
  %v592 = vpack.c.b16 %v412, %v407
  %v593 = vpack.c.b16 %v413, %v408
  %v594 = vpack.c.b16 %v414, %v409
  %v595 = vpack.c.b16 %v420, %v415
  %v596 = vpack.c.b16 %v421, %v416
  %v597 = vpack.c.b16 %v422, %v417
  %v598 = vpack.c.b16 %v423, %v418
  %v599 = vpack.c.b16 %v424, %v419
  %v600 = vpack.c.b16 %v430, %v425
  %v601 = vpack.c.b16 %v431, %v426
  %v602 = vpack.c.b16 %v432, %v427
  %v603 = vpack.c.b16 %v433, %v428
  %v604 = vpack.c.b16 %v434, %v429
  %v605 = vpack.c.b16 %v440, %v435
  %v606 = vpack.c.b16 %v441, %v436
  %v607 = vpack.c.b16 %v442, %v437
  %v608 = vpack.c.b16 %v443, %v438
  %v609 = vpack.c.b16 %v444, %v439
  %v610 = vpack.c.b16 %v450, %v445
  %v611 = vpack.c.b16 %v451, %v446
  %v612 = vpack.c.b16 %v452, %v447
  %v613 = vpack.c.b16 %v453, %v448
  %v614 = vpack.c.b16 %v454, %v449
  %v615 = vpack.c.b16 %v460, %v455
  %v616 = vpack.c.b16 %v461, %v456
  %v617 = vpack.c.b16 %v462, %v457
  %v618 = vpack.c.b16 %v463, %v458
  %v619 = vpack.c.b16 %v464, %v459
  %v620 = vpack.c.b16 %v470, %v465
  %v621 = vpack.c.b16 %v471, %v466
  %v622 = vpack.c.b16 %v472, %v467
  %v623 = vpack.c.b16 %v473, %v468
  %v624 = vpack.c.b16 %v474, %v469
  %v625 = vpack.c.b16 %v480, %v475
  %v626 = vpack.c.b16 %v481, %v476
  %v627 = vpack.c.b16 %v482, %v477
  %v628 = vpack.c.b16 %v483, %v478
  %v629 = vpack.c.b16 %v484, %v479
  %v630 = vpack.c.b16 %v490, %v485
  %v631 = vpack.c.b16 %v491, %v486
  %v632 = vpack.c.b16 %v492, %v487
  %v633 = vpack.c.b16 %v493, %v488
  %v634 = vpack.c.b16 %v494, %v489
  %v635 = vpack.c.b16 %v500, %v495
  %v636 = vpack.c.b16 %v501, %v496
  %v637 = vpack.c.b16 %v502, %v497
  %v638 = vpack.c.b16 %v503, %v498
  %v639 = vpack.c.b16 %v504, %v499
  %v640 = vpack.c.b16 %v510, %v505
  %v641 = vpack.c.b16 %v511, %v506
  %v642 = vpack.c.b16 %v512, %v507
  %v643 = vpack.c.b16 %v513, %v508
  %v644 = vpack.c.b16 %v514, %v509
  %v645 = vpack.c.b16 %v520, %v515
  %v646 = vpack.c.b16 %v521, %v516
  %v647 = vpack.c.b16 %v522, %v517
  %v648 = vpack.c.b16 %v523, %v518
  %v649 = vpack.c.b16 %v524, %v519
  %v650 = vpack.c.b16 %v530, %v525
  %v651 = vpack.c.b16 %v531, %v526
  %v652 = vpack.c.b16 %v532, %v527
  %v653 = vpack.c.b16 %v533, %v528
  %v654 = vpack.c.b16 %v534, %v529
  %v655 = vpack.c.b16 %v540, %v535
  %v656 = vpack.c.b16 %v541, %v536
  %v657 = vpack.c.b16 %v542, %v537
  %v658 = vpack.c.b16 %v543, %v538
  %v659 = vpack.c.b16 %v544, %v539
  %v660 = vpack.c.b16 %v550, %v545
  %v661 = vpack.c.b16 %v551, %v546
  %v662 = vpack.c.b16 %v552, %v547
  %v663 = vpack.c.b16 %v553, %v548
  %v664 = vpack.c.b16 %v554, %v549
  %v665 = vpack.c.b16 %v555, %v555
  %v666 = vpack.c.b16 %v556, %v556
  %v667 = vpack.c.b16 %v557, %v557
  %v668 = vpack.c.b16 %v558, %v558
  %v669 = vpack.c.b16 %v559, %v559
  %v830 = vunpack.c.l.b16 %v144
  %v831 = vunpack.c.l.b16 %v145
  %v832 = vunpack.c.l.b16 %v146
  %v833 = vunpack.c.l.b16 %v147
  %v834 = vunpack.c.l.b16 %v148
  %v835 = vunpack.c.l.b16 %v149
  %v836 = vunpack.c.l.b16 %v150
  %v837 = vunpack.c.l.b16 %v151
  %v838 = vunpack.c.l.b16 %v152
  %v839 = vunpack.c.l.b16 %v153
  %v840 = vunpack.c.l.b16 %v154
  %v841 = vunpack.c.l.b16 %v155
  %v842 = vunpack.c.l.b16 %v156
  %v843 = vunpack.c.l.b16 %v157
  %v844 = vunpack.c.l.b16 %v158
  %v845 = vunpack.c.l.b16 %v159
  %v846 = vunpack.c.l.b16 %v160
  %v847 = vunpack.c.l.b16 %v161
  %v848 = vunpack.c.l.b16 %v162
  %v849 = vunpack.c.l.b16 %v163
  %v850 = vunpack.c.l.b16 %v164
  %v851 = vunpack.c.l.b16 %v165
  %v852 = vunpack.c.l.b16 %v166
  %v853 = vunpack.c.l.b16 %v167
  %v854 = vunpack.c.l.b16 %v168
  %v855 = vunpack.c.l.b16 %v169
  %v856 = vunpack.c.l.b16 %v170
  %v857 = vunpack.c.l.b16 %v171
  %v858 = vunpack.c.l.b16 %v172
  %v859 = vunpack.c.l.b16 %v173
  %v860 = vunpack.c.l.b16 %v174
  %v861 = vunpack.c.l.b16 %v175
  %v862 = vunpack.c.l.b16 %v176
  %v863 = vunpack.c.l.b16 %v177
  %v864 = vunpack.c.l.b16 %v178
  %v865 = vunpack.c.l.b16 %v179
  %v866 = vunpack.c.l.b16 %v180
  %v867 = vunpack.c.l.b16 %v181
  %v868 = vunpack.c.l.b16 %v182
  %v869 = vunpack.c.l.b16 %v183
  %v870 = vunpack.c.l.b16 %v184
  %v871 = vunpack.c.l.b16 %v185
  %v872 = vunpack.c.l.b16 %v186
  %v873 = vunpack.c.l.b16 %v187
  %v874 = vunpack.c.l.b16 %v188
  %v875 = vunpack.c.l.b16 %v189
  %v876 = vunpack.c.l.b16 %v190
  %v877 = vunpack.c.l.b16 %v191
  %v878 = vunpack.c.l.b16 %v192
  %v879 = vunpack.c.l.b16 %v193
  %v880 = vunpack.c.l.b16 %v194
  %v881 = vunpack.c.l.b16 %v195
  %v882 = vunpack.c.l.b16 %v196
  %v883 = vunpack.c.l.b16 %v197
  %v884 = vunpack.c.l.b16 %v198
  %v885 = vunpack.c.l.b16 %v199
  %v886 = vunpack.c.l.b16 %v200
  %v887 = vunpack.c.l.b16 %v201
  %v888 = vunpack.c.l.b16 %v202
  %v889 = vunpack.c.l.b16 %v203
  %v890 = vunpack.c.l.b16 %v204
  %v891 = vunpack.c.l.b16 %v205
  %v892 = vunpack.c.l.b16 %v206
  %v893 = vunpack.c.l.b16 %v207
  %v894 = vunpack.c.l.b16 %v208
  %v895 = vunpack.c.l.b16 %v209
  %v896 = vunpack.c.l.b16 %v210
  %v897 = vunpack.c.l.b16 %v211
  %v898 = vunpack.c.l.b16 %v212
  %v899 = vunpack.c.l.b16 %v213
  %v900 = vunpack.c.l.b16 %v214
  %v901 = vunpack.c.l.b16 %v215
  %v902 = vpack.c.b16 %v831, %v830
  %v903 = vpack.c.b16 %v833, %v832
  %v904 = vpack.c.b16 %v835, %v834
  %v905 = vpack.c.b16 %v837, %v836
  %v906 = vpack.c.b16 %v839, %v838
  %v907 = vpack.c.b16 %v841, %v840
  %v908 = vpack.c.b16 %v843, %v842
  %v909 = vpack.c.b16 %v845, %v844
  %v910 = vpack.c.b16 %v847, %v846
  %v911 = vpack.c.b16 %v849, %v848
  %v912 = vpack.c.b16 %v851, %v850
  %v913 = vpack.c.b16 %v853, %v852
  %v914 = vpack.c.b16 %v855, %v854
  %v915 = vpack.c.b16 %v857, %v856
  %v916 = vpack.c.b16 %v859, %v858
  %v917 = vpack.c.b16 %v861, %v860
  %v918 = vpack.c.b16 %v863, %v862
  %v919 = vpack.c.b16 %v865, %v864
  %v920 = vpack.c.b16 %v867, %v866
  %v921 = vpack.c.b16 %v869, %v868
  %v922 = vpack.c.b16 %v871, %v870
  %v923 = vpack.c.b16 %v873, %v872
  %v924 = vpack.c.b16 %v875, %v874
  %v925 = vpack.c.b16 %v877, %v876
  %v926 = vpack.c.b16 %v879, %v878
  %v927 = vpack.c.b16 %v881, %v880
  %v928 = vpack.c.b16 %v883, %v882
  %v929 = vpack.c.b16 %v885, %v884
  %v930 = vpack.c.b16 %v887, %v886
  %v931 = vpack.c.b16 %v889, %v888
  %v932 = vpack.c.b16 %v891, %v890
  %v933 = vpack.c.b16 %v893, %v892
  %v934 = vpack.c.b16 %v895, %v894
  %v935 = vpack.c.b16 %v897, %v896
  %v936 = vpack.c.b16 %v899, %v898
  %v937 = vpack.c.b16 %v901, %v900
  %vm974 = vcmask 523264
  %v976 = vsel %vm974, %v564, 0
  %v979 = vsel %vm974, %v569, 0
  %v982 = vsel %vm974, %v574, 0
  %v985 = vsel %vm974, %v579, 0
  %v988 = vsel %vm974, %v584, 0
  %v991 = vsel %vm974, %v589, 0
  %v994 = vsel %vm974, %v594, 0
  %v997 = vsel %vm974, %v599, 0
  %v1000 = vsel %vm974, %v604, 0
  %v1003 = vsel %vm974, %v609, 0
  %v1006 = vsel %vm974, %v614, 0
  %v1009 = vsel %vm974, %v619, 0
  %v1012 = vsel %vm974, %v624, 0
  %v1015 = vsel %vm974, %v629, 0
  %v1018 = vsel %vm974, %v634, 0
  %v1021 = vsel %vm974, %v639, 0
  %v1024 = vsel %vm974, %v644, 0
  %v1027 = vsel %vm974, %v649, 0
  %v1030 = vsel %vm974, %v654, 0
  %v1033 = vsel %vm974, %v659, 0
  %v1036 = vsel %vm974, %v664, 0
  %v1039 = vsel %vm974, %v669, 0
  %1041 = vmatprep.subr.bf16.mxu0 0
  %1042 = vmatpush1.bf16.msra.mxu0 %v902
  %1043 = vmatprep.subr.bf16.mxu0 0
  %1044 = vmatpush1.bf16.msra.mxu0 %v903
  %1045 = vmatprep.subr.bf16.mxu0 0
  %1046 = vmatpush1.bf16.msra.mxu0 %v904
  %1047 = vmatprep.subr.bf16.mxu0 0
  %1048 = vmatpush1.bf16.msra.mxu0 %v905
  %1049 = vmatprep.subr.bf16.mxu0 0
  %1050 = vmatpush1.bf16.msra.mxu0 %v906
  %1051 = vmatprep.subr.bf16.mxu0 0
  %1052 = vmatpush1.bf16.msra.mxu0 %v907
  %1053 = vmatprep.subr.bf16.mxu0 0
  %1054 = vmatpush1.bf16.msra.mxu0 %v908
  %1055 = vmatprep.subr.bf16.mxu0 0
  %1056 = vmatpush1.bf16.msra.mxu0 %v909
  %1057 = vmatprep.subr.bf16.mxu0 0
  %1058 = vmatpush1.bf16.msra.mxu0 %v910
  %1059 = vmatprep.subr.bf16.mxu0 0
  %1060 = vmatpush1.bf16.msra.mxu0 %v911
  %1061 = vmatprep.subr.bf16.mxu0 0
  %1062 = vmatpush1.bf16.msra.mxu0 %v912
  %1063 = vmatprep.subr.bf16.mxu0 0
  %1064 = vmatpush1.bf16.msra.mxu0 %v913
  %1065 = vmatprep.subr.bf16.mxu0 0
  %1066 = vmatpush1.bf16.msra.mxu0 %v914
  %1067 = vmatprep.subr.bf16.mxu0 0
  %1068 = vmatpush1.bf16.msra.mxu0 %v915
  %1069 = vmatprep.subr.bf16.mxu0 0
  %1070 = vmatpush1.bf16.msra.mxu0 %v916
  %1071 = vmatprep.subr.bf16.mxu0 0
  %1072 = vmatpush1.bf16.msra.mxu0 %v917
  %1073 = vmatprep.mubr.bf16.mxu0 %v561
  %1074 = vmatmul.mubr.bf16.gmra.mrb[0].mxu0 %v560
  %v1075 = vpop.f32.mrb[0].mxu0
  %v1076 = vadd.f32 0.0, %v1075
  %v1077 = vpop.f32.mrb[0].mxu0
  %v1078 = vpop.f32.mrb[0].mxu0
  %v1079 = vadd.f32 0.0, %v1078
  %v1080 = vpop.f32.mrb[0].mxu0
  %1081 = vmatprep.mubr.bf16.mxu0 %v566
  %1082 = vmatmul.mubr.bf16.gmra.mrb[0].mxu0 %v565
  %v1083 = vpop.f32.mrb[0].mxu0
  %v1084 = vadd.f32 0.0, %v1083
  %v1085 = vpop.f32.mrb[0].mxu0
  %v1086 = vpop.f32.mrb[0].mxu0
  %v1087 = vadd.f32 0.0, %v1086
  %v1088 = vpop.f32.mrb[0].mxu0
  %1089 = vmatprep.mubr.bf16.mxu0 %v571
  %1090 = vmatmul.mubr.bf16.gmra.mrb[0].mxu0 %v570
  %v1091 = vpop.f32.mrb[0].mxu0
  %v1092 = vadd.f32 0.0, %v1091
  %v1093 = vpop.f32.mrb[0].mxu0
  %v1094 = vpop.f32.mrb[0].mxu0
  %v1095 = vadd.f32 0.0, %v1094
  %v1096 = vpop.f32.mrb[0].mxu0
  %1097 = vmatprep.mubr.bf16.mxu0 %v576
  %1098 = vmatmul.mubr.bf16.gmra.mrb[0].mxu0 %v575
  %v1099 = vpop.f32.mrb[0].mxu0
  %v1100 = vadd.f32 0.0, %v1099
  %v1101 = vpop.f32.mrb[0].mxu0
  %v1102 = vpop.f32.mrb[0].mxu0
  %v1103 = vadd.f32 0.0, %v1102
  %v1104 = vpop.f32.mrb[0].mxu0
  %1105 = vmatprep.mubr.bf16.mxu0 %v581
  %1106 = vmatmul.mubr.bf16.gmra.mrb[0].mxu0 %v580
  %v1107 = vpop.f32.mrb[0].mxu0
  %v1108 = vadd.f32 0.0, %v1107
  %v1109 = vpop.f32.mrb[0].mxu0
  %v1110 = vpop.f32.mrb[0].mxu0
  %v1111 = vadd.f32 0.0, %v1110
  %v1112 = vpop.f32.mrb[0].mxu0
  %1113 = vmatprep.mubr.bf16.mxu0 %v586
  %1114 = vmatmul.mubr.bf16.gmra.mrb[0].mxu0 %v585
  %v1115 = vpop.f32.mrb[0].mxu0
  %v1116 = vadd.f32 0.0, %v1115
  %v1117 = vpop.f32.mrb[0].mxu0
  %v1118 = vpop.f32.mrb[0].mxu0
  %v1119 = vadd.f32 0.0, %v1118
  %v1120 = vpop.f32.mrb[0].mxu0
  %1121 = vmatprep.mubr.bf16.mxu0 %v591
  %1122 = vmatmul.mubr.bf16.gmra.mrb[0].mxu0 %v590
  %v1123 = vpop.f32.mrb[0].mxu0
  %v1124 = vadd.f32 0.0, %v1123
  %v1125 = vpop.f32.mrb[0].mxu0
  %v1126 = vpop.f32.mrb[0].mxu0
  %v1127 = vadd.f32 0.0, %v1126
  %v1128 = vpop.f32.mrb[0].mxu0
  %1129 = vmatprep.mubr.bf16.mxu0 %v596
  %1130 = vmatmul.mubr.bf16.gmra.mrb[0].mxu0 %v595
  %v1131 = vpop.f32.mrb[0].mxu0
  %v1132 = vadd.f32 0.0, %v1131
  %v1133 = vpop.f32.mrb[0].mxu0
  %v1134 = vpop.f32.mrb[0].mxu0
  %v1135 = vadd.f32 0.0, %v1134
  %v1136 = vpop.f32.mrb[0].mxu0
  %1137 = vmatprep.mubr.bf16.mxu0 %v601
  %1138 = vmatmul.mubr.bf16.gmra.mrb[0].mxu0 %v600
  %v1139 = vpop.f32.mrb[0].mxu0
  %v1140 = vadd.f32 0.0, %v1139
  %v1141 = vpop.f32.mrb[0].mxu0
  %v1142 = vpop.f32.mrb[0].mxu0
  %v1143 = vadd.f32 0.0, %v1142
  %v1144 = vpop.f32.mrb[0].mxu0
  %1145 = vmatprep.mubr.bf16.mxu0 %v606
  %1146 = vmatmul.mubr.bf16.gmra.mrb[0].mxu0 %v605
  %v1147 = vpop.f32.mrb[0].mxu0
  %v1148 = vadd.f32 0.0, %v1147
  %v1149 = vpop.f32.mrb[0].mxu0
  %v1150 = vpop.f32.mrb[0].mxu0
  %v1151 = vadd.f32 0.0, %v1150
  %v1152 = vpop.f32.mrb[0].mxu0
  %1153 = vmatprep.mubr.bf16.mxu0 %v611
  %1154 = vmatmul.mubr.bf16.gmra.mrb[0].mxu0 %v610
  %v1155 = vpop.f32.mrb[0].mxu0
  %v1156 = vadd.f32 0.0, %v1155
  %v1157 = vpop.f32.mrb[0].mxu0
  %v1158 = vpop.f32.mrb[0].mxu0
  %v1159 = vadd.f32 0.0, %v1158
  %v1160 = vpop.f32.mrb[0].mxu0
  %1161 = vmatprep.mubr.bf16.mxu0 %v616
  %1162 = vmatmul.mubr.bf16.gmra.mrb[0].mxu0 %v615
  %v1163 = vpop.f32.mrb[0].mxu0
  %v1164 = vadd.f32 0.0, %v1163
  %v1165 = vpop.f32.mrb[0].mxu0
  %v1166 = vpop.f32.mrb[0].mxu0
  %v1167 = vadd.f32 0.0, %v1166
  %v1168 = vpop.f32.mrb[0].mxu0
  %1169 = vmatprep.mubr.bf16.mxu0 %v621
  %1170 = vmatmul.mubr.bf16.gmra.mrb[0].mxu0 %v620
  %v1171 = vpop.f32.mrb[0].mxu0
  %v1172 = vadd.f32 0.0, %v1171
  %v1173 = vpop.f32.mrb[0].mxu0
  %v1174 = vpop.f32.mrb[0].mxu0
  %v1175 = vadd.f32 0.0, %v1174
  %v1176 = vpop.f32.mrb[0].mxu0
  %1177 = vmatprep.mubr.bf16.mxu0 %v626
  %1178 = vmatmul.mubr.bf16.gmra.mrb[0].mxu0 %v625
  %v1179 = vpop.f32.mrb[0].mxu0
  %v1180 = vadd.f32 0.0, %v1179
  %v1181 = vpop.f32.mrb[0].mxu0
  %v1182 = vpop.f32.mrb[0].mxu0
  %v1183 = vadd.f32 0.0, %v1182
  %v1184 = vpop.f32.mrb[0].mxu0
  %1185 = vmatprep.mubr.bf16.mxu0 %v631
  %1186 = vmatmul.mubr.bf16.gmra.mrb[0].mxu0 %v630
  %v1187 = vpop.f32.mrb[0].mxu0
  %v1188 = vadd.f32 0.0, %v1187
  %v1189 = vpop.f32.mrb[0].mxu0
  %v1190 = vpop.f32.mrb[0].mxu0
  %v1191 = vadd.f32 0.0, %v1190
  %v1192 = vpop.f32.mrb[0].mxu0
  %1193 = vmatprep.mubr.bf16.mxu0 %v636
  %1194 = vmatmul.mubr.bf16.gmra.mrb[0].mxu0 %v635
  %v1195 = vpop.f32.mrb[0].mxu0
  %v1196 = vadd.f32 0.0, %v1195
  %v1197 = vpop.f32.mrb[0].mxu0
  %v1198 = vpop.f32.mrb[0].mxu0
  %v1199 = vadd.f32 0.0, %v1198
  %v1200 = vpop.f32.mrb[0].mxu0
  %1201 = vmatprep.mubr.bf16.mxu0 %v641
  %1202 = vmatmul.mubr.bf16.gmra.mrb[0].mxu0 %v640
  %v1203 = vpop.f32.mrb[0].mxu0
  %v1204 = vadd.f32 0.0, %v1203
  %v1205 = vpop.f32.mrb[0].mxu0
  %v1206 = vpop.f32.mrb[0].mxu0
  %v1207 = vadd.f32 0.0, %v1206
  %v1208 = vpop.f32.mrb[0].mxu0
  %1209 = vmatprep.mubr.bf16.mxu0 %v646
  %1210 = vmatmul.mubr.bf16.gmra.mrb[0].mxu0 %v645
  %v1211 = vpop.f32.mrb[0].mxu0
  %v1212 = vadd.f32 0.0, %v1211
  %v1213 = vpop.f32.mrb[0].mxu0
  %v1214 = vpop.f32.mrb[0].mxu0
  %v1215 = vadd.f32 0.0, %v1214
  %v1216 = vpop.f32.mrb[0].mxu0
  %1217 = vmatprep.mubr.bf16.mxu0 %v651
  %1218 = vmatmul.mubr.bf16.gmra.mrb[0].mxu0 %v650
  %v1219 = vpop.f32.mrb[0].mxu0
  %v1220 = vadd.f32 0.0, %v1219
  %v1221 = vpop.f32.mrb[0].mxu0
  %v1222 = vpop.f32.mrb[0].mxu0
  %v1223 = vadd.f32 0.0, %v1222
  %v1224 = vpop.f32.mrb[0].mxu0
  %1225 = vmatprep.mubr.bf16.mxu0 %v656
  %1226 = vmatmul.mubr.bf16.gmra.mrb[0].mxu0 %v655
  %v1227 = vpop.f32.mrb[0].mxu0
  %v1228 = vadd.f32 0.0, %v1227
  %v1229 = vpop.f32.mrb[0].mxu0
  %v1230 = vpop.f32.mrb[0].mxu0
  %v1231 = vadd.f32 0.0, %v1230
  %v1232 = vpop.f32.mrb[0].mxu0
  %1233 = vmatprep.mubr.bf16.mxu0 %v661
  %1234 = vmatmul.mubr.bf16.gmra.mrb[0].mxu0 %v660
  %v1235 = vpop.f32.mrb[0].mxu0
  %v1236 = vadd.f32 0.0, %v1235
  %v1237 = vpop.f32.mrb[0].mxu0
  %v1238 = vpop.f32.mrb[0].mxu0
  %v1239 = vadd.f32 0.0, %v1238
  %v1240 = vpop.f32.mrb[0].mxu0
  %1241 = vmatprep.mubr.bf16.mxu0 %v666
  %1242 = vmatmul.mubr.bf16.gmra.mrb[0].mxu0 %v665
  %v1243 = vpop.f32.mrb[0].mxu0
  %v1244 = vadd.f32 0.0, %v1243
  %v1245 = vpop.f32.mrb[0].mxu0
  %v1246 = vpop.f32.mrb[0].mxu0
  %v1247 = vpop.f32.mrb[0].mxu0
  %1248 = vdwg.mxu0
  %1249 = vmatprep.subr.bf16.mxu0 0
  %1250 = vmatpush1.bf16.msra.mxu0 %v918
  %1251 = vmatprep.subr.bf16.mxu0 0
  %1252 = vmatpush1.bf16.msra.mxu0 %v919
  %1253 = vmatprep.subr.bf16.mxu0 0
  %1254 = vmatpush1.bf16.msra.mxu0 %v920
  %1255 = vmatprep.subr.bf16.mxu0 0
  %1256 = vmatpush1.bf16.msra.mxu0 %v921
  %1257 = vmatprep.subr.bf16.mxu0 0
  %1258 = vmatpush1.bf16.msra.mxu0 %v922
  %1259 = vmatprep.subr.bf16.mxu0 0
  %1260 = vmatpush1.bf16.msra.mxu0 %v923
  %1261 = vmatprep.subr.bf16.mxu0 0
  %1262 = vmatpush1.bf16.msra.mxu0 %v924
  %1263 = vmatprep.subr.bf16.mxu0 0
  %1264 = vmatpush1.bf16.msra.mxu0 %v925
  %1265 = vmatprep.subr.bf16.mxu0 0
  %1266 = vmatpush1.bf16.msra.mxu0 %v926
  %1267 = vmatprep.subr.bf16.mxu0 0
  %1268 = vmatpush1.bf16.msra.mxu0 %v927
  %1269 = vmatprep.subr.bf16.mxu0 0
  %1270 = vmatpush1.bf16.msra.mxu0 %v928
  %1271 = vmatprep.subr.bf16.mxu0 0
  %1272 = vmatpush1.bf16.msra.mxu0 %v929
  %1273 = vmatprep.subr.bf16.mxu0 0
  %1274 = vmatpush1.bf16.msra.mxu0 %v930
  %1275 = vmatprep.subr.bf16.mxu0 0
  %1276 = vmatpush1.bf16.msra.mxu0 %v931
  %1277 = vmatprep.subr.bf16.mxu0 0
  %1278 = vmatpush1.bf16.msra.mxu0 %v932
  %1279 = vmatprep.subr.bf16.mxu0 0
  %1280 = vmatpush1.bf16.msra.mxu0 %v933
  %1281 = vmatprep.mubr.bf16.mxu0 %v563
  %1282 = vmatmul.mubr.bf16.gmra.mrb[0].mxu0 %v562
  %v1283 = vpop.f32.mrb[0].mxu0
  %v1284 = vadd.f32 %v1076, %v1283
  %v1285 = vpop.f32.mrb[0].mxu0
  %v1286 = vpop.f32.mrb[0].mxu0
  %v1287 = vadd.f32 %v1079, %v1286
  %v1288 = vpop.f32.mrb[0].mxu0
  %1289 = vmatprep.mubr.bf16.mxu0 %v568
  %1290 = vmatmul.mubr.bf16.gmra.mrb[0].mxu0 %v567
  %v1291 = vpop.f32.mrb[0].mxu0
  %v1292 = vadd.f32 %v1084, %v1291
  %v1293 = vpop.f32.mrb[0].mxu0
  %v1294 = vpop.f32.mrb[0].mxu0
  %v1295 = vadd.f32 %v1087, %v1294
  %v1296 = vpop.f32.mrb[0].mxu0
  %1297 = vmatprep.mubr.bf16.mxu0 %v573
  %1298 = vmatmul.mubr.bf16.gmra.mrb[0].mxu0 %v572
  %v1299 = vpop.f32.mrb[0].mxu0
  %v1300 = vadd.f32 %v1092, %v1299
  %v1301 = vpop.f32.mrb[0].mxu0
  %v1302 = vpop.f32.mrb[0].mxu0
  %v1303 = vadd.f32 %v1095, %v1302
  %v1304 = vpop.f32.mrb[0].mxu0
  %1305 = vmatprep.mubr.bf16.mxu0 %v578
  %1306 = vmatmul.mubr.bf16.gmra.mrb[0].mxu0 %v577
  %v1307 = vpop.f32.mrb[0].mxu0
  %v1308 = vadd.f32 %v1100, %v1307
  %v1309 = vpop.f32.mrb[0].mxu0
  %v1310 = vpop.f32.mrb[0].mxu0
  %v1311 = vadd.f32 %v1103, %v1310
  %v1312 = vpop.f32.mrb[0].mxu0
  %1313 = vmatprep.mubr.bf16.mxu0 %v583
  %1314 = vmatmul.mubr.bf16.gmra.mrb[0].mxu0 %v582
  %v1315 = vpop.f32.mrb[0].mxu0
  %v1316 = vadd.f32 %v1108, %v1315
  %v1317 = vpop.f32.mrb[0].mxu0
  %v1318 = vpop.f32.mrb[0].mxu0
  %v1319 = vadd.f32 %v1111, %v1318
  %v1320 = vpop.f32.mrb[0].mxu0
  %1321 = vmatprep.mubr.bf16.mxu0 %v588
  %1322 = vmatmul.mubr.bf16.gmra.mrb[0].mxu0 %v587
  %v1323 = vpop.f32.mrb[0].mxu0
  %v1324 = vadd.f32 %v1116, %v1323
  %v1325 = vpop.f32.mrb[0].mxu0
  %v1326 = vpop.f32.mrb[0].mxu0
  %v1327 = vadd.f32 %v1119, %v1326
  %v1328 = vpop.f32.mrb[0].mxu0
  %1329 = vmatprep.mubr.bf16.mxu0 %v593
  %1330 = vmatmul.mubr.bf16.gmra.mrb[0].mxu0 %v592
  %v1331 = vpop.f32.mrb[0].mxu0
  %v1332 = vadd.f32 %v1124, %v1331
  %v1333 = vpop.f32.mrb[0].mxu0
  %v1334 = vpop.f32.mrb[0].mxu0
  %v1335 = vadd.f32 %v1127, %v1334
  %v1336 = vpop.f32.mrb[0].mxu0
  %1337 = vmatprep.mubr.bf16.mxu0 %v598
  %1338 = vmatmul.mubr.bf16.gmra.mrb[0].mxu0 %v597
  %v1339 = vpop.f32.mrb[0].mxu0
  %v1340 = vadd.f32 %v1132, %v1339
  %v1341 = vpop.f32.mrb[0].mxu0
  %v1342 = vpop.f32.mrb[0].mxu0
  %v1343 = vadd.f32 %v1135, %v1342
  %v1344 = vpop.f32.mrb[0].mxu0
  %1345 = vmatprep.mubr.bf16.mxu0 %v603
  %1346 = vmatmul.mubr.bf16.gmra.mrb[0].mxu0 %v602
  %v1347 = vpop.f32.mrb[0].mxu0
  %v1348 = vadd.f32 %v1140, %v1347
  %v1349 = vpop.f32.mrb[0].mxu0
  %v1350 = vpop.f32.mrb[0].mxu0
  %v1351 = vadd.f32 %v1143, %v1350
  %v1352 = vpop.f32.mrb[0].mxu0
  %1353 = vmatprep.mubr.bf16.mxu0 %v608
  %1354 = vmatmul.mubr.bf16.gmra.mrb[0].mxu0 %v607
  %v1355 = vpop.f32.mrb[0].mxu0
  %v1356 = vadd.f32 %v1148, %v1355
  %v1357 = vpop.f32.mrb[0].mxu0
  %v1358 = vpop.f32.mrb[0].mxu0
  %v1359 = vadd.f32 %v1151, %v1358
  %v1360 = vpop.f32.mrb[0].mxu0
  %1361 = vmatprep.mubr.bf16.mxu0 %v613
  %1362 = vmatmul.mubr.bf16.gmra.mrb[0].mxu0 %v612
  %v1363 = vpop.f32.mrb[0].mxu0
  %v1364 = vadd.f32 %v1156, %v1363
  %v1365 = vpop.f32.mrb[0].mxu0
  %v1366 = vpop.f32.mrb[0].mxu0
  %v1367 = vadd.f32 %v1159, %v1366
  %v1368 = vpop.f32.mrb[0].mxu0
  %1369 = vmatprep.mubr.bf16.mxu0 %v618
  %1370 = vmatmul.mubr.bf16.gmra.mrb[0].mxu0 %v617
  %v1371 = vpop.f32.mrb[0].mxu0
  %v1372 = vadd.f32 %v1164, %v1371
  %v1373 = vpop.f32.mrb[0].mxu0
  %v1374 = vpop.f32.mrb[0].mxu0
  %v1375 = vadd.f32 %v1167, %v1374
  %v1376 = vpop.f32.mrb[0].mxu0
  %1377 = vmatprep.mubr.bf16.mxu0 %v623
  %1378 = vmatmul.mubr.bf16.gmra.mrb[0].mxu0 %v622
  %v1379 = vpop.f32.mrb[0].mxu0
  %v1380 = vadd.f32 %v1172, %v1379
  %v1381 = vpop.f32.mrb[0].mxu0
  %v1382 = vpop.f32.mrb[0].mxu0
  %v1383 = vadd.f32 %v1175, %v1382
  %v1384 = vpop.f32.mrb[0].mxu0
  %1385 = vmatprep.mubr.bf16.mxu0 %v628
  %1386 = vmatmul.mubr.bf16.gmra.mrb[0].mxu0 %v627
  %v1387 = vpop.f32.mrb[0].mxu0
  %v1388 = vadd.f32 %v1180, %v1387
  %v1389 = vpop.f32.mrb[0].mxu0
  %v1390 = vpop.f32.mrb[0].mxu0
  %v1391 = vadd.f32 %v1183, %v1390
  %v1392 = vpop.f32.mrb[0].mxu0
  %1393 = vmatprep.mubr.bf16.mxu0 %v633
  %1394 = vmatmul.mubr.bf16.gmra.mrb[0].mxu0 %v632
  %v1395 = vpop.f32.mrb[0].mxu0
  %v1396 = vadd.f32 %v1188, %v1395
  %v1397 = vpop.f32.mrb[0].mxu0
  %v1398 = vpop.f32.mrb[0].mxu0
  %v1399 = vadd.f32 %v1191, %v1398
  %v1400 = vpop.f32.mrb[0].mxu0
  %1401 = vmatprep.mubr.bf16.mxu0 %v638
  %1402 = vmatmul.mubr.bf16.gmra.mrb[0].mxu0 %v637
  %v1403 = vpop.f32.mrb[0].mxu0
  %v1404 = vadd.f32 %v1196, %v1403
  %v1405 = vpop.f32.mrb[0].mxu0
  %v1406 = vpop.f32.mrb[0].mxu0
  %v1407 = vadd.f32 %v1199, %v1406
  %v1408 = vpop.f32.mrb[0].mxu0
  %1409 = vmatprep.mubr.bf16.mxu0 %v643
  %1410 = vmatmul.mubr.bf16.gmra.mrb[0].mxu0 %v642
  %v1411 = vpop.f32.mrb[0].mxu0
  %v1412 = vadd.f32 %v1204, %v1411
  %v1413 = vpop.f32.mrb[0].mxu0
  %v1414 = vpop.f32.mrb[0].mxu0
  %v1415 = vadd.f32 %v1207, %v1414
  %v1416 = vpop.f32.mrb[0].mxu0
  %1417 = vmatprep.mubr.bf16.mxu0 %v648
  %1418 = vmatmul.mubr.bf16.gmra.mrb[0].mxu0 %v647
  %v1419 = vpop.f32.mrb[0].mxu0
  %v1420 = vadd.f32 %v1212, %v1419
  %v1421 = vpop.f32.mrb[0].mxu0
  %v1422 = vpop.f32.mrb[0].mxu0
  %v1423 = vadd.f32 %v1215, %v1422
  %v1424 = vpop.f32.mrb[0].mxu0
  %1425 = vmatprep.mubr.bf16.mxu0 %v653
  %1426 = vmatmul.mubr.bf16.gmra.mrb[0].mxu0 %v652
  %v1427 = vpop.f32.mrb[0].mxu0
  %v1428 = vadd.f32 %v1220, %v1427
  %v1429 = vpop.f32.mrb[0].mxu0
  %v1430 = vpop.f32.mrb[0].mxu0
  %v1431 = vadd.f32 %v1223, %v1430
  %v1432 = vpop.f32.mrb[0].mxu0
  %1433 = vmatprep.mubr.bf16.mxu0 %v658
  %1434 = vmatmul.mubr.bf16.gmra.mrb[0].mxu0 %v657
  %v1435 = vpop.f32.mrb[0].mxu0
  %v1436 = vadd.f32 %v1228, %v1435
  %v1437 = vpop.f32.mrb[0].mxu0
  %v1438 = vpop.f32.mrb[0].mxu0
  %v1439 = vadd.f32 %v1231, %v1438
  %v1440 = vpop.f32.mrb[0].mxu0
  %1441 = vmatprep.mubr.bf16.mxu0 %v663
  %1442 = vmatmul.mubr.bf16.gmra.mrb[0].mxu0 %v662
  %v1443 = vpop.f32.mrb[0].mxu0
  %v1444 = vadd.f32 %v1236, %v1443
  %v1445 = vpop.f32.mrb[0].mxu0
  %v1446 = vpop.f32.mrb[0].mxu0
  %v1447 = vadd.f32 %v1239, %v1446
  %v1448 = vpop.f32.mrb[0].mxu0
  %1449 = vmatprep.mubr.bf16.mxu0 %v668
  %1450 = vmatmul.mubr.bf16.gmra.mrb[0].mxu0 %v667
  %v1451 = vpop.f32.mrb[0].mxu0
  %v1452 = vadd.f32 %v1244, %v1451
  %v1453 = vpop.f32.mrb[0].mxu0
  %v1454 = vpop.f32.mrb[0].mxu0
  %v1455 = vpop.f32.mrb[0].mxu0
  %1456 = vdwg.mxu0
  %1457 = vmatprep.subr.bf16.mxu0 0
  %1458 = vmatpush1.bf16.msra.mxu0 %v934
  %1459 = vmatprep.subr.bf16.mxu0 0
  %1460 = vmatpush1.bf16.msra.mxu0 %v935
  %1461 = vmatprep.subr.bf16.mxu0 0
  %1462 = vmatpush1.bf16.msra.mxu0 %v936
  %1463 = vmatprep.subr.bf16.mxu0 0
  %1464 = vmatpush1.bf16.msra.mxu0 %v937
  %1465 = vmatprep.subr.bf16.mxu0 0
  %1466 = vmatpush1.bf16.msra.mxu0 0
  %1467 = vmatprep.subr.bf16.mxu0 0
  %1468 = vmatpush1.bf16.msra.mxu0 0
  %1469 = vmatprep.subr.bf16.mxu0 0
  %1470 = vmatpush1.bf16.msra.mxu0 0
  %1471 = vmatprep.subr.bf16.mxu0 0
  %1472 = vmatpush1.bf16.msra.mxu0 0
  %1473 = vmatprep.subr.bf16.mxu0 0
  %1474 = vmatpush1.bf16.msra.mxu0 0
  %1475 = vmatprep.subr.bf16.mxu0 0
  %1476 = vmatpush1.bf16.msra.mxu0 0
  %1477 = vmatprep.subr.bf16.mxu0 0
  %1478 = vmatpush1.bf16.msra.mxu0 0
  %1479 = vmatprep.subr.bf16.mxu0 0
  %1480 = vmatpush1.bf16.msra.mxu0 0
  %1481 = vmatprep.subr.bf16.mxu0 0
  %1482 = vmatpush1.bf16.msra.mxu0 0
  %1483 = vmatprep.subr.bf16.mxu0 0
  %1484 = vmatpush1.bf16.msra.mxu0 0
  %1485 = vmatprep.subr.bf16.mxu0 0
  %1486 = vmatpush1.bf16.msra.mxu0 0
  %1487 = vmatprep.subr.bf16.mxu0 0
  %1488 = vmatpush1.bf16.msra.mxu0 0
  %1489 = vmatprep.mubr.bf16.mxu0 0
  %1490 = vmatmul.mubr.bf16.gmra.mrb[0].mxu0 %v976
  %v1491 = vpop.f32.mrb[0].mxu0
  %v1492 = vadd.f32 %v1284, %v1491
  %v1493 = vpop.f32.mrb[0].mxu0
  %v1494 = vpop.f32.mrb[0].mxu0
  %v1495 = vadd.f32 %v1287, %v1494
  %v1496 = vpop.f32.mrb[0].mxu0
  %1497 = vmatprep.mubr.bf16.mxu0 0
  %1498 = vmatmul.mubr.bf16.gmra.mrb[0].mxu0 %v979
  %v1499 = vpop.f32.mrb[0].mxu0
  %v1500 = vadd.f32 %v1292, %v1499
  %v1501 = vpop.f32.mrb[0].mxu0
  %v1502 = vpop.f32.mrb[0].mxu0
  %v1503 = vadd.f32 %v1295, %v1502
  %v1504 = vpop.f32.mrb[0].mxu0
  %1505 = vmatprep.mubr.bf16.mxu0 0
  %1506 = vmatmul.mubr.bf16.gmra.mrb[0].mxu0 %v982
  %v1507 = vpop.f32.mrb[0].mxu0
  %v1508 = vadd.f32 %v1300, %v1507
  %v1509 = vpop.f32.mrb[0].mxu0
  %v1510 = vpop.f32.mrb[0].mxu0
  %v1511 = vadd.f32 %v1303, %v1510
  %v1512 = vpop.f32.mrb[0].mxu0
  %1513 = vmatprep.mubr.bf16.mxu0 0
  %1514 = vmatmul.mubr.bf16.gmra.mrb[0].mxu0 %v985
  %v1515 = vpop.f32.mrb[0].mxu0
  %v1516 = vadd.f32 %v1308, %v1515
  %v1517 = vpop.f32.mrb[0].mxu0
  %v1518 = vpop.f32.mrb[0].mxu0
  %v1519 = vadd.f32 %v1311, %v1518
  %v1520 = vpop.f32.mrb[0].mxu0
  %1521 = vmatprep.mubr.bf16.mxu0 0
  %1522 = vmatmul.mubr.bf16.gmra.mrb[0].mxu0 %v988
  %v1523 = vpop.f32.mrb[0].mxu0
  %v1524 = vadd.f32 %v1316, %v1523
  %v1525 = vpop.f32.mrb[0].mxu0
  %v1526 = vpop.f32.mrb[0].mxu0
  %v1527 = vadd.f32 %v1319, %v1526
  %v1528 = vpop.f32.mrb[0].mxu0
  %1529 = vmatprep.mubr.bf16.mxu0 0
  %1530 = vmatmul.mubr.bf16.gmra.mrb[0].mxu0 %v991
  %v1531 = vpop.f32.mrb[0].mxu0
  %v1532 = vadd.f32 %v1324, %v1531
  %v1533 = vpop.f32.mrb[0].mxu0
  %v1534 = vpop.f32.mrb[0].mxu0
  %v1535 = vadd.f32 %v1327, %v1534
  %v1536 = vpop.f32.mrb[0].mxu0
  %1537 = vmatprep.mubr.bf16.mxu0 0
  %1538 = vmatmul.mubr.bf16.gmra.mrb[0].mxu0 %v994
  %v1539 = vpop.f32.mrb[0].mxu0
  %v1540 = vadd.f32 %v1332, %v1539
  %v1541 = vpop.f32.mrb[0].mxu0
  %v1542 = vpop.f32.mrb[0].mxu0
  %v1543 = vadd.f32 %v1335, %v1542
  %v1544 = vpop.f32.mrb[0].mxu0
  %1545 = vmatprep.mubr.bf16.mxu0 0
  %1546 = vmatmul.mubr.bf16.gmra.mrb[0].mxu0 %v997
  %v1547 = vpop.f32.mrb[0].mxu0
  %v1548 = vadd.f32 %v1340, %v1547
  %v1549 = vpop.f32.mrb[0].mxu0
  %v1550 = vpop.f32.mrb[0].mxu0
  %v1551 = vadd.f32 %v1343, %v1550
  %v1552 = vpop.f32.mrb[0].mxu0
  %1553 = vmatprep.mubr.bf16.mxu0 0
  %1554 = vmatmul.mubr.bf16.gmra.mrb[0].mxu0 %v1000
  %v1555 = vpop.f32.mrb[0].mxu0
  %v1556 = vadd.f32 %v1348, %v1555
  %v1557 = vpop.f32.mrb[0].mxu0
  %v1558 = vpop.f32.mrb[0].mxu0
  %v1559 = vadd.f32 %v1351, %v1558
  %v1560 = vpop.f32.mrb[0].mxu0
  %1561 = vmatprep.mubr.bf16.mxu0 0
  %1562 = vmatmul.mubr.bf16.gmra.mrb[0].mxu0 %v1003
  %v1563 = vpop.f32.mrb[0].mxu0
  %v1564 = vadd.f32 %v1356, %v1563
  %v1565 = vpop.f32.mrb[0].mxu0
  %v1566 = vpop.f32.mrb[0].mxu0
  %v1567 = vadd.f32 %v1359, %v1566
  %v1568 = vpop.f32.mrb[0].mxu0
  %1569 = vmatprep.mubr.bf16.mxu0 0
  %1570 = vmatmul.mubr.bf16.gmra.mrb[0].mxu0 %v1006
  %v1571 = vpop.f32.mrb[0].mxu0
  %v1572 = vadd.f32 %v1364, %v1571
  %v1573 = vpop.f32.mrb[0].mxu0
  %v1574 = vpop.f32.mrb[0].mxu0
  %v1575 = vadd.f32 %v1367, %v1574
  %v1576 = vpop.f32.mrb[0].mxu0
  %1577 = vmatprep.mubr.bf16.mxu0 0
  %1578 = vmatmul.mubr.bf16.gmra.mrb[0].mxu0 %v1009
  %v1579 = vpop.f32.mrb[0].mxu0
  %v1580 = vadd.f32 %v1372, %v1579
  %v1581 = vpop.f32.mrb[0].mxu0
  %v1582 = vpop.f32.mrb[0].mxu0
  %v1583 = vadd.f32 %v1375, %v1582
  %v1584 = vpop.f32.mrb[0].mxu0
  %1585 = vmatprep.mubr.bf16.mxu0 0
  %1586 = vmatmul.mubr.bf16.gmra.mrb[0].mxu0 %v1012
  %v1587 = vpop.f32.mrb[0].mxu0
  %v1588 = vadd.f32 %v1380, %v1587
  %v1589 = vpop.f32.mrb[0].mxu0
  %v1590 = vpop.f32.mrb[0].mxu0
  %v1591 = vadd.f32 %v1383, %v1590
  %v1592 = vpop.f32.mrb[0].mxu0
  %1593 = vmatprep.mubr.bf16.mxu0 0
  %1594 = vmatmul.mubr.bf16.gmra.mrb[0].mxu0 %v1015
  %v1595 = vpop.f32.mrb[0].mxu0
  %v1596 = vadd.f32 %v1388, %v1595
  %v1597 = vpop.f32.mrb[0].mxu0
  %v1598 = vpop.f32.mrb[0].mxu0
  %v1599 = vadd.f32 %v1391, %v1598
  %v1600 = vpop.f32.mrb[0].mxu0
  %1601 = vmatprep.mubr.bf16.mxu0 0
  %1602 = vmatmul.mubr.bf16.gmra.mrb[0].mxu0 %v1018
  %v1603 = vpop.f32.mrb[0].mxu0
  %v1604 = vadd.f32 %v1396, %v1603
  %v1605 = vpop.f32.mrb[0].mxu0
  %v1606 = vpop.f32.mrb[0].mxu0
  %v1607 = vadd.f32 %v1399, %v1606
  %v1608 = vpop.f32.mrb[0].mxu0
  %1609 = vmatprep.mubr.bf16.mxu0 0
  %1610 = vmatmul.mubr.bf16.gmra.mrb[0].mxu0 %v1021
  %v1611 = vpop.f32.mrb[0].mxu0
  %v1612 = vadd.f32 %v1404, %v1611
  %v1613 = vpop.f32.mrb[0].mxu0
  %v1614 = vpop.f32.mrb[0].mxu0
  %v1615 = vadd.f32 %v1407, %v1614
  %v1616 = vpop.f32.mrb[0].mxu0
  %1617 = vmatprep.mubr.bf16.mxu0 0
  %1618 = vmatmul.mubr.bf16.gmra.mrb[0].mxu0 %v1024
  %v1619 = vpop.f32.mrb[0].mxu0
  %v1620 = vadd.f32 %v1412, %v1619
  %v1621 = vpop.f32.mrb[0].mxu0
  %v1622 = vpop.f32.mrb[0].mxu0
  %v1623 = vadd.f32 %v1415, %v1622
  %v1624 = vpop.f32.mrb[0].mxu0
  %1625 = vmatprep.mubr.bf16.mxu0 0
  %1626 = vmatmul.mubr.bf16.gmra.mrb[0].mxu0 %v1027
  %v1627 = vpop.f32.mrb[0].mxu0
  %v1628 = vadd.f32 %v1420, %v1627
  %v1629 = vpop.f32.mrb[0].mxu0
  %v1630 = vpop.f32.mrb[0].mxu0
  %v1631 = vadd.f32 %v1423, %v1630
  %v1632 = vpop.f32.mrb[0].mxu0
  %1633 = vmatprep.mubr.bf16.mxu0 0
  %1634 = vmatmul.mubr.bf16.gmra.mrb[0].mxu0 %v1030
  %v1635 = vpop.f32.mrb[0].mxu0
  %v1636 = vadd.f32 %v1428, %v1635
  %v1637 = vpop.f32.mrb[0].mxu0
  %v1638 = vpop.f32.mrb[0].mxu0
  %v1639 = vadd.f32 %v1431, %v1638
  %v1640 = vpop.f32.mrb[0].mxu0
  %1641 = vmatprep.mubr.bf16.mxu0 0
  %1642 = vmatmul.mubr.bf16.gmra.mrb[0].mxu0 %v1033
  %v1643 = vpop.f32.mrb[0].mxu0
  %v1644 = vadd.f32 %v1436, %v1643
  %v1645 = vpop.f32.mrb[0].mxu0
  %v1646 = vpop.f32.mrb[0].mxu0
  %v1647 = vadd.f32 %v1439, %v1646
  %v1648 = vpop.f32.mrb[0].mxu0
  %1649 = vmatprep.mubr.bf16.mxu0 0
  %1650 = vmatmul.mubr.bf16.gmra.mrb[0].mxu0 %v1036
  %v1651 = vpop.f32.mrb[0].mxu0
  %v1652 = vadd.f32 %v1444, %v1651
  %v1653 = vpop.f32.mrb[0].mxu0
  %v1654 = vpop.f32.mrb[0].mxu0
  %v1655 = vadd.f32 %v1447, %v1654
  %v1656 = vpop.f32.mrb[0].mxu0
  %1657 = vmatprep.mubr.bf16.mxu0 0
  %1658 = vmatmul.mubr.bf16.gmra.mrb[0].mxu0 %v1039
  %v1659 = vpop.f32.mrb[0].mxu0
  %v1660 = vadd.f32 %v1452, %v1659
  %v1661 = vpop.f32.mrb[0].mxu0
  %v1662 = vpop.f32.mrb[0].mxu0
  %v1663 = vpop.f32.mrb[0].mxu0
  %1664 = vdwg.mxu0
  %v1665 = vsel %vm974, %v1492, 0.0
  %v1666 = vsel %vm974, %v1495, 0.0
  %v1667 = vadd.f32 %v1665, %v1666
  %v1668 = vsel %vm974, %v1500, 0.0
  %v1669 = vadd.f32 %v1667, %v1668
  %v1670 = vsel %vm974, %v1503, 0.0
  %v1671 = vadd.f32 %v1669, %v1670
  %v1672 = vsel %vm974, %v1508, 0.0
  %v1673 = vadd.f32 %v1671, %v1672
  %v1674 = vsel %vm974, %v1511, 0.0
  %v1675 = vadd.f32 %v1673, %v1674
  %v1676 = vsel %vm974, %v1516, 0.0
  %v1677 = vadd.f32 %v1675, %v1676
  %v1678 = vsel %vm974, %v1519, 0.0
  %v1679 = vadd.f32 %v1677, %v1678
  %v1680 = vsel %vm974, %v1524, 0.0
  %v1681 = vadd.f32 %v1679, %v1680
  %v1682 = vsel %vm974, %v1527, 0.0
  %v1683 = vadd.f32 %v1681, %v1682
  %v1684 = vsel %vm974, %v1532, 0.0
  %v1685 = vadd.f32 %v1683, %v1684
  %v1686 = vsel %vm974, %v1535, 0.0
  %v1687 = vadd.f32 %v1685, %v1686
  %v1688 = vsel %vm974, %v1540, 0.0
  %v1689 = vadd.f32 %v1687, %v1688
  %v1690 = vsel %vm974, %v1543, 0.0
  %v1691 = vadd.f32 %v1689, %v1690
  %v1692 = vsel %vm974, %v1548, 0.0
  %v1693 = vadd.f32 %v1691, %v1692
  %v1694 = vsel %vm974, %v1551, 0.0
  %v1695 = vadd.f32 %v1693, %v1694
  %v1696 = vsel %vm974, %v1556, 0.0
  %v1697 = vadd.f32 %v1695, %v1696
  %v1698 = vsel %vm974, %v1559, 0.0
  %v1699 = vadd.f32 %v1697, %v1698
  %v1700 = vsel %vm974, %v1564, 0.0
  %v1701 = vadd.f32 %v1699, %v1700
  %v1702 = vsel %vm974, %v1567, 0.0
  %v1703 = vadd.f32 %v1701, %v1702
  %v1704 = vsel %vm974, %v1572, 0.0
  %v1705 = vadd.f32 %v1703, %v1704
  %v1706 = vsel %vm974, %v1575, 0.0
  %v1707 = vadd.f32 %v1705, %v1706
  %v1708 = vsel %vm974, %v1580, 0.0
  %v1709 = vadd.f32 %v1707, %v1708
  %v1710 = vsel %vm974, %v1583, 0.0
  %v1711 = vadd.f32 %v1709, %v1710
  %v1712 = vsel %vm974, %v1588, 0.0
  %v1713 = vadd.f32 %v1711, %v1712
  %v1714 = vsel %vm974, %v1591, 0.0
  %v1715 = vadd.f32 %v1713, %v1714
  %v1716 = vsel %vm974, %v1596, 0.0
  %v1717 = vadd.f32 %v1715, %v1716
  %v1718 = vsel %vm974, %v1599, 0.0
  %v1719 = vadd.f32 %v1717, %v1718
  %v1720 = vsel %vm974, %v1604, 0.0
  %v1721 = vadd.f32 %v1719, %v1720
  %v1722 = vsel %vm974, %v1607, 0.0
  %v1723 = vadd.f32 %v1721, %v1722
  %v1724 = vsel %vm974, %v1612, 0.0
  %v1725 = vadd.f32 %v1723, %v1724
  %v1726 = vsel %vm974, %v1615, 0.0
  %v1727 = vadd.f32 %v1725, %v1726
  %v1728 = vsel %vm974, %v1620, 0.0
  %v1729 = vadd.f32 %v1727, %v1728
  %v1730 = vsel %vm974, %v1623, 0.0
  %v1731 = vadd.f32 %v1729, %v1730
  %v1732 = vsel %vm974, %v1628, 0.0
  %v1733 = vadd.f32 %v1731, %v1732
  %v1734 = vsel %vm974, %v1631, 0.0
  %v1735 = vadd.f32 %v1733, %v1734
  %v1736 = vsel %vm974, %v1636, 0.0
  %v1737 = vadd.f32 %v1735, %v1736
  %v1738 = vsel %vm974, %v1639, 0.0
  %v1739 = vadd.f32 %v1737, %v1738
  %v1740 = vsel %vm974, %v1644, 0.0
  %v1741 = vadd.f32 %v1739, %v1740
  %v1742 = vsel %vm974, %v1647, 0.0
  %v1743 = vadd.f32 %v1741, %v1742
  %v1744 = vsel %vm974, %v1652, 0.0
  %v1745 = vadd.f32 %v1743, %v1744
  %v1746 = vsel %vm974, %v1655, 0.0
  %v1747 = vadd.f32 %v1745, %v1746
  %v1748 = vsel %vm974, %v1660, 0.0
  %v1749 = vadd.f32 %v1747, %v1748
  %v1750 = vrot.slane %v1749, 4
  %v1751 = vadd.f32 %v1749, %v1750
  %v1752 = vrot.slane %v1751, 2
  %v1753 = vadd.f32 %v1751, %v1752
  %v1754 = vrot.slane %v1753, 1
  %v1755 = vadd.f32 %v1753, %v1754
  %v1756 = vmul.f32 %v1755, 0.00295858
  %v1757 = vmul.f32 %v1492, %v1492
  %v1758 = vmul.f32 %v1495, %v1495
  %v1759 = vmul.f32 %v1500, %v1500
  %v1760 = vmul.f32 %v1503, %v1503
  %v1761 = vmul.f32 %v1508, %v1508
  %v1762 = vmul.f32 %v1511, %v1511
  %v1763 = vmul.f32 %v1516, %v1516
  %v1764 = vmul.f32 %v1519, %v1519
  %v1765 = vmul.f32 %v1524, %v1524
  %v1766 = vmul.f32 %v1527, %v1527
  %v1767 = vmul.f32 %v1532, %v1532
  %v1768 = vmul.f32 %v1535, %v1535
  %v1769 = vmul.f32 %v1540, %v1540
  %v1770 = vmul.f32 %v1543, %v1543
  %v1771 = vmul.f32 %v1548, %v1548
  %v1772 = vmul.f32 %v1551, %v1551
  %v1773 = vmul.f32 %v1556, %v1556
  %v1774 = vmul.f32 %v1559, %v1559
  %v1775 = vmul.f32 %v1564, %v1564
  %v1776 = vmul.f32 %v1567, %v1567
  %v1777 = vmul.f32 %v1572, %v1572
  %v1778 = vmul.f32 %v1575, %v1575
  %v1779 = vmul.f32 %v1580, %v1580
  %v1780 = vmul.f32 %v1583, %v1583
  %v1781 = vmul.f32 %v1588, %v1588
  %v1782 = vmul.f32 %v1591, %v1591
  %v1783 = vmul.f32 %v1596, %v1596
  %v1784 = vmul.f32 %v1599, %v1599
  %v1785 = vmul.f32 %v1604, %v1604
  %v1786 = vmul.f32 %v1607, %v1607
  %v1787 = vmul.f32 %v1612, %v1612
  %v1788 = vmul.f32 %v1615, %v1615
  %v1789 = vmul.f32 %v1620, %v1620
  %v1790 = vmul.f32 %v1623, %v1623
  %v1791 = vmul.f32 %v1628, %v1628
  %v1792 = vmul.f32 %v1631, %v1631
  %v1793 = vmul.f32 %v1636, %v1636
  %v1794 = vmul.f32 %v1639, %v1639
  %v1795 = vmul.f32 %v1644, %v1644
  %v1796 = vmul.f32 %v1647, %v1647
  %v1797 = vmul.f32 %v1652, %v1652
  %v1798 = vmul.f32 %v1655, %v1655
  %v1799 = vmul.f32 %v1660, %v1660
  %v1800 = vsel %vm974, %v1757, 0.0
  %v1801 = vsel %vm974, %v1758, 0.0
  %v1802 = vadd.f32 %v1800, %v1801
  %v1803 = vsel %vm974, %v1759, 0.0
  %v1804 = vadd.f32 %v1802, %v1803
  %v1805 = vsel %vm974, %v1760, 0.0
  %v1806 = vadd.f32 %v1804, %v1805
  %v1807 = vsel %vm974, %v1761, 0.0
  %v1808 = vadd.f32 %v1806, %v1807
  %v1809 = vsel %vm974, %v1762, 0.0
  %v1810 = vadd.f32 %v1808, %v1809
  %v1811 = vsel %vm974, %v1763, 0.0
  %v1812 = vadd.f32 %v1810, %v1811
  %v1813 = vsel %vm974, %v1764, 0.0
  %v1814 = vadd.f32 %v1812, %v1813
  %v1815 = vsel %vm974, %v1765, 0.0
  %v1816 = vadd.f32 %v1814, %v1815
  %v1817 = vsel %vm974, %v1766, 0.0
  %v1818 = vadd.f32 %v1816, %v1817
  %v1819 = vsel %vm974, %v1767, 0.0
  %v1820 = vadd.f32 %v1818, %v1819
  %v1821 = vsel %vm974, %v1768, 0.0
  %v1822 = vadd.f32 %v1820, %v1821
  %v1823 = vsel %vm974, %v1769, 0.0
  %v1824 = vadd.f32 %v1822, %v1823
  %v1825 = vsel %vm974, %v1770, 0.0
  %v1826 = vadd.f32 %v1824, %v1825
  %v1827 = vsel %vm974, %v1771, 0.0
  %v1828 = vadd.f32 %v1826, %v1827
  %v1829 = vsel %vm974, %v1772, 0.0
  %v1830 = vadd.f32 %v1828, %v1829
  %v1831 = vsel %vm974, %v1773, 0.0
  %v1832 = vadd.f32 %v1830, %v1831
  %v1833 = vsel %vm974, %v1774, 0.0
  %v1834 = vadd.f32 %v1832, %v1833
  %v1835 = vsel %vm974, %v1775, 0.0
  %v1836 = vadd.f32 %v1834, %v1835
  %v1837 = vsel %vm974, %v1776, 0.0
  %v1838 = vadd.f32 %v1836, %v1837
  %v1839 = vsel %vm974, %v1777, 0.0
  %v1840 = vadd.f32 %v1838, %v1839
  %v1841 = vsel %vm974, %v1778, 0.0
  %v1842 = vadd.f32 %v1840, %v1841
  %v1843 = vsel %vm974, %v1779, 0.0
  %v1844 = vadd.f32 %v1842, %v1843
  %v1845 = vsel %vm974, %v1780, 0.0
  %v1846 = vadd.f32 %v1844, %v1845
  %v1847 = vsel %vm974, %v1781, 0.0
  %v1848 = vadd.f32 %v1846, %v1847
  %v1849 = vsel %vm974, %v1782, 0.0
  %v1850 = vadd.f32 %v1848, %v1849
  %v1851 = vsel %vm974, %v1783, 0.0
  %v1852 = vadd.f32 %v1850, %v1851
  %v1853 = vsel %vm974, %v1784, 0.0
  %v1854 = vadd.f32 %v1852, %v1853
  %v1855 = vsel %vm974, %v1785, 0.0
  %v1856 = vadd.f32 %v1854, %v1855
  %v1857 = vsel %vm974, %v1786, 0.0
  %v1858 = vadd.f32 %v1856, %v1857
  %v1859 = vsel %vm974, %v1787, 0.0
  %v1860 = vadd.f32 %v1858, %v1859
  %v1861 = vsel %vm974, %v1788, 0.0
  %v1862 = vadd.f32 %v1860, %v1861
  %v1863 = vsel %vm974, %v1789, 0.0
  %v1864 = vadd.f32 %v1862, %v1863
  %v1865 = vsel %vm974, %v1790, 0.0
  %v1866 = vadd.f32 %v1864, %v1865
  %v1867 = vsel %vm974, %v1791, 0.0
  %v1868 = vadd.f32 %v1866, %v1867
  %v1869 = vsel %vm974, %v1792, 0.0
  %v1870 = vadd.f32 %v1868, %v1869
  %v1871 = vsel %vm974, %v1793, 0.0
  %v1872 = vadd.f32 %v1870, %v1871
  %v1873 = vsel %vm974, %v1794, 0.0
  %v1874 = vadd.f32 %v1872, %v1873
  %v1875 = vsel %vm974, %v1795, 0.0
  %v1876 = vadd.f32 %v1874, %v1875
  %v1877 = vsel %vm974, %v1796, 0.0
  %v1878 = vadd.f32 %v1876, %v1877
  %v1879 = vsel %vm974, %v1797, 0.0
  %v1880 = vadd.f32 %v1878, %v1879
  %v1881 = vsel %vm974, %v1798, 0.0
  %v1882 = vadd.f32 %v1880, %v1881
  %v1883 = vsel %vm974, %v1799, 0.0
  %v1884 = vadd.f32 %v1882, %v1883
  %v1885 = vrot.slane %v1884, 4
  %v1886 = vadd.f32 %v1884, %v1885
  %v1887 = vrot.slane %v1886, 2
  %v1888 = vadd.f32 %v1886, %v1887
  %v1889 = vrot.slane %v1888, 1
  %v1890 = vadd.f32 %v1888, %v1889
  %v1891 = vmul.f32 %v1890, 0.00295858
  %v1892 = vmul.f32 %v1756, %v1756
  %v1893 = vsub.f32 %v1891, %v1892
  %v1894 = vld [vmem:[%s2] sm:$0x1]
  %v1895 = vadd.f32 %v1893, 1e-05
  %v1896 = vrsqrt.pop %v1895
  %v1897 = vmul.f32 %v1894, %v1896
  %v1898 = vld [vmem:[%s2 + $0x1] sm:$0x1]
  %v1899 = vmul.f32 %v1756, %v1897
  %v1900 = vsub.f32 %v1898, %v1899
  %v1901 = vlaneseq
  %v1902 = vshrl.u32 %v1901, 7
  %v1903 = vsub.s32 0, %v1902
  %v1904 = vrot.slane %v1897, %v1903
  %v1905 = vmul.f32 %v1492, %v1904
  %v1906 = vmul.f32 %v1495, %v1904
  %v1907 = vmul.f32 %v1500, %v1904
  %v1908 = vmul.f32 %v1503, %v1904
  %v1909 = vmul.f32 %v1508, %v1904
  %v1910 = vmul.f32 %v1511, %v1904
  %v1911 = vmul.f32 %v1516, %v1904
  %v1912 = vmul.f32 %v1519, %v1904
  %v1913 = vmul.f32 %v1524, %v1904
  %v1914 = vmul.f32 %v1527, %v1904
  %v1915 = vmul.f32 %v1532, %v1904
  %v1916 = vmul.f32 %v1535, %v1904
  %v1917 = vmul.f32 %v1540, %v1904
  %v1918 = vmul.f32 %v1543, %v1904
  %v1919 = vmul.f32 %v1548, %v1904
  %v1920 = vmul.f32 %v1551, %v1904
  %v1921 = vmul.f32 %v1556, %v1904
  %v1922 = vmul.f32 %v1559, %v1904
  %v1923 = vmul.f32 %v1564, %v1904
  %v1924 = vmul.f32 %v1567, %v1904
  %v1925 = vmul.f32 %v1572, %v1904
  %v1926 = vmul.f32 %v1575, %v1904
  %v1927 = vmul.f32 %v1580, %v1904
  %v1928 = vmul.f32 %v1583, %v1904
  %v1929 = vmul.f32 %v1588, %v1904
  %v1930 = vmul.f32 %v1591, %v1904
  %v1931 = vmul.f32 %v1596, %v1904
  %v1932 = vmul.f32 %v1599, %v1904
  %v1933 = vmul.f32 %v1604, %v1904
  %v1934 = vmul.f32 %v1607, %v1904
  %v1935 = vmul.f32 %v1612, %v1904
  %v1936 = vmul.f32 %v1615, %v1904
  %v1937 = vmul.f32 %v1620, %v1904
  %v1938 = vmul.f32 %v1623, %v1904
  %v1939 = vmul.f32 %v1628, %v1904
  %v1940 = vmul.f32 %v1631, %v1904
  %v1941 = vlaneseq
  %v1942 = vshrl.u32 %v1941, 7
  %v1943 = vsub.s32 0, %v1942
  %v1944 = vrot.slane %v1900, %v1943
  %v1945 = vadd.f32 %v1905, %v1944
  %v1946 = vadd.f32 %v1906, %v1944
  %v1947 = vadd.f32 %v1907, %v1944
  %v1948 = vadd.f32 %v1908, %v1944
  %v1949 = vadd.f32 %v1909, %v1944
  %v1950 = vadd.f32 %v1910, %v1944
  %v1951 = vadd.f32 %v1911, %v1944
  %v1952 = vadd.f32 %v1912, %v1944
  %v1953 = vadd.f32 %v1913, %v1944
  %v1954 = vadd.f32 %v1914, %v1944
  %v1955 = vadd.f32 %v1915, %v1944
  %v1956 = vadd.f32 %v1916, %v1944
  %v1957 = vadd.f32 %v1917, %v1944
  %v1958 = vadd.f32 %v1918, %v1944
  %v1959 = vadd.f32 %v1919, %v1944
  %v1960 = vadd.f32 %v1920, %v1944
  %v1961 = vadd.f32 %v1921, %v1944
  %v1962 = vadd.f32 %v1922, %v1944
  %v1963 = vadd.f32 %v1923, %v1944
  %v1964 = vadd.f32 %v1924, %v1944
  %v1965 = vadd.f32 %v1925, %v1944
  %v1966 = vadd.f32 %v1926, %v1944
  %v1967 = vadd.f32 %v1927, %v1944
  %v1968 = vadd.f32 %v1928, %v1944
  %v1969 = vadd.f32 %v1929, %v1944
  %v1970 = vadd.f32 %v1930, %v1944
  %v1971 = vadd.f32 %v1931, %v1944
  %v1972 = vadd.f32 %v1932, %v1944
  %v1973 = vadd.f32 %v1933, %v1944
  %v1974 = vadd.f32 %v1934, %v1944
  %v1975 = vadd.f32 %v1935, %v1944
  %v1976 = vadd.f32 %v1936, %v1944
  %v1977 = vadd.f32 %v1937, %v1944
  %v1978 = vadd.f32 %v1938, %v1944
  %v1979 = vadd.f32 %v1939, %v1944
  %v1980 = vadd.f32 %v1940, %v1944
  %v1981 = vmax.f32 %v1945, 0.0
  %v1982 = vmax.f32 %v1946, 0.0
  %v1983 = vmax.f32 %v1947, 0.0
  %v1984 = vmax.f32 %v1948, 0.0
  %v1985 = vmax.f32 %v1949, 0.0
  %v1986 = vmax.f32 %v1950, 0.0
  %v1987 = vmax.f32 %v1951, 0.0
  %v1988 = vmax.f32 %v1952, 0.0
  %v1989 = vmax.f32 %v1953, 0.0
  %v1990 = vmax.f32 %v1954, 0.0
  %v1991 = vmax.f32 %v1955, 0.0
  %v1992 = vmax.f32 %v1956, 0.0
  %v1993 = vmax.f32 %v1957, 0.0
  %v1994 = vmax.f32 %v1958, 0.0
  %v1995 = vmax.f32 %v1959, 0.0
  %v1996 = vmax.f32 %v1960, 0.0
  %v1997 = vmax.f32 %v1961, 0.0
  %v1998 = vmax.f32 %v1962, 0.0
  %v1999 = vmax.f32 %v1963, 0.0
  %v2000 = vmax.f32 %v1964, 0.0
  %v2001 = vmax.f32 %v1965, 0.0
  %v2002 = vmax.f32 %v1966, 0.0
  %v2003 = vmax.f32 %v1967, 0.0
  %v2004 = vmax.f32 %v1968, 0.0
  %v2005 = vmax.f32 %v1969, 0.0
  %v2006 = vmax.f32 %v1970, 0.0
  %v2007 = vmax.f32 %v1971, 0.0
  %v2008 = vmax.f32 %v1972, 0.0
  %v2009 = vmax.f32 %v1973, 0.0
  %v2010 = vmax.f32 %v1974, 0.0
  %v2011 = vmax.f32 %v1975, 0.0
  %v2012 = vmax.f32 %v1976, 0.0
  %v2013 = vmax.f32 %v1977, 0.0
  %v2014 = vmax.f32 %v1978, 0.0
  %v2015 = vmax.f32 %v1979, 0.0
  %v2016 = vmax.f32 %v1980, 0.0
  %v2017 = vmax.f32 %v1981, %v1990
  %v2018 = vmax.f32 %v1982, %v1991
  %v2019 = vmax.f32 %v1983, %v1992
  %v2020 = vmax.f32 %v1984, %v1993
  %v2021 = vmax.f32 %v1985, %v1994
  %v2022 = vmax.f32 %v1986, %v1995
  %v2023 = vmax.f32 %v1987, %v1996
  %v2024 = vmax.f32 %v1988, %v1997
  %v2025 = vmax.f32 %v1989, %v1998
  %v2026 = vmax.f32 %v1999, %v2008
  %v2027 = vmax.f32 %v2000, %v2009
  %v2028 = vmax.f32 %v2001, %v2010
  %v2029 = vmax.f32 %v2002, %v2011
  %v2030 = vmax.f32 %v2003, %v2012
  %v2031 = vmax.f32 %v2004, %v2013
  %v2032 = vmax.f32 %v2005, %v2014
  %v2033 = vmax.f32 %v2006, %v2015
  %v2034 = vmax.f32 %v2007, %v2016
  %v2035 = vmax.f32 %v2017, %v2026
  %v2036 = vmax.f32 %v2018, %v2027
  %v2037 = vmax.f32 %v2019, %v2028
  %v2038 = vmax.f32 %v2020, %v2029
  %v2039 = vmax.f32 %v2021, %v2030
  %v2040 = vmax.f32 %v2022, %v2031
  %v2041 = vmax.f32 %v2023, %v2032
  %v2042 = vmax.f32 %v2024, %v2033
  %v2043 = vmax.f32 %v2025, %v2034
  %v2044 = vpack.c.bf16 %v2036, %v2035
  %v2045 = vpack.c.bf16 %v2038, %v2037
  %v2046 = vpack.c.bf16 %v2040, %v2039
  %v2047 = vpack.c.bf16 %v2042, %v2041
  %v2048 = vpack.c.bf16 %v2043, %v2043
  %v2054 = vunpack.c.l.b16 %v2044
  %v2055 = vunpack.c.h.b16 %v2044
  %v2056 = vunpack.c.l.b16 %v2045
  %v2057 = vunpack.c.h.b16 %v2045
  %v2058 = vunpack.c.l.b16 %v2046
  %v2059 = vunpack.c.h.b16 %v2046
  %v2060 = vunpack.c.l.b16 %v2047
  %v2061 = vunpack.c.h.b16 %v2047
  %v2062 = vunpack.c.l.b16 %v2048
  %v2063 = vpack.c.b16 %v2054, %v2054
  %v2064 = vpack.c.b16 %v2055, %v2055
  %v2065 = vpack.c.b16 %v2056, %v2056
  %v2066 = vpack.c.b16 %v2057, %v2057
  %v2067 = vpack.c.b16 %v2058, %v2058
  %v2068 = vpack.c.b16 %v2059, %v2059
  %v2069 = vpack.c.b16 %v2060, %v2060
  %v2070 = vpack.c.b16 %v2061, %v2061
  %v2071 = vpack.c.b16 %v2062, %v2062
  %vm2081 = vcmask 519168
  %2082 = vst.msk [vmem:[%s3] sm:$0xf] %vm2081, %v2063
  %2083 = vst.msk [vmem:[%s3 + $0x4] sm:$0xf] %vm2081, %v2064
  %2084 = vst.msk [vmem:[%s3 + $0x8] sm:$0xf] %vm2081, %v2065
  %2085 = vst.msk [vmem:[%s3 + $0xc] sm:$0xf] %vm2081, %v2066
  %2086 = vst.msk [vmem:[%s3 + $0x10] sm:$0xf] %vm2081, %v2067
  %2087 = vst.msk [vmem:[%s3 + $0x14] sm:$0xf] %vm2081, %v2068
  %2088 = vst.msk [vmem:[%s3 + $0x18] sm:$0xf] %vm2081, %v2069
  %2089 = vst.msk [vmem:[%s3 + $0x1c] sm:$0xf] %vm2081, %v2070
  %2090 = vst.msk [vmem:[%s3 + $0x20] sm:$0xf] %vm2081, %v2071
  // Predicated region
  $region14: #{_lambda_.4} parent=0 // pred_check
    _
  $region15: #{_lambda_.4} parent=0 // pred_check_branch
    %2092 = sbr.rel (0) target = $region17
  $region16: #{_lambda_.4} parent=0 // pred_region
    _
  $region17: #{_lambda_.4} parent=0 // pred_fallthru
    _
  // Predicated region
  $region18: #{_lambda_.4} parent=0 // pred_check
    _
  $region19: #{_lambda_.4} parent=0 // pred_check_branch
    %2094 = sbr.rel (0) target = $region21
  $region20: #{_lambda_.4} parent=0 // pred_region
    _
  $region21: #{_lambda_.4} parent=0 // pred_fallthru
    _

// kernel: _lambda_.5
$region0: #{_lambda_.5}
  #allocation0 [shape = 'u32[]', space=smem, size = 0x4, offset = 0x4, fixed_abs, tag = 'smem constant byte address 0x4 - core index']
  #allocation1 [shape = 'u32[144,128]{1,0:T(1,128)}', space=vmem, size = 0x12000, scoped, tag = 'internal scratch']
  #allocation2 [shape = 'f32[160,64]{1,0:T(8,128)}', space=vmem, size = 0x14000, scoped, tag = 'scratch operand']
  %s0 = inlined_call_operand.vmem [shape: bf16[160,64], index: 0, kind: input, shape index: {}]
  %s1 = inlined_call_operand.vmem [shape: bf16[1152,64], index: 1, kind: input, shape index: {}]
  %s2 = inlined_call_operand.vmem [shape: f32[4,64], index: 2, kind: input, shape index: {}]
  %s3 = inlined_call_operand.vmem [shape: f32[128,1], index: 3, kind: input, shape index: {}]
  %s4 = inlined_call_operand.vmem [shape: f32[128,64], index: 4, kind: output, shape index: {}]
  %s5 = sld [smem:[#allocation0]]
  $region26: #{_lambda_.5} parent=0
    _
  %s7 = ssub.s32 1, %s5
  %s8 = scalar_select 0, %s7, %s5
  // Predicated region
  $region2: #{_lambda_.5} parent=0 // pred_check
    _
  $region3: #{_lambda_.5} parent=0 // pred_check_branch
    %10 = sbr.rel (0) target = $region5
  $region4: #{_lambda_.5} parent=0 // pred_region
    _
  $region5: #{_lambda_.5} parent=0 // pred_fallthru
    _
  // Predicated region
  $region6: #{_lambda_.5} parent=0 // pred_check
    _
  $region7: #{_lambda_.5} parent=0 // pred_check_branch
    %12 = sbr.rel (0) target = $region9
  $region8: #{_lambda_.5} parent=0 // pred_region
    _
  $region9: #{_lambda_.5} parent=0 // pred_fallthru
    _
  // Predicated region
  $region10: #{_lambda_.5} parent=0 // pred_check
    _
  $region11: #{_lambda_.5} parent=0 // pred_check_branch
    %14 = sbr.rel (0) target = $region13
  $region12: #{_lambda_.5} parent=0 // pred_region
    _
  $region13: #{_lambda_.5} parent=0 // pred_fallthru
    _
  // Predicated region
  $region14: #{_lambda_.5} parent=0 // pred_check
    _
  $region15: #{_lambda_.5} parent=0 // pred_check_branch
    %16 = sbr.rel (0) target = $region17
  $region16: #{_lambda_.5} parent=0 // pred_region
    _
  $region17: #{_lambda_.5} parent=0 // pred_fallthru
    _
  %v18 = vld [vmem:[%s3] sm:$0xff]
  %v19 = vld [vmem:[%s3 + $0x8] sm:$0xff]
  %v20 = vld [vmem:[%s3 + $0x10] sm:$0xff]
  %v21 = vld [vmem:[%s3 + $0x18] sm:$0xff]
  %v22 = vld [vmem:[%s3 + $0x20] sm:$0xff]
  %v23 = vld [vmem:[%s3 + $0x28] sm:$0xff]
  %v24 = vld [vmem:[%s3 + $0x30] sm:$0xff]
  %v25 = vld [vmem:[%s3 + $0x38] sm:$0xff]
  %v26 = vld [vmem:[%s3 + $0x40] sm:$0xff]
  %v27 = vld [vmem:[%s3 + $0x48] sm:$0xff]
  %v28 = vld [vmem:[%s3 + $0x50] sm:$0xff]
  %v29 = vld [vmem:[%s3 + $0x58] sm:$0xff]
  %v30 = vld [vmem:[%s3 + $0x60] sm:$0xff]
  %v31 = vld [vmem:[%s3 + $0x68] sm:$0xff]
  %v32 = vld [vmem:[%s3 + $0x70] sm:$0xff]
  %v33 = vld [vmem:[%s3 + $0x78] sm:$0xff]
  %v34 = vld [vmem:[%s0] sm:$0xf]
  %v35 = vld [vmem:[%s0 + $0x4] sm:$0xf]
  %v36 = vld [vmem:[%s0 + $0x8] sm:$0xf]
  %v37 = vld [vmem:[%s0 + $0xc] sm:$0xf]
  %v38 = vld [vmem:[%s0 + $0x10] sm:$0xf]
  %v39 = vld [vmem:[%s0 + $0x14] sm:$0xf]
  %v40 = vld [vmem:[%s0 + $0x18] sm:$0xf]
  %v41 = vld [vmem:[%s0 + $0x1c] sm:$0xf]
  %v42 = vld [vmem:[%s0 + $0x20] sm:$0xf]
  %v43 = vld [vmem:[%s0 + $0x24] sm:$0xf]
  %v44 = vld [vmem:[%s0 + $0x28] sm:$0xf]
  %v45 = vld [vmem:[%s0 + $0x2c] sm:$0xf]
  %v46 = vld [vmem:[%s0 + $0x30] sm:$0xf]
  %v47 = vld [vmem:[%s0 + $0x34] sm:$0xf]
  %v48 = vld [vmem:[%s0 + $0x38] sm:$0xf]
  %v49 = vld [vmem:[%s0 + $0x3c] sm:$0xf]
  %v50 = vld [vmem:[%s1] sm:$0xf]
  %v51 = vld [vmem:[%s1 + $0x4] sm:$0xf]
  %v52 = vld [vmem:[%s1 + $0x8] sm:$0xf]
  %v53 = vld [vmem:[%s1 + $0xc] sm:$0xf]
  %v54 = vld [vmem:[%s1 + $0x10] sm:$0xf]
  %v55 = vld [vmem:[%s1 + $0x14] sm:$0xf]
  %v56 = vld [vmem:[%s1 + $0x18] sm:$0xf]
  %v57 = vld [vmem:[%s1 + $0x1c] sm:$0xf]
  %v58 = vld [vmem:[%s0 + $0x40] sm:$0x1]
  %v59 = vld [vmem:[%s1 + $0x20] sm:$0xf]
  %v60 = vld [vmem:[%s1 + $0x24] sm:$0xf]
  %v61 = vld [vmem:[%s1 + $0x28] sm:$0xf]
  %v62 = vld [vmem:[%s1 + $0x2c] sm:$0xf]
  %v63 = vld [vmem:[%s1 + $0x30] sm:$0xf]
  %v64 = vld [vmem:[%s1 + $0x34] sm:$0xf]
  %v65 = vld [vmem:[%s1 + $0x38] sm:$0xf]
  %v66 = vld [vmem:[%s1 + $0x3c] sm:$0xf]
  %v84 = vunpack.c.l.b16 %v34
  %v85 = vunpack.c.l.b16 %v35
  %v86 = vunpack.c.l.b16 %v36
  %v87 = vunpack.c.l.b16 %v37
  %v88 = vunpack.c.l.b16 %v38
  %v89 = vunpack.c.l.b16 %v39
  %v90 = vunpack.c.l.b16 %v40
  %v91 = vunpack.c.l.b16 %v41
  %v92 = vunpack.c.l.b16 %v42
  %v93 = vunpack.c.l.b16 %v43
  %v94 = vunpack.c.l.b16 %v44
  %v95 = vunpack.c.l.b16 %v45
  %v96 = vunpack.c.l.b16 %v46
  %v97 = vunpack.c.l.b16 %v47
  %v98 = vunpack.c.l.b16 %v48
  %v99 = vunpack.c.l.b16 %v49
  %v100 = vunpack.c.l.b16 %v58
  %v101 = vpack.c.b16 %v85, %v84
  %v102 = vpack.c.b16 %v87, %v86
  %v103 = vpack.c.b16 %v89, %v88
  %v104 = vpack.c.b16 %v91, %v90
  %v105 = vpack.c.b16 %v93, %v92
  %v106 = vpack.c.b16 %v95, %v94
  %v107 = vpack.c.b16 %v97, %v96
  %v108 = vpack.c.b16 %v99, %v98
  %v109 = vpack.c.b16 %v100, %v100
  %vm110 = vsmask.f32 7424
  %v112 = vshrl.u32 %v101, 16
  %v114 = vshll.u32 %v101, 16
  %v116 = vrot.slane %v114, 1
  %v117 = vor.u32 %v112, %v116
  %v119 = vshll.u32 %v102, 16
  %v121 = vrot.slane %v119, 1
  %v122 = vsel %vm110, %v117, %v121
  %v123 = vshrl.u32 %v102, 16
  %v125 = vor.u32 %v123, %v121
  %v127 = vshll.u32 %v103, 16
  %v129 = vrot.slane %v127, 1
  %v130 = vsel %vm110, %v125, %v129
  %v131 = vshrl.u32 %v103, 16
  %v133 = vor.u32 %v131, %v129
  %v135 = vshll.u32 %v104, 16
  %v137 = vrot.slane %v135, 1
  %v138 = vsel %vm110, %v133, %v137
  %v139 = vshrl.u32 %v104, 16
  %v141 = vor.u32 %v139, %v137
  %v143 = vshll.u32 %v105, 16
  %v145 = vrot.slane %v143, 1
  %v146 = vsel %vm110, %v141, %v145
  %v147 = vshrl.u32 %v105, 16
  %v149 = vor.u32 %v147, %v145
  %v151 = vshll.u32 %v106, 16
  %v153 = vrot.slane %v151, 1
  %v154 = vsel %vm110, %v149, %v153
  %v155 = vshrl.u32 %v106, 16
  %v157 = vor.u32 %v155, %v153
  %v159 = vshll.u32 %v107, 16
  %v161 = vrot.slane %v159, 1
  %v162 = vsel %vm110, %v157, %v161
  %v163 = vshrl.u32 %v107, 16
  %v165 = vor.u32 %v163, %v161
  %v167 = vshll.u32 %v108, 16
  %v169 = vrot.slane %v167, 1
  %v170 = vsel %vm110, %v165, %v169
  %v171 = vshrl.u32 %v108, 16
  %v173 = vor.u32 %v171, %v169
  %v175 = vshll.u32 %v109, 16
  %v177 = vrot.slane %v175, 1
  %v178 = vsel %vm110, %v173, %v177
  %v187 = vunpack.c.l.b16 %v59
  %v188 = vunpack.c.l.b16 %v60
  %v189 = vunpack.c.l.b16 %v61
  %v190 = vunpack.c.l.b16 %v62
  %v191 = vunpack.c.l.b16 %v63
  %v192 = vunpack.c.l.b16 %v64
  %v193 = vunpack.c.l.b16 %v65
  %v194 = vunpack.c.l.b16 %v66
  %v195 = vpack.c.b16 %v188, %v187
  %v196 = vpack.c.b16 %v190, %v189
  %v197 = vpack.c.b16 %v192, %v191
  %v198 = vpack.c.b16 %v194, %v193
  %vm203 = vcmask 523264
  %v205 = vsel %vm203, %v122, 0
  %v208 = vsel %vm203, %v130, 0
  %v211 = vsel %vm203, %v138, 0
  %v214 = vsel %vm203, %v146, 0
  %v217 = vsel %vm203, %v154, 0
  %v220 = vsel %vm203, %v162, 0
  %v223 = vsel %vm203, %v170, 0
  %v226 = vsel %vm203, %v178, 0
  %228 = vmatprep.subr.bf16.mxu0 0
  %229 = vmatpush1.bf16.msra.mxu0 %v195
  %230 = vmatprep.subr.bf16.mxu0 0
  %231 = vmatpush1.bf16.msra.mxu0 %v196
  %232 = vmatprep.subr.bf16.mxu0 0
  %233 = vmatpush1.bf16.msra.mxu0 %v197
  %234 = vmatprep.subr.bf16.mxu0 0
  %235 = vmatpush1.bf16.msra.mxu0 %v198
  %236 = vmatprep.subr.bf16.mxu0 0
  %237 = vmatpush1.bf16.msra.mxu0 0
  %238 = vmatprep.subr.bf16.mxu0 0
  %239 = vmatpush1.bf16.msra.mxu0 0
  %240 = vmatprep.subr.bf16.mxu0 0
  %241 = vmatpush1.bf16.msra.mxu0 0
  %242 = vmatprep.subr.bf16.mxu0 0
  %243 = vmatpush1.bf16.msra.mxu0 0
  %244 = vmatprep.subr.bf16.mxu0 0
  %245 = vmatpush1.bf16.msra.mxu0 0
  %246 = vmatprep.subr.bf16.mxu0 0
  %247 = vmatpush1.bf16.msra.mxu0 0
  %248 = vmatprep.subr.bf16.mxu0 0
  %249 = vmatpush1.bf16.msra.mxu0 0
  %250 = vmatprep.subr.bf16.mxu0 0
  %251 = vmatpush1.bf16.msra.mxu0 0
  %252 = vmatprep.subr.bf16.mxu0 0
  %253 = vmatpush1.bf16.msra.mxu0 0
  %254 = vmatprep.subr.bf16.mxu0 0
  %255 = vmatpush1.bf16.msra.mxu0 0
  %256 = vmatprep.subr.bf16.mxu0 0
  %257 = vmatpush1.bf16.msra.mxu0 0
  %258 = vmatprep.subr.bf16.mxu0 0
  %259 = vmatpush1.bf16.msra.mxu0 0
  %260 = vmatprep.mubr.bf16.mxu0 0
  %261 = vmatmul.mubr.bf16.gmra.mrb[0].mxu0 %v205
  %v262 = vpop.f32.mrb[0].mxu0
  %v263 = vadd.f32 0.0, %v262
  %v264 = vpop.f32.mrb[0].mxu0
  %v265 = vpop.f32.mrb[0].mxu0
  %v266 = vadd.f32 0.0, %v265
  %v267 = vpop.f32.mrb[0].mxu0
  %268 = vmatprep.mubr.bf16.mxu0 0
  %269 = vmatmul.mubr.bf16.gmra.mrb[0].mxu0 %v208
  %v270 = vpop.f32.mrb[0].mxu0
  %v271 = vadd.f32 0.0, %v270
  %v272 = vpop.f32.mrb[0].mxu0
  %v273 = vpop.f32.mrb[0].mxu0
  %v274 = vadd.f32 0.0, %v273
  %v275 = vpop.f32.mrb[0].mxu0
  %276 = vmatprep.mubr.bf16.mxu0 0
  %277 = vmatmul.mubr.bf16.gmra.mrb[0].mxu0 %v211
  %v278 = vpop.f32.mrb[0].mxu0
  %v279 = vadd.f32 0.0, %v278
  %v280 = vpop.f32.mrb[0].mxu0
  %v281 = vpop.f32.mrb[0].mxu0
  %v282 = vadd.f32 0.0, %v281
  %v283 = vpop.f32.mrb[0].mxu0
  %284 = vmatprep.mubr.bf16.mxu0 0
  %285 = vmatmul.mubr.bf16.gmra.mrb[0].mxu0 %v214
  %v286 = vpop.f32.mrb[0].mxu0
  %v287 = vadd.f32 0.0, %v286
  %v288 = vpop.f32.mrb[0].mxu0
  %v289 = vpop.f32.mrb[0].mxu0
  %v290 = vadd.f32 0.0, %v289
  %v291 = vpop.f32.mrb[0].mxu0
  %292 = vmatprep.mubr.bf16.mxu0 0
  %293 = vmatmul.mubr.bf16.gmra.mrb[0].mxu0 %v217
  %v294 = vpop.f32.mrb[0].mxu0
  %v295 = vadd.f32 0.0, %v294
  %v296 = vpop.f32.mrb[0].mxu0
  %v297 = vpop.f32.mrb[0].mxu0
  %v298 = vadd.f32 0.0, %v297
  %v299 = vpop.f32.mrb[0].mxu0
  %300 = vmatprep.mubr.bf16.mxu0 0
  %301 = vmatmul.mubr.bf16.gmra.mrb[0].mxu0 %v220
  %v302 = vpop.f32.mrb[0].mxu0
  %v303 = vadd.f32 0.0, %v302
  %v304 = vpop.f32.mrb[0].mxu0
  %v305 = vpop.f32.mrb[0].mxu0
  %v306 = vadd.f32 0.0, %v305
  %v307 = vpop.f32.mrb[0].mxu0
  %308 = vmatprep.mubr.bf16.mxu0 0
  %309 = vmatmul.mubr.bf16.gmra.mrb[0].mxu0 %v223
  %v310 = vpop.f32.mrb[0].mxu0
  %v311 = vadd.f32 0.0, %v310
  %v312 = vpop.f32.mrb[0].mxu0
  %v313 = vpop.f32.mrb[0].mxu0
  %v314 = vadd.f32 0.0, %v313
  %v315 = vpop.f32.mrb[0].mxu0
  %316 = vmatprep.mubr.bf16.mxu0 0
  %317 = vmatmul.mubr.bf16.gmra.mrb[0].mxu0 %v226
  %v318 = vpop.f32.mrb[0].mxu0
  %v319 = vadd.f32 0.0, %v318
  %v320 = vpop.f32.mrb[0].mxu0
  %v321 = vpop.f32.mrb[0].mxu0
  %v322 = vadd.f32 0.0, %v321
  %v323 = vpop.f32.mrb[0].mxu0
  %324 = vdwg.mxu0
  %v333 = vunpack.c.l.b16 %v50
  %v334 = vunpack.c.l.b16 %v51
  %v335 = vunpack.c.l.b16 %v52
  %v336 = vunpack.c.l.b16 %v53
  %v337 = vunpack.c.l.b16 %v54
  %v338 = vunpack.c.l.b16 %v55
  %v339 = vunpack.c.l.b16 %v56
  %v340 = vunpack.c.l.b16 %v57
  %v341 = vpack.c.b16 %v334, %v333
  %v342 = vpack.c.b16 %v336, %v335
  %v343 = vpack.c.b16 %v338, %v337
  %v344 = vpack.c.b16 %v340, %v339
  %v349 = vsel %vm203, %v101, 0
  %v351 = vsel %vm203, %v102, 0
  %v353 = vsel %vm203, %v103, 0
  %v355 = vsel %vm203, %v104, 0
  %v357 = vsel %vm203, %v105, 0
  %v359 = vsel %vm203, %v106, 0
  %v361 = vsel %vm203, %v107, 0
  %v363 = vsel %vm203, %v108, 0
  %365 = vmatprep.subr.bf16.mxu0 0
  %366 = vmatpush1.bf16.msra.mxu0 %v341
  %367 = vmatprep.subr.bf16.mxu0 0
  %368 = vmatpush1.bf16.msra.mxu0 %v342
  %369 = vmatprep.subr.bf16.mxu0 0
  %370 = vmatpush1.bf16.msra.mxu0 %v343
  %371 = vmatprep.subr.bf16.mxu0 0
  %372 = vmatpush1.bf16.msra.mxu0 %v344
  %373 = vmatprep.subr.bf16.mxu0 0
  %374 = vmatpush1.bf16.msra.mxu0 0
  %375 = vmatprep.subr.bf16.mxu0 0
  %376 = vmatpush1.bf16.msra.mxu0 0
  %377 = vmatprep.subr.bf16.mxu0 0
  %378 = vmatpush1.bf16.msra.mxu0 0
  %379 = vmatprep.subr.bf16.mxu0 0
  %380 = vmatpush1.bf16.msra.mxu0 0
  %381 = vmatprep.subr.bf16.mxu0 0
  %382 = vmatpush1.bf16.msra.mxu0 0
  %383 = vmatprep.subr.bf16.mxu0 0
  %384 = vmatpush1.bf16.msra.mxu0 0
  %385 = vmatprep.subr.bf16.mxu0 0
  %386 = vmatpush1.bf16.msra.mxu0 0
  %387 = vmatprep.subr.bf16.mxu0 0
  %388 = vmatpush1.bf16.msra.mxu0 0
  %389 = vmatprep.subr.bf16.mxu0 0
  %390 = vmatpush1.bf16.msra.mxu0 0
  %391 = vmatprep.subr.bf16.mxu0 0
  %392 = vmatpush1.bf16.msra.mxu0 0
  %393 = vmatprep.subr.bf16.mxu0 0
  %394 = vmatpush1.bf16.msra.mxu0 0
  %395 = vmatprep.subr.bf16.mxu0 0
  %396 = vmatpush1.bf16.msra.mxu0 0
  %397 = vmatprep.mubr.bf16.mxu0 0
  %398 = vmatmul.mubr.bf16.gmra.mrb[0].mxu0 %v349
  %v399 = vpop.f32.mrb[0].mxu0
  %v400 = vadd.f32 %v263, %v399
  %v401 = vpop.f32.mrb[0].mxu0
  %v402 = vpop.f32.mrb[0].mxu0
  %v403 = vadd.f32 %v266, %v402
  %v404 = vpop.f32.mrb[0].mxu0
  %405 = vmatprep.mubr.bf16.mxu0 0
  %406 = vmatmul.mubr.bf16.gmra.mrb[0].mxu0 %v351
  %v407 = vpop.f32.mrb[0].mxu0
  %v408 = vadd.f32 %v271, %v407
  %v409 = vpop.f32.mrb[0].mxu0
  %v410 = vpop.f32.mrb[0].mxu0
  %v411 = vadd.f32 %v274, %v410
  %v412 = vpop.f32.mrb[0].mxu0
  %413 = vmatprep.mubr.bf16.mxu0 0
  %414 = vmatmul.mubr.bf16.gmra.mrb[0].mxu0 %v353
  %v415 = vpop.f32.mrb[0].mxu0
  %v416 = vadd.f32 %v279, %v415
  %v417 = vpop.f32.mrb[0].mxu0
  %v418 = vpop.f32.mrb[0].mxu0
  %v419 = vadd.f32 %v282, %v418
  %v420 = vpop.f32.mrb[0].mxu0
  %421 = vmatprep.mubr.bf16.mxu0 0
  %422 = vmatmul.mubr.bf16.gmra.mrb[0].mxu0 %v355
  %v423 = vpop.f32.mrb[0].mxu0
  %v424 = vadd.f32 %v287, %v423
  %v425 = vpop.f32.mrb[0].mxu0
  %v426 = vpop.f32.mrb[0].mxu0
  %v427 = vadd.f32 %v290, %v426
  %v428 = vpop.f32.mrb[0].mxu0
  %429 = vmatprep.mubr.bf16.mxu0 0
  %430 = vmatmul.mubr.bf16.gmra.mrb[0].mxu0 %v357
  %v431 = vpop.f32.mrb[0].mxu0
  %v432 = vadd.f32 %v295, %v431
  %v433 = vpop.f32.mrb[0].mxu0
  %v434 = vpop.f32.mrb[0].mxu0
  %v435 = vadd.f32 %v298, %v434
  %v436 = vpop.f32.mrb[0].mxu0
  %437 = vmatprep.mubr.bf16.mxu0 0
  %438 = vmatmul.mubr.bf16.gmra.mrb[0].mxu0 %v359
  %v439 = vpop.f32.mrb[0].mxu0
  %v440 = vadd.f32 %v303, %v439
  %v441 = vpop.f32.mrb[0].mxu0
  %v442 = vpop.f32.mrb[0].mxu0
  %v443 = vadd.f32 %v306, %v442
  %v444 = vpop.f32.mrb[0].mxu0
  %445 = vmatprep.mubr.bf16.mxu0 0
  %446 = vmatmul.mubr.bf16.gmra.mrb[0].mxu0 %v361
  %v447 = vpop.f32.mrb[0].mxu0
  %v448 = vadd.f32 %v311, %v447
  %v449 = vpop.f32.mrb[0].mxu0
  %v450 = vpop.f32.mrb[0].mxu0
  %v451 = vadd.f32 %v314, %v450
  %v452 = vpop.f32.mrb[0].mxu0
  %453 = vmatprep.mubr.bf16.mxu0 0
  %454 = vmatmul.mubr.bf16.gmra.mrb[0].mxu0 %v363
  %v455 = vpop.f32.mrb[0].mxu0
  %v456 = vadd.f32 %v319, %v455
  %v457 = vpop.f32.mrb[0].mxu0
  %v458 = vpop.f32.mrb[0].mxu0
  %v459 = vadd.f32 %v322, %v458
  %v460 = vpop.f32.mrb[0].mxu0
  %461 = vdwg.mxu0
  %v462 = vld [vmem:[%s0] sm:$0xe]
  %v463 = vld [vmem:[%s1 + $0x40] sm:$0xf]
  %v464 = vld [vmem:[%s1 + $0x44] sm:$0xf]
  %v465 = vld [vmem:[%s1 + $0x48] sm:$0xf]
  %v466 = vld [vmem:[%s1 + $0x4c] sm:$0xf]
  %v467 = vld [vmem:[%s1 + $0x50] sm:$0xf]
  %v468 = vld [vmem:[%s1 + $0x54] sm:$0xf]
  %v469 = vld [vmem:[%s1 + $0x58] sm:$0xf]
  %v470 = vld [vmem:[%s1 + $0x5c] sm:$0xf]
  %v472 = vunpack.c.l.b16 %v462
  %v473 = vpack.c.b16 %v85, %v472
  %vm474 = vcmask 1046528
  %v475 = vrot.slane %v473, 1
  %v476 = vrot.slane %v102, 1
  %v477 = vsel %vm474, %v475, %v476
  %v478 = vrot.slane %v103, 1
  %v479 = vsel %vm474, %v476, %v478
  %v480 = vrot.slane %v104, 1
  %v481 = vsel %vm474, %v478, %v480
  %v482 = vrot.slane %v105, 1
  %v483 = vsel %vm474, %v480, %v482
  %v484 = vrot.slane %v106, 1
  %v485 = vsel %vm474, %v482, %v484
  %v486 = vrot.slane %v107, 1
  %v487 = vsel %vm474, %v484, %v486
  %v488 = vrot.slane %v108, 1
  %v489 = vsel %vm474, %v486, %v488
  %v490 = vrot.slane %v109, 1
  %v491 = vsel %vm474, %v488, %v490
  %v500 = vunpack.c.l.b16 %v463
  %v501 = vunpack.c.l.b16 %v464
  %v502 = vunpack.c.l.b16 %v465
  %v503 = vunpack.c.l.b16 %v466
  %v504 = vunpack.c.l.b16 %v467
  %v505 = vunpack.c.l.b16 %v468
  %v506 = vunpack.c.l.b16 %v469
  %v507 = vunpack.c.l.b16 %v470
  %v508 = vpack.c.b16 %v501, %v500
  %v509 = vpack.c.b16 %v503, %v502
  %v510 = vpack.c.b16 %v505, %v504
  %v511 = vpack.c.b16 %v507, %v506
  %v517 = vsel %vm203, %v477, 0
  %v520 = vsel %vm203, %v479, 0
  %v523 = vsel %vm203, %v481, 0
  %v526 = vsel %vm203, %v483, 0
  %v529 = vsel %vm203, %v485, 0
  %v532 = vsel %vm203, %v487, 0
  %v535 = vsel %vm203, %v489, 0
  %v538 = vsel %vm203, %v491, 0
  %540 = vmatprep.subr.bf16.mxu0 0
  %541 = vmatpush1.bf16.msra.mxu0 %v508
  %542 = vmatprep.subr.bf16.mxu0 0
  %543 = vmatpush1.bf16.msra.mxu0 %v509
  %544 = vmatprep.subr.bf16.mxu0 0
  %545 = vmatpush1.bf16.msra.mxu0 %v510
  %546 = vmatprep.subr.bf16.mxu0 0
  %547 = vmatpush1.bf16.msra.mxu0 %v511
  %548 = vmatprep.subr.bf16.mxu0 0
  %549 = vmatpush1.bf16.msra.mxu0 0
  %550 = vmatprep.subr.bf16.mxu0 0
  %551 = vmatpush1.bf16.msra.mxu0 0
  %552 = vmatprep.subr.bf16.mxu0 0
  %553 = vmatpush1.bf16.msra.mxu0 0
  %554 = vmatprep.subr.bf16.mxu0 0
  %555 = vmatpush1.bf16.msra.mxu0 0
  %556 = vmatprep.subr.bf16.mxu0 0
  %557 = vmatpush1.bf16.msra.mxu0 0
  %558 = vmatprep.subr.bf16.mxu0 0
  %559 = vmatpush1.bf16.msra.mxu0 0
  %560 = vmatprep.subr.bf16.mxu0 0
  %561 = vmatpush1.bf16.msra.mxu0 0
  %562 = vmatprep.subr.bf16.mxu0 0
  %563 = vmatpush1.bf16.msra.mxu0 0
  %564 = vmatprep.subr.bf16.mxu0 0
  %565 = vmatpush1.bf16.msra.mxu0 0
  %566 = vmatprep.subr.bf16.mxu0 0
  %567 = vmatpush1.bf16.msra.mxu0 0
  %568 = vmatprep.subr.bf16.mxu0 0
  %569 = vmatpush1.bf16.msra.mxu0 0
  %570 = vmatprep.subr.bf16.mxu0 0
  %571 = vmatpush1.bf16.msra.mxu0 0
  %572 = vmatprep.mubr.bf16.mxu0 0
  %573 = vmatmul.mubr.bf16.gmra.mrb[0].mxu0 %v517
  %v574 = vpop.f32.mrb[0].mxu0
  %v575 = vadd.f32 0.0, %v574
  %v576 = vpop.f32.mrb[0].mxu0
  %v577 = vpop.f32.mrb[0].mxu0
  %v578 = vadd.f32 0.0, %v577
  %v579 = vpop.f32.mrb[0].mxu0
  %580 = vmatprep.mubr.bf16.mxu0 0
  %581 = vmatmul.mubr.bf16.gmra.mrb[0].mxu0 %v520
  %v582 = vpop.f32.mrb[0].mxu0
  %v583 = vadd.f32 0.0, %v582
  %v584 = vpop.f32.mrb[0].mxu0
  %v585 = vpop.f32.mrb[0].mxu0
  %v586 = vadd.f32 0.0, %v585
  %v587 = vpop.f32.mrb[0].mxu0
  %588 = vmatprep.mubr.bf16.mxu0 0
  %589 = vmatmul.mubr.bf16.gmra.mrb[0].mxu0 %v523
  %v590 = vpop.f32.mrb[0].mxu0
  %v591 = vadd.f32 0.0, %v590
  %v592 = vpop.f32.mrb[0].mxu0
  %v593 = vpop.f32.mrb[0].mxu0
  %v594 = vadd.f32 0.0, %v593
  %v595 = vpop.f32.mrb[0].mxu0
  %596 = vmatprep.mubr.bf16.mxu0 0
  %597 = vmatmul.mubr.bf16.gmra.mrb[0].mxu0 %v526
  %v598 = vpop.f32.mrb[0].mxu0
  %v599 = vadd.f32 0.0, %v598
  %v600 = vpop.f32.mrb[0].mxu0
  %v601 = vpop.f32.mrb[0].mxu0
  %v602 = vadd.f32 0.0, %v601
  %v603 = vpop.f32.mrb[0].mxu0
  %604 = vmatprep.mubr.bf16.mxu0 0
  %605 = vmatmul.mubr.bf16.gmra.mrb[0].mxu0 %v529
  %v606 = vpop.f32.mrb[0].mxu0
  %v607 = vadd.f32 0.0, %v606
  %v608 = vpop.f32.mrb[0].mxu0
  %v609 = vpop.f32.mrb[0].mxu0
  %v610 = vadd.f32 0.0, %v609
  %v611 = vpop.f32.mrb[0].mxu0
  %612 = vmatprep.mubr.bf16.mxu0 0
  %613 = vmatmul.mubr.bf16.gmra.mrb[0].mxu0 %v532
  %v614 = vpop.f32.mrb[0].mxu0
  %v615 = vadd.f32 0.0, %v614
  %v616 = vpop.f32.mrb[0].mxu0
  %v617 = vpop.f32.mrb[0].mxu0
  %v618 = vadd.f32 0.0, %v617
  %v619 = vpop.f32.mrb[0].mxu0
  %620 = vmatprep.mubr.bf16.mxu0 0
  %621 = vmatmul.mubr.bf16.gmra.mrb[0].mxu0 %v535
  %v622 = vpop.f32.mrb[0].mxu0
  %v623 = vadd.f32 0.0, %v622
  %v624 = vpop.f32.mrb[0].mxu0
  %v625 = vpop.f32.mrb[0].mxu0
  %v626 = vadd.f32 0.0, %v625
  %v627 = vpop.f32.mrb[0].mxu0
  %628 = vmatprep.mubr.bf16.mxu0 0
  %629 = vmatmul.mubr.bf16.gmra.mrb[0].mxu0 %v538
  %v630 = vpop.f32.mrb[0].mxu0
  %v631 = vadd.f32 0.0, %v630
  %v632 = vpop.f32.mrb[0].mxu0
  %v633 = vpop.f32.mrb[0].mxu0
  %v634 = vadd.f32 0.0, %v633
  %v635 = vpop.f32.mrb[0].mxu0
  %636 = vdwg.mxu0
  %v637 = vadd.f32 %v400, %v575
  %v638 = vadd.f32 %v403, %v578
  %v639 = vadd.f32 %v408, %v583
  %v640 = vadd.f32 %v411, %v586
  %v641 = vadd.f32 %v416, %v591
  %v642 = vadd.f32 %v419, %v594
  %v643 = vadd.f32 %v424, %v599
  %v644 = vadd.f32 %v427, %v602
  %v645 = vadd.f32 %v432, %v607
  %v646 = vadd.f32 %v435, %v610
  %v647 = vadd.f32 %v440, %v615
  %v648 = vadd.f32 %v443, %v618
  %v649 = vadd.f32 %v448, %v623
  %v650 = vadd.f32 %v451, %v626
  %v651 = vadd.f32 %v456, %v631
  %v652 = vadd.f32 %v459, %v634
  %v653 = vld [vmem:[%s0 + $0x40] sm:$0xf]
  %v654 = vld [vmem:[%s1 + $0x60] sm:$0xf]
  %v655 = vld [vmem:[%s1 + $0x64] sm:$0xf]
  %v656 = vld [vmem:[%s1 + $0x68] sm:$0xf]
  %v657 = vld [vmem:[%s1 + $0x6c] sm:$0xf]
  %v658 = vld [vmem:[%s1 + $0x70] sm:$0xf]
  %v659 = vld [vmem:[%s1 + $0x74] sm:$0xf]
  %v660 = vld [vmem:[%s1 + $0x78] sm:$0xf]
  %v661 = vld [vmem:[%s1 + $0x7c] sm:$0xf]
  %v663 = vunpack.c.l.b16 %v653
  %v664 = vpack.c.b16 %v86, %v85
  %v665 = vpack.c.b16 %v88, %v87
  %v666 = vpack.c.b16 %v90, %v89
  %v667 = vpack.c.b16 %v92, %v91
  %v668 = vpack.c.b16 %v94, %v93
  %v669 = vpack.c.b16 %v96, %v95
  %v670 = vpack.c.b16 %v98, %v97
  %v671 = vpack.c.b16 %v663, %v99
  %v680 = vunpack.c.l.b16 %v654
  %v681 = vunpack.c.l.b16 %v655
  %v682 = vunpack.c.l.b16 %v656
  %v683 = vunpack.c.l.b16 %v657
  %v684 = vunpack.c.l.b16 %v658
  %v685 = vunpack.c.l.b16 %v659
  %v686 = vunpack.c.l.b16 %v660
  %v687 = vunpack.c.l.b16 %v661
  %v688 = vpack.c.b16 %v681, %v680
  %v689 = vpack.c.b16 %v683, %v682
  %v690 = vpack.c.b16 %v685, %v684
  %v691 = vpack.c.b16 %v687, %v686
  %v697 = vsel %vm203, %v664, 0
  %v700 = vsel %vm203, %v665, 0
  %v703 = vsel %vm203, %v666, 0
  %v706 = vsel %vm203, %v667, 0
  %v709 = vsel %vm203, %v668, 0
  %v712 = vsel %vm203, %v669, 0
  %v715 = vsel %vm203, %v670, 0
  %v718 = vsel %vm203, %v671, 0
  %720 = vmatprep.subr.bf16.mxu0 0
  %721 = vmatpush1.bf16.msra.mxu0 %v688
  %722 = vmatprep.subr.bf16.mxu0 0
  %723 = vmatpush1.bf16.msra.mxu0 %v689
  %724 = vmatprep.subr.bf16.mxu0 0
  %725 = vmatpush1.bf16.msra.mxu0 %v690
  %726 = vmatprep.subr.bf16.mxu0 0
  %727 = vmatpush1.bf16.msra.mxu0 %v691
  %728 = vmatprep.subr.bf16.mxu0 0
  %729 = vmatpush1.bf16.msra.mxu0 0
  %730 = vmatprep.subr.bf16.mxu0 0
  %731 = vmatpush1.bf16.msra.mxu0 0
  %732 = vmatprep.subr.bf16.mxu0 0
  %733 = vmatpush1.bf16.msra.mxu0 0
  %734 = vmatprep.subr.bf16.mxu0 0
  %735 = vmatpush1.bf16.msra.mxu0 0
  %736 = vmatprep.subr.bf16.mxu0 0
  %737 = vmatpush1.bf16.msra.mxu0 0
  %738 = vmatprep.subr.bf16.mxu0 0
  %739 = vmatpush1.bf16.msra.mxu0 0
  %740 = vmatprep.subr.bf16.mxu0 0
  %741 = vmatpush1.bf16.msra.mxu0 0
  %742 = vmatprep.subr.bf16.mxu0 0
  %743 = vmatpush1.bf16.msra.mxu0 0
  %744 = vmatprep.subr.bf16.mxu0 0
  %745 = vmatpush1.bf16.msra.mxu0 0
  %746 = vmatprep.subr.bf16.mxu0 0
  %747 = vmatpush1.bf16.msra.mxu0 0
  %748 = vmatprep.subr.bf16.mxu0 0
  %749 = vmatpush1.bf16.msra.mxu0 0
  %750 = vmatprep.subr.bf16.mxu0 0
  %751 = vmatpush1.bf16.msra.mxu0 0
  %752 = vmatprep.mubr.bf16.mxu0 0
  %753 = vmatmul.mubr.bf16.gmra.mrb[0].mxu0 %v697
  %v754 = vpop.f32.mrb[0].mxu0
  %v755 = vadd.f32 0.0, %v754
  %v756 = vpop.f32.mrb[0].mxu0
  %v757 = vpop.f32.mrb[0].mxu0
  %v758 = vadd.f32 0.0, %v757
  %v759 = vpop.f32.mrb[0].mxu0
  %760 = vmatprep.mubr.bf16.mxu0 0
  %761 = vmatmul.mubr.bf16.gmra.mrb[0].mxu0 %v700
  %v762 = vpop.f32.mrb[0].mxu0
  %v763 = vadd.f32 0.0, %v762
  %v764 = vpop.f32.mrb[0].mxu0
  %v765 = vpop.f32.mrb[0].mxu0
  %v766 = vadd.f32 0.0, %v765
  %v767 = vpop.f32.mrb[0].mxu0
  %768 = vmatprep.mubr.bf16.mxu0 0
  %769 = vmatmul.mubr.bf16.gmra.mrb[0].mxu0 %v703
  %v770 = vpop.f32.mrb[0].mxu0
  %v771 = vadd.f32 0.0, %v770
  %v772 = vpop.f32.mrb[0].mxu0
  %v773 = vpop.f32.mrb[0].mxu0
  %v774 = vadd.f32 0.0, %v773
  %v775 = vpop.f32.mrb[0].mxu0
  %776 = vmatprep.mubr.bf16.mxu0 0
  %777 = vmatmul.mubr.bf16.gmra.mrb[0].mxu0 %v706
  %v778 = vpop.f32.mrb[0].mxu0
  %v779 = vadd.f32 0.0, %v778
  %v780 = vpop.f32.mrb[0].mxu0
  %v781 = vpop.f32.mrb[0].mxu0
  %v782 = vadd.f32 0.0, %v781
  %v783 = vpop.f32.mrb[0].mxu0
  %784 = vmatprep.mubr.bf16.mxu0 0
  %785 = vmatmul.mubr.bf16.gmra.mrb[0].mxu0 %v709
  %v786 = vpop.f32.mrb[0].mxu0
  %v787 = vadd.f32 0.0, %v786
  %v788 = vpop.f32.mrb[0].mxu0
  %v789 = vpop.f32.mrb[0].mxu0
  %v790 = vadd.f32 0.0, %v789
  %v791 = vpop.f32.mrb[0].mxu0
  %792 = vmatprep.mubr.bf16.mxu0 0
  %793 = vmatmul.mubr.bf16.gmra.mrb[0].mxu0 %v712
  %v794 = vpop.f32.mrb[0].mxu0
  %v795 = vadd.f32 0.0, %v794
  %v796 = vpop.f32.mrb[0].mxu0
  %v797 = vpop.f32.mrb[0].mxu0
  %v798 = vadd.f32 0.0, %v797
  %v799 = vpop.f32.mrb[0].mxu0
  %800 = vmatprep.mubr.bf16.mxu0 0
  %801 = vmatmul.mubr.bf16.gmra.mrb[0].mxu0 %v715
  %v802 = vpop.f32.mrb[0].mxu0
  %v803 = vadd.f32 0.0, %v802
  %v804 = vpop.f32.mrb[0].mxu0
  %v805 = vpop.f32.mrb[0].mxu0
  %v806 = vadd.f32 0.0, %v805
  %v807 = vpop.f32.mrb[0].mxu0
  %808 = vmatprep.mubr.bf16.mxu0 0
  %809 = vmatmul.mubr.bf16.gmra.mrb[0].mxu0 %v718
  %v810 = vpop.f32.mrb[0].mxu0
  %v811 = vadd.f32 0.0, %v810
  %v812 = vpop.f32.mrb[0].mxu0
  %v813 = vpop.f32.mrb[0].mxu0
  %v814 = vadd.f32 0.0, %v813
  %v815 = vpop.f32.mrb[0].mxu0
  %816 = vdwg.mxu0
  %v817 = vadd.f32 %v637, %v755
  %v818 = vadd.f32 %v638, %v758
  %v819 = vadd.f32 %v639, %v763
  %v820 = vadd.f32 %v640, %v766
  %v821 = vadd.f32 %v641, %v771
  %v822 = vadd.f32 %v642, %v774
  %v823 = vadd.f32 %v643, %v779
  %v824 = vadd.f32 %v644, %v782
  %v825 = vadd.f32 %v645, %v787
  %v826 = vadd.f32 %v646, %v790
  %v827 = vadd.f32 %v647, %v795
  %v828 = vadd.f32 %v648, %v798
  %v829 = vadd.f32 %v649, %v803
  %v830 = vadd.f32 %v650, %v806
  %v831 = vadd.f32 %v651, %v811
  %v832 = vadd.f32 %v652, %v814
  %v833 = vld [vmem:[%s0 + $0x4] sm:$0xf]
  %v834 = vld [vmem:[%s0 + $0x8] sm:$0xf]
  %v835 = vld [vmem:[%s0 + $0xc] sm:$0xf]
  %v836 = vld [vmem:[%s0 + $0x10] sm:$0xf]
  %v837 = vld [vmem:[%s0 + $0x14] sm:$0xf]
  %v838 = vld [vmem:[%s0 + $0x18] sm:$0xf]
  %v839 = vld [vmem:[%s0 + $0x1c] sm:$0xf]
  %v840 = vld [vmem:[%s0 + $0x20] sm:$0xf]
  %v841 = vld [vmem:[%s0 + $0x24] sm:$0xf]
  %v842 = vld [vmem:[%s0 + $0x28] sm:$0xf]
  %v843 = vld [vmem:[%s0 + $0x2c] sm:$0xf]
  %v844 = vld [vmem:[%s0 + $0x30] sm:$0xf]
  %v845 = vld [vmem:[%s0 + $0x34] sm:$0xf]
  %v846 = vld [vmem:[%s0 + $0x38] sm:$0xf]
  %v847 = vld [vmem:[%s0 + $0x3c] sm:$0xf]
  %v848 = vld [vmem:[%s0 + $0x40] sm:$0xf]
  %v849 = vld [vmem:[%s0 + $0x44] sm:$0x1]
  %v850 = vld [vmem:[%s1 + $0x80] sm:$0xf]
  %v851 = vld [vmem:[%s1 + $0x84] sm:$0xf]
  %v852 = vld [vmem:[%s1 + $0x88] sm:$0xf]
  %v853 = vld [vmem:[%s1 + $0x8c] sm:$0xf]
  %v854 = vld [vmem:[%s1 + $0x90] sm:$0xf]
  %v855 = vld [vmem:[%s1 + $0x94] sm:$0xf]
  %v856 = vld [vmem:[%s1 + $0x98] sm:$0xf]
  %v857 = vld [vmem:[%s1 + $0x9c] sm:$0xf]
  %v875 = vunpack.c.l.b16 %v833
  %v876 = vunpack.c.l.b16 %v834
  %v877 = vunpack.c.l.b16 %v835
  %v878 = vunpack.c.l.b16 %v836
  %v879 = vunpack.c.l.b16 %v837
  %v880 = vunpack.c.l.b16 %v838
  %v881 = vunpack.c.l.b16 %v839
  %v882 = vunpack.c.l.b16 %v840
  %v883 = vunpack.c.l.b16 %v841
  %v884 = vunpack.c.l.b16 %v842
  %v885 = vunpack.c.l.b16 %v843
  %v886 = vunpack.c.l.b16 %v844
  %v887 = vunpack.c.l.b16 %v845
  %v888 = vunpack.c.l.b16 %v846
  %v889 = vunpack.c.l.b16 %v847
  %v890 = vunpack.c.l.b16 %v848
  %v891 = vunpack.c.l.b16 %v849
  %v892 = vpack.c.b16 %v876, %v875
  %v893 = vpack.c.b16 %v878, %v877
  %v894 = vpack.c.b16 %v880, %v879
  %v895 = vpack.c.b16 %v882, %v881
  %v896 = vpack.c.b16 %v884, %v883
  %v897 = vpack.c.b16 %v886, %v885
  %v898 = vpack.c.b16 %v888, %v887
  %v899 = vpack.c.b16 %v890, %v889
  %v900 = vpack.c.b16 %v891, %v891
  %v902 = vshrl.u32 %v892, 16
  %v904 = vshll.u32 %v892, 16
  %v906 = vrot.slane %v904, 1
  %v907 = vor.u32 %v902, %v906
  %v909 = vshll.u32 %v893, 16
  %v911 = vrot.slane %v909, 1
  %v912 = vsel %vm110, %v907, %v911
  %v913 = vshrl.u32 %v893, 16
  %v915 = vor.u32 %v913, %v911
  %v917 = vshll.u32 %v894, 16
  %v919 = vrot.slane %v917, 1
  %v920 = vsel %vm110, %v915, %v919
  %v921 = vshrl.u32 %v894, 16
  %v923 = vor.u32 %v921, %v919
  %v925 = vshll.u32 %v895, 16
  %v927 = vrot.slane %v925, 1
  %v928 = vsel %vm110, %v923, %v927
  %v929 = vshrl.u32 %v895, 16
  %v931 = vor.u32 %v929, %v927
  %v933 = vshll.u32 %v896, 16
  %v935 = vrot.slane %v933, 1
  %v936 = vsel %vm110, %v931, %v935
  %v937 = vshrl.u32 %v896, 16
  %v939 = vor.u32 %v937, %v935
  %v941 = vshll.u32 %v897, 16
  %v943 = vrot.slane %v941, 1
  %v944 = vsel %vm110, %v939, %v943
  %v945 = vshrl.u32 %v897, 16
  %v947 = vor.u32 %v945, %v943
  %v949 = vshll.u32 %v898, 16
  %v951 = vrot.slane %v949, 1
  %v952 = vsel %vm110, %v947, %v951
  %v953 = vshrl.u32 %v898, 16
  %v955 = vor.u32 %v953, %v951
  %v957 = vshll.u32 %v899, 16
  %v959 = vrot.slane %v957, 1
  %v960 = vsel %vm110, %v955, %v959
  %v961 = vshrl.u32 %v899, 16
  %v963 = vor.u32 %v961, %v959
  %v965 = vshll.u32 %v900, 16
  %v967 = vrot.slane %v965, 1
  %v968 = vsel %vm110, %v963, %v967
  %v977 = vunpack.c.l.b16 %v850
  %v978 = vunpack.c.l.b16 %v851
  %v979 = vunpack.c.l.b16 %v852
  %v980 = vunpack.c.l.b16 %v853
  %v981 = vunpack.c.l.b16 %v854
  %v982 = vunpack.c.l.b16 %v855
  %v983 = vunpack.c.l.b16 %v856
  %v984 = vunpack.c.l.b16 %v857
  %v985 = vpack.c.b16 %v978, %v977
  %v986 = vpack.c.b16 %v980, %v979
  %v987 = vpack.c.b16 %v982, %v981
  %v988 = vpack.c.b16 %v984, %v983
  %v994 = vsel %vm203, %v912, 0
  %v997 = vsel %vm203, %v920, 0
  %v1000 = vsel %vm203, %v928, 0
  %v1003 = vsel %vm203, %v936, 0
  %v1006 = vsel %vm203, %v944, 0
  %v1009 = vsel %vm203, %v952, 0
  %v1012 = vsel %vm203, %v960, 0
  %v1015 = vsel %vm203, %v968, 0
  %1017 = vmatprep.subr.bf16.mxu0 0
  %1018 = vmatpush1.bf16.msra.mxu0 %v985
  %1019 = vmatprep.subr.bf16.mxu0 0
  %1020 = vmatpush1.bf16.msra.mxu0 %v986
  %1021 = vmatprep.subr.bf16.mxu0 0
  %1022 = vmatpush1.bf16.msra.mxu0 %v987
  %1023 = vmatprep.subr.bf16.mxu0 0
  %1024 = vmatpush1.bf16.msra.mxu0 %v988
  %1025 = vmatprep.subr.bf16.mxu0 0
  %1026 = vmatpush1.bf16.msra.mxu0 0
  %1027 = vmatprep.subr.bf16.mxu0 0
  %1028 = vmatpush1.bf16.msra.mxu0 0
  %1029 = vmatprep.subr.bf16.mxu0 0
  %1030 = vmatpush1.bf16.msra.mxu0 0
  %1031 = vmatprep.subr.bf16.mxu0 0
  %1032 = vmatpush1.bf16.msra.mxu0 0
  %1033 = vmatprep.subr.bf16.mxu0 0
  %1034 = vmatpush1.bf16.msra.mxu0 0
  %1035 = vmatprep.subr.bf16.mxu0 0
  %1036 = vmatpush1.bf16.msra.mxu0 0
  %1037 = vmatprep.subr.bf16.mxu0 0
  %1038 = vmatpush1.bf16.msra.mxu0 0
  %1039 = vmatprep.subr.bf16.mxu0 0
  %1040 = vmatpush1.bf16.msra.mxu0 0
  %1041 = vmatprep.subr.bf16.mxu0 0
  %1042 = vmatpush1.bf16.msra.mxu0 0
  %1043 = vmatprep.subr.bf16.mxu0 0
  %1044 = vmatpush1.bf16.msra.mxu0 0
  %1045 = vmatprep.subr.bf16.mxu0 0
  %1046 = vmatpush1.bf16.msra.mxu0 0
  %1047 = vmatprep.subr.bf16.mxu0 0
  %1048 = vmatpush1.bf16.msra.mxu0 0
  %1049 = vmatprep.mubr.bf16.mxu0 0
  %1050 = vmatmul.mubr.bf16.gmra.mrb[0].mxu0 %v994
  %v1051 = vpop.f32.mrb[0].mxu0
  %v1052 = vadd.f32 0.0, %v1051
  %v1053 = vpop.f32.mrb[0].mxu0
  %v1054 = vpop.f32.mrb[0].mxu0
  %v1055 = vadd.f32 0.0, %v1054
  %v1056 = vpop.f32.mrb[0].mxu0
  %1057 = vmatprep.mubr.bf16.mxu0 0
  %1058 = vmatmul.mubr.bf16.gmra.mrb[0].mxu0 %v997
  %v1059 = vpop.f32.mrb[0].mxu0
  %v1060 = vadd.f32 0.0, %v1059
  %v1061 = vpop.f32.mrb[0].mxu0
  %v1062 = vpop.f32.mrb[0].mxu0
  %v1063 = vadd.f32 0.0, %v1062
  %v1064 = vpop.f32.mrb[0].mxu0
  %1065 = vmatprep.mubr.bf16.mxu0 0
  %1066 = vmatmul.mubr.bf16.gmra.mrb[0].mxu0 %v1000
  %v1067 = vpop.f32.mrb[0].mxu0
  %v1068 = vadd.f32 0.0, %v1067
  %v1069 = vpop.f32.mrb[0].mxu0
  %v1070 = vpop.f32.mrb[0].mxu0
  %v1071 = vadd.f32 0.0, %v1070
  %v1072 = vpop.f32.mrb[0].mxu0
  %1073 = vmatprep.mubr.bf16.mxu0 0
  %1074 = vmatmul.mubr.bf16.gmra.mrb[0].mxu0 %v1003
  %v1075 = vpop.f32.mrb[0].mxu0
  %v1076 = vadd.f32 0.0, %v1075
  %v1077 = vpop.f32.mrb[0].mxu0
  %v1078 = vpop.f32.mrb[0].mxu0
  %v1079 = vadd.f32 0.0, %v1078
  %v1080 = vpop.f32.mrb[0].mxu0
  %1081 = vmatprep.mubr.bf16.mxu0 0
  %1082 = vmatmul.mubr.bf16.gmra.mrb[0].mxu0 %v1006
  %v1083 = vpop.f32.mrb[0].mxu0
  %v1084 = vadd.f32 0.0, %v1083
  %v1085 = vpop.f32.mrb[0].mxu0
  %v1086 = vpop.f32.mrb[0].mxu0
  %v1087 = vadd.f32 0.0, %v1086
  %v1088 = vpop.f32.mrb[0].mxu0
  %1089 = vmatprep.mubr.bf16.mxu0 0
  %1090 = vmatmul.mubr.bf16.gmra.mrb[0].mxu0 %v1009
  %v1091 = vpop.f32.mrb[0].mxu0
  %v1092 = vadd.f32 0.0, %v1091
  %v1093 = vpop.f32.mrb[0].mxu0
  %v1094 = vpop.f32.mrb[0].mxu0
  %v1095 = vadd.f32 0.0, %v1094
  %v1096 = vpop.f32.mrb[0].mxu0
  %1097 = vmatprep.mubr.bf16.mxu0 0
  %1098 = vmatmul.mubr.bf16.gmra.mrb[0].mxu0 %v1012
  %v1099 = vpop.f32.mrb[0].mxu0
  %v1100 = vadd.f32 0.0, %v1099
  %v1101 = vpop.f32.mrb[0].mxu0
  %v1102 = vpop.f32.mrb[0].mxu0
  %v1103 = vadd.f32 0.0, %v1102
  %v1104 = vpop.f32.mrb[0].mxu0
  %1105 = vmatprep.mubr.bf16.mxu0 0
  %1106 = vmatmul.mubr.bf16.gmra.mrb[0].mxu0 %v1015
  %v1107 = vpop.f32.mrb[0].mxu0
  %v1108 = vadd.f32 0.0, %v1107
  %v1109 = vpop.f32.mrb[0].mxu0
  %v1110 = vpop.f32.mrb[0].mxu0
  %v1111 = vadd.f32 0.0, %v1110
  %v1112 = vpop.f32.mrb[0].mxu0
  %1113 = vdwg.mxu0
  %v1114 = vadd.f32 %v817, %v1052
  %v1115 = vadd.f32 %v818, %v1055
  %v1116 = vadd.f32 %v819, %v1060
  %v1117 = vadd.f32 %v820, %v1063
  %v1118 = vadd.f32 %v821, %v1068
  %v1119 = vadd.f32 %v822, %v1071
  %v1120 = vadd.f32 %v823, %v1076
  %v1121 = vadd.f32 %v824, %v1079
  %v1122 = vadd.f32 %v825, %v1084
  %v1123 = vadd.f32 %v826, %v1087
  %v1124 = vadd.f32 %v827, %v1092
  %v1125 = vadd.f32 %v828, %v1095
  %v1126 = vadd.f32 %v829, %v1100
  %v1127 = vadd.f32 %v830, %v1103
  %v1128 = vadd.f32 %v831, %v1108
  %v1129 = vadd.f32 %v832, %v1111
  %v1130 = vld [vmem:[%s0 + $0x4] sm:$0xe]
  %v1131 = vld [vmem:[%s1 + $0xa0] sm:$0xf]
  %v1132 = vld [vmem:[%s1 + $0xa4] sm:$0xf]
  %v1133 = vld [vmem:[%s1 + $0xa8] sm:$0xf]
  %v1134 = vld [vmem:[%s1 + $0xac] sm:$0xf]
  %v1135 = vld [vmem:[%s1 + $0xb0] sm:$0xf]
  %v1136 = vld [vmem:[%s1 + $0xb4] sm:$0xf]
  %v1137 = vld [vmem:[%s1 + $0xb8] sm:$0xf]
  %v1138 = vld [vmem:[%s1 + $0xbc] sm:$0xf]
  %v1140 = vunpack.c.l.b16 %v1130
  %v1141 = vpack.c.b16 %v876, %v1140
  %v1142 = vrot.slane %v1141, 1
  %v1143 = vrot.slane %v893, 1
  %v1144 = vsel %vm474, %v1142, %v1143
  %v1145 = vrot.slane %v894, 1
  %v1146 = vsel %vm474, %v1143, %v1145
  %v1147 = vrot.slane %v895, 1
  %v1148 = vsel %vm474, %v1145, %v1147
  %v1149 = vrot.slane %v896, 1
  %v1150 = vsel %vm474, %v1147, %v1149
  %v1151 = vrot.slane %v897, 1
  %v1152 = vsel %vm474, %v1149, %v1151
  %v1153 = vrot.slane %v898, 1
  %v1154 = vsel %vm474, %v1151, %v1153
  %v1155 = vrot.slane %v899, 1
  %v1156 = vsel %vm474, %v1153, %v1155
  %v1157 = vrot.slane %v900, 1
  %v1158 = vsel %vm474, %v1155, %v1157
  %v1167 = vunpack.c.l.b16 %v1131
  %v1168 = vunpack.c.l.b16 %v1132
  %v1169 = vunpack.c.l.b16 %v1133
  %v1170 = vunpack.c.l.b16 %v1134
  %v1171 = vunpack.c.l.b16 %v1135
  %v1172 = vunpack.c.l.b16 %v1136
  %v1173 = vunpack.c.l.b16 %v1137
  %v1174 = vunpack.c.l.b16 %v1138
  %v1175 = vpack.c.b16 %v1168, %v1167
  %v1176 = vpack.c.b16 %v1170, %v1169
  %v1177 = vpack.c.b16 %v1172, %v1171
  %v1178 = vpack.c.b16 %v1174, %v1173
  %v1184 = vsel %vm203, %v1144, 0
  %v1187 = vsel %vm203, %v1146, 0
  %v1190 = vsel %vm203, %v1148, 0
  %v1193 = vsel %vm203, %v1150, 0
  %v1196 = vsel %vm203, %v1152, 0
  %v1199 = vsel %vm203, %v1154, 0
  %v1202 = vsel %vm203, %v1156, 0
  %v1205 = vsel %vm203, %v1158, 0
  %1207 = vmatprep.subr.bf16.mxu0 0
  %1208 = vmatpush1.bf16.msra.mxu0 %v1175
  %1209 = vmatprep.subr.bf16.mxu0 0
  %1210 = vmatpush1.bf16.msra.mxu0 %v1176
  %1211 = vmatprep.subr.bf16.mxu0 0
  %1212 = vmatpush1.bf16.msra.mxu0 %v1177
  %1213 = vmatprep.subr.bf16.mxu0 0
  %1214 = vmatpush1.bf16.msra.mxu0 %v1178
  %1215 = vmatprep.subr.bf16.mxu0 0
  %1216 = vmatpush1.bf16.msra.mxu0 0
  %1217 = vmatprep.subr.bf16.mxu0 0
  %1218 = vmatpush1.bf16.msra.mxu0 0
  %1219 = vmatprep.subr.bf16.mxu0 0
  %1220 = vmatpush1.bf16.msra.mxu0 0
  %1221 = vmatprep.subr.bf16.mxu0 0
  %1222 = vmatpush1.bf16.msra.mxu0 0
  %1223 = vmatprep.subr.bf16.mxu0 0
  %1224 = vmatpush1.bf16.msra.mxu0 0
  %1225 = vmatprep.subr.bf16.mxu0 0
  %1226 = vmatpush1.bf16.msra.mxu0 0
  %1227 = vmatprep.subr.bf16.mxu0 0
  %1228 = vmatpush1.bf16.msra.mxu0 0
  %1229 = vmatprep.subr.bf16.mxu0 0
  %1230 = vmatpush1.bf16.msra.mxu0 0
  %1231 = vmatprep.subr.bf16.mxu0 0
  %1232 = vmatpush1.bf16.msra.mxu0 0
  %1233 = vmatprep.subr.bf16.mxu0 0
  %1234 = vmatpush1.bf16.msra.mxu0 0
  %1235 = vmatprep.subr.bf16.mxu0 0
  %1236 = vmatpush1.bf16.msra.mxu0 0
  %1237 = vmatprep.subr.bf16.mxu0 0
  %1238 = vmatpush1.bf16.msra.mxu0 0
  %1239 = vmatprep.mubr.bf16.mxu0 0
  %1240 = vmatmul.mubr.bf16.gmra.mrb[0].mxu0 %v1184
  %v1241 = vpop.f32.mrb[0].mxu0
  %v1242 = vadd.f32 0.0, %v1241
  %v1243 = vpop.f32.mrb[0].mxu0
  %v1244 = vpop.f32.mrb[0].mxu0
  %v1245 = vadd.f32 0.0, %v1244
  %v1246 = vpop.f32.mrb[0].mxu0
  %1247 = vmatprep.mubr.bf16.mxu0 0
  %1248 = vmatmul.mubr.bf16.gmra.mrb[0].mxu0 %v1187
  %v1249 = vpop.f32.mrb[0].mxu0
  %v1250 = vadd.f32 0.0, %v1249
  %v1251 = vpop.f32.mrb[0].mxu0
  %v1252 = vpop.f32.mrb[0].mxu0
  %v1253 = vadd.f32 0.0, %v1252
  %v1254 = vpop.f32.mrb[0].mxu0
  %1255 = vmatprep.mubr.bf16.mxu0 0
  %1256 = vmatmul.mubr.bf16.gmra.mrb[0].mxu0 %v1190
  %v1257 = vpop.f32.mrb[0].mxu0
  %v1258 = vadd.f32 0.0, %v1257
  %v1259 = vpop.f32.mrb[0].mxu0
  %v1260 = vpop.f32.mrb[0].mxu0
  %v1261 = vadd.f32 0.0, %v1260
  %v1262 = vpop.f32.mrb[0].mxu0
  %1263 = vmatprep.mubr.bf16.mxu0 0
  %1264 = vmatmul.mubr.bf16.gmra.mrb[0].mxu0 %v1193
  %v1265 = vpop.f32.mrb[0].mxu0
  %v1266 = vadd.f32 0.0, %v1265
  %v1267 = vpop.f32.mrb[0].mxu0
  %v1268 = vpop.f32.mrb[0].mxu0
  %v1269 = vadd.f32 0.0, %v1268
  %v1270 = vpop.f32.mrb[0].mxu0
  %1271 = vmatprep.mubr.bf16.mxu0 0
  %1272 = vmatmul.mubr.bf16.gmra.mrb[0].mxu0 %v1196
  %v1273 = vpop.f32.mrb[0].mxu0
  %v1274 = vadd.f32 0.0, %v1273
  %v1275 = vpop.f32.mrb[0].mxu0
  %v1276 = vpop.f32.mrb[0].mxu0
  %v1277 = vadd.f32 0.0, %v1276
  %v1278 = vpop.f32.mrb[0].mxu0
  %1279 = vmatprep.mubr.bf16.mxu0 0
  %1280 = vmatmul.mubr.bf16.gmra.mrb[0].mxu0 %v1199
  %v1281 = vpop.f32.mrb[0].mxu0
  %v1282 = vadd.f32 0.0, %v1281
  %v1283 = vpop.f32.mrb[0].mxu0
  %v1284 = vpop.f32.mrb[0].mxu0
  %v1285 = vadd.f32 0.0, %v1284
  %v1286 = vpop.f32.mrb[0].mxu0
  %1287 = vmatprep.mubr.bf16.mxu0 0
  %1288 = vmatmul.mubr.bf16.gmra.mrb[0].mxu0 %v1202
  %v1289 = vpop.f32.mrb[0].mxu0
  %v1290 = vadd.f32 0.0, %v1289
  %v1291 = vpop.f32.mrb[0].mxu0
  %v1292 = vpop.f32.mrb[0].mxu0
  %v1293 = vadd.f32 0.0, %v1292
  %v1294 = vpop.f32.mrb[0].mxu0
  %1295 = vmatprep.mubr.bf16.mxu0 0
  %1296 = vmatmul.mubr.bf16.gmra.mrb[0].mxu0 %v1205
  %v1297 = vpop.f32.mrb[0].mxu0
  %v1298 = vadd.f32 0.0, %v1297
  %v1299 = vpop.f32.mrb[0].mxu0
  %v1300 = vpop.f32.mrb[0].mxu0
  %v1301 = vadd.f32 0.0, %v1300
  %v1302 = vpop.f32.mrb[0].mxu0
  %1303 = vdwg.mxu0
  %v1304 = vadd.f32 %v1114, %v1242
  %v1305 = vadd.f32 %v1115, %v1245
  %v1306 = vadd.f32 %v1116, %v1250
  %v1307 = vadd.f32 %v1117, %v1253
  %v1308 = vadd.f32 %v1118, %v1258
  %v1309 = vadd.f32 %v1119, %v1261
  %v1310 = vadd.f32 %v1120, %v1266
  %v1311 = vadd.f32 %v1121, %v1269
  %v1312 = vadd.f32 %v1122, %v1274
  %v1313 = vadd.f32 %v1123, %v1277
  %v1314 = vadd.f32 %v1124, %v1282
  %v1315 = vadd.f32 %v1125, %v1285
  %v1316 = vadd.f32 %v1126, %v1290
  %v1317 = vadd.f32 %v1127, %v1293
  %v1318 = vadd.f32 %v1128, %v1298
  %v1319 = vadd.f32 %v1129, %v1301
  %v1320 = vld [vmem:[%s0 + $0x44] sm:$0xf]
  %v1321 = vld [vmem:[%s1 + $0xc0] sm:$0xf]
  %v1322 = vld [vmem:[%s1 + $0xc4] sm:$0xf]
  %v1323 = vld [vmem:[%s1 + $0xc8] sm:$0xf]
  %v1324 = vld [vmem:[%s1 + $0xcc] sm:$0xf]
  %v1325 = vld [vmem:[%s1 + $0xd0] sm:$0xf]
  %v1326 = vld [vmem:[%s1 + $0xd4] sm:$0xf]
  %v1327 = vld [vmem:[%s1 + $0xd8] sm:$0xf]
  %v1328 = vld [vmem:[%s1 + $0xdc] sm:$0xf]
  %v1330 = vunpack.c.l.b16 %v1320
  %v1331 = vpack.c.b16 %v877, %v876
  %v1332 = vpack.c.b16 %v879, %v878
  %v1333 = vpack.c.b16 %v881, %v880
  %v1334 = vpack.c.b16 %v883, %v882
  %v1335 = vpack.c.b16 %v885, %v884
  %v1336 = vpack.c.b16 %v887, %v886
  %v1337 = vpack.c.b16 %v889, %v888
  %v1338 = vpack.c.b16 %v1330, %v890
  %v1347 = vunpack.c.l.b16 %v1321
  %v1348 = vunpack.c.l.b16 %v1322
  %v1349 = vunpack.c.l.b16 %v1323
  %v1350 = vunpack.c.l.b16 %v1324
  %v1351 = vunpack.c.l.b16 %v1325
  %v1352 = vunpack.c.l.b16 %v1326
  %v1353 = vunpack.c.l.b16 %v1327
  %v1354 = vunpack.c.l.b16 %v1328
  %v1355 = vpack.c.b16 %v1348, %v1347
  %v1356 = vpack.c.b16 %v1350, %v1349
  %v1357 = vpack.c.b16 %v1352, %v1351
  %v1358 = vpack.c.b16 %v1354, %v1353
  %v1364 = vsel %vm203, %v1331, 0
  %v1367 = vsel %vm203, %v1332, 0
  %v1370 = vsel %vm203, %v1333, 0
  %v1373 = vsel %vm203, %v1334, 0
  %v1376 = vsel %vm203, %v1335, 0
  %v1379 = vsel %vm203, %v1336, 0
  %v1382 = vsel %vm203, %v1337, 0
  %v1385 = vsel %vm203, %v1338, 0
  %1387 = vmatprep.subr.bf16.mxu0 0
  %1388 = vmatpush1.bf16.msra.mxu0 %v1355
  %1389 = vmatprep.subr.bf16.mxu0 0
  %1390 = vmatpush1.bf16.msra.mxu0 %v1356
  %1391 = vmatprep.subr.bf16.mxu0 0
  %1392 = vmatpush1.bf16.msra.mxu0 %v1357
  %1393 = vmatprep.subr.bf16.mxu0 0
  %1394 = vmatpush1.bf16.msra.mxu0 %v1358
  %1395 = vmatprep.subr.bf16.mxu0 0
  %1396 = vmatpush1.bf16.msra.mxu0 0
  %1397 = vmatprep.subr.bf16.mxu0 0
  %1398 = vmatpush1.bf16.msra.mxu0 0
  %1399 = vmatprep.subr.bf16.mxu0 0
  %1400 = vmatpush1.bf16.msra.mxu0 0
  %1401 = vmatprep.subr.bf16.mxu0 0
  %1402 = vmatpush1.bf16.msra.mxu0 0
  %1403 = vmatprep.subr.bf16.mxu0 0
  %1404 = vmatpush1.bf16.msra.mxu0 0
  %1405 = vmatprep.subr.bf16.mxu0 0
  %1406 = vmatpush1.bf16.msra.mxu0 0
  %1407 = vmatprep.subr.bf16.mxu0 0
  %1408 = vmatpush1.bf16.msra.mxu0 0
  %1409 = vmatprep.subr.bf16.mxu0 0
  %1410 = vmatpush1.bf16.msra.mxu0 0
  %1411 = vmatprep.subr.bf16.mxu0 0
  %1412 = vmatpush1.bf16.msra.mxu0 0
  %1413 = vmatprep.subr.bf16.mxu0 0
  %1414 = vmatpush1.bf16.msra.mxu0 0
  %1415 = vmatprep.subr.bf16.mxu0 0
  %1416 = vmatpush1.bf16.msra.mxu0 0
  %1417 = vmatprep.subr.bf16.mxu0 0
  %1418 = vmatpush1.bf16.msra.mxu0 0
  %1419 = vmatprep.mubr.bf16.mxu0 0
  %1420 = vmatmul.mubr.bf16.gmra.mrb[0].mxu0 %v1364
  %v1421 = vpop.f32.mrb[0].mxu0
  %v1422 = vadd.f32 0.0, %v1421
  %v1423 = vpop.f32.mrb[0].mxu0
  %v1424 = vpop.f32.mrb[0].mxu0
  %v1425 = vadd.f32 0.0, %v1424
  %v1426 = vpop.f32.mrb[0].mxu0
  %1427 = vmatprep.mubr.bf16.mxu0 0
  %1428 = vmatmul.mubr.bf16.gmra.mrb[0].mxu0 %v1367
  %v1429 = vpop.f32.mrb[0].mxu0
  %v1430 = vadd.f32 0.0, %v1429
  %v1431 = vpop.f32.mrb[0].mxu0
  %v1432 = vpop.f32.mrb[0].mxu0
  %v1433 = vadd.f32 0.0, %v1432
  %v1434 = vpop.f32.mrb[0].mxu0
  %1435 = vmatprep.mubr.bf16.mxu0 0
  %1436 = vmatmul.mubr.bf16.gmra.mrb[0].mxu0 %v1370
  %v1437 = vpop.f32.mrb[0].mxu0
  %v1438 = vadd.f32 0.0, %v1437
  %v1439 = vpop.f32.mrb[0].mxu0
  %v1440 = vpop.f32.mrb[0].mxu0
  %v1441 = vadd.f32 0.0, %v1440
  %v1442 = vpop.f32.mrb[0].mxu0
  %1443 = vmatprep.mubr.bf16.mxu0 0
  %1444 = vmatmul.mubr.bf16.gmra.mrb[0].mxu0 %v1373
  %v1445 = vpop.f32.mrb[0].mxu0
  %v1446 = vadd.f32 0.0, %v1445
  %v1447 = vpop.f32.mrb[0].mxu0
  %v1448 = vpop.f32.mrb[0].mxu0
  %v1449 = vadd.f32 0.0, %v1448
  %v1450 = vpop.f32.mrb[0].mxu0
  %1451 = vmatprep.mubr.bf16.mxu0 0
  %1452 = vmatmul.mubr.bf16.gmra.mrb[0].mxu0 %v1376
  %v1453 = vpop.f32.mrb[0].mxu0
  %v1454 = vadd.f32 0.0, %v1453
  %v1455 = vpop.f32.mrb[0].mxu0
  %v1456 = vpop.f32.mrb[0].mxu0
  %v1457 = vadd.f32 0.0, %v1456
  %v1458 = vpop.f32.mrb[0].mxu0
  %1459 = vmatprep.mubr.bf16.mxu0 0
  %1460 = vmatmul.mubr.bf16.gmra.mrb[0].mxu0 %v1379
  %v1461 = vpop.f32.mrb[0].mxu0
  %v1462 = vadd.f32 0.0, %v1461
  %v1463 = vpop.f32.mrb[0].mxu0
  %v1464 = vpop.f32.mrb[0].mxu0
  %v1465 = vadd.f32 0.0, %v1464
  %v1466 = vpop.f32.mrb[0].mxu0
  %1467 = vmatprep.mubr.bf16.mxu0 0
  %1468 = vmatmul.mubr.bf16.gmra.mrb[0].mxu0 %v1382
  %v1469 = vpop.f32.mrb[0].mxu0
  %v1470 = vadd.f32 0.0, %v1469
  %v1471 = vpop.f32.mrb[0].mxu0
  %v1472 = vpop.f32.mrb[0].mxu0
  %v1473 = vadd.f32 0.0, %v1472
  %v1474 = vpop.f32.mrb[0].mxu0
  %1475 = vmatprep.mubr.bf16.mxu0 0
  %1476 = vmatmul.mubr.bf16.gmra.mrb[0].mxu0 %v1385
  %v1477 = vpop.f32.mrb[0].mxu0
  %v1478 = vadd.f32 0.0, %v1477
  %v1479 = vpop.f32.mrb[0].mxu0
  %v1480 = vpop.f32.mrb[0].mxu0
  %v1481 = vadd.f32 0.0, %v1480
  %v1482 = vpop.f32.mrb[0].mxu0
  %1483 = vdwg.mxu0
  %v1484 = vadd.f32 %v1304, %v1422
  %v1485 = vadd.f32 %v1305, %v1425
  %v1486 = vadd.f32 %v1306, %v1430
  %v1487 = vadd.f32 %v1307, %v1433
  %v1488 = vadd.f32 %v1308, %v1438
  %v1489 = vadd.f32 %v1309, %v1441
  %v1490 = vadd.f32 %v1310, %v1446
  %v1491 = vadd.f32 %v1311, %v1449
  %v1492 = vadd.f32 %v1312, %v1454
  %v1493 = vadd.f32 %v1313, %v1457
  %v1494 = vadd.f32 %v1314, %v1462
  %v1495 = vadd.f32 %v1315, %v1465
  %v1496 = vadd.f32 %v1316, %v1470
  %v1497 = vadd.f32 %v1317, %v1473
  %v1498 = vadd.f32 %v1318, %v1478
  %v1499 = vadd.f32 %v1319, %v1481
  %v1500 = vld [vmem:[%s0 + $0x8] sm:$0xf]
  %v1501 = vld [vmem:[%s0 + $0xc] sm:$0xf]
  %v1502 = vld [vmem:[%s0 + $0x10] sm:$0xf]
  %v1503 = vld [vmem:[%s0 + $0x14] sm:$0xf]
  %v1504 = vld [vmem:[%s0 + $0x18] sm:$0xf]
  %v1505 = vld [vmem:[%s0 + $0x1c] sm:$0xf]
  %v1506 = vld [vmem:[%s0 + $0x20] sm:$0xf]
  %v1507 = vld [vmem:[%s0 + $0x24] sm:$0xf]
  %v1508 = vld [vmem:[%s0 + $0x28] sm:$0xf]
  %v1509 = vld [vmem:[%s0 + $0x2c] sm:$0xf]
  %v1510 = vld [vmem:[%s0 + $0x30] sm:$0xf]
  %v1511 = vld [vmem:[%s0 + $0x34] sm:$0xf]
  %v1512 = vld [vmem:[%s0 + $0x38] sm:$0xf]
  %v1513 = vld [vmem:[%s0 + $0x3c] sm:$0xf]
  %v1514 = vld [vmem:[%s0 + $0x40] sm:$0xf]
  %v1515 = vld [vmem:[%s0 + $0x44] sm:$0xf]
  %v1516 = vld [vmem:[%s0 + $0x48] sm:$0x1]
  %v1517 = vld [vmem:[%s1 + $0xe0] sm:$0xf]
  %v1518 = vld [vmem:[%s1 + $0xe4] sm:$0xf]
  %v1519 = vld [vmem:[%s1 + $0xe8] sm:$0xf]
  %v1520 = vld [vmem:[%s1 + $0xec] sm:$0xf]
  %v1521 = vld [vmem:[%s1 + $0xf0] sm:$0xf]
  %v1522 = vld [vmem:[%s1 + $0xf4] sm:$0xf]
  %v1523 = vld [vmem:[%s1 + $0xf8] sm:$0xf]
  %v1524 = vld [vmem:[%s1 + $0xfc] sm:$0xf]
  %v1542 = vunpack.c.l.b16 %v1500
  %v1543 = vunpack.c.l.b16 %v1501
  %v1544 = vunpack.c.l.b16 %v1502
  %v1545 = vunpack.c.l.b16 %v1503
  %v1546 = vunpack.c.l.b16 %v1504
  %v1547 = vunpack.c.l.b16 %v1505
  %v1548 = vunpack.c.l.b16 %v1506
  %v1549 = vunpack.c.l.b16 %v1507
  %v1550 = vunpack.c.l.b16 %v1508
  %v1551 = vunpack.c.l.b16 %v1509
  %v1552 = vunpack.c.l.b16 %v1510
  %v1553 = vunpack.c.l.b16 %v1511
  %v1554 = vunpack.c.l.b16 %v1512
  %v1555 = vunpack.c.l.b16 %v1513
  %v1556 = vunpack.c.l.b16 %v1514
  %v1557 = vunpack.c.l.b16 %v1515
  %v1558 = vunpack.c.l.b16 %v1516
  %v1559 = vpack.c.b16 %v1543, %v1542
  %v1560 = vpack.c.b16 %v1545, %v1544
  %v1561 = vpack.c.b16 %v1547, %v1546
  %v1562 = vpack.c.b16 %v1549, %v1548
  %v1563 = vpack.c.b16 %v1551, %v1550
  %v1564 = vpack.c.b16 %v1553, %v1552
  %v1565 = vpack.c.b16 %v1555, %v1554
  %v1566 = vpack.c.b16 %v1557, %v1556
  %v1567 = vpack.c.b16 %v1558, %v1558
  %v1569 = vshrl.u32 %v1559, 16
  %v1571 = vshll.u32 %v1559, 16
  %v1573 = vrot.slane %v1571, 1
  %v1574 = vor.u32 %v1569, %v1573
  %v1576 = vshll.u32 %v1560, 16
  %v1578 = vrot.slane %v1576, 1
  %v1579 = vsel %vm110, %v1574, %v1578
  %v1580 = vshrl.u32 %v1560, 16
  %v1582 = vor.u32 %v1580, %v1578
  %v1584 = vshll.u32 %v1561, 16
  %v1586 = vrot.slane %v1584, 1
  %v1587 = vsel %vm110, %v1582, %v1586
  %v1588 = vshrl.u32 %v1561, 16
  %v1590 = vor.u32 %v1588, %v1586
  %v1592 = vshll.u32 %v1562, 16
  %v1594 = vrot.slane %v1592, 1
  %v1595 = vsel %vm110, %v1590, %v1594
  %v1596 = vshrl.u32 %v1562, 16
  %v1598 = vor.u32 %v1596, %v1594
  %v1600 = vshll.u32 %v1563, 16
  %v1602 = vrot.slane %v1600, 1
  %v1603 = vsel %vm110, %v1598, %v1602
  %v1604 = vshrl.u32 %v1563, 16
  %v1606 = vor.u32 %v1604, %v1602
  %v1608 = vshll.u32 %v1564, 16
  %v1610 = vrot.slane %v1608, 1
  %v1611 = vsel %vm110, %v1606, %v1610
  %v1612 = vshrl.u32 %v1564, 16
  %v1614 = vor.u32 %v1612, %v1610
  %v1616 = vshll.u32 %v1565, 16
  %v1618 = vrot.slane %v1616, 1
  %v1619 = vsel %vm110, %v1614, %v1618
  %v1620 = vshrl.u32 %v1565, 16
  %v1622 = vor.u32 %v1620, %v1618
  %v1624 = vshll.u32 %v1566, 16
  %v1626 = vrot.slane %v1624, 1
  %v1627 = vsel %vm110, %v1622, %v1626
  %v1628 = vshrl.u32 %v1566, 16
  %v1630 = vor.u32 %v1628, %v1626
  %v1632 = vshll.u32 %v1567, 16
  %v1634 = vrot.slane %v1632, 1
  %v1635 = vsel %vm110, %v1630, %v1634
  %v1644 = vunpack.c.l.b16 %v1517
  %v1645 = vunpack.c.l.b16 %v1518
  %v1646 = vunpack.c.l.b16 %v1519
  %v1647 = vunpack.c.l.b16 %v1520
  %v1648 = vunpack.c.l.b16 %v1521
  %v1649 = vunpack.c.l.b16 %v1522
  %v1650 = vunpack.c.l.b16 %v1523
  %v1651 = vunpack.c.l.b16 %v1524
  %v1652 = vpack.c.b16 %v1645, %v1644
  %v1653 = vpack.c.b16 %v1647, %v1646
  %v1654 = vpack.c.b16 %v1649, %v1648
  %v1655 = vpack.c.b16 %v1651, %v1650
  %v1661 = vsel %vm203, %v1579, 0
  %v1664 = vsel %vm203, %v1587, 0
  %v1667 = vsel %vm203, %v1595, 0
  %v1670 = vsel %vm203, %v1603, 0
  %v1673 = vsel %vm203, %v1611, 0
  %v1676 = vsel %vm203, %v1619, 0
  %v1679 = vsel %vm203, %v1627, 0
  %v1682 = vsel %vm203, %v1635, 0
  %1684 = vmatprep.subr.bf16.mxu0 0
  %1685 = vmatpush1.bf16.msra.mxu0 %v1652
  %1686 = vmatprep.subr.bf16.mxu0 0
  %1687 = vmatpush1.bf16.msra.mxu0 %v1653
  %1688 = vmatprep.subr.bf16.mxu0 0
  %1689 = vmatpush1.bf16.msra.mxu0 %v1654
  %1690 = vmatprep.subr.bf16.mxu0 0
  %1691 = vmatpush1.bf16.msra.mxu0 %v1655
  %1692 = vmatprep.subr.bf16.mxu0 0
  %1693 = vmatpush1.bf16.msra.mxu0 0
  %1694 = vmatprep.subr.bf16.mxu0 0
  %1695 = vmatpush1.bf16.msra.mxu0 0
  %1696 = vmatprep.subr.bf16.mxu0 0
  %1697 = vmatpush1.bf16.msra.mxu0 0
  %1698 = vmatprep.subr.bf16.mxu0 0
  %1699 = vmatpush1.bf16.msra.mxu0 0
  %1700 = vmatprep.subr.bf16.mxu0 0
  %1701 = vmatpush1.bf16.msra.mxu0 0
  %1702 = vmatprep.subr.bf16.mxu0 0
  %1703 = vmatpush1.bf16.msra.mxu0 0
  %1704 = vmatprep.subr.bf16.mxu0 0
  %1705 = vmatpush1.bf16.msra.mxu0 0
  %1706 = vmatprep.subr.bf16.mxu0 0
  %1707 = vmatpush1.bf16.msra.mxu0 0
  %1708 = vmatprep.subr.bf16.mxu0 0
  %1709 = vmatpush1.bf16.msra.mxu0 0
  %1710 = vmatprep.subr.bf16.mxu0 0
  %1711 = vmatpush1.bf16.msra.mxu0 0
  %1712 = vmatprep.subr.bf16.mxu0 0
  %1713 = vmatpush1.bf16.msra.mxu0 0
  %1714 = vmatprep.subr.bf16.mxu0 0
  %1715 = vmatpush1.bf16.msra.mxu0 0
  %1716 = vmatprep.mubr.bf16.mxu0 0
  %1717 = vmatmul.mubr.bf16.gmra.mrb[0].mxu0 %v1661
  %v1718 = vpop.f32.mrb[0].mxu0
  %v1719 = vadd.f32 0.0, %v1718
  %v1720 = vpop.f32.mrb[0].mxu0
  %v1721 = vpop.f32.mrb[0].mxu0
  %v1722 = vadd.f32 0.0, %v1721
  %v1723 = vpop.f32.mrb[0].mxu0
  %1724 = vmatprep.mubr.bf16.mxu0 0
  %1725 = vmatmul.mubr.bf16.gmra.mrb[0].mxu0 %v1664
  %v1726 = vpop.f32.mrb[0].mxu0
  %v1727 = vadd.f32 0.0, %v1726
  %v1728 = vpop.f32.mrb[0].mxu0
  %v1729 = vpop.f32.mrb[0].mxu0
  %v1730 = vadd.f32 0.0, %v1729
  %v1731 = vpop.f32.mrb[0].mxu0
  %1732 = vmatprep.mubr.bf16.mxu0 0
  %1733 = vmatmul.mubr.bf16.gmra.mrb[0].mxu0 %v1667
  %v1734 = vpop.f32.mrb[0].mxu0
  %v1735 = vadd.f32 0.0, %v1734
  %v1736 = vpop.f32.mrb[0].mxu0
  %v1737 = vpop.f32.mrb[0].mxu0
  %v1738 = vadd.f32 0.0, %v1737
  %v1739 = vpop.f32.mrb[0].mxu0
  %1740 = vmatprep.mubr.bf16.mxu0 0
  %1741 = vmatmul.mubr.bf16.gmra.mrb[0].mxu0 %v1670
  %v1742 = vpop.f32.mrb[0].mxu0
  %v1743 = vadd.f32 0.0, %v1742
  %v1744 = vpop.f32.mrb[0].mxu0
  %v1745 = vpop.f32.mrb[0].mxu0
  %v1746 = vadd.f32 0.0, %v1745
  %v1747 = vpop.f32.mrb[0].mxu0
  %1748 = vmatprep.mubr.bf16.mxu0 0
  %1749 = vmatmul.mubr.bf16.gmra.mrb[0].mxu0 %v1673
  %v1750 = vpop.f32.mrb[0].mxu0
  %v1751 = vadd.f32 0.0, %v1750
  %v1752 = vpop.f32.mrb[0].mxu0
  %v1753 = vpop.f32.mrb[0].mxu0
  %v1754 = vadd.f32 0.0, %v1753
  %v1755 = vpop.f32.mrb[0].mxu0
  %1756 = vmatprep.mubr.bf16.mxu0 0
  %1757 = vmatmul.mubr.bf16.gmra.mrb[0].mxu0 %v1676
  %v1758 = vpop.f32.mrb[0].mxu0
  %v1759 = vadd.f32 0.0, %v1758
  %v1760 = vpop.f32.mrb[0].mxu0
  %v1761 = vpop.f32.mrb[0].mxu0
  %v1762 = vadd.f32 0.0, %v1761
  %v1763 = vpop.f32.mrb[0].mxu0
  %1764 = vmatprep.mubr.bf16.mxu0 0
  %1765 = vmatmul.mubr.bf16.gmra.mrb[0].mxu0 %v1679
  %v1766 = vpop.f32.mrb[0].mxu0
  %v1767 = vadd.f32 0.0, %v1766
  %v1768 = vpop.f32.mrb[0].mxu0
  %v1769 = vpop.f32.mrb[0].mxu0
  %v1770 = vadd.f32 0.0, %v1769
  %v1771 = vpop.f32.mrb[0].mxu0
  %1772 = vmatprep.mubr.bf16.mxu0 0
  %1773 = vmatmul.mubr.bf16.gmra.mrb[0].mxu0 %v1682
  %v1774 = vpop.f32.mrb[0].mxu0
  %v1775 = vadd.f32 0.0, %v1774
  %v1776 = vpop.f32.mrb[0].mxu0
  %v1777 = vpop.f32.mrb[0].mxu0
  %v1778 = vadd.f32 0.0, %v1777
  %v1779 = vpop.f32.mrb[0].mxu0
  %1780 = vdwg.mxu0
  %v1781 = vadd.f32 %v1484, %v1719
  %v1782 = vadd.f32 %v1485, %v1722
  %v1783 = vadd.f32 %v1486, %v1727
  %v1784 = vadd.f32 %v1487, %v1730
  %v1785 = vadd.f32 %v1488, %v1735
  %v1786 = vadd.f32 %v1489, %v1738
  %v1787 = vadd.f32 %v1490, %v1743
  %v1788 = vadd.f32 %v1491, %v1746
  %v1789 = vadd.f32 %v1492, %v1751
  %v1790 = vadd.f32 %v1493, %v1754
  %v1791 = vadd.f32 %v1494, %v1759
  %v1792 = vadd.f32 %v1495, %v1762
  %v1793 = vadd.f32 %v1496, %v1767
  %v1794 = vadd.f32 %v1497, %v1770
  %v1795 = vadd.f32 %v1498, %v1775
  %v1796 = vadd.f32 %v1499, %v1778
  %v1797 = vld [vmem:[%s0 + $0x8] sm:$0xe]
  %v1798 = vld [vmem:[%s1 + $0x100] sm:$0xf]
  %v1799 = vld [vmem:[%s1 + $0x104] sm:$0xf]
  %v1800 = vld [vmem:[%s1 + $0x108] sm:$0xf]
  %v1801 = vld [vmem:[%s1 + $0x10c] sm:$0xf]
  %v1802 = vld [vmem:[%s1 + $0x110] sm:$0xf]
  %v1803 = vld [vmem:[%s1 + $0x114] sm:$0xf]
  %v1804 = vld [vmem:[%s1 + $0x118] sm:$0xf]
  %v1805 = vld [vmem:[%s1 + $0x11c] sm:$0xf]
  %v1807 = vunpack.c.l.b16 %v1797
  %v1808 = vpack.c.b16 %v1543, %v1807
  %v1809 = vrot.slane %v1808, 1
  %v1810 = vrot.slane %v1560, 1
  %v1811 = vsel %vm474, %v1809, %v1810
  %v1812 = vrot.slane %v1561, 1
  %v1813 = vsel %vm474, %v1810, %v1812
  %v1814 = vrot.slane %v1562, 1
  %v1815 = vsel %vm474, %v1812, %v1814
  %v1816 = vrot.slane %v1563, 1
  %v1817 = vsel %vm474, %v1814, %v1816
  %v1818 = vrot.slane %v1564, 1
  %v1819 = vsel %vm474, %v1816, %v1818
  %v1820 = vrot.slane %v1565, 1
  %v1821 = vsel %vm474, %v1818, %v1820
  %v1822 = vrot.slane %v1566, 1
  %v1823 = vsel %vm474, %v1820, %v1822
  %v1824 = vrot.slane %v1567, 1
  %v1825 = vsel %vm474, %v1822, %v1824
  %v1834 = vunpack.c.l.b16 %v1798
  %v1835 = vunpack.c.l.b16 %v1799
  %v1836 = vunpack.c.l.b16 %v1800
  %v1837 = vunpack.c.l.b16 %v1801
  %v1838 = vunpack.c.l.b16 %v1802
  %v1839 = vunpack.c.l.b16 %v1803
  %v1840 = vunpack.c.l.b16 %v1804
  %v1841 = vunpack.c.l.b16 %v1805
  %v1842 = vpack.c.b16 %v1835, %v1834
  %v1843 = vpack.c.b16 %v1837, %v1836
  %v1844 = vpack.c.b16 %v1839, %v1838
  %v1845 = vpack.c.b16 %v1841, %v1840
  %v1851 = vsel %vm203, %v1811, 0
  %v1854 = vsel %vm203, %v1813, 0
  %v1857 = vsel %vm203, %v1815, 0
  %v1860 = vsel %vm203, %v1817, 0
  %v1863 = vsel %vm203, %v1819, 0
  %v1866 = vsel %vm203, %v1821, 0
  %v1869 = vsel %vm203, %v1823, 0
  %v1872 = vsel %vm203, %v1825, 0
  %1874 = vmatprep.subr.bf16.mxu0 0
  %1875 = vmatpush1.bf16.msra.mxu0 %v1842
  %1876 = vmatprep.subr.bf16.mxu0 0
  %1877 = vmatpush1.bf16.msra.mxu0 %v1843
  %1878 = vmatprep.subr.bf16.mxu0 0
  %1879 = vmatpush1.bf16.msra.mxu0 %v1844
  %1880 = vmatprep.subr.bf16.mxu0 0
  %1881 = vmatpush1.bf16.msra.mxu0 %v1845
  %1882 = vmatprep.subr.bf16.mxu0 0
  %1883 = vmatpush1.bf16.msra.mxu0 0
  %1884 = vmatprep.subr.bf16.mxu0 0
  %1885 = vmatpush1.bf16.msra.mxu0 0
  %1886 = vmatprep.subr.bf16.mxu0 0
  %1887 = vmatpush1.bf16.msra.mxu0 0
  %1888 = vmatprep.subr.bf16.mxu0 0
  %1889 = vmatpush1.bf16.msra.mxu0 0
  %1890 = vmatprep.subr.bf16.mxu0 0
  %1891 = vmatpush1.bf16.msra.mxu0 0
  %1892 = vmatprep.subr.bf16.mxu0 0
  %1893 = vmatpush1.bf16.msra.mxu0 0
  %1894 = vmatprep.subr.bf16.mxu0 0
  %1895 = vmatpush1.bf16.msra.mxu0 0
  %1896 = vmatprep.subr.bf16.mxu0 0
  %1897 = vmatpush1.bf16.msra.mxu0 0
  %1898 = vmatprep.subr.bf16.mxu0 0
  %1899 = vmatpush1.bf16.msra.mxu0 0
  %1900 = vmatprep.subr.bf16.mxu0 0
  %1901 = vmatpush1.bf16.msra.mxu0 0
  %1902 = vmatprep.subr.bf16.mxu0 0
  %1903 = vmatpush1.bf16.msra.mxu0 0
  %1904 = vmatprep.subr.bf16.mxu0 0
  %1905 = vmatpush1.bf16.msra.mxu0 0
  %1906 = vmatprep.mubr.bf16.mxu0 0
  %1907 = vmatmul.mubr.bf16.gmra.mrb[0].mxu0 %v1851
  %v1908 = vpop.f32.mrb[0].mxu0
  %v1909 = vadd.f32 0.0, %v1908
  %v1910 = vpop.f32.mrb[0].mxu0
  %v1911 = vpop.f32.mrb[0].mxu0
  %v1912 = vadd.f32 0.0, %v1911
  %v1913 = vpop.f32.mrb[0].mxu0
  %1914 = vmatprep.mubr.bf16.mxu0 0
  %1915 = vmatmul.mubr.bf16.gmra.mrb[0].mxu0 %v1854
  %v1916 = vpop.f32.mrb[0].mxu0
  %v1917 = vadd.f32 0.0, %v1916
  %v1918 = vpop.f32.mrb[0].mxu0
  %v1919 = vpop.f32.mrb[0].mxu0
  %v1920 = vadd.f32 0.0, %v1919
  %v1921 = vpop.f32.mrb[0].mxu0
  %1922 = vmatprep.mubr.bf16.mxu0 0
  %1923 = vmatmul.mubr.bf16.gmra.mrb[0].mxu0 %v1857
  %v1924 = vpop.f32.mrb[0].mxu0
  %v1925 = vadd.f32 0.0, %v1924
  %v1926 = vpop.f32.mrb[0].mxu0
  %v1927 = vpop.f32.mrb[0].mxu0
  %v1928 = vadd.f32 0.0, %v1927
  %v1929 = vpop.f32.mrb[0].mxu0
  %1930 = vmatprep.mubr.bf16.mxu0 0
  %1931 = vmatmul.mubr.bf16.gmra.mrb[0].mxu0 %v1860
  %v1932 = vpop.f32.mrb[0].mxu0
  %v1933 = vadd.f32 0.0, %v1932
  %v1934 = vpop.f32.mrb[0].mxu0
  %v1935 = vpop.f32.mrb[0].mxu0
  %v1936 = vadd.f32 0.0, %v1935
  %v1937 = vpop.f32.mrb[0].mxu0
  %1938 = vmatprep.mubr.bf16.mxu0 0
  %1939 = vmatmul.mubr.bf16.gmra.mrb[0].mxu0 %v1863
  %v1940 = vpop.f32.mrb[0].mxu0
  %v1941 = vadd.f32 0.0, %v1940
  %v1942 = vpop.f32.mrb[0].mxu0
  %v1943 = vpop.f32.mrb[0].mxu0
  %v1944 = vadd.f32 0.0, %v1943
  %v1945 = vpop.f32.mrb[0].mxu0
  %1946 = vmatprep.mubr.bf16.mxu0 0
  %1947 = vmatmul.mubr.bf16.gmra.mrb[0].mxu0 %v1866
  %v1948 = vpop.f32.mrb[0].mxu0
  %v1949 = vadd.f32 0.0, %v1948
  %v1950 = vpop.f32.mrb[0].mxu0
  %v1951 = vpop.f32.mrb[0].mxu0
  %v1952 = vadd.f32 0.0, %v1951
  %v1953 = vpop.f32.mrb[0].mxu0
  %1954 = vmatprep.mubr.bf16.mxu0 0
  %1955 = vmatmul.mubr.bf16.gmra.mrb[0].mxu0 %v1869
  %v1956 = vpop.f32.mrb[0].mxu0
  %v1957 = vadd.f32 0.0, %v1956
  %v1958 = vpop.f32.mrb[0].mxu0
  %v1959 = vpop.f32.mrb[0].mxu0
  %v1960 = vadd.f32 0.0, %v1959
  %v1961 = vpop.f32.mrb[0].mxu0
  %1962 = vmatprep.mubr.bf16.mxu0 0
  %1963 = vmatmul.mubr.bf16.gmra.mrb[0].mxu0 %v1872
  %v1964 = vpop.f32.mrb[0].mxu0
  %v1965 = vadd.f32 0.0, %v1964
  %v1966 = vpop.f32.mrb[0].mxu0
  %v1967 = vpop.f32.mrb[0].mxu0
  %v1968 = vadd.f32 0.0, %v1967
  %v1969 = vpop.f32.mrb[0].mxu0
  %1970 = vdwg.mxu0
  %v1971 = vadd.f32 %v1781, %v1909
  %v1972 = vadd.f32 %v1782, %v1912
  %v1973 = vadd.f32 %v1783, %v1917
  %v1974 = vadd.f32 %v1784, %v1920
  %v1975 = vadd.f32 %v1785, %v1925
  %v1976 = vadd.f32 %v1786, %v1928
  %v1977 = vadd.f32 %v1787, %v1933
  %v1978 = vadd.f32 %v1788, %v1936
  %v1979 = vadd.f32 %v1789, %v1941
  %v1980 = vadd.f32 %v1790, %v1944
  %v1981 = vadd.f32 %v1791, %v1949
  %v1982 = vadd.f32 %v1792, %v1952
  %v1983 = vadd.f32 %v1793, %v1957
  %v1984 = vadd.f32 %v1794, %v1960
  %v1985 = vadd.f32 %v1795, %v1965
  %v1986 = vadd.f32 %v1796, %v1968
  %1988 = vset.pattern.permute.xlu0 0
  %1989 = vperm.xlu0 %1988, %v18
  %v1990 = vpop.permute.xlu0 %1989
  %1993 = vset.pattern.permute.xlu0 0
  %1994 = vperm.xlu0 %1993, %v19
  %v1995 = vpop.permute.xlu0 %1994
  %1998 = vset.pattern.permute.xlu0 0
  %1999 = vperm.xlu0 %1998, %v20
  %v2000 = vpop.permute.xlu0 %1999
  %2003 = vset.pattern.permute.xlu0 0
  %2004 = vperm.xlu0 %2003, %v21
  %v2005 = vpop.permute.xlu0 %2004
  %2008 = vset.pattern.permute.xlu0 0
  %2009 = vperm.xlu0 %2008, %v22
  %v2010 = vpop.permute.xlu0 %2009
  %2013 = vset.pattern.permute.xlu0 0
  %2014 = vperm.xlu0 %2013, %v23
  %v2015 = vpop.permute.xlu0 %2014
  %2018 = vset.pattern.permute.xlu0 0
  %2019 = vperm.xlu0 %2018, %v24
  %v2020 = vpop.permute.xlu0 %2019
  %2023 = vset.pattern.permute.xlu0 0
  %2024 = vperm.xlu0 %2023, %v25
  %v2025 = vpop.permute.xlu0 %2024
  %2028 = vset.pattern.permute.xlu0 0
  %2029 = vperm.xlu0 %2028, %v26
  %v2030 = vpop.permute.xlu0 %2029
  %2033 = vset.pattern.permute.xlu0 0
  %2034 = vperm.xlu0 %2033, %v27
  %v2035 = vpop.permute.xlu0 %2034
  %2038 = vset.pattern.permute.xlu0 0
  %2039 = vperm.xlu0 %2038, %v28
  %v2040 = vpop.permute.xlu0 %2039
  %2043 = vset.pattern.permute.xlu0 0
  %2044 = vperm.xlu0 %2043, %v29
  %v2045 = vpop.permute.xlu0 %2044
  %2048 = vset.pattern.permute.xlu0 0
  %2049 = vperm.xlu0 %2048, %v30
  %v2050 = vpop.permute.xlu0 %2049
  %2053 = vset.pattern.permute.xlu0 0
  %2054 = vperm.xlu0 %2053, %v31
  %v2055 = vpop.permute.xlu0 %2054
  %2058 = vset.pattern.permute.xlu0 0
  %2059 = vperm.xlu0 %2058, %v32
  %v2060 = vpop.permute.xlu0 %2059
  %2063 = vset.pattern.permute.xlu0 0
  %2064 = vperm.xlu0 %2063, %v33
  %v2065 = vpop.permute.xlu0 %2064
  %v2067 = vmul.f32 %v1971, %v1990
  %v2068 = vmul.f32 %v1972, %v1995
  %v2069 = vmul.f32 %v1973, %v2000
  %v2070 = vmul.f32 %v1974, %v2005
  %v2071 = vmul.f32 %v1975, %v2010
  %v2072 = vmul.f32 %v1976, %v2015
  %v2073 = vmul.f32 %v1977, %v2020
  %v2074 = vmul.f32 %v1978, %v2025
  %v2075 = vmul.f32 %v1979, %v2030
  %v2076 = vmul.f32 %v1980, %v2035
  %v2077 = vmul.f32 %v1981, %v2040
  %v2078 = vmul.f32 %v1982, %v2045
  %v2079 = vmul.f32 %v1983, %v2050
  %v2080 = vmul.f32 %v1984, %v2055
  %v2081 = vmul.f32 %v1985, %v2060
  %v2082 = vmul.f32 %v1986, %v2065
  %v2083 = vsel %vm203, %v2067, 0.0
  %v2084 = vsel %vm203, %v2068, 0.0
  %v2085 = vadd.f32 %v2083, %v2084
  %v2086 = vsel %vm203, %v2069, 0.0
  %v2087 = vadd.f32 %v2085, %v2086
  %v2088 = vsel %vm203, %v2070, 0.0
  %v2089 = vadd.f32 %v2087, %v2088
  %v2090 = vsel %vm203, %v2071, 0.0
  %v2091 = vadd.f32 %v2089, %v2090
  %v2092 = vsel %vm203, %v2072, 0.0
  %v2093 = vadd.f32 %v2091, %v2092
  %v2094 = vsel %vm203, %v2073, 0.0
  %v2095 = vadd.f32 %v2093, %v2094
  %v2096 = vsel %vm203, %v2074, 0.0
  %v2097 = vadd.f32 %v2095, %v2096
  %v2098 = vsel %vm203, %v2075, 0.0
  %v2099 = vadd.f32 %v2097, %v2098
  %v2100 = vsel %vm203, %v2076, 0.0
  %v2101 = vadd.f32 %v2099, %v2100
  %v2102 = vsel %vm203, %v2077, 0.0
  %v2103 = vadd.f32 %v2101, %v2102
  %v2104 = vsel %vm203, %v2078, 0.0
  %v2105 = vadd.f32 %v2103, %v2104
  %v2106 = vsel %vm203, %v2079, 0.0
  %v2107 = vadd.f32 %v2105, %v2106
  %v2108 = vsel %vm203, %v2080, 0.0
  %v2109 = vadd.f32 %v2107, %v2108
  %v2110 = vsel %vm203, %v2081, 0.0
  %v2111 = vadd.f32 %v2109, %v2110
  %v2112 = vsel %vm203, %v2082, 0.0
  %v2113 = vadd.f32 %v2111, %v2112
  %v2114 = vrot.slane %v2113, 4
  %v2115 = vadd.f32 %v2113, %v2114
  %v2116 = vrot.slane %v2115, 2
  %v2117 = vadd.f32 %v2115, %v2116
  %v2118 = vrot.slane %v2117, 1
  %v2119 = vadd.f32 %v2117, %v2118
  %v2120 = vmul.f32 %v2119, 0.013888889
  %v2121 = vmul.f32 %v2067, %v2067
  %v2122 = vmul.f32 %v2068, %v2068
  %v2123 = vmul.f32 %v2069, %v2069
  %v2124 = vmul.f32 %v2070, %v2070
  %v2125 = vmul.f32 %v2071, %v2071
  %v2126 = vmul.f32 %v2072, %v2072
  %v2127 = vmul.f32 %v2073, %v2073
  %v2128 = vmul.f32 %v2074, %v2074
  %v2129 = vmul.f32 %v2075, %v2075
  %v2130 = vmul.f32 %v2076, %v2076
  %v2131 = vmul.f32 %v2077, %v2077
  %v2132 = vmul.f32 %v2078, %v2078
  %v2133 = vmul.f32 %v2079, %v2079
  %v2134 = vmul.f32 %v2080, %v2080
  %v2135 = vmul.f32 %v2081, %v2081
  %v2136 = vmul.f32 %v2082, %v2082
  %v2137 = vsel %vm203, %v2121, 0.0
  %v2138 = vsel %vm203, %v2122, 0.0
  %v2139 = vadd.f32 %v2137, %v2138
  %v2140 = vsel %vm203, %v2123, 0.0
  %v2141 = vadd.f32 %v2139, %v2140
  %v2142 = vsel %vm203, %v2124, 0.0
  %v2143 = vadd.f32 %v2141, %v2142
  %v2144 = vsel %vm203, %v2125, 0.0
  %v2145 = vadd.f32 %v2143, %v2144
  %v2146 = vsel %vm203, %v2126, 0.0
  %v2147 = vadd.f32 %v2145, %v2146
  %v2148 = vsel %vm203, %v2127, 0.0
  %v2149 = vadd.f32 %v2147, %v2148
  %v2150 = vsel %vm203, %v2128, 0.0
  %v2151 = vadd.f32 %v2149, %v2150
  %v2152 = vsel %vm203, %v2129, 0.0
  %v2153 = vadd.f32 %v2151, %v2152
  %v2154 = vsel %vm203, %v2130, 0.0
  %v2155 = vadd.f32 %v2153, %v2154
  %v2156 = vsel %vm203, %v2131, 0.0
  %v2157 = vadd.f32 %v2155, %v2156
  %v2158 = vsel %vm203, %v2132, 0.0
  %v2159 = vadd.f32 %v2157, %v2158
  %v2160 = vsel %vm203, %v2133, 0.0
  %v2161 = vadd.f32 %v2159, %v2160
  %v2162 = vsel %vm203, %v2134, 0.0
  %v2163 = vadd.f32 %v2161, %v2162
  %v2164 = vsel %vm203, %v2135, 0.0
  %v2165 = vadd.f32 %v2163, %v2164
  %v2166 = vsel %vm203, %v2136, 0.0
  %v2167 = vadd.f32 %v2165, %v2166
  %v2168 = vrot.slane %v2167, 4
  %v2169 = vadd.f32 %v2167, %v2168
  %v2170 = vrot.slane %v2169, 2
  %v2171 = vadd.f32 %v2169, %v2170
  %v2172 = vrot.slane %v2171, 1
  %v2173 = vadd.f32 %v2171, %v2172
  %v2174 = vmul.f32 %v2173, 0.013888889
  %v2175 = vmul.f32 %v2120, %v2120
  %v2176 = vsub.f32 %v2174, %v2175
  %v2177 = vld [vmem:[%s2] sm:$0x1]
  %v2178 = vadd.f32 %v2176, 1e-05
  %v2179 = vrsqrt.pop %v2178
  %v2180 = vmul.f32 %v2177, %v2179
  %v2181 = vld [vmem:[%s2 + $0x1] sm:$0x1]
  %v2182 = vmul.f32 %v2120, %v2180
  %v2183 = vsub.f32 %v2181, %v2182
  %v2184 = vlaneseq
  %v2185 = vshrl.u32 %v2184, 7
  %v2186 = vsub.s32 0, %v2185
  %v2187 = vrot.slane %v2180, %v2186
  %v2188 = vmul.f32 %v1971, %v2187
  %v2189 = vmul.f32 %v1972, %v2187
  %v2190 = vmul.f32 %v1973, %v2187
  %v2191 = vmul.f32 %v1974, %v2187
  %v2192 = vmul.f32 %v1975, %v2187
  %v2193 = vmul.f32 %v1976, %v2187
  %v2194 = vmul.f32 %v1977, %v2187
  %v2195 = vmul.f32 %v1978, %v2187
  %v2196 = vmul.f32 %v1979, %v2187
  %v2197 = vmul.f32 %v1980, %v2187
  %v2198 = vmul.f32 %v1981, %v2187
  %v2199 = vmul.f32 %v1982, %v2187
  %v2200 = vmul.f32 %v1983, %v2187
  %v2201 = vmul.f32 %v1984, %v2187
  %v2202 = vmul.f32 %v1985, %v2187
  %v2203 = vmul.f32 %v1986, %v2187
  %v2204 = vlaneseq
  %v2205 = vshrl.u32 %v2204, 7
  %v2206 = vsub.s32 0, %v2205
  %v2207 = vrot.slane %v2183, %v2206
  %v2208 = vadd.f32 %v2188, %v2207
  %v2209 = vadd.f32 %v2189, %v2207
  %v2210 = vadd.f32 %v2190, %v2207
  %v2211 = vadd.f32 %v2191, %v2207
  %v2212 = vadd.f32 %v2192, %v2207
  %v2213 = vadd.f32 %v2193, %v2207
  %v2214 = vadd.f32 %v2194, %v2207
  %v2215 = vadd.f32 %v2195, %v2207
  %v2216 = vadd.f32 %v2196, %v2207
  %v2217 = vadd.f32 %v2197, %v2207
  %v2218 = vadd.f32 %v2198, %v2207
  %v2219 = vadd.f32 %v2199, %v2207
  %v2220 = vadd.f32 %v2200, %v2207
  %v2221 = vadd.f32 %v2201, %v2207
  %v2222 = vadd.f32 %v2202, %v2207
  %v2223 = vadd.f32 %v2203, %v2207
  %v2224 = vmax.f32 %v2208, 0.0
  %v2225 = vmax.f32 %v2209, 0.0
  %v2226 = vmax.f32 %v2210, 0.0
  %v2227 = vmax.f32 %v2211, 0.0
  %v2228 = vmax.f32 %v2212, 0.0
  %v2229 = vmax.f32 %v2213, 0.0
  %v2230 = vmax.f32 %v2214, 0.0
  %v2231 = vmax.f32 %v2215, 0.0
  %v2232 = vmax.f32 %v2216, 0.0
  %v2233 = vmax.f32 %v2217, 0.0
  %v2234 = vmax.f32 %v2218, 0.0
  %v2235 = vmax.f32 %v2219, 0.0
  %v2236 = vmax.f32 %v2220, 0.0
  %v2237 = vmax.f32 %v2221, 0.0
  %v2238 = vmax.f32 %v2222, 0.0
  %v2239 = vmax.f32 %v2223, 0.0
  %v2240 = vmul.f32 %v2224, %v1990
  %v2241 = vmul.f32 %v2225, %v1995
  %v2242 = vmul.f32 %v2226, %v2000
  %v2243 = vmul.f32 %v2227, %v2005
  %v2244 = vmul.f32 %v2228, %v2010
  %v2245 = vmul.f32 %v2229, %v2015
  %v2246 = vmul.f32 %v2230, %v2020
  %v2247 = vmul.f32 %v2231, %v2025
  %v2248 = vmul.f32 %v2232, %v2030
  %v2249 = vmul.f32 %v2233, %v2035
  %v2250 = vmul.f32 %v2234, %v2040
  %v2251 = vmul.f32 %v2235, %v2045
  %v2252 = vmul.f32 %v2236, %v2050
  %v2253 = vmul.f32 %v2237, %v2055
  %v2254 = vmul.f32 %v2238, %v2060
  %v2255 = vmul.f32 %v2239, %v2065
  %2256 = vst.msk [vmem:[#allocation2] sm:$0xff] %vm203, 0.0
  %2257 = vst.msk [vmem:[#allocation2 + $0x8] sm:$0xff] %vm203, 0.0
  %2258 = vst.msk [vmem:[#allocation2 + $0x10] sm:$0xff] %vm203, 0.0
  %2259 = vst.msk [vmem:[#allocation2 + $0x18] sm:$0xff] %vm203, 0.0
  %2260 = vst.msk [vmem:[#allocation2 + $0x20] sm:$0xff] %vm203, 0.0
  %2261 = vst.msk [vmem:[#allocation2 + $0x28] sm:$0xff] %vm203, 0.0
  %2262 = vst.msk [vmem:[#allocation2 + $0x30] sm:$0xff] %vm203, 0.0
  %2263 = vst.msk [vmem:[#allocation2 + $0x38] sm:$0xff] %vm203, 0.0
  %2264 = vst.msk [vmem:[#allocation2 + $0x40] sm:$0xff] %vm203, 0.0
  %2265 = vst.msk [vmem:[#allocation2 + $0x48] sm:$0xff] %vm203, 0.0
  %2266 = vst.msk [vmem:[#allocation2 + $0x50] sm:$0xff] %vm203, 0.0
  %2267 = vst.msk [vmem:[#allocation2 + $0x58] sm:$0xff] %vm203, 0.0
  %2268 = vst.msk [vmem:[#allocation2 + $0x60] sm:$0xff] %vm203, 0.0
  %2269 = vst.msk [vmem:[#allocation2 + $0x68] sm:$0xff] %vm203, 0.0
  %2270 = vst.msk [vmem:[#allocation2 + $0x70] sm:$0xff] %vm203, 0.0
  %2271 = vst.msk [vmem:[#allocation2 + $0x78] sm:$0xff] %vm203, 0.0
  %2272 = vst.msk [vmem:[#allocation2 + $0x80] sm:$0xff] %vm203, 0.0
  %2273 = vst.msk [vmem:[#allocation2 + $0x88] sm:$0xff] %vm203, 0.0
  %2274 = vst.msk [vmem:[#allocation2 + $0x90] sm:$0xff] %vm203, 0.0
  %2275 = vst.msk [vmem:[#allocation2 + $0x98] sm:$0xff] %vm203, 0.0
  %2276 = vst.msk [vmem:[#allocation2 + $0x10] sm:$0xff] %vm203, %v2240
  %2277 = vst.msk [vmem:[#allocation2 + $0x18] sm:$0xff] %vm203, %v2241
  %2278 = vst.msk [vmem:[#allocation2 + $0x20] sm:$0xff] %vm203, %v2242
  %2279 = vst.msk [vmem:[#allocation2 + $0x28] sm:$0xff] %vm203, %v2243
  %2280 = vst.msk [vmem:[#allocation2 + $0x30] sm:$0xff] %vm203, %v2244
  %2281 = vst.msk [vmem:[#allocation2 + $0x38] sm:$0xff] %vm203, %v2245
  %2282 = vst.msk [vmem:[#allocation2 + $0x40] sm:$0xff] %vm203, %v2246
  %2283 = vst.msk [vmem:[#allocation2 + $0x48] sm:$0xff] %vm203, %v2247
  %2284 = vst.msk [vmem:[#allocation2 + $0x50] sm:$0xff] %vm203, %v2248
  %2285 = vst.msk [vmem:[#allocation2 + $0x58] sm:$0xff] %vm203, %v2249
  %2286 = vst.msk [vmem:[#allocation2 + $0x60] sm:$0xff] %vm203, %v2250
  %2287 = vst.msk [vmem:[#allocation2 + $0x68] sm:$0xff] %vm203, %v2251
  %2288 = vst.msk [vmem:[#allocation2 + $0x70] sm:$0xff] %vm203, %v2252
  %2289 = vst.msk [vmem:[#allocation2 + $0x78] sm:$0xff] %vm203, %v2253
  %2290 = vst.msk [vmem:[#allocation2 + $0x80] sm:$0xff] %vm203, %v2254
  %2291 = vst.msk [vmem:[#allocation2 + $0x88] sm:$0xff] %vm203, %v2255
  %v2292 = vld [vmem:[#allocation2 + $0x7] sm:$0xff]
  %v2293 = vld [vmem:[#allocation2 + $0xf] sm:$0xff]
  %v2294 = vld [vmem:[#allocation2 + $0x17] sm:$0xff]
  %v2295 = vld [vmem:[#allocation2 + $0x1f] sm:$0xff]
  %v2296 = vld [vmem:[#allocation2 + $0x27] sm:$0xff]
  %v2297 = vld [vmem:[#allocation2 + $0x2f] sm:$0xff]
  %v2298 = vld [vmem:[#allocation2 + $0x37] sm:$0xff]
  %v2299 = vld [vmem:[#allocation2 + $0x3f] sm:$0xff]
  %v2300 = vld [vmem:[#allocation2 + $0x47] sm:$0xff]
  %v2301 = vld [vmem:[#allocation2 + $0x4f] sm:$0xff]
  %v2302 = vld [vmem:[#allocation2 + $0x57] sm:$0xff]
  %v2303 = vld [vmem:[#allocation2 + $0x5f] sm:$0xff]
  %v2304 = vld [vmem:[#allocation2 + $0x67] sm:$0xff]
  %v2305 = vld [vmem:[#allocation2 + $0x6f] sm:$0xff]
  %v2306 = vld [vmem:[#allocation2 + $0x77] sm:$0xff]
  %v2307 = vld [vmem:[#allocation2 + $0x7f] sm:$0xff]
  %v2308 = vpack.c.bf16 %v2293, %v2292
  %v2309 = vpack.c.bf16 %v2295, %v2294
  %v2310 = vpack.c.bf16 %v2297, %v2296
  %v2311 = vpack.c.bf16 %v2299, %v2298
  %v2312 = vpack.c.bf16 %v2301, %v2300
  %v2313 = vpack.c.bf16 %v2303, %v2302
  %v2314 = vpack.c.bf16 %v2305, %v2304
  %v2315 = vpack.c.bf16 %v2307, %v2306
  %v2316 = vld [vmem:[%s1 + $0x120] sm:$0xf]
  %v2317 = vld [vmem:[%s1 + $0x124] sm:$0xf]
  %v2318 = vld [vmem:[%s1 + $0x128] sm:$0xf]
  %v2319 = vld [vmem:[%s1 + $0x12c] sm:$0xf]
  %v2320 = vld [vmem:[%s1 + $0x130] sm:$0xf]
  %v2321 = vld [vmem:[%s1 + $0x134] sm:$0xf]
  %v2322 = vld [vmem:[%s1 + $0x138] sm:$0xf]
  %v2323 = vld [vmem:[%s1 + $0x13c] sm:$0xf]
  %v2324 = vld [vmem:[#allocation2 + $0x8] sm:$0xff]
  %v2325 = vld [vmem:[#allocation2 + $0x10] sm:$0xff]
  %v2326 = vld [vmem:[#allocation2 + $0x18] sm:$0xff]
  %v2327 = vld [vmem:[#allocation2 + $0x20] sm:$0xff]
  %v2328 = vld [vmem:[#allocation2 + $0x28] sm:$0xff]
  %v2329 = vld [vmem:[#allocation2 + $0x30] sm:$0xff]
  %v2330 = vld [vmem:[#allocation2 + $0x38] sm:$0xff]
  %v2331 = vld [vmem:[#allocation2 + $0x40] sm:$0xff]
  %v2332 = vld [vmem:[#allocation2 + $0x48] sm:$0xff]
  %v2333 = vld [vmem:[#allocation2 + $0x50] sm:$0xff]
  %v2334 = vld [vmem:[#allocation2 + $0x58] sm:$0xff]
  %v2335 = vld [vmem:[#allocation2 + $0x60] sm:$0xff]
  %v2336 = vld [vmem:[#allocation2 + $0x68] sm:$0xff]
  %v2337 = vld [vmem:[#allocation2 + $0x70] sm:$0xff]
  %v2338 = vld [vmem:[#allocation2 + $0x78] sm:$0xff]
  %v2339 = vld [vmem:[#allocation2 + $0x80] sm:$0xff]
  %v2340 = vpack.c.bf16 %v2325, %v2324
  %v2341 = vpack.c.bf16 %v2327, %v2326
  %v2342 = vpack.c.bf16 %v2329, %v2328
  %v2343 = vpack.c.bf16 %v2331, %v2330
  %v2344 = vpack.c.bf16 %v2333, %v2332
  %v2345 = vpack.c.bf16 %v2335, %v2334
  %v2346 = vpack.c.bf16 %v2337, %v2336
  %v2347 = vpack.c.bf16 %v2339, %v2338
  %v2348 = vld [vmem:[%s1 + $0x140] sm:$0xf]
  %v2349 = vld [vmem:[%s1 + $0x144] sm:$0xf]
  %v2350 = vld [vmem:[%s1 + $0x148] sm:$0xf]
  %v2351 = vld [vmem:[%s1 + $0x14c] sm:$0xf]
  %v2352 = vld [vmem:[%s1 + $0x150] sm:$0xf]
  %v2353 = vld [vmem:[%s1 + $0x154] sm:$0xf]
  %v2354 = vld [vmem:[%s1 + $0x158] sm:$0xf]
  %v2355 = vld [vmem:[%s1 + $0x15c] sm:$0xf]
  %v2364 = vunpack.c.l.b16 %v2348
  %v2365 = vunpack.c.l.b16 %v2349
  %v2366 = vunpack.c.l.b16 %v2350
  %v2367 = vunpack.c.l.b16 %v2351
  %v2368 = vunpack.c.l.b16 %v2352
  %v2369 = vunpack.c.l.b16 %v2353
  %v2370 = vunpack.c.l.b16 %v2354
  %v2371 = vunpack.c.l.b16 %v2355
  %v2372 = vpack.c.b16 %v2365, %v2364
  %v2373 = vpack.c.b16 %v2367, %v2366
  %v2374 = vpack.c.b16 %v2369, %v2368
  %v2375 = vpack.c.b16 %v2371, %v2370
  %v2381 = vsel %vm203, %v2340, 0
  %v2384 = vsel %vm203, %v2341, 0
  %v2387 = vsel %vm203, %v2342, 0
  %v2390 = vsel %vm203, %v2343, 0
  %v2393 = vsel %vm203, %v2344, 0
  %v2396 = vsel %vm203, %v2345, 0
  %v2399 = vsel %vm203, %v2346, 0
  %v2402 = vsel %vm203, %v2347, 0
  %2404 = vmatprep.subr.bf16.mxu0 0
  %2405 = vmatpush1.bf16.msra.mxu0 %v2372
  %2406 = vmatprep.subr.bf16.mxu0 0
  %2407 = vmatpush1.bf16.msra.mxu0 %v2373
  %2408 = vmatprep.subr.bf16.mxu0 0
  %2409 = vmatpush1.bf16.msra.mxu0 %v2374
  %2410 = vmatprep.subr.bf16.mxu0 0
  %2411 = vmatpush1.bf16.msra.mxu0 %v2375
  %2412 = vmatprep.subr.bf16.mxu0 0
  %2413 = vmatpush1.bf16.msra.mxu0 0
  %2414 = vmatprep.subr.bf16.mxu0 0
  %2415 = vmatpush1.bf16.msra.mxu0 0
  %2416 = vmatprep.subr.bf16.mxu0 0
  %2417 = vmatpush1.bf16.msra.mxu0 0
  %2418 = vmatprep.subr.bf16.mxu0 0
  %2419 = vmatpush1.bf16.msra.mxu0 0
  %2420 = vmatprep.subr.bf16.mxu0 0
  %2421 = vmatpush1.bf16.msra.mxu0 0
  %2422 = vmatprep.subr.bf16.mxu0 0
  %2423 = vmatpush1.bf16.msra.mxu0 0
  %2424 = vmatprep.subr.bf16.mxu0 0
  %2425 = vmatpush1.bf16.msra.mxu0 0
  %2426 = vmatprep.subr.bf16.mxu0 0
  %2427 = vmatpush1.bf16.msra.mxu0 0
  %2428 = vmatprep.subr.bf16.mxu0 0
  %2429 = vmatpush1.bf16.msra.mxu0 0
  %2430 = vmatprep.subr.bf16.mxu0 0
  %2431 = vmatpush1.bf16.msra.mxu0 0
  %2432 = vmatprep.subr.bf16.mxu0 0
  %2433 = vmatpush1.bf16.msra.mxu0 0
  %2434 = vmatprep.subr.bf16.mxu0 0
  %2435 = vmatpush1.bf16.msra.mxu0 0
  %2436 = vmatprep.mubr.bf16.mxu0 0
  %2437 = vmatmul.mubr.bf16.gmra.mrb[0].mxu0 %v2381
  %v2438 = vpop.f32.mrb[0].mxu0
  %v2439 = vadd.f32 0.0, %v2438
  %v2440 = vpop.f32.mrb[0].mxu0
  %v2441 = vpop.f32.mrb[0].mxu0
  %v2442 = vadd.f32 0.0, %v2441
  %v2443 = vpop.f32.mrb[0].mxu0
  %2444 = vmatprep.mubr.bf16.mxu0 0
  %2445 = vmatmul.mubr.bf16.gmra.mrb[0].mxu0 %v2384
  %v2446 = vpop.f32.mrb[0].mxu0
  %v2447 = vadd.f32 0.0, %v2446
  %v2448 = vpop.f32.mrb[0].mxu0
  %v2449 = vpop.f32.mrb[0].mxu0
  %v2450 = vadd.f32 0.0, %v2449
  %v2451 = vpop.f32.mrb[0].mxu0
  %2452 = vmatprep.mubr.bf16.mxu0 0
  %2453 = vmatmul.mubr.bf16.gmra.mrb[0].mxu0 %v2387
  %v2454 = vpop.f32.mrb[0].mxu0
  %v2455 = vadd.f32 0.0, %v2454
  %v2456 = vpop.f32.mrb[0].mxu0
  %v2457 = vpop.f32.mrb[0].mxu0
  %v2458 = vadd.f32 0.0, %v2457
  %v2459 = vpop.f32.mrb[0].mxu0
  %2460 = vmatprep.mubr.bf16.mxu0 0
  %2461 = vmatmul.mubr.bf16.gmra.mrb[0].mxu0 %v2390
  %v2462 = vpop.f32.mrb[0].mxu0
  %v2463 = vadd.f32 0.0, %v2462
  %v2464 = vpop.f32.mrb[0].mxu0
  %v2465 = vpop.f32.mrb[0].mxu0
  %v2466 = vadd.f32 0.0, %v2465
  %v2467 = vpop.f32.mrb[0].mxu0
  %2468 = vmatprep.mubr.bf16.mxu0 0
  %2469 = vmatmul.mubr.bf16.gmra.mrb[0].mxu0 %v2393
  %v2470 = vpop.f32.mrb[0].mxu0
  %v2471 = vadd.f32 0.0, %v2470
  %v2472 = vpop.f32.mrb[0].mxu0
  %v2473 = vpop.f32.mrb[0].mxu0
  %v2474 = vadd.f32 0.0, %v2473
  %v2475 = vpop.f32.mrb[0].mxu0
  %2476 = vmatprep.mubr.bf16.mxu0 0
  %2477 = vmatmul.mubr.bf16.gmra.mrb[0].mxu0 %v2396
  %v2478 = vpop.f32.mrb[0].mxu0
  %v2479 = vadd.f32 0.0, %v2478
  %v2480 = vpop.f32.mrb[0].mxu0
  %v2481 = vpop.f32.mrb[0].mxu0
  %v2482 = vadd.f32 0.0, %v2481
  %v2483 = vpop.f32.mrb[0].mxu0
  %2484 = vmatprep.mubr.bf16.mxu0 0
  %2485 = vmatmul.mubr.bf16.gmra.mrb[0].mxu0 %v2399
  %v2486 = vpop.f32.mrb[0].mxu0
  %v2487 = vadd.f32 0.0, %v2486
  %v2488 = vpop.f32.mrb[0].mxu0
  %v2489 = vpop.f32.mrb[0].mxu0
  %v2490 = vadd.f32 0.0, %v2489
  %v2491 = vpop.f32.mrb[0].mxu0
  %2492 = vmatprep.mubr.bf16.mxu0 0
  %2493 = vmatmul.mubr.bf16.gmra.mrb[0].mxu0 %v2402
  %v2494 = vpop.f32.mrb[0].mxu0
  %v2495 = vadd.f32 0.0, %v2494
  %v2496 = vpop.f32.mrb[0].mxu0
  %v2497 = vpop.f32.mrb[0].mxu0
  %v2498 = vadd.f32 0.0, %v2497
  %v2499 = vpop.f32.mrb[0].mxu0
  %2500 = vdwg.mxu0
  %v2509 = vunpack.c.l.b16 %v2316
  %v2510 = vunpack.c.l.b16 %v2317
  %v2511 = vunpack.c.l.b16 %v2318
  %v2512 = vunpack.c.l.b16 %v2319
  %v2513 = vunpack.c.l.b16 %v2320
  %v2514 = vunpack.c.l.b16 %v2321
  %v2515 = vunpack.c.l.b16 %v2322
  %v2516 = vunpack.c.l.b16 %v2323
  %v2517 = vpack.c.b16 %v2510, %v2509
  %v2518 = vpack.c.b16 %v2512, %v2511
  %v2519 = vpack.c.b16 %v2514, %v2513
  %v2520 = vpack.c.b16 %v2516, %v2515
  %v2526 = vsel %vm203, %v2308, 0
  %v2529 = vsel %vm203, %v2309, 0
  %v2532 = vsel %vm203, %v2310, 0
  %v2535 = vsel %vm203, %v2311, 0
  %v2538 = vsel %vm203, %v2312, 0
  %v2541 = vsel %vm203, %v2313, 0
  %v2544 = vsel %vm203, %v2314, 0
  %v2547 = vsel %vm203, %v2315, 0
  %2549 = vmatprep.subr.bf16.mxu0 0
  %2550 = vmatpush1.bf16.msra.mxu0 %v2517
  %2551 = vmatprep.subr.bf16.mxu0 0
  %2552 = vmatpush1.bf16.msra.mxu0 %v2518
  %2553 = vmatprep.subr.bf16.mxu0 0
  %2554 = vmatpush1.bf16.msra.mxu0 %v2519
  %2555 = vmatprep.subr.bf16.mxu0 0
  %2556 = vmatpush1.bf16.msra.mxu0 %v2520
  %2557 = vmatprep.subr.bf16.mxu0 0
  %2558 = vmatpush1.bf16.msra.mxu0 0
  %2559 = vmatprep.subr.bf16.mxu0 0
  %2560 = vmatpush1.bf16.msra.mxu0 0
  %2561 = vmatprep.subr.bf16.mxu0 0
  %2562 = vmatpush1.bf16.msra.mxu0 0
  %2563 = vmatprep.subr.bf16.mxu0 0
  %2564 = vmatpush1.bf16.msra.mxu0 0
  %2565 = vmatprep.subr.bf16.mxu0 0
  %2566 = vmatpush1.bf16.msra.mxu0 0
  %2567 = vmatprep.subr.bf16.mxu0 0
  %2568 = vmatpush1.bf16.msra.mxu0 0
  %2569 = vmatprep.subr.bf16.mxu0 0
  %2570 = vmatpush1.bf16.msra.mxu0 0
  %2571 = vmatprep.subr.bf16.mxu0 0
  %2572 = vmatpush1.bf16.msra.mxu0 0
  %2573 = vmatprep.subr.bf16.mxu0 0
  %2574 = vmatpush1.bf16.msra.mxu0 0
  %2575 = vmatprep.subr.bf16.mxu0 0
  %2576 = vmatpush1.bf16.msra.mxu0 0
  %2577 = vmatprep.subr.bf16.mxu0 0
  %2578 = vmatpush1.bf16.msra.mxu0 0
  %2579 = vmatprep.subr.bf16.mxu0 0
  %2580 = vmatpush1.bf16.msra.mxu0 0
  %2581 = vmatprep.mubr.bf16.mxu0 0
  %2582 = vmatmul.mubr.bf16.gmra.mrb[0].mxu0 %v2526
  %v2583 = vpop.f32.mrb[0].mxu0
  %v2584 = vadd.f32 %v2439, %v2583
  %v2585 = vpop.f32.mrb[0].mxu0
  %v2586 = vpop.f32.mrb[0].mxu0
  %v2587 = vadd.f32 %v2442, %v2586
  %v2588 = vpop.f32.mrb[0].mxu0
  %2589 = vmatprep.mubr.bf16.mxu0 0
  %2590 = vmatmul.mubr.bf16.gmra.mrb[0].mxu0 %v2529
  %v2591 = vpop.f32.mrb[0].mxu0
  %v2592 = vadd.f32 %v2447, %v2591
  %v2593 = vpop.f32.mrb[0].mxu0
  %v2594 = vpop.f32.mrb[0].mxu0
  %v2595 = vadd.f32 %v2450, %v2594
  %v2596 = vpop.f32.mrb[0].mxu0
  %2597 = vmatprep.mubr.bf16.mxu0 0
  %2598 = vmatmul.mubr.bf16.gmra.mrb[0].mxu0 %v2532
  %v2599 = vpop.f32.mrb[0].mxu0
  %v2600 = vadd.f32 %v2455, %v2599
  %v2601 = vpop.f32.mrb[0].mxu0
  %v2602 = vpop.f32.mrb[0].mxu0
  %v2603 = vadd.f32 %v2458, %v2602
  %v2604 = vpop.f32.mrb[0].mxu0
  %2605 = vmatprep.mubr.bf16.mxu0 0
  %2606 = vmatmul.mubr.bf16.gmra.mrb[0].mxu0 %v2535
  %v2607 = vpop.f32.mrb[0].mxu0
  %v2608 = vadd.f32 %v2463, %v2607
  %v2609 = vpop.f32.mrb[0].mxu0
  %v2610 = vpop.f32.mrb[0].mxu0
  %v2611 = vadd.f32 %v2466, %v2610
  %v2612 = vpop.f32.mrb[0].mxu0
  %2613 = vmatprep.mubr.bf16.mxu0 0
  %2614 = vmatmul.mubr.bf16.gmra.mrb[0].mxu0 %v2538
  %v2615 = vpop.f32.mrb[0].mxu0
  %v2616 = vadd.f32 %v2471, %v2615
  %v2617 = vpop.f32.mrb[0].mxu0
  %v2618 = vpop.f32.mrb[0].mxu0
  %v2619 = vadd.f32 %v2474, %v2618
  %v2620 = vpop.f32.mrb[0].mxu0
  %2621 = vmatprep.mubr.bf16.mxu0 0
  %2622 = vmatmul.mubr.bf16.gmra.mrb[0].mxu0 %v2541
  %v2623 = vpop.f32.mrb[0].mxu0
  %v2624 = vadd.f32 %v2479, %v2623
  %v2625 = vpop.f32.mrb[0].mxu0
  %v2626 = vpop.f32.mrb[0].mxu0
  %v2627 = vadd.f32 %v2482, %v2626
  %v2628 = vpop.f32.mrb[0].mxu0
  %2629 = vmatprep.mubr.bf16.mxu0 0
  %2630 = vmatmul.mubr.bf16.gmra.mrb[0].mxu0 %v2544
  %v2631 = vpop.f32.mrb[0].mxu0
  %v2632 = vadd.f32 %v2487, %v2631
  %v2633 = vpop.f32.mrb[0].mxu0
  %v2634 = vpop.f32.mrb[0].mxu0
  %v2635 = vadd.f32 %v2490, %v2634
  %v2636 = vpop.f32.mrb[0].mxu0
  %2637 = vmatprep.mubr.bf16.mxu0 0
  %2638 = vmatmul.mubr.bf16.gmra.mrb[0].mxu0 %v2547
  %v2639 = vpop.f32.mrb[0].mxu0
  %v2640 = vadd.f32 %v2495, %v2639
  %v2641 = vpop.f32.mrb[0].mxu0
  %v2642 = vpop.f32.mrb[0].mxu0
  %v2643 = vadd.f32 %v2498, %v2642
  %v2644 = vpop.f32.mrb[0].mxu0
  %2645 = vdwg.mxu0
  %v2646 = vld [vmem:[#allocation2 + $0x9] sm:$0xff]
  %v2647 = vld [vmem:[#allocation2 + $0x11] sm:$0xff]
  %v2648 = vld [vmem:[#allocation2 + $0x19] sm:$0xff]
  %v2649 = vld [vmem:[#allocation2 + $0x21] sm:$0xff]
  %v2650 = vld [vmem:[#allocation2 + $0x29] sm:$0xff]
  %v2651 = vld [vmem:[#allocation2 + $0x31] sm:$0xff]
  %v2652 = vld [vmem:[#allocation2 + $0x39] sm:$0xff]
  %v2653 = vld [vmem:[#allocation2 + $0x41] sm:$0xff]
  %v2654 = vld [vmem:[#allocation2 + $0x49] sm:$0xff]
  %v2655 = vld [vmem:[#allocation2 + $0x51] sm:$0xff]
  %v2656 = vld [vmem:[#allocation2 + $0x59] sm:$0xff]
  %v2657 = vld [vmem:[#allocation2 + $0x61] sm:$0xff]
  %v2658 = vld [vmem:[#allocation2 + $0x69] sm:$0xff]
  %v2659 = vld [vmem:[#allocation2 + $0x71] sm:$0xff]
  %v2660 = vld [vmem:[#allocation2 + $0x79] sm:$0xff]
  %v2661 = vld [vmem:[#allocation2 + $0x81] sm:$0xff]
  %v2662 = vpack.c.bf16 %v2647, %v2646
  %v2663 = vpack.c.bf16 %v2649, %v2648
  %v2664 = vpack.c.bf16 %v2651, %v2650
  %v2665 = vpack.c.bf16 %v2653, %v2652
  %v2666 = vpack.c.bf16 %v2655, %v2654
  %v2667 = vpack.c.bf16 %v2657, %v2656
  %v2668 = vpack.c.bf16 %v2659, %v2658
  %v2669 = vpack.c.bf16 %v2661, %v2660
  %v2670 = vld [vmem:[%s1 + $0x160] sm:$0xf]
  %v2671 = vld [vmem:[%s1 + $0x164] sm:$0xf]
  %v2672 = vld [vmem:[%s1 + $0x168] sm:$0xf]
  %v2673 = vld [vmem:[%s1 + $0x16c] sm:$0xf]
  %v2674 = vld [vmem:[%s1 + $0x170] sm:$0xf]
  %v2675 = vld [vmem:[%s1 + $0x174] sm:$0xf]
  %v2676 = vld [vmem:[%s1 + $0x178] sm:$0xf]
  %v2677 = vld [vmem:[%s1 + $0x17c] sm:$0xf]
  %v2686 = vunpack.c.l.b16 %v2670
  %v2687 = vunpack.c.l.b16 %v2671
  %v2688 = vunpack.c.l.b16 %v2672
  %v2689 = vunpack.c.l.b16 %v2673
  %v2690 = vunpack.c.l.b16 %v2674
  %v2691 = vunpack.c.l.b16 %v2675
  %v2692 = vunpack.c.l.b16 %v2676
  %v2693 = vunpack.c.l.b16 %v2677
  %v2694 = vpack.c.b16 %v2687, %v2686
  %v2695 = vpack.c.b16 %v2689, %v2688
  %v2696 = vpack.c.b16 %v2691, %v2690
  %v2697 = vpack.c.b16 %v2693, %v2692
  %v2703 = vsel %vm203, %v2662, 0
  %v2706 = vsel %vm203, %v2663, 0
  %v2709 = vsel %vm203, %v2664, 0
  %v2712 = vsel %vm203, %v2665, 0
  %v2715 = vsel %vm203, %v2666, 0
  %v2718 = vsel %vm203, %v2667, 0
  %v2721 = vsel %vm203, %v2668, 0
  %v2724 = vsel %vm203, %v2669, 0
  %2726 = vmatprep.subr.bf16.mxu0 0
  %2727 = vmatpush1.bf16.msra.mxu0 %v2694
  %2728 = vmatprep.subr.bf16.mxu0 0
  %2729 = vmatpush1.bf16.msra.mxu0 %v2695
  %2730 = vmatprep.subr.bf16.mxu0 0
  %2731 = vmatpush1.bf16.msra.mxu0 %v2696
  %2732 = vmatprep.subr.bf16.mxu0 0
  %2733 = vmatpush1.bf16.msra.mxu0 %v2697
  %2734 = vmatprep.subr.bf16.mxu0 0
  %2735 = vmatpush1.bf16.msra.mxu0 0
  %2736 = vmatprep.subr.bf16.mxu0 0
  %2737 = vmatpush1.bf16.msra.mxu0 0
  %2738 = vmatprep.subr.bf16.mxu0 0
  %2739 = vmatpush1.bf16.msra.mxu0 0
  %2740 = vmatprep.subr.bf16.mxu0 0
  %2741 = vmatpush1.bf16.msra.mxu0 0
  %2742 = vmatprep.subr.bf16.mxu0 0
  %2743 = vmatpush1.bf16.msra.mxu0 0
  %2744 = vmatprep.subr.bf16.mxu0 0
  %2745 = vmatpush1.bf16.msra.mxu0 0
  %2746 = vmatprep.subr.bf16.mxu0 0
  %2747 = vmatpush1.bf16.msra.mxu0 0
  %2748 = vmatprep.subr.bf16.mxu0 0
  %2749 = vmatpush1.bf16.msra.mxu0 0
  %2750 = vmatprep.subr.bf16.mxu0 0
  %2751 = vmatpush1.bf16.msra.mxu0 0
  %2752 = vmatprep.subr.bf16.mxu0 0
  %2753 = vmatpush1.bf16.msra.mxu0 0
  %2754 = vmatprep.subr.bf16.mxu0 0
  %2755 = vmatpush1.bf16.msra.mxu0 0
  %2756 = vmatprep.subr.bf16.mxu0 0
  %2757 = vmatpush1.bf16.msra.mxu0 0
  %2758 = vmatprep.mubr.bf16.mxu0 0
  %2759 = vmatmul.mubr.bf16.gmra.mrb[0].mxu0 %v2703
  %v2760 = vpop.f32.mrb[0].mxu0
  %v2761 = vadd.f32 0.0, %v2760
  %v2762 = vpop.f32.mrb[0].mxu0
  %v2763 = vpop.f32.mrb[0].mxu0
  %v2764 = vadd.f32 0.0, %v2763
  %v2765 = vpop.f32.mrb[0].mxu0
  %2766 = vmatprep.mubr.bf16.mxu0 0
  %2767 = vmatmul.mubr.bf16.gmra.mrb[0].mxu0 %v2706
  %v2768 = vpop.f32.mrb[0].mxu0
  %v2769 = vadd.f32 0.0, %v2768
  %v2770 = vpop.f32.mrb[0].mxu0
  %v2771 = vpop.f32.mrb[0].mxu0
  %v2772 = vadd.f32 0.0, %v2771
  %v2773 = vpop.f32.mrb[0].mxu0
  %2774 = vmatprep.mubr.bf16.mxu0 0
  %2775 = vmatmul.mubr.bf16.gmra.mrb[0].mxu0 %v2709
  %v2776 = vpop.f32.mrb[0].mxu0
  %v2777 = vadd.f32 0.0, %v2776
  %v2778 = vpop.f32.mrb[0].mxu0
  %v2779 = vpop.f32.mrb[0].mxu0
  %v2780 = vadd.f32 0.0, %v2779
  %v2781 = vpop.f32.mrb[0].mxu0
  %2782 = vmatprep.mubr.bf16.mxu0 0
  %2783 = vmatmul.mubr.bf16.gmra.mrb[0].mxu0 %v2712
  %v2784 = vpop.f32.mrb[0].mxu0
  %v2785 = vadd.f32 0.0, %v2784
  %v2786 = vpop.f32.mrb[0].mxu0
  %v2787 = vpop.f32.mrb[0].mxu0
  %v2788 = vadd.f32 0.0, %v2787
  %v2789 = vpop.f32.mrb[0].mxu0
  %2790 = vmatprep.mubr.bf16.mxu0 0
  %2791 = vmatmul.mubr.bf16.gmra.mrb[0].mxu0 %v2715
  %v2792 = vpop.f32.mrb[0].mxu0
  %v2793 = vadd.f32 0.0, %v2792
  %v2794 = vpop.f32.mrb[0].mxu0
  %v2795 = vpop.f32.mrb[0].mxu0
  %v2796 = vadd.f32 0.0, %v2795
  %v2797 = vpop.f32.mrb[0].mxu0
  %2798 = vmatprep.mubr.bf16.mxu0 0
  %2799 = vmatmul.mubr.bf16.gmra.mrb[0].mxu0 %v2718
  %v2800 = vpop.f32.mrb[0].mxu0
  %v2801 = vadd.f32 0.0, %v2800
  %v2802 = vpop.f32.mrb[0].mxu0
  %v2803 = vpop.f32.mrb[0].mxu0
  %v2804 = vadd.f32 0.0, %v2803
  %v2805 = vpop.f32.mrb[0].mxu0
  %2806 = vmatprep.mubr.bf16.mxu0 0
  %2807 = vmatmul.mubr.bf16.gmra.mrb[0].mxu0 %v2721
  %v2808 = vpop.f32.mrb[0].mxu0
  %v2809 = vadd.f32 0.0, %v2808
  %v2810 = vpop.f32.mrb[0].mxu0
  %v2811 = vpop.f32.mrb[0].mxu0
  %v2812 = vadd.f32 0.0, %v2811
  %v2813 = vpop.f32.mrb[0].mxu0
  %2814 = vmatprep.mubr.bf16.mxu0 0
  %2815 = vmatmul.mubr.bf16.gmra.mrb[0].mxu0 %v2724
  %v2816 = vpop.f32.mrb[0].mxu0
  %v2817 = vadd.f32 0.0, %v2816
  %v2818 = vpop.f32.mrb[0].mxu0
  %v2819 = vpop.f32.mrb[0].mxu0
  %v2820 = vadd.f32 0.0, %v2819
  %v2821 = vpop.f32.mrb[0].mxu0
  %2822 = vdwg.mxu0
  %v2823 = vadd.f32 %v2584, %v2761
  %v2824 = vadd.f32 %v2587, %v2764
  %v2825 = vadd.f32 %v2592, %v2769
  %v2826 = vadd.f32 %v2595, %v2772
  %v2827 = vadd.f32 %v2600, %v2777
  %v2828 = vadd.f32 %v2603, %v2780
  %v2829 = vadd.f32 %v2608, %v2785
  %v2830 = vadd.f32 %v2611, %v2788
  %v2831 = vadd.f32 %v2616, %v2793
  %v2832 = vadd.f32 %v2619, %v2796
  %v2833 = vadd.f32 %v2624, %v2801
  %v2834 = vadd.f32 %v2627, %v2804
  %v2835 = vadd.f32 %v2632, %v2809
  %v2836 = vadd.f32 %v2635, %v2812
  %v2837 = vadd.f32 %v2640, %v2817
  %v2838 = vadd.f32 %v2643, %v2820
  %v2839 = vld [vmem:[#allocation2 + $0xf] sm:$0xff]
  %v2840 = vld [vmem:[#allocation2 + $0x17] sm:$0xff]
  %v2841 = vld [vmem:[#allocation2 + $0x1f] sm:$0xff]
  %v2842 = vld [vmem:[#allocation2 + $0x27] sm:$0xff]
  %v2843 = vld [vmem:[#allocation2 + $0x2f] sm:$0xff]
  %v2844 = vld [vmem:[#allocation2 + $0x37] sm:$0xff]
  %v2845 = vld [vmem:[#allocation2 + $0x3f] sm:$0xff]
  %v2846 = vld [vmem:[#allocation2 + $0x47] sm:$0xff]
  %v2847 = vld [vmem:[#allocation2 + $0x4f] sm:$0xff]
  %v2848 = vld [vmem:[#allocation2 + $0x57] sm:$0xff]
  %v2849 = vld [vmem:[#allocation2 + $0x5f] sm:$0xff]
  %v2850 = vld [vmem:[#allocation2 + $0x67] sm:$0xff]
  %v2851 = vld [vmem:[#allocation2 + $0x6f] sm:$0xff]
  %v2852 = vld [vmem:[#allocation2 + $0x77] sm:$0xff]
  %v2853 = vld [vmem:[#allocation2 + $0x7f] sm:$0xff]
  %v2854 = vld [vmem:[#allocation2 + $0x87] sm:$0xff]
  %v2855 = vpack.c.bf16 %v2840, %v2839
  %v2856 = vpack.c.bf16 %v2842, %v2841
  %v2857 = vpack.c.bf16 %v2844, %v2843
  %v2858 = vpack.c.bf16 %v2846, %v2845
  %v2859 = vpack.c.bf16 %v2848, %v2847
  %v2860 = vpack.c.bf16 %v2850, %v2849
  %v2861 = vpack.c.bf16 %v2852, %v2851
  %v2862 = vpack.c.bf16 %v2854, %v2853
  %v2863 = vld [vmem:[%s1 + $0x180] sm:$0xf]
  %v2864 = vld [vmem:[%s1 + $0x184] sm:$0xf]
  %v2865 = vld [vmem:[%s1 + $0x188] sm:$0xf]
  %v2866 = vld [vmem:[%s1 + $0x18c] sm:$0xf]
  %v2867 = vld [vmem:[%s1 + $0x190] sm:$0xf]
  %v2868 = vld [vmem:[%s1 + $0x194] sm:$0xf]
  %v2869 = vld [vmem:[%s1 + $0x198] sm:$0xf]
  %v2870 = vld [vmem:[%s1 + $0x19c] sm:$0xf]
  %v2879 = vunpack.c.l.b16 %v2863
  %v2880 = vunpack.c.l.b16 %v2864
  %v2881 = vunpack.c.l.b16 %v2865
  %v2882 = vunpack.c.l.b16 %v2866
  %v2883 = vunpack.c.l.b16 %v2867
  %v2884 = vunpack.c.l.b16 %v2868
  %v2885 = vunpack.c.l.b16 %v2869
  %v2886 = vunpack.c.l.b16 %v2870
  %v2887 = vpack.c.b16 %v2880, %v2879
  %v2888 = vpack.c.b16 %v2882, %v2881
  %v2889 = vpack.c.b16 %v2884, %v2883
  %v2890 = vpack.c.b16 %v2886, %v2885
  %v2896 = vsel %vm203, %v2855, 0
  %v2899 = vsel %vm203, %v2856, 0
  %v2902 = vsel %vm203, %v2857, 0
  %v2905 = vsel %vm203, %v2858, 0
  %v2908 = vsel %vm203, %v2859, 0
  %v2911 = vsel %vm203, %v2860, 0
  %v2914 = vsel %vm203, %v2861, 0
  %v2917 = vsel %vm203, %v2862, 0
  %2919 = vmatprep.subr.bf16.mxu0 0
  %2920 = vmatpush1.bf16.msra.mxu0 %v2887
  %2921 = vmatprep.subr.bf16.mxu0 0
  %2922 = vmatpush1.bf16.msra.mxu0 %v2888
  %2923 = vmatprep.subr.bf16.mxu0 0
  %2924 = vmatpush1.bf16.msra.mxu0 %v2889
  %2925 = vmatprep.subr.bf16.mxu0 0
  %2926 = vmatpush1.bf16.msra.mxu0 %v2890
  %2927 = vmatprep.subr.bf16.mxu0 0
  %2928 = vmatpush1.bf16.msra.mxu0 0
  %2929 = vmatprep.subr.bf16.mxu0 0
  %2930 = vmatpush1.bf16.msra.mxu0 0
  %2931 = vmatprep.subr.bf16.mxu0 0
  %2932 = vmatpush1.bf16.msra.mxu0 0
  %2933 = vmatprep.subr.bf16.mxu0 0
  %2934 = vmatpush1.bf16.msra.mxu0 0
  %2935 = vmatprep.subr.bf16.mxu0 0
  %2936 = vmatpush1.bf16.msra.mxu0 0
  %2937 = vmatprep.subr.bf16.mxu0 0
  %2938 = vmatpush1.bf16.msra.mxu0 0
  %2939 = vmatprep.subr.bf16.mxu0 0
  %2940 = vmatpush1.bf16.msra.mxu0 0
  %2941 = vmatprep.subr.bf16.mxu0 0
  %2942 = vmatpush1.bf16.msra.mxu0 0
  %2943 = vmatprep.subr.bf16.mxu0 0
  %2944 = vmatpush1.bf16.msra.mxu0 0
  %2945 = vmatprep.subr.bf16.mxu0 0
  %2946 = vmatpush1.bf16.msra.mxu0 0
  %2947 = vmatprep.subr.bf16.mxu0 0
  %2948 = vmatpush1.bf16.msra.mxu0 0
  %2949 = vmatprep.subr.bf16.mxu0 0
  %2950 = vmatpush1.bf16.msra.mxu0 0
  %2951 = vmatprep.mubr.bf16.mxu0 0
  %2952 = vmatmul.mubr.bf16.gmra.mrb[0].mxu0 %v2896
  %v2953 = vpop.f32.mrb[0].mxu0
  %v2954 = vadd.f32 0.0, %v2953
  %v2955 = vpop.f32.mrb[0].mxu0
  %v2956 = vpop.f32.mrb[0].mxu0
  %v2957 = vadd.f32 0.0, %v2956
  %v2958 = vpop.f32.mrb[0].mxu0
  %2959 = vmatprep.mubr.bf16.mxu0 0
  %2960 = vmatmul.mubr.bf16.gmra.mrb[0].mxu0 %v2899
  %v2961 = vpop.f32.mrb[0].mxu0
  %v2962 = vadd.f32 0.0, %v2961
  %v2963 = vpop.f32.mrb[0].mxu0
  %v2964 = vpop.f32.mrb[0].mxu0
  %v2965 = vadd.f32 0.0, %v2964
  %v2966 = vpop.f32.mrb[0].mxu0
  %2967 = vmatprep.mubr.bf16.mxu0 0
  %2968 = vmatmul.mubr.bf16.gmra.mrb[0].mxu0 %v2902
  %v2969 = vpop.f32.mrb[0].mxu0
  %v2970 = vadd.f32 0.0, %v2969
  %v2971 = vpop.f32.mrb[0].mxu0
  %v2972 = vpop.f32.mrb[0].mxu0
  %v2973 = vadd.f32 0.0, %v2972
  %v2974 = vpop.f32.mrb[0].mxu0
  %2975 = vmatprep.mubr.bf16.mxu0 0
  %2976 = vmatmul.mubr.bf16.gmra.mrb[0].mxu0 %v2905
  %v2977 = vpop.f32.mrb[0].mxu0
  %v2978 = vadd.f32 0.0, %v2977
  %v2979 = vpop.f32.mrb[0].mxu0
  %v2980 = vpop.f32.mrb[0].mxu0
  %v2981 = vadd.f32 0.0, %v2980
  %v2982 = vpop.f32.mrb[0].mxu0
  %2983 = vmatprep.mubr.bf16.mxu0 0
  %2984 = vmatmul.mubr.bf16.gmra.mrb[0].mxu0 %v2908
  %v2985 = vpop.f32.mrb[0].mxu0
  %v2986 = vadd.f32 0.0, %v2985
  %v2987 = vpop.f32.mrb[0].mxu0
  %v2988 = vpop.f32.mrb[0].mxu0
  %v2989 = vadd.f32 0.0, %v2988
  %v2990 = vpop.f32.mrb[0].mxu0
  %2991 = vmatprep.mubr.bf16.mxu0 0
  %2992 = vmatmul.mubr.bf16.gmra.mrb[0].mxu0 %v2911
  %v2993 = vpop.f32.mrb[0].mxu0
  %v2994 = vadd.f32 0.0, %v2993
  %v2995 = vpop.f32.mrb[0].mxu0
  %v2996 = vpop.f32.mrb[0].mxu0
  %v2997 = vadd.f32 0.0, %v2996
  %v2998 = vpop.f32.mrb[0].mxu0
  %2999 = vmatprep.mubr.bf16.mxu0 0
  %3000 = vmatmul.mubr.bf16.gmra.mrb[0].mxu0 %v2914
  %v3001 = vpop.f32.mrb[0].mxu0
  %v3002 = vadd.f32 0.0, %v3001
  %v3003 = vpop.f32.mrb[0].mxu0
  %v3004 = vpop.f32.mrb[0].mxu0
  %v3005 = vadd.f32 0.0, %v3004
  %v3006 = vpop.f32.mrb[0].mxu0
  %3007 = vmatprep.mubr.bf16.mxu0 0
  %3008 = vmatmul.mubr.bf16.gmra.mrb[0].mxu0 %v2917
  %v3009 = vpop.f32.mrb[0].mxu0
  %v3010 = vadd.f32 0.0, %v3009
  %v3011 = vpop.f32.mrb[0].mxu0
  %v3012 = vpop.f32.mrb[0].mxu0
  %v3013 = vadd.f32 0.0, %v3012
  %v3014 = vpop.f32.mrb[0].mxu0
  %3015 = vdwg.mxu0
  %v3016 = vadd.f32 %v2823, %v2954
  %v3017 = vadd.f32 %v2824, %v2957
  %v3018 = vadd.f32 %v2825, %v2962
  %v3019 = vadd.f32 %v2826, %v2965
  %v3020 = vadd.f32 %v2827, %v2970
  %v3021 = vadd.f32 %v2828, %v2973
  %v3022 = vadd.f32 %v2829, %v2978
  %v3023 = vadd.f32 %v2830, %v2981
  %v3024 = vadd.f32 %v2831, %v2986
  %v3025 = vadd.f32 %v2832, %v2989
  %v3026 = vadd.f32 %v2833, %v2994
  %v3027 = vadd.f32 %v2834, %v2997
  %v3028 = vadd.f32 %v2835, %v3002
  %v3029 = vadd.f32 %v2836, %v3005
  %v3030 = vadd.f32 %v2837, %v3010
  %v3031 = vadd.f32 %v2838, %v3013
  %v3032 = vld [vmem:[#allocation2 + $0x10] sm:$0xff]
  %v3033 = vld [vmem:[#allocation2 + $0x18] sm:$0xff]
  %v3034 = vld [vmem:[#allocation2 + $0x20] sm:$0xff]
  %v3035 = vld [vmem:[#allocation2 + $0x28] sm:$0xff]
  %v3036 = vld [vmem:[#allocation2 + $0x30] sm:$0xff]
  %v3037 = vld [vmem:[#allocation2 + $0x38] sm:$0xff]
  %v3038 = vld [vmem:[#allocation2 + $0x40] sm:$0xff]
  %v3039 = vld [vmem:[#allocation2 + $0x48] sm:$0xff]
  %v3040 = vld [vmem:[#allocation2 + $0x50] sm:$0xff]
  %v3041 = vld [vmem:[#allocation2 + $0x58] sm:$0xff]
  %v3042 = vld [vmem:[#allocation2 + $0x60] sm:$0xff]
  %v3043 = vld [vmem:[#allocation2 + $0x68] sm:$0xff]
  %v3044 = vld [vmem:[#allocation2 + $0x70] sm:$0xff]
  %v3045 = vld [vmem:[#allocation2 + $0x78] sm:$0xff]
  %v3046 = vld [vmem:[#allocation2 + $0x80] sm:$0xff]
  %v3047 = vld [vmem:[#allocation2 + $0x88] sm:$0xff]
  %v3048 = vpack.c.bf16 %v3033, %v3032
  %v3049 = vpack.c.bf16 %v3035, %v3034
  %v3050 = vpack.c.bf16 %v3037, %v3036
  %v3051 = vpack.c.bf16 %v3039, %v3038
  %v3052 = vpack.c.bf16 %v3041, %v3040
  %v3053 = vpack.c.bf16 %v3043, %v3042
  %v3054 = vpack.c.bf16 %v3045, %v3044
  %v3055 = vpack.c.bf16 %v3047, %v3046
  %v3056 = vld [vmem:[%s1 + $0x1a0] sm:$0xf]
  %v3057 = vld [vmem:[%s1 + $0x1a4] sm:$0xf]
  %v3058 = vld [vmem:[%s1 + $0x1a8] sm:$0xf]
  %v3059 = vld [vmem:[%s1 + $0x1ac] sm:$0xf]
  %v3060 = vld [vmem:[%s1 + $0x1b0] sm:$0xf]
  %v3061 = vld [vmem:[%s1 + $0x1b4] sm:$0xf]
  %v3062 = vld [vmem:[%s1 + $0x1b8] sm:$0xf]
  %v3063 = vld [vmem:[%s1 + $0x1bc] sm:$0xf]
  %v3072 = vunpack.c.l.b16 %v3056
  %v3073 = vunpack.c.l.b16 %v3057
  %v3074 = vunpack.c.l.b16 %v3058
  %v3075 = vunpack.c.l.b16 %v3059
  %v3076 = vunpack.c.l.b16 %v3060
  %v3077 = vunpack.c.l.b16 %v3061
  %v3078 = vunpack.c.l.b16 %v3062
  %v3079 = vunpack.c.l.b16 %v3063
  %v3080 = vpack.c.b16 %v3073, %v3072
  %v3081 = vpack.c.b16 %v3075, %v3074
  %v3082 = vpack.c.b16 %v3077, %v3076
  %v3083 = vpack.c.b16 %v3079, %v3078
  %v3089 = vsel %vm203, %v3048, 0
  %v3092 = vsel %vm203, %v3049, 0
  %v3095 = vsel %vm203, %v3050, 0
  %v3098 = vsel %vm203, %v3051, 0
  %v3101 = vsel %vm203, %v3052, 0
  %v3104 = vsel %vm203, %v3053, 0
  %v3107 = vsel %vm203, %v3054, 0
  %v3110 = vsel %vm203, %v3055, 0
  %3112 = vmatprep.subr.bf16.mxu0 0
  %3113 = vmatpush1.bf16.msra.mxu0 %v3080
  %3114 = vmatprep.subr.bf16.mxu0 0
  %3115 = vmatpush1.bf16.msra.mxu0 %v3081
  %3116 = vmatprep.subr.bf16.mxu0 0
  %3117 = vmatpush1.bf16.msra.mxu0 %v3082
  %3118 = vmatprep.subr.bf16.mxu0 0
  %3119 = vmatpush1.bf16.msra.mxu0 %v3083
  %3120 = vmatprep.subr.bf16.mxu0 0
  %3121 = vmatpush1.bf16.msra.mxu0 0
  %3122 = vmatprep.subr.bf16.mxu0 0
  %3123 = vmatpush1.bf16.msra.mxu0 0
  %3124 = vmatprep.subr.bf16.mxu0 0
  %3125 = vmatpush1.bf16.msra.mxu0 0
  %3126 = vmatprep.subr.bf16.mxu0 0
  %3127 = vmatpush1.bf16.msra.mxu0 0
  %3128 = vmatprep.subr.bf16.mxu0 0
  %3129 = vmatpush1.bf16.msra.mxu0 0
  %3130 = vmatprep.subr.bf16.mxu0 0
  %3131 = vmatpush1.bf16.msra.mxu0 0
  %3132 = vmatprep.subr.bf16.mxu0 0
  %3133 = vmatpush1.bf16.msra.mxu0 0
  %3134 = vmatprep.subr.bf16.mxu0 0
  %3135 = vmatpush1.bf16.msra.mxu0 0
  %3136 = vmatprep.subr.bf16.mxu0 0
  %3137 = vmatpush1.bf16.msra.mxu0 0
  %3138 = vmatprep.subr.bf16.mxu0 0
  %3139 = vmatpush1.bf16.msra.mxu0 0
  %3140 = vmatprep.subr.bf16.mxu0 0
  %3141 = vmatpush1.bf16.msra.mxu0 0
  %3142 = vmatprep.subr.bf16.mxu0 0
  %3143 = vmatpush1.bf16.msra.mxu0 0
  %3144 = vmatprep.mubr.bf16.mxu0 0
  %3145 = vmatmul.mubr.bf16.gmra.mrb[0].mxu0 %v3089
  %v3146 = vpop.f32.mrb[0].mxu0
  %v3147 = vadd.f32 0.0, %v3146
  %v3148 = vpop.f32.mrb[0].mxu0
  %v3149 = vpop.f32.mrb[0].mxu0
  %v3150 = vadd.f32 0.0, %v3149
  %v3151 = vpop.f32.mrb[0].mxu0
  %3152 = vmatprep.mubr.bf16.mxu0 0
  %3153 = vmatmul.mubr.bf16.gmra.mrb[0].mxu0 %v3092
  %v3154 = vpop.f32.mrb[0].mxu0
  %v3155 = vadd.f32 0.0, %v3154
  %v3156 = vpop.f32.mrb[0].mxu0
  %v3157 = vpop.f32.mrb[0].mxu0
  %v3158 = vadd.f32 0.0, %v3157
  %v3159 = vpop.f32.mrb[0].mxu0
  %3160 = vmatprep.mubr.bf16.mxu0 0
  %3161 = vmatmul.mubr.bf16.gmra.mrb[0].mxu0 %v3095
  %v3162 = vpop.f32.mrb[0].mxu0
  %v3163 = vadd.f32 0.0, %v3162
  %v3164 = vpop.f32.mrb[0].mxu0
  %v3165 = vpop.f32.mrb[0].mxu0
  %v3166 = vadd.f32 0.0, %v3165
  %v3167 = vpop.f32.mrb[0].mxu0
  %3168 = vmatprep.mubr.bf16.mxu0 0
  %3169 = vmatmul.mubr.bf16.gmra.mrb[0].mxu0 %v3098
  %v3170 = vpop.f32.mrb[0].mxu0
  %v3171 = vadd.f32 0.0, %v3170
  %v3172 = vpop.f32.mrb[0].mxu0
  %v3173 = vpop.f32.mrb[0].mxu0
  %v3174 = vadd.f32 0.0, %v3173
  %v3175 = vpop.f32.mrb[0].mxu0
  %3176 = vmatprep.mubr.bf16.mxu0 0
  %3177 = vmatmul.mubr.bf16.gmra.mrb[0].mxu0 %v3101
  %v3178 = vpop.f32.mrb[0].mxu0
  %v3179 = vadd.f32 0.0, %v3178
  %v3180 = vpop.f32.mrb[0].mxu0
  %v3181 = vpop.f32.mrb[0].mxu0
  %v3182 = vadd.f32 0.0, %v3181
  %v3183 = vpop.f32.mrb[0].mxu0
  %3184 = vmatprep.mubr.bf16.mxu0 0
  %3185 = vmatmul.mubr.bf16.gmra.mrb[0].mxu0 %v3104
  %v3186 = vpop.f32.mrb[0].mxu0
  %v3187 = vadd.f32 0.0, %v3186
  %v3188 = vpop.f32.mrb[0].mxu0
  %v3189 = vpop.f32.mrb[0].mxu0
  %v3190 = vadd.f32 0.0, %v3189
  %v3191 = vpop.f32.mrb[0].mxu0
  %3192 = vmatprep.mubr.bf16.mxu0 0
  %3193 = vmatmul.mubr.bf16.gmra.mrb[0].mxu0 %v3107
  %v3194 = vpop.f32.mrb[0].mxu0
  %v3195 = vadd.f32 0.0, %v3194
  %v3196 = vpop.f32.mrb[0].mxu0
  %v3197 = vpop.f32.mrb[0].mxu0
  %v3198 = vadd.f32 0.0, %v3197
  %v3199 = vpop.f32.mrb[0].mxu0
  %3200 = vmatprep.mubr.bf16.mxu0 0
  %3201 = vmatmul.mubr.bf16.gmra.mrb[0].mxu0 %v3110
  %v3202 = vpop.f32.mrb[0].mxu0
  %v3203 = vadd.f32 0.0, %v3202
  %v3204 = vpop.f32.mrb[0].mxu0
  %v3205 = vpop.f32.mrb[0].mxu0
  %v3206 = vadd.f32 0.0, %v3205
  %v3207 = vpop.f32.mrb[0].mxu0
  %3208 = vdwg.mxu0
  %v3209 = vadd.f32 %v3016, %v3147
  %v3210 = vadd.f32 %v3017, %v3150
  %v3211 = vadd.f32 %v3018, %v3155
  %v3212 = vadd.f32 %v3019, %v3158
  %v3213 = vadd.f32 %v3020, %v3163
  %v3214 = vadd.f32 %v3021, %v3166
  %v3215 = vadd.f32 %v3022, %v3171
  %v3216 = vadd.f32 %v3023, %v3174
  %v3217 = vadd.f32 %v3024, %v3179
  %v3218 = vadd.f32 %v3025, %v3182
  %v3219 = vadd.f32 %v3026, %v3187
  %v3220 = vadd.f32 %v3027, %v3190
  %v3221 = vadd.f32 %v3028, %v3195
  %v3222 = vadd.f32 %v3029, %v3198
  %v3223 = vadd.f32 %v3030, %v3203
  %v3224 = vadd.f32 %v3031, %v3206
  %v3225 = vld [vmem:[#allocation2 + $0x11] sm:$0xff]
  %v3226 = vld [vmem:[#allocation2 + $0x19] sm:$0xff]
  %v3227 = vld [vmem:[#allocation2 + $0x21] sm:$0xff]
  %v3228 = vld [vmem:[#allocation2 + $0x29] sm:$0xff]
  %v3229 = vld [vmem:[#allocation2 + $0x31] sm:$0xff]
  %v3230 = vld [vmem:[#allocation2 + $0x39] sm:$0xff]
  %v3231 = vld [vmem:[#allocation2 + $0x41] sm:$0xff]
  %v3232 = vld [vmem:[#allocation2 + $0x49] sm:$0xff]
  %v3233 = vld [vmem:[#allocation2 + $0x51] sm:$0xff]
  %v3234 = vld [vmem:[#allocation2 + $0x59] sm:$0xff]
  %v3235 = vld [vmem:[#allocation2 + $0x61] sm:$0xff]
  %v3236 = vld [vmem:[#allocation2 + $0x69] sm:$0xff]
  %v3237 = vld [vmem:[#allocation2 + $0x71] sm:$0xff]
  %v3238 = vld [vmem:[#allocation2 + $0x79] sm:$0xff]
  %v3239 = vld [vmem:[#allocation2 + $0x81] sm:$0xff]
  %v3240 = vld [vmem:[#allocation2 + $0x89] sm:$0xff]
  %v3241 = vpack.c.bf16 %v3226, %v3225
  %v3242 = vpack.c.bf16 %v3228, %v3227
  %v3243 = vpack.c.bf16 %v3230, %v3229
  %v3244 = vpack.c.bf16 %v3232, %v3231
  %v3245 = vpack.c.bf16 %v3234, %v3233
  %v3246 = vpack.c.bf16 %v3236, %v3235
  %v3247 = vpack.c.bf16 %v3238, %v3237
  %v3248 = vpack.c.bf16 %v3240, %v3239
  %v3249 = vld [vmem:[%s1 + $0x1c0] sm:$0xf]
  %v3250 = vld [vmem:[%s1 + $0x1c4] sm:$0xf]
  %v3251 = vld [vmem:[%s1 + $0x1c8] sm:$0xf]
  %v3252 = vld [vmem:[%s1 + $0x1cc] sm:$0xf]
  %v3253 = vld [vmem:[%s1 + $0x1d0] sm:$0xf]
  %v3254 = vld [vmem:[%s1 + $0x1d4] sm:$0xf]
  %v3255 = vld [vmem:[%s1 + $0x1d8] sm:$0xf]
  %v3256 = vld [vmem:[%s1 + $0x1dc] sm:$0xf]
  %v3265 = vunpack.c.l.b16 %v3249
  %v3266 = vunpack.c.l.b16 %v3250
  %v3267 = vunpack.c.l.b16 %v3251
  %v3268 = vunpack.c.l.b16 %v3252
  %v3269 = vunpack.c.l.b16 %v3253
  %v3270 = vunpack.c.l.b16 %v3254
  %v3271 = vunpack.c.l.b16 %v3255
  %v3272 = vunpack.c.l.b16 %v3256
  %v3273 = vpack.c.b16 %v3266, %v3265
  %v3274 = vpack.c.b16 %v3268, %v3267
  %v3275 = vpack.c.b16 %v3270, %v3269
  %v3276 = vpack.c.b16 %v3272, %v3271
  %v3282 = vsel %vm203, %v3241, 0
  %v3285 = vsel %vm203, %v3242, 0
  %v3288 = vsel %vm203, %v3243, 0
  %v3291 = vsel %vm203, %v3244, 0
  %v3294 = vsel %vm203, %v3245, 0
  %v3297 = vsel %vm203, %v3246, 0
  %v3300 = vsel %vm203, %v3247, 0
  %v3303 = vsel %vm203, %v3248, 0
  %3305 = vmatprep.subr.bf16.mxu0 0
  %3306 = vmatpush1.bf16.msra.mxu0 %v3273
  %3307 = vmatprep.subr.bf16.mxu0 0
  %3308 = vmatpush1.bf16.msra.mxu0 %v3274
  %3309 = vmatprep.subr.bf16.mxu0 0
  %3310 = vmatpush1.bf16.msra.mxu0 %v3275
  %3311 = vmatprep.subr.bf16.mxu0 0
  %3312 = vmatpush1.bf16.msra.mxu0 %v3276
  %3313 = vmatprep.subr.bf16.mxu0 0
  %3314 = vmatpush1.bf16.msra.mxu0 0
  %3315 = vmatprep.subr.bf16.mxu0 0
  %3316 = vmatpush1.bf16.msra.mxu0 0
  %3317 = vmatprep.subr.bf16.mxu0 0
  %3318 = vmatpush1.bf16.msra.mxu0 0
  %3319 = vmatprep.subr.bf16.mxu0 0
  %3320 = vmatpush1.bf16.msra.mxu0 0
  %3321 = vmatprep.subr.bf16.mxu0 0
  %3322 = vmatpush1.bf16.msra.mxu0 0
  %3323 = vmatprep.subr.bf16.mxu0 0
  %3324 = vmatpush1.bf16.msra.mxu0 0
  %3325 = vmatprep.subr.bf16.mxu0 0
  %3326 = vmatpush1.bf16.msra.mxu0 0
  %3327 = vmatprep.subr.bf16.mxu0 0
  %3328 = vmatpush1.bf16.msra.mxu0 0
  %3329 = vmatprep.subr.bf16.mxu0 0
  %3330 = vmatpush1.bf16.msra.mxu0 0
  %3331 = vmatprep.subr.bf16.mxu0 0
  %3332 = vmatpush1.bf16.msra.mxu0 0
  %3333 = vmatprep.subr.bf16.mxu0 0
  %3334 = vmatpush1.bf16.msra.mxu0 0
  %3335 = vmatprep.subr.bf16.mxu0 0
  %3336 = vmatpush1.bf16.msra.mxu0 0
  %3337 = vmatprep.mubr.bf16.mxu0 0
  %3338 = vmatmul.mubr.bf16.gmra.mrb[0].mxu0 %v3282
  %v3339 = vpop.f32.mrb[0].mxu0
  %v3340 = vadd.f32 0.0, %v3339
  %v3341 = vpop.f32.mrb[0].mxu0
  %v3342 = vpop.f32.mrb[0].mxu0
  %v3343 = vadd.f32 0.0, %v3342
  %v3344 = vpop.f32.mrb[0].mxu0
  %3345 = vmatprep.mubr.bf16.mxu0 0
  %3346 = vmatmul.mubr.bf16.gmra.mrb[0].mxu0 %v3285
  %v3347 = vpop.f32.mrb[0].mxu0
  %v3348 = vadd.f32 0.0, %v3347
  %v3349 = vpop.f32.mrb[0].mxu0
  %v3350 = vpop.f32.mrb[0].mxu0
  %v3351 = vadd.f32 0.0, %v3350
  %v3352 = vpop.f32.mrb[0].mxu0
  %3353 = vmatprep.mubr.bf16.mxu0 0
  %3354 = vmatmul.mubr.bf16.gmra.mrb[0].mxu0 %v3288
  %v3355 = vpop.f32.mrb[0].mxu0
  %v3356 = vadd.f32 0.0, %v3355
  %v3357 = vpop.f32.mrb[0].mxu0
  %v3358 = vpop.f32.mrb[0].mxu0
  %v3359 = vadd.f32 0.0, %v3358
  %v3360 = vpop.f32.mrb[0].mxu0
  %3361 = vmatprep.mubr.bf16.mxu0 0
  %3362 = vmatmul.mubr.bf16.gmra.mrb[0].mxu0 %v3291
  %v3363 = vpop.f32.mrb[0].mxu0
  %v3364 = vadd.f32 0.0, %v3363
  %v3365 = vpop.f32.mrb[0].mxu0
  %v3366 = vpop.f32.mrb[0].mxu0
  %v3367 = vadd.f32 0.0, %v3366
  %v3368 = vpop.f32.mrb[0].mxu0
  %3369 = vmatprep.mubr.bf16.mxu0 0
  %3370 = vmatmul.mubr.bf16.gmra.mrb[0].mxu0 %v3294
  %v3371 = vpop.f32.mrb[0].mxu0
  %v3372 = vadd.f32 0.0, %v3371
  %v3373 = vpop.f32.mrb[0].mxu0
  %v3374 = vpop.f32.mrb[0].mxu0
  %v3375 = vadd.f32 0.0, %v3374
  %v3376 = vpop.f32.mrb[0].mxu0
  %3377 = vmatprep.mubr.bf16.mxu0 0
  %3378 = vmatmul.mubr.bf16.gmra.mrb[0].mxu0 %v3297
  %v3379 = vpop.f32.mrb[0].mxu0
  %v3380 = vadd.f32 0.0, %v3379
  %v3381 = vpop.f32.mrb[0].mxu0
  %v3382 = vpop.f32.mrb[0].mxu0
  %v3383 = vadd.f32 0.0, %v3382
  %v3384 = vpop.f32.mrb[0].mxu0
  %3385 = vmatprep.mubr.bf16.mxu0 0
  %3386 = vmatmul.mubr.bf16.gmra.mrb[0].mxu0 %v3300
  %v3387 = vpop.f32.mrb[0].mxu0
  %v3388 = vadd.f32 0.0, %v3387
  %v3389 = vpop.f32.mrb[0].mxu0
  %v3390 = vpop.f32.mrb[0].mxu0
  %v3391 = vadd.f32 0.0, %v3390
  %v3392 = vpop.f32.mrb[0].mxu0
  %3393 = vmatprep.mubr.bf16.mxu0 0
  %3394 = vmatmul.mubr.bf16.gmra.mrb[0].mxu0 %v3303
  %v3395 = vpop.f32.mrb[0].mxu0
  %v3396 = vadd.f32 0.0, %v3395
  %v3397 = vpop.f32.mrb[0].mxu0
  %v3398 = vpop.f32.mrb[0].mxu0
  %v3399 = vadd.f32 0.0, %v3398
  %v3400 = vpop.f32.mrb[0].mxu0
  %3401 = vdwg.mxu0
  %v3402 = vadd.f32 %v3209, %v3340
  %v3403 = vadd.f32 %v3210, %v3343
  %v3404 = vadd.f32 %v3211, %v3348
  %v3405 = vadd.f32 %v3212, %v3351
  %v3406 = vadd.f32 %v3213, %v3356
  %v3407 = vadd.f32 %v3214, %v3359
  %v3408 = vadd.f32 %v3215, %v3364
  %v3409 = vadd.f32 %v3216, %v3367
  %v3410 = vadd.f32 %v3217, %v3372
  %v3411 = vadd.f32 %v3218, %v3375
  %v3412 = vadd.f32 %v3219, %v3380
  %v3413 = vadd.f32 %v3220, %v3383
  %v3414 = vadd.f32 %v3221, %v3388
  %v3415 = vadd.f32 %v3222, %v3391
  %v3416 = vadd.f32 %v3223, %v3396
  %v3417 = vadd.f32 %v3224, %v3399
  %v3418 = vld [vmem:[#allocation2 + $0x17] sm:$0xff]
  %v3419 = vld [vmem:[#allocation2 + $0x1f] sm:$0xff]
  %v3420 = vld [vmem:[#allocation2 + $0x27] sm:$0xff]
  %v3421 = vld [vmem:[#allocation2 + $0x2f] sm:$0xff]
  %v3422 = vld [vmem:[#allocation2 + $0x37] sm:$0xff]
  %v3423 = vld [vmem:[#allocation2 + $0x3f] sm:$0xff]
  %v3424 = vld [vmem:[#allocation2 + $0x47] sm:$0xff]
  %v3425 = vld [vmem:[#allocation2 + $0x4f] sm:$0xff]
  %v3426 = vld [vmem:[#allocation2 + $0x57] sm:$0xff]
  %v3427 = vld [vmem:[#allocation2 + $0x5f] sm:$0xff]
  %v3428 = vld [vmem:[#allocation2 + $0x67] sm:$0xff]
  %v3429 = vld [vmem:[#allocation2 + $0x6f] sm:$0xff]
  %v3430 = vld [vmem:[#allocation2 + $0x77] sm:$0xff]
  %v3431 = vld [vmem:[#allocation2 + $0x7f] sm:$0xff]
  %v3432 = vld [vmem:[#allocation2 + $0x87] sm:$0xff]
  %v3433 = vld [vmem:[#allocation2 + $0x8f] sm:$0xff]
  %v3434 = vpack.c.bf16 %v3419, %v3418
  %v3435 = vpack.c.bf16 %v3421, %v3420
  %v3436 = vpack.c.bf16 %v3423, %v3422
  %v3437 = vpack.c.bf16 %v3425, %v3424
  %v3438 = vpack.c.bf16 %v3427, %v3426
  %v3439 = vpack.c.bf16 %v3429, %v3428
  %v3440 = vpack.c.bf16 %v3431, %v3430
  %v3441 = vpack.c.bf16 %v3433, %v3432
  %v3442 = vld [vmem:[%s1 + $0x1e0] sm:$0xf]
  %v3443 = vld [vmem:[%s1 + $0x1e4] sm:$0xf]
  %v3444 = vld [vmem:[%s1 + $0x1e8] sm:$0xf]
  %v3445 = vld [vmem:[%s1 + $0x1ec] sm:$0xf]
  %v3446 = vld [vmem:[%s1 + $0x1f0] sm:$0xf]
  %v3447 = vld [vmem:[%s1 + $0x1f4] sm:$0xf]
  %v3448 = vld [vmem:[%s1 + $0x1f8] sm:$0xf]
  %v3449 = vld [vmem:[%s1 + $0x1fc] sm:$0xf]
  %v3458 = vunpack.c.l.b16 %v3442
  %v3459 = vunpack.c.l.b16 %v3443
  %v3460 = vunpack.c.l.b16 %v3444
  %v3461 = vunpack.c.l.b16 %v3445
  %v3462 = vunpack.c.l.b16 %v3446
  %v3463 = vunpack.c.l.b16 %v3447
  %v3464 = vunpack.c.l.b16 %v3448
  %v3465 = vunpack.c.l.b16 %v3449
  %v3466 = vpack.c.b16 %v3459, %v3458
  %v3467 = vpack.c.b16 %v3461, %v3460
  %v3468 = vpack.c.b16 %v3463, %v3462
  %v3469 = vpack.c.b16 %v3465, %v3464
  %v3475 = vsel %vm203, %v3434, 0
  %v3478 = vsel %vm203, %v3435, 0
  %v3481 = vsel %vm203, %v3436, 0
  %v3484 = vsel %vm203, %v3437, 0
  %v3487 = vsel %vm203, %v3438, 0
  %v3490 = vsel %vm203, %v3439, 0
  %v3493 = vsel %vm203, %v3440, 0
  %v3496 = vsel %vm203, %v3441, 0
  %3498 = vmatprep.subr.bf16.mxu0 0
  %3499 = vmatpush1.bf16.msra.mxu0 %v3466
  %3500 = vmatprep.subr.bf16.mxu0 0
  %3501 = vmatpush1.bf16.msra.mxu0 %v3467
  %3502 = vmatprep.subr.bf16.mxu0 0
  %3503 = vmatpush1.bf16.msra.mxu0 %v3468
  %3504 = vmatprep.subr.bf16.mxu0 0
  %3505 = vmatpush1.bf16.msra.mxu0 %v3469
  %3506 = vmatprep.subr.bf16.mxu0 0
  %3507 = vmatpush1.bf16.msra.mxu0 0
  %3508 = vmatprep.subr.bf16.mxu0 0
  %3509 = vmatpush1.bf16.msra.mxu0 0
  %3510 = vmatprep.subr.bf16.mxu0 0
  %3511 = vmatpush1.bf16.msra.mxu0 0
  %3512 = vmatprep.subr.bf16.mxu0 0
  %3513 = vmatpush1.bf16.msra.mxu0 0
  %3514 = vmatprep.subr.bf16.mxu0 0
  %3515 = vmatpush1.bf16.msra.mxu0 0
  %3516 = vmatprep.subr.bf16.mxu0 0
  %3517 = vmatpush1.bf16.msra.mxu0 0
  %3518 = vmatprep.subr.bf16.mxu0 0
  %3519 = vmatpush1.bf16.msra.mxu0 0
  %3520 = vmatprep.subr.bf16.mxu0 0
  %3521 = vmatpush1.bf16.msra.mxu0 0
  %3522 = vmatprep.subr.bf16.mxu0 0
  %3523 = vmatpush1.bf16.msra.mxu0 0
  %3524 = vmatprep.subr.bf16.mxu0 0
  %3525 = vmatpush1.bf16.msra.mxu0 0
  %3526 = vmatprep.subr.bf16.mxu0 0
  %3527 = vmatpush1.bf16.msra.mxu0 0
  %3528 = vmatprep.subr.bf16.mxu0 0
  %3529 = vmatpush1.bf16.msra.mxu0 0
  %3530 = vmatprep.mubr.bf16.mxu0 0
  %3531 = vmatmul.mubr.bf16.gmra.mrb[0].mxu0 %v3475
  %v3532 = vpop.f32.mrb[0].mxu0
  %v3533 = vadd.f32 0.0, %v3532
  %v3534 = vpop.f32.mrb[0].mxu0
  %v3535 = vpop.f32.mrb[0].mxu0
  %v3536 = vadd.f32 0.0, %v3535
  %v3537 = vpop.f32.mrb[0].mxu0
  %3538 = vmatprep.mubr.bf16.mxu0 0
  %3539 = vmatmul.mubr.bf16.gmra.mrb[0].mxu0 %v3478
  %v3540 = vpop.f32.mrb[0].mxu0
  %v3541 = vadd.f32 0.0, %v3540
  %v3542 = vpop.f32.mrb[0].mxu0
  %v3543 = vpop.f32.mrb[0].mxu0
  %v3544 = vadd.f32 0.0, %v3543
  %v3545 = vpop.f32.mrb[0].mxu0
  %3546 = vmatprep.mubr.bf16.mxu0 0
  %3547 = vmatmul.mubr.bf16.gmra.mrb[0].mxu0 %v3481
  %v3548 = vpop.f32.mrb[0].mxu0
  %v3549 = vadd.f32 0.0, %v3548
  %v3550 = vpop.f32.mrb[0].mxu0
  %v3551 = vpop.f32.mrb[0].mxu0
  %v3552 = vadd.f32 0.0, %v3551
  %v3553 = vpop.f32.mrb[0].mxu0
  %3554 = vmatprep.mubr.bf16.mxu0 0
  %3555 = vmatmul.mubr.bf16.gmra.mrb[0].mxu0 %v3484
  %v3556 = vpop.f32.mrb[0].mxu0
  %v3557 = vadd.f32 0.0, %v3556
  %v3558 = vpop.f32.mrb[0].mxu0
  %v3559 = vpop.f32.mrb[0].mxu0
  %v3560 = vadd.f32 0.0, %v3559
  %v3561 = vpop.f32.mrb[0].mxu0
  %3562 = vmatprep.mubr.bf16.mxu0 0
  %3563 = vmatmul.mubr.bf16.gmra.mrb[0].mxu0 %v3487
  %v3564 = vpop.f32.mrb[0].mxu0
  %v3565 = vadd.f32 0.0, %v3564
  %v3566 = vpop.f32.mrb[0].mxu0
  %v3567 = vpop.f32.mrb[0].mxu0
  %v3568 = vadd.f32 0.0, %v3567
  %v3569 = vpop.f32.mrb[0].mxu0
  %3570 = vmatprep.mubr.bf16.mxu0 0
  %3571 = vmatmul.mubr.bf16.gmra.mrb[0].mxu0 %v3490
  %v3572 = vpop.f32.mrb[0].mxu0
  %v3573 = vadd.f32 0.0, %v3572
  %v3574 = vpop.f32.mrb[0].mxu0
  %v3575 = vpop.f32.mrb[0].mxu0
  %v3576 = vadd.f32 0.0, %v3575
  %v3577 = vpop.f32.mrb[0].mxu0
  %3578 = vmatprep.mubr.bf16.mxu0 0
  %3579 = vmatmul.mubr.bf16.gmra.mrb[0].mxu0 %v3493
  %v3580 = vpop.f32.mrb[0].mxu0
  %v3581 = vadd.f32 0.0, %v3580
  %v3582 = vpop.f32.mrb[0].mxu0
  %v3583 = vpop.f32.mrb[0].mxu0
  %v3584 = vadd.f32 0.0, %v3583
  %v3585 = vpop.f32.mrb[0].mxu0
  %3586 = vmatprep.mubr.bf16.mxu0 0
  %3587 = vmatmul.mubr.bf16.gmra.mrb[0].mxu0 %v3496
  %v3588 = vpop.f32.mrb[0].mxu0
  %v3589 = vadd.f32 0.0, %v3588
  %v3590 = vpop.f32.mrb[0].mxu0
  %v3591 = vpop.f32.mrb[0].mxu0
  %v3592 = vadd.f32 0.0, %v3591
  %v3593 = vpop.f32.mrb[0].mxu0
  %3594 = vdwg.mxu0
  %v3595 = vadd.f32 %v3402, %v3533
  %v3596 = vadd.f32 %v3403, %v3536
  %v3597 = vadd.f32 %v3404, %v3541
  %v3598 = vadd.f32 %v3405, %v3544
  %v3599 = vadd.f32 %v3406, %v3549
  %v3600 = vadd.f32 %v3407, %v3552
  %v3601 = vadd.f32 %v3408, %v3557
  %v3602 = vadd.f32 %v3409, %v3560
  %v3603 = vadd.f32 %v3410, %v3565
  %v3604 = vadd.f32 %v3411, %v3568
  %v3605 = vadd.f32 %v3412, %v3573
  %v3606 = vadd.f32 %v3413, %v3576
  %v3607 = vadd.f32 %v3414, %v3581
  %v3608 = vadd.f32 %v3415, %v3584
  %v3609 = vadd.f32 %v3416, %v3589
  %v3610 = vadd.f32 %v3417, %v3592
  %v3611 = vld [vmem:[#allocation2 + $0x18] sm:$0xff]
  %v3612 = vld [vmem:[#allocation2 + $0x20] sm:$0xff]
  %v3613 = vld [vmem:[#allocation2 + $0x28] sm:$0xff]
  %v3614 = vld [vmem:[#allocation2 + $0x30] sm:$0xff]
  %v3615 = vld [vmem:[#allocation2 + $0x38] sm:$0xff]
  %v3616 = vld [vmem:[#allocation2 + $0x40] sm:$0xff]
  %v3617 = vld [vmem:[#allocation2 + $0x48] sm:$0xff]
  %v3618 = vld [vmem:[#allocation2 + $0x50] sm:$0xff]
  %v3619 = vld [vmem:[#allocation2 + $0x58] sm:$0xff]
  %v3620 = vld [vmem:[#allocation2 + $0x60] sm:$0xff]
  %v3621 = vld [vmem:[#allocation2 + $0x68] sm:$0xff]
  %v3622 = vld [vmem:[#allocation2 + $0x70] sm:$0xff]
  %v3623 = vld [vmem:[#allocation2 + $0x78] sm:$0xff]
  %v3624 = vld [vmem:[#allocation2 + $0x80] sm:$0xff]
  %v3625 = vld [vmem:[#allocation2 + $0x88] sm:$0xff]
  %v3626 = vld [vmem:[#allocation2 + $0x90] sm:$0xff]
  %v3627 = vpack.c.bf16 %v3612, %v3611
  %v3628 = vpack.c.bf16 %v3614, %v3613
  %v3629 = vpack.c.bf16 %v3616, %v3615
  %v3630 = vpack.c.bf16 %v3618, %v3617
  %v3631 = vpack.c.bf16 %v3620, %v3619
  %v3632 = vpack.c.bf16 %v3622, %v3621
  %v3633 = vpack.c.bf16 %v3624, %v3623
  %v3634 = vpack.c.bf16 %v3626, %v3625
  %v3635 = vld [vmem:[%s1 + $0x200] sm:$0xf]
  %v3636 = vld [vmem:[%s1 + $0x204] sm:$0xf]
  %v3637 = vld [vmem:[%s1 + $0x208] sm:$0xf]
  %v3638 = vld [vmem:[%s1 + $0x20c] sm:$0xf]
  %v3639 = vld [vmem:[%s1 + $0x210] sm:$0xf]
  %v3640 = vld [vmem:[%s1 + $0x214] sm:$0xf]
  %v3641 = vld [vmem:[%s1 + $0x218] sm:$0xf]
  %v3642 = vld [vmem:[%s1 + $0x21c] sm:$0xf]
  %v3651 = vunpack.c.l.b16 %v3635
  %v3652 = vunpack.c.l.b16 %v3636
  %v3653 = vunpack.c.l.b16 %v3637
  %v3654 = vunpack.c.l.b16 %v3638
  %v3655 = vunpack.c.l.b16 %v3639
  %v3656 = vunpack.c.l.b16 %v3640
  %v3657 = vunpack.c.l.b16 %v3641
  %v3658 = vunpack.c.l.b16 %v3642
  %v3659 = vpack.c.b16 %v3652, %v3651
  %v3660 = vpack.c.b16 %v3654, %v3653
  %v3661 = vpack.c.b16 %v3656, %v3655
  %v3662 = vpack.c.b16 %v3658, %v3657
  %v3668 = vsel %vm203, %v3627, 0
  %v3671 = vsel %vm203, %v3628, 0
  %v3674 = vsel %vm203, %v3629, 0
  %v3677 = vsel %vm203, %v3630, 0
  %v3680 = vsel %vm203, %v3631, 0
  %v3683 = vsel %vm203, %v3632, 0
  %v3686 = vsel %vm203, %v3633, 0
  %v3689 = vsel %vm203, %v3634, 0
  %3691 = vmatprep.subr.bf16.mxu0 0
  %3692 = vmatpush1.bf16.msra.mxu0 %v3659
  %3693 = vmatprep.subr.bf16.mxu0 0
  %3694 = vmatpush1.bf16.msra.mxu0 %v3660
  %3695 = vmatprep.subr.bf16.mxu0 0
  %3696 = vmatpush1.bf16.msra.mxu0 %v3661
  %3697 = vmatprep.subr.bf16.mxu0 0
  %3698 = vmatpush1.bf16.msra.mxu0 %v3662
  %3699 = vmatprep.subr.bf16.mxu0 0
  %3700 = vmatpush1.bf16.msra.mxu0 0
  %3701 = vmatprep.subr.bf16.mxu0 0
  %3702 = vmatpush1.bf16.msra.mxu0 0
  %3703 = vmatprep.subr.bf16.mxu0 0
  %3704 = vmatpush1.bf16.msra.mxu0 0
  %3705 = vmatprep.subr.bf16.mxu0 0
  %3706 = vmatpush1.bf16.msra.mxu0 0
  %3707 = vmatprep.subr.bf16.mxu0 0
  %3708 = vmatpush1.bf16.msra.mxu0 0
  %3709 = vmatprep.subr.bf16.mxu0 0
  %3710 = vmatpush1.bf16.msra.mxu0 0
  %3711 = vmatprep.subr.bf16.mxu0 0
  %3712 = vmatpush1.bf16.msra.mxu0 0
  %3713 = vmatprep.subr.bf16.mxu0 0
  %3714 = vmatpush1.bf16.msra.mxu0 0
  %3715 = vmatprep.subr.bf16.mxu0 0
  %3716 = vmatpush1.bf16.msra.mxu0 0
  %3717 = vmatprep.subr.bf16.mxu0 0
  %3718 = vmatpush1.bf16.msra.mxu0 0
  %3719 = vmatprep.subr.bf16.mxu0 0
  %3720 = vmatpush1.bf16.msra.mxu0 0
  %3721 = vmatprep.subr.bf16.mxu0 0
  %3722 = vmatpush1.bf16.msra.mxu0 0
  %3723 = vmatprep.mubr.bf16.mxu0 0
  %3724 = vmatmul.mubr.bf16.gmra.mrb[0].mxu0 %v3668
  %v3725 = vpop.f32.mrb[0].mxu0
  %v3726 = vadd.f32 0.0, %v3725
  %v3727 = vpop.f32.mrb[0].mxu0
  %v3728 = vpop.f32.mrb[0].mxu0
  %v3729 = vadd.f32 0.0, %v3728
  %v3730 = vpop.f32.mrb[0].mxu0
  %3731 = vmatprep.mubr.bf16.mxu0 0
  %3732 = vmatmul.mubr.bf16.gmra.mrb[0].mxu0 %v3671
  %v3733 = vpop.f32.mrb[0].mxu0
  %v3734 = vadd.f32 0.0, %v3733
  %v3735 = vpop.f32.mrb[0].mxu0
  %v3736 = vpop.f32.mrb[0].mxu0
  %v3737 = vadd.f32 0.0, %v3736
  %v3738 = vpop.f32.mrb[0].mxu0
  %3739 = vmatprep.mubr.bf16.mxu0 0
  %3740 = vmatmul.mubr.bf16.gmra.mrb[0].mxu0 %v3674
  %v3741 = vpop.f32.mrb[0].mxu0
  %v3742 = vadd.f32 0.0, %v3741
  %v3743 = vpop.f32.mrb[0].mxu0
  %v3744 = vpop.f32.mrb[0].mxu0
  %v3745 = vadd.f32 0.0, %v3744
  %v3746 = vpop.f32.mrb[0].mxu0
  %3747 = vmatprep.mubr.bf16.mxu0 0
  %3748 = vmatmul.mubr.bf16.gmra.mrb[0].mxu0 %v3677
  %v3749 = vpop.f32.mrb[0].mxu0
  %v3750 = vadd.f32 0.0, %v3749
  %v3751 = vpop.f32.mrb[0].mxu0
  %v3752 = vpop.f32.mrb[0].mxu0
  %v3753 = vadd.f32 0.0, %v3752
  %v3754 = vpop.f32.mrb[0].mxu0
  %3755 = vmatprep.mubr.bf16.mxu0 0
  %3756 = vmatmul.mubr.bf16.gmra.mrb[0].mxu0 %v3680
  %v3757 = vpop.f32.mrb[0].mxu0
  %v3758 = vadd.f32 0.0, %v3757
  %v3759 = vpop.f32.mrb[0].mxu0
  %v3760 = vpop.f32.mrb[0].mxu0
  %v3761 = vadd.f32 0.0, %v3760
  %v3762 = vpop.f32.mrb[0].mxu0
  %3763 = vmatprep.mubr.bf16.mxu0 0
  %3764 = vmatmul.mubr.bf16.gmra.mrb[0].mxu0 %v3683
  %v3765 = vpop.f32.mrb[0].mxu0
  %v3766 = vadd.f32 0.0, %v3765
  %v3767 = vpop.f32.mrb[0].mxu0
  %v3768 = vpop.f32.mrb[0].mxu0
  %v3769 = vadd.f32 0.0, %v3768
  %v3770 = vpop.f32.mrb[0].mxu0
  %3771 = vmatprep.mubr.bf16.mxu0 0
  %3772 = vmatmul.mubr.bf16.gmra.mrb[0].mxu0 %v3686
  %v3773 = vpop.f32.mrb[0].mxu0
  %v3774 = vadd.f32 0.0, %v3773
  %v3775 = vpop.f32.mrb[0].mxu0
  %v3776 = vpop.f32.mrb[0].mxu0
  %v3777 = vadd.f32 0.0, %v3776
  %v3778 = vpop.f32.mrb[0].mxu0
  %3779 = vmatprep.mubr.bf16.mxu0 0
  %3780 = vmatmul.mubr.bf16.gmra.mrb[0].mxu0 %v3689
  %v3781 = vpop.f32.mrb[0].mxu0
  %v3782 = vadd.f32 0.0, %v3781
  %v3783 = vpop.f32.mrb[0].mxu0
  %v3784 = vpop.f32.mrb[0].mxu0
  %v3785 = vadd.f32 0.0, %v3784
  %v3786 = vpop.f32.mrb[0].mxu0
  %3787 = vdwg.mxu0
  %v3788 = vadd.f32 %v3595, %v3726
  %v3789 = vadd.f32 %v3596, %v3729
  %v3790 = vadd.f32 %v3597, %v3734
  %v3791 = vadd.f32 %v3598, %v3737
  %v3792 = vadd.f32 %v3599, %v3742
  %v3793 = vadd.f32 %v3600, %v3745
  %v3794 = vadd.f32 %v3601, %v3750
  %v3795 = vadd.f32 %v3602, %v3753
  %v3796 = vadd.f32 %v3603, %v3758
  %v3797 = vadd.f32 %v3604, %v3761
  %v3798 = vadd.f32 %v3605, %v3766
  %v3799 = vadd.f32 %v3606, %v3769
  %v3800 = vadd.f32 %v3607, %v3774
  %v3801 = vadd.f32 %v3608, %v3777
  %v3802 = vadd.f32 %v3609, %v3782
  %v3803 = vadd.f32 %v3610, %v3785
  %v3804 = vld [vmem:[#allocation2 + $0x19] sm:$0xff]
  %v3805 = vld [vmem:[#allocation2 + $0x21] sm:$0xff]
  %v3806 = vld [vmem:[#allocation2 + $0x29] sm:$0xff]
  %v3807 = vld [vmem:[#allocation2 + $0x31] sm:$0xff]
  %v3808 = vld [vmem:[#allocation2 + $0x39] sm:$0xff]
  %v3809 = vld [vmem:[#allocation2 + $0x41] sm:$0xff]
  %v3810 = vld [vmem:[#allocation2 + $0x49] sm:$0xff]
  %v3811 = vld [vmem:[#allocation2 + $0x51] sm:$0xff]
  %v3812 = vld [vmem:[#allocation2 + $0x59] sm:$0xff]
  %v3813 = vld [vmem:[#allocation2 + $0x61] sm:$0xff]
  %v3814 = vld [vmem:[#allocation2 + $0x69] sm:$0xff]
  %v3815 = vld [vmem:[#allocation2 + $0x71] sm:$0xff]
  %v3816 = vld [vmem:[#allocation2 + $0x79] sm:$0xff]
  %v3817 = vld [vmem:[#allocation2 + $0x81] sm:$0xff]
  %v3818 = vld [vmem:[#allocation2 + $0x89] sm:$0xff]
  %v3819 = vld [vmem:[#allocation2 + $0x91] sm:$0xff]
  %v3820 = vpack.c.bf16 %v3805, %v3804
  %v3821 = vpack.c.bf16 %v3807, %v3806
  %v3822 = vpack.c.bf16 %v3809, %v3808
  %v3823 = vpack.c.bf16 %v3811, %v3810
  %v3824 = vpack.c.bf16 %v3813, %v3812
  %v3825 = vpack.c.bf16 %v3815, %v3814
  %v3826 = vpack.c.bf16 %v3817, %v3816
  %v3827 = vpack.c.bf16 %v3819, %v3818
  %v3828 = vld [vmem:[%s1 + $0x220] sm:$0xf]
  %v3829 = vld [vmem:[%s1 + $0x224] sm:$0xf]
  %v3830 = vld [vmem:[%s1 + $0x228] sm:$0xf]
  %v3831 = vld [vmem:[%s1 + $0x22c] sm:$0xf]
  %v3832 = vld [vmem:[%s1 + $0x230] sm:$0xf]
  %v3833 = vld [vmem:[%s1 + $0x234] sm:$0xf]
  %v3834 = vld [vmem:[%s1 + $0x238] sm:$0xf]
  %v3835 = vld [vmem:[%s1 + $0x23c] sm:$0xf]
  %v3844 = vunpack.c.l.b16 %v3828
  %v3845 = vunpack.c.l.b16 %v3829
  %v3846 = vunpack.c.l.b16 %v3830
  %v3847 = vunpack.c.l.b16 %v3831
  %v3848 = vunpack.c.l.b16 %v3832
  %v3849 = vunpack.c.l.b16 %v3833
  %v3850 = vunpack.c.l.b16 %v3834
  %v3851 = vunpack.c.l.b16 %v3835
  %v3852 = vpack.c.b16 %v3845, %v3844
  %v3853 = vpack.c.b16 %v3847, %v3846
  %v3854 = vpack.c.b16 %v3849, %v3848
  %v3855 = vpack.c.b16 %v3851, %v3850
  %v3861 = vsel %vm203, %v3820, 0
  %v3864 = vsel %vm203, %v3821, 0
  %v3867 = vsel %vm203, %v3822, 0
  %v3870 = vsel %vm203, %v3823, 0
  %v3873 = vsel %vm203, %v3824, 0
  %v3876 = vsel %vm203, %v3825, 0
  %v3879 = vsel %vm203, %v3826, 0
  %v3882 = vsel %vm203, %v3827, 0
  %3884 = vmatprep.subr.bf16.mxu0 0
  %3885 = vmatpush1.bf16.msra.mxu0 %v3852
  %3886 = vmatprep.subr.bf16.mxu0 0
  %3887 = vmatpush1.bf16.msra.mxu0 %v3853
  %3888 = vmatprep.subr.bf16.mxu0 0
  %3889 = vmatpush1.bf16.msra.mxu0 %v3854
  %3890 = vmatprep.subr.bf16.mxu0 0
  %3891 = vmatpush1.bf16.msra.mxu0 %v3855
  %3892 = vmatprep.subr.bf16.mxu0 0
  %3893 = vmatpush1.bf16.msra.mxu0 0
  %3894 = vmatprep.subr.bf16.mxu0 0
  %3895 = vmatpush1.bf16.msra.mxu0 0
  %3896 = vmatprep.subr.bf16.mxu0 0
  %3897 = vmatpush1.bf16.msra.mxu0 0
  %3898 = vmatprep.subr.bf16.mxu0 0
  %3899 = vmatpush1.bf16.msra.mxu0 0
  %3900 = vmatprep.subr.bf16.mxu0 0
  %3901 = vmatpush1.bf16.msra.mxu0 0
  %3902 = vmatprep.subr.bf16.mxu0 0
  %3903 = vmatpush1.bf16.msra.mxu0 0
  %3904 = vmatprep.subr.bf16.mxu0 0
  %3905 = vmatpush1.bf16.msra.mxu0 0
  %3906 = vmatprep.subr.bf16.mxu0 0
  %3907 = vmatpush1.bf16.msra.mxu0 0
  %3908 = vmatprep.subr.bf16.mxu0 0
  %3909 = vmatpush1.bf16.msra.mxu0 0
  %3910 = vmatprep.subr.bf16.mxu0 0
  %3911 = vmatpush1.bf16.msra.mxu0 0
  %3912 = vmatprep.subr.bf16.mxu0 0
  %3913 = vmatpush1.bf16.msra.mxu0 0
  %3914 = vmatprep.subr.bf16.mxu0 0
  %3915 = vmatpush1.bf16.msra.mxu0 0
  %3916 = vmatprep.mubr.bf16.mxu0 0
  %3917 = vmatmul.mubr.bf16.gmra.mrb[0].mxu0 %v3861
  %v3918 = vpop.f32.mrb[0].mxu0
  %v3919 = vadd.f32 0.0, %v3918
  %v3920 = vpop.f32.mrb[0].mxu0
  %v3921 = vpop.f32.mrb[0].mxu0
  %v3922 = vadd.f32 0.0, %v3921
  %v3923 = vpop.f32.mrb[0].mxu0
  %3924 = vmatprep.mubr.bf16.mxu0 0
  %3925 = vmatmul.mubr.bf16.gmra.mrb[0].mxu0 %v3864
  %v3926 = vpop.f32.mrb[0].mxu0
  %v3927 = vadd.f32 0.0, %v3926
  %v3928 = vpop.f32.mrb[0].mxu0
  %v3929 = vpop.f32.mrb[0].mxu0
  %v3930 = vadd.f32 0.0, %v3929
  %v3931 = vpop.f32.mrb[0].mxu0
  %3932 = vmatprep.mubr.bf16.mxu0 0
  %3933 = vmatmul.mubr.bf16.gmra.mrb[0].mxu0 %v3867
  %v3934 = vpop.f32.mrb[0].mxu0
  %v3935 = vadd.f32 0.0, %v3934
  %v3936 = vpop.f32.mrb[0].mxu0
  %v3937 = vpop.f32.mrb[0].mxu0
  %v3938 = vadd.f32 0.0, %v3937
  %v3939 = vpop.f32.mrb[0].mxu0
  %3940 = vmatprep.mubr.bf16.mxu0 0
  %3941 = vmatmul.mubr.bf16.gmra.mrb[0].mxu0 %v3870
  %v3942 = vpop.f32.mrb[0].mxu0
  %v3943 = vadd.f32 0.0, %v3942
  %v3944 = vpop.f32.mrb[0].mxu0
  %v3945 = vpop.f32.mrb[0].mxu0
  %v3946 = vadd.f32 0.0, %v3945
  %v3947 = vpop.f32.mrb[0].mxu0
  %3948 = vmatprep.mubr.bf16.mxu0 0
  %3949 = vmatmul.mubr.bf16.gmra.mrb[0].mxu0 %v3873
  %v3950 = vpop.f32.mrb[0].mxu0
  %v3951 = vadd.f32 0.0, %v3950
  %v3952 = vpop.f32.mrb[0].mxu0
  %v3953 = vpop.f32.mrb[0].mxu0
  %v3954 = vadd.f32 0.0, %v3953
  %v3955 = vpop.f32.mrb[0].mxu0
  %3956 = vmatprep.mubr.bf16.mxu0 0
  %3957 = vmatmul.mubr.bf16.gmra.mrb[0].mxu0 %v3876
  %v3958 = vpop.f32.mrb[0].mxu0
  %v3959 = vadd.f32 0.0, %v3958
  %v3960 = vpop.f32.mrb[0].mxu0
  %v3961 = vpop.f32.mrb[0].mxu0
  %v3962 = vadd.f32 0.0, %v3961
  %v3963 = vpop.f32.mrb[0].mxu0
  %3964 = vmatprep.mubr.bf16.mxu0 0
  %3965 = vmatmul.mubr.bf16.gmra.mrb[0].mxu0 %v3879
  %v3966 = vpop.f32.mrb[0].mxu0
  %v3967 = vadd.f32 0.0, %v3966
  %v3968 = vpop.f32.mrb[0].mxu0
  %v3969 = vpop.f32.mrb[0].mxu0
  %v3970 = vadd.f32 0.0, %v3969
  %v3971 = vpop.f32.mrb[0].mxu0
  %3972 = vmatprep.mubr.bf16.mxu0 0
  %3973 = vmatmul.mubr.bf16.gmra.mrb[0].mxu0 %v3882
  %v3974 = vpop.f32.mrb[0].mxu0
  %v3975 = vadd.f32 0.0, %v3974
  %v3976 = vpop.f32.mrb[0].mxu0
  %v3977 = vpop.f32.mrb[0].mxu0
  %v3978 = vadd.f32 0.0, %v3977
  %v3979 = vpop.f32.mrb[0].mxu0
  %3980 = vdwg.mxu0
  %v3981 = vadd.f32 %v3788, %v3919
  %v3982 = vadd.f32 %v3789, %v3922
  %v3983 = vadd.f32 %v3790, %v3927
  %v3984 = vadd.f32 %v3791, %v3930
  %v3985 = vadd.f32 %v3792, %v3935
  %v3986 = vadd.f32 %v3793, %v3938
  %v3987 = vadd.f32 %v3794, %v3943
  %v3988 = vadd.f32 %v3795, %v3946
  %v3989 = vadd.f32 %v3796, %v3951
  %v3990 = vadd.f32 %v3797, %v3954
  %v3991 = vadd.f32 %v3798, %v3959
  %v3992 = vadd.f32 %v3799, %v3962
  %v3993 = vadd.f32 %v3800, %v3967
  %v3994 = vadd.f32 %v3801, %v3970
  %v3995 = vadd.f32 %v3802, %v3975
  %v3996 = vadd.f32 %v3803, %v3978
  %v3997 = vmul.f32 %v3981, %v1990
  %v3998 = vmul.f32 %v3982, %v1995
  %v3999 = vmul.f32 %v3983, %v2000
  %v4000 = vmul.f32 %v3984, %v2005
  %v4001 = vmul.f32 %v3985, %v2010
  %v4002 = vmul.f32 %v3986, %v2015
  %v4003 = vmul.f32 %v3987, %v2020
  %v4004 = vmul.f32 %v3988, %v2025
  %v4005 = vmul.f32 %v3989, %v2030
  %v4006 = vmul.f32 %v3990, %v2035
  %v4007 = vmul.f32 %v3991, %v2040
  %v4008 = vmul.f32 %v3992, %v2045
  %v4009 = vmul.f32 %v3993, %v2050
  %v4010 = vmul.f32 %v3994, %v2055
  %v4011 = vmul.f32 %v3995, %v2060
  %v4012 = vmul.f32 %v3996, %v2065
  %v4013 = vsel %vm203, %v3997, 0.0
  %v4014 = vsel %vm203, %v3998, 0.0
  %v4015 = vadd.f32 %v4013, %v4014
  %v4016 = vsel %vm203, %v3999, 0.0
  %v4017 = vadd.f32 %v4015, %v4016
  %v4018 = vsel %vm203, %v4000, 0.0
  %v4019 = vadd.f32 %v4017, %v4018
  %v4020 = vsel %vm203, %v4001, 0.0
  %v4021 = vadd.f32 %v4019, %v4020
  %v4022 = vsel %vm203, %v4002, 0.0
  %v4023 = vadd.f32 %v4021, %v4022
  %v4024 = vsel %vm203, %v4003, 0.0
  %v4025 = vadd.f32 %v4023, %v4024
  %v4026 = vsel %vm203, %v4004, 0.0
  %v4027 = vadd.f32 %v4025, %v4026
  %v4028 = vsel %vm203, %v4005, 0.0
  %v4029 = vadd.f32 %v4027, %v4028
  %v4030 = vsel %vm203, %v4006, 0.0
  %v4031 = vadd.f32 %v4029, %v4030
  %v4032 = vsel %vm203, %v4007, 0.0
  %v4033 = vadd.f32 %v4031, %v4032
  %v4034 = vsel %vm203, %v4008, 0.0
  %v4035 = vadd.f32 %v4033, %v4034
  %v4036 = vsel %vm203, %v4009, 0.0
  %v4037 = vadd.f32 %v4035, %v4036
  %v4038 = vsel %vm203, %v4010, 0.0
  %v4039 = vadd.f32 %v4037, %v4038
  %v4040 = vsel %vm203, %v4011, 0.0
  %v4041 = vadd.f32 %v4039, %v4040
  %v4042 = vsel %vm203, %v4012, 0.0
  %v4043 = vadd.f32 %v4041, %v4042
  %v4044 = vrot.slane %v4043, 4
  %v4045 = vadd.f32 %v4043, %v4044
  %v4046 = vrot.slane %v4045, 2
  %v4047 = vadd.f32 %v4045, %v4046
  %v4048 = vrot.slane %v4047, 1
  %v4049 = vadd.f32 %v4047, %v4048
  %v4050 = vmul.f32 %v4049, 0.013888889
  %v4051 = vmul.f32 %v3997, %v3997
  %v4052 = vmul.f32 %v3998, %v3998
  %v4053 = vmul.f32 %v3999, %v3999
  %v4054 = vmul.f32 %v4000, %v4000
  %v4055 = vmul.f32 %v4001, %v4001
  %v4056 = vmul.f32 %v4002, %v4002
  %v4057 = vmul.f32 %v4003, %v4003
  %v4058 = vmul.f32 %v4004, %v4004
  %v4059 = vmul.f32 %v4005, %v4005
  %v4060 = vmul.f32 %v4006, %v4006
  %v4061 = vmul.f32 %v4007, %v4007
  %v4062 = vmul.f32 %v4008, %v4008
  %v4063 = vmul.f32 %v4009, %v4009
  %v4064 = vmul.f32 %v4010, %v4010
  %v4065 = vmul.f32 %v4011, %v4011
  %v4066 = vmul.f32 %v4012, %v4012
  %v4067 = vsel %vm203, %v4051, 0.0
  %v4068 = vsel %vm203, %v4052, 0.0
  %v4069 = vadd.f32 %v4067, %v4068
  %v4070 = vsel %vm203, %v4053, 0.0
  %v4071 = vadd.f32 %v4069, %v4070
  %v4072 = vsel %vm203, %v4054, 0.0
  %v4073 = vadd.f32 %v4071, %v4072
  %v4074 = vsel %vm203, %v4055, 0.0
  %v4075 = vadd.f32 %v4073, %v4074
  %v4076 = vsel %vm203, %v4056, 0.0
  %v4077 = vadd.f32 %v4075, %v4076
  %v4078 = vsel %vm203, %v4057, 0.0
  %v4079 = vadd.f32 %v4077, %v4078
  %v4080 = vsel %vm203, %v4058, 0.0
  %v4081 = vadd.f32 %v4079, %v4080
  %v4082 = vsel %vm203, %v4059, 0.0
  %v4083 = vadd.f32 %v4081, %v4082
  %v4084 = vsel %vm203, %v4060, 0.0
  %v4085 = vadd.f32 %v4083, %v4084
  %v4086 = vsel %vm203, %v4061, 0.0
  %v4087 = vadd.f32 %v4085, %v4086
  %v4088 = vsel %vm203, %v4062, 0.0
  %v4089 = vadd.f32 %v4087, %v4088
  %v4090 = vsel %vm203, %v4063, 0.0
  %v4091 = vadd.f32 %v4089, %v4090
  %v4092 = vsel %vm203, %v4064, 0.0
  %v4093 = vadd.f32 %v4091, %v4092
  %v4094 = vsel %vm203, %v4065, 0.0
  %v4095 = vadd.f32 %v4093, %v4094
  %v4096 = vsel %vm203, %v4066, 0.0
  %v4097 = vadd.f32 %v4095, %v4096
  %v4098 = vrot.slane %v4097, 4
  %v4099 = vadd.f32 %v4097, %v4098
  %v4100 = vrot.slane %v4099, 2
  %v4101 = vadd.f32 %v4099, %v4100
  %v4102 = vrot.slane %v4101, 1
  %v4103 = vadd.f32 %v4101, %v4102
  %v4104 = vmul.f32 %v4103, 0.013888889
  %v4105 = vmul.f32 %v4050, %v4050
  %v4106 = vsub.f32 %v4104, %v4105
  %v4107 = vld [vmem:[%s2 + $0x2] sm:$0x1]
  %v4108 = vadd.f32 %v4106, 1e-05
  %v4109 = vrsqrt.pop %v4108
  %v4110 = vmul.f32 %v4107, %v4109
  %v4111 = vld [vmem:[%s2 + $0x3] sm:$0x1]
  %v4112 = vmul.f32 %v4050, %v4110
  %v4113 = vsub.f32 %v4111, %v4112
  %v4114 = vlaneseq
  %v4115 = vshrl.u32 %v4114, 7
  %v4116 = vsub.s32 0, %v4115
  %v4117 = vrot.slane %v4110, %v4116
  %v4118 = vmul.f32 %v3981, %v4117
  %v4119 = vmul.f32 %v3982, %v4117
  %v4120 = vmul.f32 %v3983, %v4117
  %v4121 = vmul.f32 %v3984, %v4117
  %v4122 = vmul.f32 %v3985, %v4117
  %v4123 = vmul.f32 %v3986, %v4117
  %v4124 = vmul.f32 %v3987, %v4117
  %v4125 = vmul.f32 %v3988, %v4117
  %v4126 = vmul.f32 %v3989, %v4117
  %v4127 = vmul.f32 %v3990, %v4117
  %v4128 = vmul.f32 %v3991, %v4117
  %v4129 = vmul.f32 %v3992, %v4117
  %v4130 = vmul.f32 %v3993, %v4117
  %v4131 = vmul.f32 %v3994, %v4117
  %v4132 = vmul.f32 %v3995, %v4117
  %v4133 = vmul.f32 %v3996, %v4117
  %v4134 = vlaneseq
  %v4135 = vshrl.u32 %v4134, 7
  %v4136 = vsub.s32 0, %v4135
  %v4137 = vrot.slane %v4113, %v4136
  %v4138 = vadd.f32 %v4118, %v4137
  %v4139 = vadd.f32 %v4119, %v4137
  %v4140 = vadd.f32 %v4120, %v4137
  %v4141 = vadd.f32 %v4121, %v4137
  %v4142 = vadd.f32 %v4122, %v4137
  %v4143 = vadd.f32 %v4123, %v4137
  %v4144 = vadd.f32 %v4124, %v4137
  %v4145 = vadd.f32 %v4125, %v4137
  %v4146 = vadd.f32 %v4126, %v4137
  %v4147 = vadd.f32 %v4127, %v4137
  %v4148 = vadd.f32 %v4128, %v4137
  %v4149 = vadd.f32 %v4129, %v4137
  %v4150 = vadd.f32 %v4130, %v4137
  %v4151 = vadd.f32 %v4131, %v4137
  %v4152 = vadd.f32 %v4132, %v4137
  %v4153 = vadd.f32 %v4133, %v4137
  %v4154 = vmax.f32 %v4138, 0.0
  %v4155 = vmax.f32 %v4139, 0.0
  %v4156 = vmax.f32 %v4140, 0.0
  %v4157 = vmax.f32 %v4141, 0.0
  %v4158 = vmax.f32 %v4142, 0.0
  %v4159 = vmax.f32 %v4143, 0.0
  %v4160 = vmax.f32 %v4144, 0.0
  %v4161 = vmax.f32 %v4145, 0.0
  %v4162 = vmax.f32 %v4146, 0.0
  %v4163 = vmax.f32 %v4147, 0.0
  %v4164 = vmax.f32 %v4148, 0.0
  %v4165 = vmax.f32 %v4149, 0.0
  %v4166 = vmax.f32 %v4150, 0.0
  %v4167 = vmax.f32 %v4151, 0.0
  %v4168 = vmax.f32 %v4152, 0.0
  %v4169 = vmax.f32 %v4153, 0.0
  %4170 = vst.msk [vmem:[%s4] sm:$0xff] %vm203, %v4154
  %4171 = vst.msk [vmem:[%s4 + $0x8] sm:$0xff] %vm203, %v4155
  %4172 = vst.msk [vmem:[%s4 + $0x10] sm:$0xff] %vm203, %v4156
  %4173 = vst.msk [vmem:[%s4 + $0x18] sm:$0xff] %vm203, %v4157
  %4174 = vst.msk [vmem:[%s4 + $0x20] sm:$0xff] %vm203, %v4158
  %4175 = vst.msk [vmem:[%s4 + $0x28] sm:$0xff] %vm203, %v4159
  %4176 = vst.msk [vmem:[%s4 + $0x30] sm:$0xff] %vm203, %v4160
  %4177 = vst.msk [vmem:[%s4 + $0x38] sm:$0xff] %vm203, %v4161
  %4178 = vst.msk [vmem:[%s4 + $0x40] sm:$0xff] %vm203, %v4162
  %4179 = vst.msk [vmem:[%s4 + $0x48] sm:$0xff] %vm203, %v4163
  %4180 = vst.msk [vmem:[%s4 + $0x50] sm:$0xff] %vm203, %v4164
  %4181 = vst.msk [vmem:[%s4 + $0x58] sm:$0xff] %vm203, %v4165
  %4182 = vst.msk [vmem:[%s4 + $0x60] sm:$0xff] %vm203, %v4166
  %4183 = vst.msk [vmem:[%s4 + $0x68] sm:$0xff] %vm203, %v4167
  %4184 = vst.msk [vmem:[%s4 + $0x70] sm:$0xff] %vm203, %v4168
  %4185 = vst.msk [vmem:[%s4 + $0x78] sm:$0xff] %vm203, %v4169
  // Predicated region
  $region18: #{_lambda_.5} parent=0 // pred_check
    _
  $region19: #{_lambda_.5} parent=0 // pred_check_branch
    %4187 = sbr.rel (0) target = $region21
  $region20: #{_lambda_.5} parent=0 // pred_region
    _
  $region21: #{_lambda_.5} parent=0 // pred_fallthru
    _
  // Predicated region
  $region22: #{_lambda_.5} parent=0 // pred_check
    _
  $region23: #{_lambda_.5} parent=0 // pred_check_branch
    %4189 = sbr.rel (0) target = $region25
  $region24: #{_lambda_.5} parent=0 // pred_region
    _
  $region25: #{_lambda_.5} parent=0 // pred_fallthru
    _

</llo_original>
